<compile_context>
chip_gen: v7x
topology: tpu7x:2x2x1
jax: 0.10.0
libtpu: 0.0.40
codegen_flags: <defaults>
</compile_context>

<pallas_src>
import jax
import jax.numpy as jnp
from jax import lax
from jax.experimental import pallas as pl
from jax.experimental.pallas import tpu as pltpu


def _round_up(n, m):
    return ((n + m - 1) // m) * m


# -------------------- fused conv5x5 (pad=2) + bias + maxpool2 --------------------

def _make_conv_pool_kernel(H, Wo, K, Cout, rt, n_taps):
    n_chunks = H // rt
    M = rt * Wo                # GEMM rows per chunk (conv rows x pooled cols)
    half = (rt // 2) * Wo      # pooled rows per chunk (flattened)

    def kernel(fe_ref, fo_ref, w_ref, b_ref, o_ref):
        def chunk(c):
            static = isinstance(c, int)
            base = c * M if static else pl.multiple_of(c * M, M)
            acc_e = jnp.zeros((M, Cout), jnp.float32)
            acc_o = jnp.zeros((M, Cout), jnp.float32)
            for i in range(n_taps):              # kernel-row taps (1 if fully folded)
                off = base + i * Wo
                w_i = w_ref[i]                   # (K, Cout), VMEM-resident
                acc_e = acc_e + jnp.dot(fe_ref[pl.ds(off, M), :], w_i,
                                        preferred_element_type=jnp.float32)
                acc_o = acc_o + jnp.dot(fo_ref[pl.ds(off, M), :], w_i,
                                        preferred_element_type=jnp.float32)
            # 2x2 max-pool epilogue: column pairs = the two accumulators,
            # row pairs = adjacent Wo-row blocks of the chunk.
            cand = jnp.maximum(acc_e, acc_o)
            rows = []
            for p in range(rt // 2):
                top = cand[(2 * p) * Wo:(2 * p + 1) * Wo, :]
                bot = cand[(2 * p + 1) * Wo:(2 * p + 2) * Wo, :]
                rows.append(jnp.maximum(top, bot))
            pooled = rows[0] if len(rows) == 1 else jnp.concatenate(rows, axis=0)
            pooled = pooled + b_ref[...]          # per-channel bias (pool-commutes)
            out_base = c * half if static else pl.multiple_of(c * half, half)
            o_ref[pl.ds(out_base, half), :] = pooled.astype(o_ref.dtype)

        if n_chunks == 1:
            chunk(0)                              # fully static offsets (stage 3)
        else:
            def body(c, carry):
                chunk(c)
                return carry
            lax.fori_loop(0, n_chunks, body, 0)

    return kernel


def conv5x5_pool_stage(x, w_slab, b, rt=8):
    """Conv2d(Cin,Cout,5,1,2) + bias + MaxPool2d(2), channels-last, f32.

    x:      (B, H, W, Cin)       NHWC activations
    w_slab: (n_taps, K, Cout)    folded weights (see prepare_params)
    b:      (1, Cout)            bias
    returns (B, H//2, W//2, Cout)
    """
    B, H, W, Cin0 = x.shape
    n_taps, K, Cout = w_slab.shape
    cin_p = K // (25 if n_taps == 1 else 5)
    Ho, Wo = H // 2, W // 2
    rt = min(rt, H)
    assert H % rt == 0 and rt % 2 == 0

    # Pad channels to the slab's (multiple-of-8) channel count (zeros are inert).
    if Cin0 < cin_p:
        x = jnp.pad(x, ((0, 0), (0, 0), (0, 0), (0, cin_p - Cin0)))

    # Spatial zero-pad (conv padding=2) + even/odd column de-interleave.
    xp = jnp.pad(x, ((0, 0), (2, 2), (2, 2), (0, 0)))        # (B, H+4, W+4, cin_p)
    xe = xp[:, :, 0::2, :]                                    # (B, H+4, Wo+2, cin_p)
    xo = xp[:, :, 1::2, :]

    def kw_fold(u, v, v_off):
        # 5 kernel-width taps in order kw = 0,2,4,1,3 for one output-column parity.
        return jnp.concatenate(
            [u[:, :, 0:Wo, :], u[:, :, 1:Wo + 1, :], u[:, :, 2:Wo + 2, :],
             v[:, :, v_off:v_off + Wo, :], v[:, :, v_off + 1:v_off + 1 + Wo, :]],
            axis=-1)

    fe = kw_fold(xe, xo, 0)      # even output columns   (B, H+4, Wo, 5*cin_p)
    fo = kw_fold(xo, xe, 1)      # odd output columns
    if n_taps == 1:              # additionally fold the 5 kernel rows into K
        fe = jnp.concatenate([fe[:, i:i + H] for i in range(5)], axis=-1)
        fo = jnp.concatenate([fo[:, i:i + H] for i in range(5)], axis=-1)
        R = H
    else:
        R = H + 4
    fe = fe.reshape(B, R * Wo, K)
    fo = fo.reshape(B, R * Wo, K)

    out = pl.pallas_call(
        _make_conv_pool_kernel(H, Wo, K, Cout, rt, n_taps),
        out_shape=jax.ShapeDtypeStruct((B, Ho * Wo, Cout), jnp.float32),
        grid=(B,),
        in_specs=[
            pl.BlockSpec((None, R * Wo, K), lambda bb: (bb, 0, 0)),
            pl.BlockSpec((None, R * Wo, K), lambda bb: (bb, 0, 0)),
            pl.BlockSpec((n_taps, K, Cout), lambda bb: (0, 0, 0)),   # resident weights
            pl.BlockSpec((1, Cout), lambda bb: (0, 0)),              # resident bias
        ],
        out_specs=pl.BlockSpec((None, Ho * Wo, Cout), lambda bb: (bb, 0, 0)),
        compiler_params=pltpu.CompilerParams(
            dimension_semantics=("parallel",)),
    )(fe, fo, w_slab, b)
    return out.reshape(B, Ho, Wo, Cout)


# ------------------------- collapsed linear head (one dot) -----------------------

def _head_kernel(x_ref, w_ref, b_ref, o_ref):
    o_ref[...] = (jnp.dot(x_ref[...], w_ref[...],
                          preferred_element_type=jnp.float32) + b_ref[...])


def linear_head(x, wf, bf):
    """Linear(2048,128) @ Linear(128,10) collapsed to a single (2048,10) GEMM."""
    B = x.shape[0]
    return pl.pallas_call(
        _head_kernel,
        out_shape=jax.ShapeDtypeStruct((B, wf.shape[1]), jnp.float32),
    )(x, wf, bf)


# ------------------------------------ params -------------------------------------

def init_params(key):
    """PyTorch-layout parameters with torch-default uniform init."""
    ks = jax.random.split(key, 10)

    def u(k, shape, fan_in):
        bound = 1.0 / float(fan_in) ** 0.5
        return jax.random.uniform(k, shape, jnp.float32, -bound, bound)

    return {
        "w1": u(ks[0], (32, 3, 5, 5), 3 * 25),    "b1": u(ks[1], (32,), 3 * 25),
        "w2": u(ks[2], (64, 32, 5, 5), 32 * 25),  "b2": u(ks[3], (64,), 32 * 25),
        "w3": u(ks[4], (128, 64, 5, 5), 64 * 25), "b3": u(ks[5], (128,), 64 * 25),
        "wl1": u(ks[6], (128, 2048), 2048),       "bl1": u(ks[7], (128,), 2048),
        "wl2": u(ks[8], (10, 128), 128),          "bl2": u(ks[9], (10,), 128),
    }


def prepare_params(p):
    """One-time conversion of PyTorch-layout params into kernel layout."""
    def conv_slab(w, full):
        cout, cin = w.shape[0], w.shape[1]
        cin_p = _round_up(cin, 8)
        wt = jnp.transpose(w, (2, 3, 1, 0))                        # (kh, kw, cin, cout)
        wt = jnp.pad(wt, ((0, 0), (0, 0), (0, cin_p - cin), (0, 0)))
        wt = wt[:, jnp.array([0, 2, 4, 1, 3]), :, :]               # kw order: even, odd
        slab = wt.reshape(5, 5 * cin_p, cout)                      # per-kernel-row slabs
        if full:
            slab = slab.reshape(1, 25 * cin_p, cout)               # fully folded (stage 1)
        return slab.astype(jnp.float32)

    def bias(b):
        return b.reshape(1, -1).astype(jnp.float32)

    # Collapse Linear(2048,128)->Linear(128,10) (no nonlinearity between them);
    # permute Linear1 columns from torch's (C,H,W) flatten order to our (H,W,C).
    wl1 = p["wl1"].reshape(128, 128, 4, 4)                         # (out, C, H, W)
    wl1 = jnp.transpose(wl1, (2, 3, 1, 0)).reshape(4 * 4 * 128, 128)
    wf = wl1 @ p["wl2"].T                                          # (2048, 10)
    bf = (p["bl1"] @ p["wl2"].T + p["bl2"]).reshape(1, -1)         # (1, 10)

    return {
        "w1": conv_slab(p["w1"], full=True),  "b1": bias(p["b1"]),
        "w2": conv_slab(p["w2"], full=False), "b2": bias(p["b2"]),
        "w3": conv_slab(p["w3"], full=False), "b3": bias(p["b3"]),
        "wf": wf.astype(jnp.float32), "bf": bf.astype(jnp.float32),
    }


# ------------------------------------ model --------------------------------------

@jax.jit
def neural_network_forward(x, kp):
    # x: (B, 3, 32, 32) float32, PyTorch NCHW layout.
    x = jnp.transpose(x, (0, 2, 3, 1))                        # NHWC
    x = conv5x5_pool_stage(x, kp["w1"], kp["b1"])             # (B, 16, 16, 32)
    x = conv5x5_pool_stage(x, kp["w2"], kp["b2"])             # (B, 8, 8, 64)
    x = conv5x5_pool_stage(x, kp["w3"], kp["b3"])             # (B, 4, 4, 128)
    B = x.shape[0]
    x = x.reshape(B, -1)                                      # (B, 2048), (h,w,c) order
    return linear_head(x, kp["wf"], kp["bf"])                 # (B, 10)


if __name__ == "__main__":
    key = jax.random.PRNGKey(0)
    pkey, xkey = jax.random.split(key)
    params = init_params(pkey)
    kparams = prepare_params(params)
    # Input must be 3x32x32 so Flatten -> 128*4*4 matches the first Linear layer.
    x = jax.random.normal(xkey, (2, 3, 32, 32), dtype=jnp.float32)

    out = neural_network_forward(x, kparams)
    out = jax.block_until_ready(out)
    assert out.shape == (2, 10), out.shape
    print("KERNEL_OK")
</pallas_src>

<mosaic_0001>
module attributes {stable_mosaic.version = 11 : i64} {
  func.func @kernel(%arg0: i32, %arg1: memref<1x512x200xf32, #tpu.memory_space<vmem>>, %arg2: memref<1x512x200xf32, #tpu.memory_space<vmem>>, %arg3: memref<1x200x32xf32, #tpu.memory_space<vmem>>, %arg4: memref<1x32xf32, #tpu.memory_space<vmem>>, %arg5: memref<1x256x32xf32, #tpu.memory_space<vmem>>) attributes {dimension_semantics = [#tpu.dimension_semantics<parallel>], iteration_bounds = array<i64: 2>, scalar_prefetch = 0 : i64, scratch_operands = 0 : i64, tpu.core_type = #tpu.core_type<tc>, window_params = [{transform_indices = @transform_0, window_bounds = array<i64: 1, 512, 200>}, {transform_indices = @transform_1, window_bounds = array<i64: 1, 512, 200>}, {pipeline_mode = #tpu.pipeline_mode<synchronous>, transform_indices = @transform_2, window_bounds = array<i64: 1, 200, 32>}, {pipeline_mode = #tpu.pipeline_mode<synchronous>, transform_indices = @transform_3, window_bounds = array<i64: 1, 32>}, {transform_indices = @transform_4, window_bounds = array<i64: 1, 256, 32>}]} {
    %c0_i32 = arith.constant 0 : i32
    %c4_i32 = arith.constant 4 : i32
    %0 = arith.addi %c0_i32, %c4_i32 : i32
    %c1_i32 = arith.constant 1 : i32
    scf.for %arg6 = %c0_i32 to %0 step %c1_i32  : i32 {
      %c128_i32 = arith.constant 128 : i32
      %1 = arith.muli %arg6, %c128_i32 : i32
      %2 = tpu.assume_multiple %1, 128 : i32
      %cst = arith.constant 0.000000e+00 : f32
      %3 = vector.broadcast %cst : f32 to vector<128x32xf32>
      %cst_1 = arith.constant 0.000000e+00 : f32
      %4 = vector.broadcast %cst_1 : f32 to vector<128x32xf32>
      %c0_i32_2 = arith.constant 0 : i32
      %5 = arith.addi %2, %c0_i32_2 : i32
      %c0 = arith.constant 0 : index
      %c0_3 = arith.constant 0 : index
      %c0_4 = arith.constant 0 : index
      %6 = vector.load %arg3[%c0, %c0_3, %c0_4] : memref<1x200x32xf32, #tpu.memory_space<vmem>>, vector<1x200x32xf32>
      %7 = vector.shape_cast %6 : vector<1x200x32xf32> to vector<200x32xf32>
      %c0_5 = arith.constant 0 : index
      %8 = arith.index_cast %5 : i32 to index
      %c0_6 = arith.constant 0 : index
      %9 = vector.load %arg1[%c0_5, %8, %c0_6] : memref<1x512x200xf32, #tpu.memory_space<vmem>>, vector<1x128x200xf32>
      %10 = vector.shape_cast %9 : vector<1x128x200xf32> to vector<128x200xf32>
      %cst_7 = arith.constant dense<0.000000e+00> : vector<128x32xf32>
      %11 = tpu.matmul %10, %7, %cst_7 {dimension_numbers = #tpu.dot_dimension_numbers<[1], [0], [0], [1], [0, 0, 1, 1], [], []>} : vector<128x200xf32>, vector<200x32xf32>, vector<128x32xf32> -> vector<128x32xf32>
      %12 = arith.addf %3, %11 : vector<128x32xf32>
      %c0_8 = arith.constant 0 : index
      %13 = arith.index_cast %5 : i32 to index
      %c0_9 = arith.constant 0 : index
      %14 = vector.load %arg2[%c0_8, %13, %c0_9] : memref<1x512x200xf32, #tpu.memory_space<vmem>>, vector<1x128x200xf32>
      %15 = vector.shape_cast %14 : vector<1x128x200xf32> to vector<128x200xf32>
      %cst_10 = arith.constant dense<0.000000e+00> : vector<128x32xf32>
      %16 = tpu.matmul %15, %7, %cst_10 {dimension_numbers = #tpu.dot_dimension_numbers<[1], [0], [0], [1], [0, 0, 1, 1], [], []>} : vector<128x200xf32>, vector<200x32xf32>, vector<128x32xf32> -> vector<128x32xf32>
      %17 = arith.addf %4, %16 : vector<128x32xf32>
      %18 = arith.maximumf %12, %17 : vector<128x32xf32>
      %19 = vector.extract_strided_slice %18 {offsets = [0, 0], sizes = [16, 32], strides = [1, 1]} : vector<128x32xf32> to vector<16x32xf32>
      %20 = vector.extract_strided_slice %18 {offsets = [16, 0], sizes = [16, 32], strides = [1, 1]} : vector<128x32xf32> to vector<16x32xf32>
      %21 = arith.maximumf %19, %20 : vector<16x32xf32>
      %22 = vector.extract_strided_slice %18 {offsets = [32, 0], sizes = [16, 32], strides = [1, 1]} : vector<128x32xf32> to vector<16x32xf32>
      %23 = vector.extract_strided_slice %18 {offsets = [48, 0], sizes = [16, 32], strides = [1, 1]} : vector<128x32xf32> to vector<16x32xf32>
      %24 = arith.maximumf %22, %23 : vector<16x32xf32>
      %25 = vector.extract_strided_slice %18 {offsets = [64, 0], sizes = [16, 32], strides = [1, 1]} : vector<128x32xf32> to vector<16x32xf32>
      %26 = vector.extract_strided_slice %18 {offsets = [80, 0], sizes = [16, 32], strides = [1, 1]} : vector<128x32xf32> to vector<16x32xf32>
      %27 = arith.maximumf %25, %26 : vector<16x32xf32>
      %28 = vector.extract_strided_slice %18 {offsets = [96, 0], sizes = [16, 32], strides = [1, 1]} : vector<128x32xf32> to vector<16x32xf32>
      %29 = vector.extract_strided_slice %18 {offsets = [112, 0], sizes = [16, 32], strides = [1, 1]} : vector<128x32xf32> to vector<16x32xf32>
      %30 = arith.maximumf %28, %29 : vector<16x32xf32>
      %31 = tpu.concatenate %21, %24, %27, %30 in 0 : vector<16x32xf32>, vector<16x32xf32>, vector<16x32xf32>, vector<16x32xf32> -> vector<64x32xf32>
      %c0_11 = arith.constant 0 : index
      %c0_12 = arith.constant 0 : index
      %32 = vector.load %arg4[%c0_11, %c0_12] : memref<1x32xf32, #tpu.memory_space<vmem>>, vector<1x32xf32>
      %33 = vector.broadcast %32 : vector<1x32xf32> to vector<64x32xf32>
      %34 = arith.addf %31, %33 : vector<64x32xf32>
      %c64_i32 = arith.constant 64 : i32
      %35 = arith.muli %arg6, %c64_i32 : i32
      %36 = tpu.assume_multiple %35, 64 : i32
      %c0_13 = arith.constant 0 : index
      %37 = arith.index_cast %36 : i32 to index
      %c0_14 = arith.constant 0 : index
      %38 = vector.load %arg5[%c0_13, %37, %c0_14] : memref<1x256x32xf32, #tpu.memory_space<vmem>>, vector<1x64x32xf32>
      %39 = vector.shape_cast %38 : vector<1x64x32xf32> to vector<64x32xf32>
      %40 = vector.shape_cast %34 : vector<64x32xf32> to vector<1x64x32xf32>
      tpu.vector_store %arg5[%c0_13, %37, %c0_14], %40 {strides = array<i32>} : memref<1x256x32xf32, #tpu.memory_space<vmem>>, vector<1x64x32xf32>,
    }
    %c4_i32_0 = arith.constant 4 : i32
    return
  }
  func.func @transform_0(%arg0: i32) -> (i32, i32, i32) {
    %c0_i32 = arith.constant 0 : i32
    %c0_i32_0 = arith.constant 0 : i32
    %c0_i32_1 = arith.constant 0 : i32
    return %arg0, %c0_i32, %c0_i32_0 : i32, i32, i32
  }
  func.func @transform_1(%arg0: i32) -> (i32, i32, i32) {
    %c0_i32 = arith.constant 0 : i32
    %c0_i32_0 = arith.constant 0 : i32
    %c0_i32_1 = arith.constant 0 : i32
    return %arg0, %c0_i32, %c0_i32_0 : i32, i32, i32
  }
  func.func @transform_2(%arg0: i32) -> (i32, i32, i32) {
    %c0_i32 = arith.constant 0 : i32
    %c0_i32_0 = arith.constant 0 : i32
    %c0_i32_1 = arith.constant 0 : i32
    %c0_i32_2 = arith.constant 0 : i32
    return %c0_i32, %c0_i32_0, %c0_i32_1 : i32, i32, i32
  }
  func.func @transform_3(%arg0: i32) -> (i32, i32) {
    %c0_i32 = arith.constant 0 : i32
    %c0_i32_0 = arith.constant 0 : i32
    %c0_i32_1 = arith.constant 0 : i32
    return %c0_i32, %c0_i32_0 : i32, i32
  }
  func.func @transform_4(%arg0: i32) -> (i32, i32, i32) {
    %c0_i32 = arith.constant 0 : i32
    %c0_i32_0 = arith.constant 0 : i32
    %c0_i32_1 = arith.constant 0 : i32
    return %arg0, %c0_i32, %c0_i32_0 : i32, i32, i32
  }
}

module attributes {stable_mosaic.version = 11 : i64} {
  func.func @kernel(%arg0: i32, %arg1: memref<1x160x160xf32, #tpu.memory_space<vmem>>, %arg2: memref<1x160x160xf32, #tpu.memory_space<vmem>>, %arg3: memref<5x160x64xf32, #tpu.memory_space<vmem>>, %arg4: memref<1x64xf32, #tpu.memory_space<vmem>>, %arg5: memref<1x64x64xf32, #tpu.memory_space<vmem>>) attributes {dimension_semantics = [#tpu.dimension_semantics<parallel>], iteration_bounds = array<i64: 2>, scalar_prefetch = 0 : i64, scratch_operands = 0 : i64, tpu.core_type = #tpu.core_type<tc>, window_params = [{transform_indices = @transform_0, window_bounds = array<i64: 1, 160, 160>}, {transform_indices = @transform_1, window_bounds = array<i64: 1, 160, 160>}, {pipeline_mode = #tpu.pipeline_mode<synchronous>, transform_indices = @transform_2, window_bounds = array<i64: 5, 160, 64>}, {pipeline_mode = #tpu.pipeline_mode<synchronous>, transform_indices = @transform_3, window_bounds = array<i64: 1, 64>}, {transform_indices = @transform_4, window_bounds = array<i64: 1, 64, 64>}]} {
    %c0_i32 = arith.constant 0 : i32
    %c2_i32 = arith.constant 2 : i32
    %0 = arith.addi %c0_i32, %c2_i32 : i32
    %c1_i32 = arith.constant 1 : i32
    scf.for %arg6 = %c0_i32 to %0 step %c1_i32  : i32 {
      %c64_i32 = arith.constant 64 : i32
      %1 = arith.muli %arg6, %c64_i32 : i32
      %2 = tpu.assume_multiple %1, 64 : i32
      %cst = arith.constant 0.000000e+00 : f32
      %3 = vector.broadcast %cst : f32 to vector<64x64xf32>
      %cst_1 = arith.constant 0.000000e+00 : f32
      %4 = vector.broadcast %cst_1 : f32 to vector<64x64xf32>
      %c0_i32_2 = arith.constant 0 : i32
      %5 = arith.addi %2, %c0_i32_2 : i32
      %c0 = arith.constant 0 : index
      %c0_3 = arith.constant 0 : index
      %c0_4 = arith.constant 0 : index
      %6 = vector.load %arg3[%c0, %c0_3, %c0_4] : memref<5x160x64xf32, #tpu.memory_space<vmem>>, vector<1x160x64xf32>
      %7 = vector.shape_cast %6 : vector<1x160x64xf32> to vector<160x64xf32>
      %c0_5 = arith.constant 0 : index
      %8 = arith.index_cast %5 : i32 to index
      %c0_6 = arith.constant 0 : index
      %9 = vector.load %arg1[%c0_5, %8, %c0_6] : memref<1x160x160xf32, #tpu.memory_space<vmem>>, vector<1x64x160xf32>
      %10 = vector.shape_cast %9 : vector<1x64x160xf32> to vector<64x160xf32>
      %cst_7 = arith.constant dense<0.000000e+00> : vector<64x64xf32>
      %11 = tpu.matmul %10, %7, %cst_7 {dimension_numbers = #tpu.dot_dimension_numbers<[1], [0], [0], [1], [0, 0, 1, 1], [], []>} : vector<64x160xf32>, vector<160x64xf32>, vector<64x64xf32> -> vector<64x64xf32>
      %12 = arith.addf %3, %11 : vector<64x64xf32>
      %c0_8 = arith.constant 0 : index
      %13 = arith.index_cast %5 : i32 to index
      %c0_9 = arith.constant 0 : index
      %14 = vector.load %arg2[%c0_8, %13, %c0_9] : memref<1x160x160xf32, #tpu.memory_space<vmem>>, vector<1x64x160xf32>
      %15 = vector.shape_cast %14 : vector<1x64x160xf32> to vector<64x160xf32>
      %cst_10 = arith.constant dense<0.000000e+00> : vector<64x64xf32>
      %16 = tpu.matmul %15, %7, %cst_10 {dimension_numbers = #tpu.dot_dimension_numbers<[1], [0], [0], [1], [0, 0, 1, 1], [], []>} : vector<64x160xf32>, vector<160x64xf32>, vector<64x64xf32> -> vector<64x64xf32>
      %17 = arith.addf %4, %16 : vector<64x64xf32>
      %c8_i32 = arith.constant 8 : i32
      %18 = arith.addi %2, %c8_i32 : i32
      %c1 = arith.constant 1 : index
      %c0_11 = arith.constant 0 : index
      %c0_12 = arith.constant 0 : index
      %19 = vector.load %arg3[%c1, %c0_11, %c0_12] : memref<5x160x64xf32, #tpu.memory_space<vmem>>, vector<1x160x64xf32>
      %20 = vector.shape_cast %19 : vector<1x160x64xf32> to vector<160x64xf32>
      %c0_13 = arith.constant 0 : index
      %21 = arith.index_cast %18 : i32 to index
      %c0_14 = arith.constant 0 : index
      %22 = vector.load %arg1[%c0_13, %21, %c0_14] : memref<1x160x160xf32, #tpu.memory_space<vmem>>, vector<1x64x160xf32>
      %23 = vector.shape_cast %22 : vector<1x64x160xf32> to vector<64x160xf32>
      %cst_15 = arith.constant dense<0.000000e+00> : vector<64x64xf32>
      %24 = tpu.matmul %23, %20, %cst_15 {dimension_numbers = #tpu.dot_dimension_numbers<[1], [0], [0], [1], [0, 0, 1, 1], [], []>} : vector<64x160xf32>, vector<160x64xf32>, vector<64x64xf32> -> vector<64x64xf32>
      %25 = arith.addf %12, %24 : vector<64x64xf32>
      %c0_16 = arith.constant 0 : index
      %26 = arith.index_cast %18 : i32 to index
      %c0_17 = arith.constant 0 : index
      %27 = vector.load %arg2[%c0_16, %26, %c0_17] : memref<1x160x160xf32, #tpu.memory_space<vmem>>, vector<1x64x160xf32>
      %28 = vector.shape_cast %27 : vector<1x64x160xf32> to vector<64x160xf32>
      %cst_18 = arith.constant dense<0.000000e+00> : vector<64x64xf32>
      %29 = tpu.matmul %28, %20, %cst_18 {dimension_numbers = #tpu.dot_dimension_numbers<[1], [0], [0], [1], [0, 0, 1, 1], [], []>} : vector<64x160xf32>, vector<160x64xf32>, vector<64x64xf32> -> vector<64x64xf32>
      %30 = arith.addf %17, %29 : vector<64x64xf32>
      %c16_i32 = arith.constant 16 : i32
      %31 = arith.addi %2, %c16_i32 : i32
      %c2 = arith.constant 2 : index
      %c0_19 = arith.constant 0 : index
      %c0_20 = arith.constant 0 : index
      %32 = vector.load %arg3[%c2, %c0_19, %c0_20] : memref<5x160x64xf32, #tpu.memory_space<vmem>>, vector<1x160x64xf32>
      %33 = vector.shape_cast %32 : vector<1x160x64xf32> to vector<160x64xf32>
      %c0_21 = arith.constant 0 : index
      %34 = arith.index_cast %31 : i32 to index
      %c0_22 = arith.constant 0 : index
      %35 = vector.load %arg1[%c0_21, %34, %c0_22] : memref<1x160x160xf32, #tpu.memory_space<vmem>>, vector<1x64x160xf32>
      %36 = vector.shape_cast %35 : vector<1x64x160xf32> to vector<64x160xf32>
      %cst_23 = arith.constant dense<0.000000e+00> : vector<64x64xf32>
      %37 = tpu.matmul %36, %33, %cst_23 {dimension_numbers = #tpu.dot_dimension_numbers<[1], [0], [0], [1], [0, 0, 1, 1], [], []>} : vector<64x160xf32>, vector<160x64xf32>, vector<64x64xf32> -> vector<64x64xf32>
      %38 = arith.addf %25, %37 : vector<64x64xf32>
      %c0_24 = arith.constant 0 : index
      %39 = arith.index_cast %31 : i32 to index
      %c0_25 = arith.constant 0 : index
      %40 = vector.load %arg2[%c0_24, %39, %c0_25] : memref<1x160x160xf32, #tpu.memory_space<vmem>>, vector<1x64x160xf32>
      %41 = vector.shape_cast %40 : vector<1x64x160xf32> to vector<64x160xf32>
      %cst_26 = arith.constant dense<0.000000e+00> : vector<64x64xf32>
      %42 = tpu.matmul %41, %33, %cst_26 {dimension_numbers = #tpu.dot_dimension_numbers<[1], [0], [0], [1], [0, 0, 1, 1], [], []>} : vector<64x160xf32>, vector<160x64xf32>, vector<64x64xf32> -> vector<64x64xf32>
      %43 = arith.addf %30, %42 : vector<64x64xf32>
      %c24_i32 = arith.constant 24 : i32
      %44 = arith.addi %2, %c24_i32 : i32
      %c3 = arith.constant 3 : index
      %c0_27 = arith.constant 0 : index
      %c0_28 = arith.constant 0 : index
      %45 = vector.load %arg3[%c3, %c0_27, %c0_28] : memref<5x160x64xf32, #tpu.memory_space<vmem>>, vector<1x160x64xf32>
      %46 = vector.shape_cast %45 : vector<1x160x64xf32> to vector<160x64xf32>
      %c0_29 = arith.constant 0 : index
      %47 = arith.index_cast %44 : i32 to index
      %c0_30 = arith.constant 0 : index
      %48 = vector.load %arg1[%c0_29, %47, %c0_30] : memref<1x160x160xf32, #tpu.memory_space<vmem>>, vector<1x64x160xf32>
      %49 = vector.shape_cast %48 : vector<1x64x160xf32> to vector<64x160xf32>
      %cst_31 = arith.constant dense<0.000000e+00> : vector<64x64xf32>
      %50 = tpu.matmul %49, %46, %cst_31 {dimension_numbers = #tpu.dot_dimension_numbers<[1], [0], [0], [1], [0, 0, 1, 1], [], []>} : vector<64x160xf32>, vector<160x64xf32>, vector<64x64xf32> -> vector<64x64xf32>
      %51 = arith.addf %38, %50 : vector<64x64xf32>
      %c0_32 = arith.constant 0 : index
      %52 = arith.index_cast %44 : i32 to index
      %c0_33 = arith.constant 0 : index
      %53 = vector.load %arg2[%c0_32, %52, %c0_33] : memref<1x160x160xf32, #tpu.memory_space<vmem>>, vector<1x64x160xf32>
      %54 = vector.shape_cast %53 : vector<1x64x160xf32> to vector<64x160xf32>
      %cst_34 = arith.constant dense<0.000000e+00> : vector<64x64xf32>
      %55 = tpu.matmul %54, %46, %cst_34 {dimension_numbers = #tpu.dot_dimension_numbers<[1], [0], [0], [1], [0, 0, 1, 1], [], []>} : vector<64x160xf32>, vector<160x64xf32>, vector<64x64xf32> -> vector<64x64xf32>
      %56 = arith.addf %43, %55 : vector<64x64xf32>
      %c32_i32 = arith.constant 32 : i32
      %57 = arith.addi %2, %c32_i32 : i32
      %c4 = arith.constant 4 : index
      %c0_35 = arith.constant 0 : index
      %c0_36 = arith.constant 0 : index
      %58 = vector.load %arg3[%c4, %c0_35, %c0_36] : memref<5x160x64xf32, #tpu.memory_space<vmem>>, vector<1x160x64xf32>
      %59 = vector.shape_cast %58 : vector<1x160x64xf32> to vector<160x64xf32>
      %c0_37 = arith.constant 0 : index
      %60 = arith.index_cast %57 : i32 to index
      %c0_38 = arith.constant 0 : index
      %61 = vector.load %arg1[%c0_37, %60, %c0_38] : memref<1x160x160xf32, #tpu.memory_space<vmem>>, vector<1x64x160xf32>
      %62 = vector.shape_cast %61 : vector<1x64x160xf32> to vector<64x160xf32>
      %cst_39 = arith.constant dense<0.000000e+00> : vector<64x64xf32>
      %63 = tpu.matmul %62, %59, %cst_39 {dimension_numbers = #tpu.dot_dimension_numbers<[1], [0], [0], [1], [0, 0, 1, 1], [], []>} : vector<64x160xf32>, vector<160x64xf32>, vector<64x64xf32> -> vector<64x64xf32>
      %64 = arith.addf %51, %63 : vector<64x64xf32>
      %c0_40 = arith.constant 0 : index
      %65 = arith.index_cast %57 : i32 to index
      %c0_41 = arith.constant 0 : index
      %66 = vector.load %arg2[%c0_40, %65, %c0_41] : memref<1x160x160xf32, #tpu.memory_space<vmem>>, vector<1x64x160xf32>
      %67 = vector.shape_cast %66 : vector<1x64x160xf32> to vector<64x160xf32>
      %cst_42 = arith.constant dense<0.000000e+00> : vector<64x64xf32>
      %68 = tpu.matmul %67, %59, %cst_42 {dimension_numbers = #tpu.dot_dimension_numbers<[1], [0], [0], [1], [0, 0, 1, 1], [], []>} : vector<64x160xf32>, vector<160x64xf32>, vector<64x64xf32> -> vector<64x64xf32>
      %69 = arith.addf %56, %68 : vector<64x64xf32>
      %70 = arith.maximumf %64, %69 : vector<64x64xf32>
      %71 = vector.extract_strided_slice %70 {offsets = [0, 0], sizes = [8, 64], strides = [1, 1]} : vector<64x64xf32> to vector<8x64xf32>
      %72 = vector.extract_strided_slice %70 {offsets = [8, 0], sizes = [8, 64], strides = [1, 1]} : vector<64x64xf32> to vector<8x64xf32>
      %73 = arith.maximumf %71, %72 : vector<8x64xf32>
      %74 = vector.extract_strided_slice %70 {offsets = [16, 0], sizes = [8, 64], strides = [1, 1]} : vector<64x64xf32> to vector<8x64xf32>
      %75 = vector.extract_strided_slice %70 {offsets = [24, 0], sizes = [8, 64], strides = [1, 1]} : vector<64x64xf32> to vector<8x64xf32>
      %76 = arith.maximumf %74, %75 : vector<8x64xf32>
      %77 = vector.extract_strided_slice %70 {offsets = [32, 0], sizes = [8, 64], strides = [1, 1]} : vector<64x64xf32> to vector<8x64xf32>
      %78 = vector.extract_strided_slice %70 {offsets = [40, 0], sizes = [8, 64], strides = [1, 1]} : vector<64x64xf32> to vector<8x64xf32>
      %79 = arith.maximumf %77, %78 : vector<8x64xf32>
      %80 = vector.extract_strided_slice %70 {offsets = [48, 0], sizes = [8, 64], strides = [1, 1]} : vector<64x64xf32> to vector<8x64xf32>
      %81 = vector.extract_strided_slice %70 {offsets = [56, 0], sizes = [8, 64], strides = [1, 1]} : vector<64x64xf32> to vector<8x64xf32>
      %82 = arith.maximumf %80, %81 : vector<8x64xf32>
      %83 = tpu.concatenate %73, %76, %79, %82 in 0 : vector<8x64xf32>, vector<8x64xf32>, vector<8x64xf32>, vector<8x64xf32> -> vector<32x64xf32>
      %c0_43 = arith.constant 0 : index
      %c0_44 = arith.constant 0 : index
      %84 = vector.load %arg4[%c0_43, %c0_44] : memref<1x64xf32, #tpu.memory_space<vmem>>, vector<1x64xf32>
      %85 = vector.broadcast %84 : vector<1x64xf32> to vector<32x64xf32>
      %86 = arith.addf %83, %85 : vector<32x64xf32>
      %c32_i32_45 = arith.constant 32 : i32
      %87 = arith.muli %arg6, %c32_i32_45 : i32
      %88 = tpu.assume_multiple %87, 32 : i32
      %c0_46 = arith.constant 0 : index
      %89 = arith.index_cast %88 : i32 to index
      %c0_47 = arith.constant 0 : index
      %90 = vector.load %arg5[%c0_46, %89, %c0_47] : memref<1x64x64xf32, #tpu.memory_space<vmem>>, vector<1x32x64xf32>
      %91 = vector.shape_cast %90 : vector<1x32x64xf32> to vector<32x64xf32>
      %92 = vector.shape_cast %86 : vector<32x64xf32> to vector<1x32x64xf32>
      tpu.vector_store %arg5[%c0_46, %89, %c0_47], %92 {strides = array<i32>} : memref<1x64x64xf32, #tpu.memory_space<vmem>>, vector<1x32x64xf32>,
    }
    %c2_i32_0 = arith.constant 2 : i32
    return
  }
  func.func @transform_0(%arg0: i32) -> (i32, i32, i32) {
    %c0_i32 = arith.constant 0 : i32
    %c0_i32_0 = arith.constant 0 : i32
    %c0_i32_1 = arith.constant 0 : i32
    return %arg0, %c0_i32, %c0_i32_0 : i32, i32, i32
  }
  func.func @transform_1(%arg0: i32) -> (i32, i32, i32) {
    %c0_i32 = arith.constant 0 : i32
    %c0_i32_0 = arith.constant 0 : i32
    %c0_i32_1 = arith.constant 0 : i32
    return %arg0, %c0_i32, %c0_i32_0 : i32, i32, i32
  }
  func.func @transform_2(%arg0: i32) -> (i32, i32, i32) {
    %c0_i32 = arith.constant 0 : i32
    %c0_i32_0 = arith.constant 0 : i32
    %c0_i32_1 = arith.constant 0 : i32
    %c0_i32_2 = arith.constant 0 : i32
    return %c0_i32, %c0_i32_0, %c0_i32_1 : i32, i32, i32
  }
  func.func @transform_3(%arg0: i32) -> (i32, i32) {
    %c0_i32 = arith.constant 0 : i32
    %c0_i32_0 = arith.constant 0 : i32
    %c0_i32_1 = arith.constant 0 : i32
    return %c0_i32, %c0_i32_0 : i32, i32
  }
  func.func @transform_4(%arg0: i32) -> (i32, i32, i32) {
    %c0_i32 = arith.constant 0 : i32
    %c0_i32_0 = arith.constant 0 : i32
    %c0_i32_1 = arith.constant 0 : i32
    return %arg0, %c0_i32, %c0_i32_0 : i32, i32, i32
  }
}

module attributes {stable_mosaic.version = 11 : i64} {
  func.func @kernel(%arg0: i32, %arg1: memref<1x48x320xf32, #tpu.memory_space<vmem>>, %arg2: memref<1x48x320xf32, #tpu.memory_space<vmem>>, %arg3: memref<5x320x128xf32, #tpu.memory_space<vmem>>, %arg4: memref<1x128xf32, #tpu.memory_space<vmem>>, %arg5: memref<1x16x128xf32, #tpu.memory_space<vmem>>) attributes {dimension_semantics = [#tpu.dimension_semantics<parallel>], iteration_bounds = array<i64: 2>, scalar_prefetch = 0 : i64, scratch_operands = 0 : i64, tpu.core_type = #tpu.core_type<tc>, window_params = [{transform_indices = @transform_0, window_bounds = array<i64: 1, 48, 320>}, {transform_indices = @transform_1, window_bounds = array<i64: 1, 48, 320>}, {pipeline_mode = #tpu.pipeline_mode<synchronous>, transform_indices = @transform_2, window_bounds = array<i64: 5, 320, 128>}, {pipeline_mode = #tpu.pipeline_mode<synchronous>, transform_indices = @transform_3, window_bounds = array<i64: 1, 128>}, {transform_indices = @transform_4, window_bounds = array<i64: 1, 16, 128>}]} {
    %cst = arith.constant 0.000000e+00 : f32
    %0 = vector.broadcast %cst : f32 to vector<32x128xf32>
    %cst_0 = arith.constant 0.000000e+00 : f32
    %1 = vector.broadcast %cst_0 : f32 to vector<32x128xf32>
    %c0 = arith.constant 0 : index
    %c0_1 = arith.constant 0 : index
    %c0_2 = arith.constant 0 : index
    %2 = vector.load %arg3[%c0, %c0_1, %c0_2] : memref<5x320x128xf32, #tpu.memory_space<vmem>>, vector<1x320x128xf32>
    %3 = vector.shape_cast %2 : vector<1x320x128xf32> to vector<320x128xf32>
    %c0_3 = arith.constant 0 : index
    %c0_4 = arith.constant 0 : index
    %c0_5 = arith.constant 0 : index
    %4 = vector.load %arg1[%c0_3, %c0_4, %c0_5] : memref<1x48x320xf32, #tpu.memory_space<vmem>>, vector<1x32x320xf32>
    %5 = vector.shape_cast %4 : vector<1x32x320xf32> to vector<32x320xf32>
    %cst_6 = arith.constant dense<0.000000e+00> : vector<32x128xf32>
    %6 = tpu.matmul %5, %3, %cst_6 {dimension_numbers = #tpu.dot_dimension_numbers<[1], [0], [0], [1], [0, 0, 1, 1], [], []>} : vector<32x320xf32>, vector<320x128xf32>, vector<32x128xf32> -> vector<32x128xf32>
    %7 = arith.addf %0, %6 : vector<32x128xf32>
    %c0_7 = arith.constant 0 : index
    %c0_8 = arith.constant 0 : index
    %c0_9 = arith.constant 0 : index
    %8 = vector.load %arg2[%c0_7, %c0_8, %c0_9] : memref<1x48x320xf32, #tpu.memory_space<vmem>>, vector<1x32x320xf32>
    %9 = vector.shape_cast %8 : vector<1x32x320xf32> to vector<32x320xf32>
    %cst_10 = arith.constant dense<0.000000e+00> : vector<32x128xf32>
    %10 = tpu.matmul %9, %3, %cst_10 {dimension_numbers = #tpu.dot_dimension_numbers<[1], [0], [0], [1], [0, 0, 1, 1], [], []>} : vector<32x320xf32>, vector<320x128xf32>, vector<32x128xf32> -> vector<32x128xf32>
    %11 = arith.addf %1, %10 : vector<32x128xf32>
    %c1 = arith.constant 1 : index
    %c0_11 = arith.constant 0 : index
    %c0_12 = arith.constant 0 : index
    %12 = vector.load %arg3[%c1, %c0_11, %c0_12] : memref<5x320x128xf32, #tpu.memory_space<vmem>>, vector<1x320x128xf32>
    %13 = vector.shape_cast %12 : vector<1x320x128xf32> to vector<320x128xf32>
    %c0_13 = arith.constant 0 : index
    %c4 = arith.constant 4 : index
    %c0_14 = arith.constant 0 : index
    %14 = vector.load %arg1[%c0_13, %c4, %c0_14] : memref<1x48x320xf32, #tpu.memory_space<vmem>>, vector<1x32x320xf32>
    %15 = vector.shape_cast %14 : vector<1x32x320xf32> to vector<32x320xf32>
    %cst_15 = arith.constant dense<0.000000e+00> : vector<32x128xf32>
    %16 = tpu.matmul %15, %13, %cst_15 {dimension_numbers = #tpu.dot_dimension_numbers<[1], [0], [0], [1], [0, 0, 1, 1], [], []>} : vector<32x320xf32>, vector<320x128xf32>, vector<32x128xf32> -> vector<32x128xf32>
    %17 = arith.addf %7, %16 : vector<32x128xf32>
    %c0_16 = arith.constant 0 : index
    %c4_17 = arith.constant 4 : index
    %c0_18 = arith.constant 0 : index
    %18 = vector.load %arg2[%c0_16, %c4_17, %c0_18] : memref<1x48x320xf32, #tpu.memory_space<vmem>>, vector<1x32x320xf32>
    %19 = vector.shape_cast %18 : vector<1x32x320xf32> to vector<32x320xf32>
    %cst_19 = arith.constant dense<0.000000e+00> : vector<32x128xf32>
    %20 = tpu.matmul %19, %13, %cst_19 {dimension_numbers = #tpu.dot_dimension_numbers<[1], [0], [0], [1], [0, 0, 1, 1], [], []>} : vector<32x320xf32>, vector<320x128xf32>, vector<32x128xf32> -> vector<32x128xf32>
    %21 = arith.addf %11, %20 : vector<32x128xf32>
    %c2 = arith.constant 2 : index
    %c0_20 = arith.constant 0 : index
    %c0_21 = arith.constant 0 : index
    %22 = vector.load %arg3[%c2, %c0_20, %c0_21] : memref<5x320x128xf32, #tpu.memory_space<vmem>>, vector<1x320x128xf32>
    %23 = vector.shape_cast %22 : vector<1x320x128xf32> to vector<320x128xf32>
    %c0_22 = arith.constant 0 : index
    %c8 = arith.constant 8 : index
    %c0_23 = arith.constant 0 : index
    %24 = vector.load %arg1[%c0_22, %c8, %c0_23] : memref<1x48x320xf32, #tpu.memory_space<vmem>>, vector<1x32x320xf32>
    %25 = vector.shape_cast %24 : vector<1x32x320xf32> to vector<32x320xf32>
    %cst_24 = arith.constant dense<0.000000e+00> : vector<32x128xf32>
    %26 = tpu.matmul %25, %23, %cst_24 {dimension_numbers = #tpu.dot_dimension_numbers<[1], [0], [0], [1], [0, 0, 1, 1], [], []>} : vector<32x320xf32>, vector<320x128xf32>, vector<32x128xf32> -> vector<32x128xf32>
    %27 = arith.addf %17, %26 : vector<32x128xf32>
    %c0_25 = arith.constant 0 : index
    %c8_26 = arith.constant 8 : index
    %c0_27 = arith.constant 0 : index
    %28 = vector.load %arg2[%c0_25, %c8_26, %c0_27] : memref<1x48x320xf32, #tpu.memory_space<vmem>>, vector<1x32x320xf32>
    %29 = vector.shape_cast %28 : vector<1x32x320xf32> to vector<32x320xf32>
    %cst_28 = arith.constant dense<0.000000e+00> : vector<32x128xf32>
    %30 = tpu.matmul %29, %23, %cst_28 {dimension_numbers = #tpu.dot_dimension_numbers<[1], [0], [0], [1], [0, 0, 1, 1], [], []>} : vector<32x320xf32>, vector<320x128xf32>, vector<32x128xf32> -> vector<32x128xf32>
    %31 = arith.addf %21, %30 : vector<32x128xf32>
    %c3 = arith.constant 3 : index
    %c0_29 = arith.constant 0 : index
    %c0_30 = arith.constant 0 : index
    %32 = vector.load %arg3[%c3, %c0_29, %c0_30] : memref<5x320x128xf32, #tpu.memory_space<vmem>>, vector<1x320x128xf32>
    %33 = vector.shape_cast %32 : vector<1x320x128xf32> to vector<320x128xf32>
    %c0_31 = arith.constant 0 : index
    %c12 = arith.constant 12 : index
    %c0_32 = arith.constant 0 : index
    %34 = vector.load %arg1[%c0_31, %c12, %c0_32] : memref<1x48x320xf32, #tpu.memory_space<vmem>>, vector<1x32x320xf32>
    %35 = vector.shape_cast %34 : vector<1x32x320xf32> to vector<32x320xf32>
    %cst_33 = arith.constant dense<0.000000e+00> : vector<32x128xf32>
    %36 = tpu.matmul %35, %33, %cst_33 {dimension_numbers = #tpu.dot_dimension_numbers<[1], [0], [0], [1], [0, 0, 1, 1], [], []>} : vector<32x320xf32>, vector<320x128xf32>, vector<32x128xf32> -> vector<32x128xf32>
    %37 = arith.addf %27, %36 : vector<32x128xf32>
    %c0_34 = arith.constant 0 : index
    %c12_35 = arith.constant 12 : index
    %c0_36 = arith.constant 0 : index
    %38 = vector.load %arg2[%c0_34, %c12_35, %c0_36] : memref<1x48x320xf32, #tpu.memory_space<vmem>>, vector<1x32x320xf32>
    %39 = vector.shape_cast %38 : vector<1x32x320xf32> to vector<32x320xf32>
    %cst_37 = arith.constant dense<0.000000e+00> : vector<32x128xf32>
    %40 = tpu.matmul %39, %33, %cst_37 {dimension_numbers = #tpu.dot_dimension_numbers<[1], [0], [0], [1], [0, 0, 1, 1], [], []>} : vector<32x320xf32>, vector<320x128xf32>, vector<32x128xf32> -> vector<32x128xf32>
    %41 = arith.addf %31, %40 : vector<32x128xf32>
    %c4_38 = arith.constant 4 : index
    %c0_39 = arith.constant 0 : index
    %c0_40 = arith.constant 0 : index
    %42 = vector.load %arg3[%c4_38, %c0_39, %c0_40] : memref<5x320x128xf32, #tpu.memory_space<vmem>>, vector<1x320x128xf32>
    %43 = vector.shape_cast %42 : vector<1x320x128xf32> to vector<320x128xf32>
    %c0_41 = arith.constant 0 : index
    %c16 = arith.constant 16 : index
    %c0_42 = arith.constant 0 : index
    %44 = vector.load %arg1[%c0_41, %c16, %c0_42] : memref<1x48x320xf32, #tpu.memory_space<vmem>>, vector<1x32x320xf32>
    %45 = vector.shape_cast %44 : vector<1x32x320xf32> to vector<32x320xf32>
    %cst_43 = arith.constant dense<0.000000e+00> : vector<32x128xf32>
    %46 = tpu.matmul %45, %43, %cst_43 {dimension_numbers = #tpu.dot_dimension_numbers<[1], [0], [0], [1], [0, 0, 1, 1], [], []>} : vector<32x320xf32>, vector<320x128xf32>, vector<32x128xf32> -> vector<32x128xf32>
    %47 = arith.addf %37, %46 : vector<32x128xf32>
    %c0_44 = arith.constant 0 : index
    %c16_45 = arith.constant 16 : index
    %c0_46 = arith.constant 0 : index
    %48 = vector.load %arg2[%c0_44, %c16_45, %c0_46] : memref<1x48x320xf32, #tpu.memory_space<vmem>>, vector<1x32x320xf32>
    %49 = vector.shape_cast %48 : vector<1x32x320xf32> to vector<32x320xf32>
    %cst_47 = arith.constant dense<0.000000e+00> : vector<32x128xf32>
    %50 = tpu.matmul %49, %43, %cst_47 {dimension_numbers = #tpu.dot_dimension_numbers<[1], [0], [0], [1], [0, 0, 1, 1], [], []>} : vector<32x320xf32>, vector<320x128xf32>, vector<32x128xf32> -> vector<32x128xf32>
    %51 = arith.addf %41, %50 : vector<32x128xf32>
    %52 = arith.maximumf %47, %51 : vector<32x128xf32>
    %53 = vector.extract_strided_slice %52 {offsets = [0, 0], sizes = [4, 128], strides = [1, 1]} : vector<32x128xf32> to vector<4x128xf32>
    %54 = vector.extract_strided_slice %52 {offsets = [4, 0], sizes = [4, 128], strides = [1, 1]} : vector<32x128xf32> to vector<4x128xf32>
    %55 = arith.maximumf %53, %54 : vector<4x128xf32>
    %56 = vector.extract_strided_slice %52 {offsets = [8, 0], sizes = [4, 128], strides = [1, 1]} : vector<32x128xf32> to vector<4x128xf32>
    %57 = vector.extract_strided_slice %52 {offsets = [12, 0], sizes = [4, 128], strides = [1, 1]} : vector<32x128xf32> to vector<4x128xf32>
    %58 = arith.maximumf %56, %57 : vector<4x128xf32>
    %59 = vector.extract_strided_slice %52 {offsets = [16, 0], sizes = [4, 128], strides = [1, 1]} : vector<32x128xf32> to vector<4x128xf32>
    %60 = vector.extract_strided_slice %52 {offsets = [20, 0], sizes = [4, 128], strides = [1, 1]} : vector<32x128xf32> to vector<4x128xf32>
    %61 = arith.maximumf %59, %60 : vector<4x128xf32>
    %62 = vector.extract_strided_slice %52 {offsets = [24, 0], sizes = [4, 128], strides = [1, 1]} : vector<32x128xf32> to vector<4x128xf32>
    %63 = vector.extract_strided_slice %52 {offsets = [28, 0], sizes = [4, 128], strides = [1, 1]} : vector<32x128xf32> to vector<4x128xf32>
    %64 = arith.maximumf %62, %63 : vector<4x128xf32>
    %65 = tpu.concatenate %55, %58, %61, %64 in 0 : vector<4x128xf32>, vector<4x128xf32>, vector<4x128xf32>, vector<4x128xf32> -> vector<16x128xf32>
    %c0_48 = arith.constant 0 : index
    %c0_49 = arith.constant 0 : index
    %66 = vector.load %arg4[%c0_48, %c0_49] : memref<1x128xf32, #tpu.memory_space<vmem>>, vector<1x128xf32>
    %67 = vector.broadcast %66 : vector<1x128xf32> to vector<16x128xf32>
    %68 = arith.addf %65, %67 : vector<16x128xf32>
    %c0_50 = arith.constant 0 : index
    %c0_51 = arith.constant 0 : index
    %c0_52 = arith.constant 0 : index
    %69 = vector.load %arg5[%c0_50, %c0_51, %c0_52] : memref<1x16x128xf32, #tpu.memory_space<vmem>>, vector<1x16x128xf32>
    %70 = vector.shape_cast %69 : vector<1x16x128xf32> to vector<16x128xf32>
    %71 = vector.shape_cast %68 : vector<16x128xf32> to vector<1x16x128xf32>
    tpu.vector_store %arg5[%c0_50, %c0_51, %c0_52], %71 {strides = array<i32>} : memref<1x16x128xf32, #tpu.memory_space<vmem>>, vector<1x16x128xf32>,
    return
  }
  func.func @transform_0(%arg0: i32) -> (i32, i32, i32) {
    %c0_i32 = arith.constant 0 : i32
    %c0_i32_0 = arith.constant 0 : i32
    %c0_i32_1 = arith.constant 0 : i32
    return %arg0, %c0_i32, %c0_i32_0 : i32, i32, i32
  }
  func.func @transform_1(%arg0: i32) -> (i32, i32, i32) {
    %c0_i32 = arith.constant 0 : i32
    %c0_i32_0 = arith.constant 0 : i32
    %c0_i32_1 = arith.constant 0 : i32
    return %arg0, %c0_i32, %c0_i32_0 : i32, i32, i32
  }
  func.func @transform_2(%arg0: i32) -> (i32, i32, i32) {
    %c0_i32 = arith.constant 0 : i32
    %c0_i32_0 = arith.constant 0 : i32
    %c0_i32_1 = arith.constant 0 : i32
    %c0_i32_2 = arith.constant 0 : i32
    return %c0_i32, %c0_i32_0, %c0_i32_1 : i32, i32, i32
  }
  func.func @transform_3(%arg0: i32) -> (i32, i32) {
    %c0_i32 = arith.constant 0 : i32
    %c0_i32_0 = arith.constant 0 : i32
    %c0_i32_1 = arith.constant 0 : i32
    return %c0_i32, %c0_i32_0 : i32, i32
  }
  func.func @transform_4(%arg0: i32) -> (i32, i32, i32) {
    %c0_i32 = arith.constant 0 : i32
    %c0_i32_0 = arith.constant 0 : i32
    %c0_i32_1 = arith.constant 0 : i32
    return %arg0, %c0_i32, %c0_i32_0 : i32, i32, i32
  }
}

module attributes {stable_mosaic.version = 11 : i64} {
  func.func @_head_kernel(%arg0: memref<2x2048xf32, #tpu.memory_space<vmem>>, %arg1: memref<2048x10xf32, #tpu.memory_space<vmem>>, %arg2: memref<1x10xf32, #tpu.memory_space<vmem>>, %arg3: memref<2x10xf32, #tpu.memory_space<vmem>>) attributes {dimension_semantics = [], scalar_prefetch = 0 : i64, scratch_operands = 0 : i64, tpu.core_type = #tpu.core_type<tc>} {
    %c0 = arith.constant 0 : index
    %c0_0 = arith.constant 0 : index
    %0 = vector.load %arg0[%c0, %c0_0] : memref<2x2048xf32, #tpu.memory_space<vmem>>, vector<2x2048xf32>
    %c0_1 = arith.constant 0 : index
    %c0_2 = arith.constant 0 : index
    %1 = vector.load %arg1[%c0_1, %c0_2] : memref<2048x10xf32, #tpu.memory_space<vmem>>, vector<2048x10xf32>
    %cst = arith.constant dense<0.000000e+00> : vector<2x10xf32>
    %2 = tpu.matmul %0, %1, %cst {dimension_numbers = #tpu.dot_dimension_numbers<[1], [0], [0], [1], [0, 0, 1, 1], [], []>} : vector<2x2048xf32>, vector<2048x10xf32>, vector<2x10xf32> -> vector<2x10xf32>
    %c0_3 = arith.constant 0 : index
    %c0_4 = arith.constant 0 : index
    %3 = vector.load %arg2[%c0_3, %c0_4] : memref<1x10xf32, #tpu.memory_space<vmem>>, vector<1x10xf32>
    %4 = vector.broadcast %3 : vector<1x10xf32> to vector<2x10xf32>
    %5 = arith.addf %2, %4 : vector<2x10xf32>
    %c0_5 = arith.constant 0 : index
    %c0_6 = arith.constant 0 : index
    %6 = vector.load %arg3[%c0_5, %c0_6] : memref<2x10xf32, #tpu.memory_space<vmem>>, vector<2x10xf32>
    tpu.vector_store %arg3[%c0_5, %c0_6], %5 {strides = array<i32>} : memref<2x10xf32, #tpu.memory_space<vmem>>, vector<2x10xf32>,
    return
  }
}

</mosaic_0001>

<llo_original>
// kernel: neural_network_forward.4
$region0: #{neural_network_forward.4}
  #allocation0 [shape = 'u32[]', space=smem, size = 0x4, offset = 0x4, fixed_abs, tag = 'smem constant byte address 0x4 - core index']
  #allocation1 [shape = 'u32[144,128]{1,0:T(1,128)}', space=vmem, size = 0x12000, scoped, tag = 'internal scratch']
  %s0 = inlined_call_operand.vmem [shape: f32[2,512,200], index: 0, kind: input, shape index: {}]
  %s1 = inlined_call_operand.vmem [shape: f32[2,512,200], index: 1, kind: input, shape index: {}]
  %s2 = inlined_call_operand.vmem [shape: f32[1,200,32], index: 2, kind: input, shape index: {}]
  %s3 = inlined_call_operand.vmem [shape: f32[1,32], index: 3, kind: input, shape index: {}]
  %s4 = inlined_call_operand.vmem [shape: f32[2,256,32], index: 4, kind: output, shape index: {}]
  %s5 = sld [smem:[#allocation0]]
  $region56: #{neural_network_forward.4} parent=0
    _
  %s7 = ssub.s32 1, %s5
  %s8 = scalar_select 0, %s7, %s5
  loop: start=0, step=1, limit=4
  $region2: #{neural_network_forward.4} parent=0 // loop_pre_header
    _
  $region3: #{neural_network_forward.4} parent=0 // loop_header
    %s10 = sphi 0, %s14
    %p11 = scmp.ge.s32.totalorder %s10, 4
    %s20 = sphi 0, %s22
    %s23 = sphi 0, %s20
    %s24 = sphi 0, %s23
    %s40 = sphi 0, %s24
    %s46 = sphi 0, %s48
    %s49 = sphi 0, %s46
    %s50 = sphi 0, %s49
    %s66 = sphi 0, %s50
    %s70 = sphi 0, %s70
    %s72 = sphi 0, %s70
    %s73 = sphi 0, %s72
    %s87 = sphi 0, %s73
    %s91 = sphi 0, %s91
    %s93 = sphi 0, %s91
    %s94 = sphi 0, %s93
    %s108 = sphi 0, %s94
    %s114 = sphi 0, %s116
    %s117 = sphi 0, %s114
    %s118 = sphi 0, %s117
    %s134 = sphi 0, %s118
  $region4: #{neural_network_forward.4} parent=0 // loop_header_branch
    %13 = sbr.rel (%p11) target = $region8
  $region5: #{neural_network_forward.4} parent=0 // loop_body
    %s15 = ssub.s32 %s10, 1
    %s16 = ssub.s32 %s10, 2
    %s17 = sadd.s32 %s10, 1
    %s18 = ssub.s32 %s10, %s17
    %p19 = scmp.eq.s32.totalorder %s18, 0
    %s21 = sadd.s32 %s20, 1
    %s22 = scalar_select %p19, %s20, %s21
    %p25 = pneg %p19
    %p26 = scmp.eq.s32.totalorder %s10, 1
    %p27 = por %p25, %p26
    %p28 = scmp.ne.s32.totalorder %s20, %s23
    %p29 = scmp.eq.s32.totalorder %s10, 0
    %p30 = por %p28, %p29
    %p31 = scmp.ne.s32.totalorder %s20, %s23
    %p32 = scmp.eq.s32.totalorder %s15, 1
    %p33 = por %p31, %p32
    %p34 = scmp.ne.s32.totalorder %s23, %s24
    %p35 = scmp.eq.s32.totalorder %s15, 0
    %p36 = por %p34, %p35
    %p37 = scmp.ne.s32.totalorder %s23, %s24
    %p38 = scmp.eq.s32.totalorder %s16, 1
    %p39 = por %p37, %p38
    %p41 = scmp.ne.s32.totalorder %s24, %s40
    %p42 = scmp.eq.s32.totalorder %s16, 0
    %p43 = por %p41, %p42
    %s44 = ssub.s32 %s10, %s17
    %p45 = scmp.eq.s32.totalorder %s44, 0
    %s47 = sadd.s32 %s46, 1
    %s48 = scalar_select %p45, %s46, %s47
    %p51 = pneg %p45
    %p52 = scmp.eq.s32.totalorder %s10, 1
    %p53 = por %p51, %p52
    %p54 = scmp.ne.s32.totalorder %s46, %s49
    %p55 = scmp.eq.s32.totalorder %s10, 0
    %p56 = por %p54, %p55
    %p57 = scmp.ne.s32.totalorder %s46, %s49
    %p58 = scmp.eq.s32.totalorder %s15, 1
    %p59 = por %p57, %p58
    %p60 = scmp.ne.s32.totalorder %s49, %s50
    %p61 = scmp.eq.s32.totalorder %s15, 0
    %p62 = por %p60, %p61
    %p63 = scmp.ne.s32.totalorder %s49, %s50
    %p64 = scmp.eq.s32.totalorder %s16, 1
    %p65 = por %p63, %p64
    %p67 = scmp.ne.s32.totalorder %s50, %s66
    %p68 = scmp.eq.s32.totalorder %s16, 0
    %p69 = por %p67, %p68
    %s71 = sadd.s32 %s70, 1
    %p74 = scmp.eq.s32.totalorder %s10, 1
    %p75 = scmp.ne.s32.totalorder %s70, %s72
    %p76 = scmp.eq.s32.totalorder %s10, 0
    %p77 = por %p75, %p76
    %p78 = scmp.ne.s32.totalorder %s70, %s72
    %p79 = scmp.eq.s32.totalorder %s15, 1
    %p80 = por %p78, %p79
    %p81 = scmp.ne.s32.totalorder %s72, %s73
    %p82 = scmp.eq.s32.totalorder %s15, 0
    %p83 = por %p81, %p82
    %p84 = scmp.ne.s32.totalorder %s72, %s73
    %p85 = scmp.eq.s32.totalorder %s16, 1
    %p86 = por %p84, %p85
    %p88 = scmp.ne.s32.totalorder %s73, %s87
    %p89 = scmp.eq.s32.totalorder %s16, 0
    %p90 = por %p88, %p89
    %s92 = sadd.s32 %s91, 1
    %p95 = scmp.eq.s32.totalorder %s10, 1
    %p96 = scmp.ne.s32.totalorder %s91, %s93
    %p97 = scmp.eq.s32.totalorder %s10, 0
    %p98 = por %p96, %p97
    %p99 = scmp.ne.s32.totalorder %s91, %s93
    %p100 = scmp.eq.s32.totalorder %s15, 1
    %p101 = por %p99, %p100
    %p102 = scmp.ne.s32.totalorder %s93, %s94
    %p103 = scmp.eq.s32.totalorder %s15, 0
    %p104 = por %p102, %p103
    %p105 = scmp.ne.s32.totalorder %s93, %s94
    %p106 = scmp.eq.s32.totalorder %s16, 1
    %p107 = por %p105, %p106
    %p109 = scmp.ne.s32.totalorder %s94, %s108
    %p110 = scmp.eq.s32.totalorder %s16, 0
    %p111 = por %p109, %p110
    %s112 = ssub.s32 %s10, %s17
    %p113 = scmp.eq.s32.totalorder %s112, 0
    %s115 = sadd.s32 %s114, 1
    %s116 = scalar_select %p113, %s114, %s115
    %p119 = pneg %p113
    %p120 = scmp.eq.s32.totalorder %s10, 1
    %p121 = por %p119, %p120
    %p122 = scmp.ne.s32.totalorder %s114, %s117
    %p123 = scmp.eq.s32.totalorder %s10, 0
    %p124 = por %p122, %p123
    %p125 = scmp.ne.s32.totalorder %s114, %s117
    %p126 = scmp.eq.s32.totalorder %s15, 1
    %p127 = por %p125, %p126
    %p128 = scmp.ne.s32.totalorder %s117, %s118
    %p129 = scmp.eq.s32.totalorder %s15, 0
    %p130 = por %p128, %p129
    %p131 = scmp.ne.s32.totalorder %s117, %s118
    %p132 = scmp.eq.s32.totalorder %s16, 1
    %p133 = por %p131, %p132
    %p135 = scmp.ne.s32.totalorder %s118, %s134
    %p136 = scmp.eq.s32.totalorder %s16, 0
    %p137 = por %p135, %p136
    %p138 = scmp.le.s32.totalorder 1, %s10
    %p139 = scmp.lt.s32.totalorder %s10, 3
    %p140 = pnand %p138, %p139
    %p141 = pneg %p140
    // Predicated region
    $region9: #{neural_network_forward.4} parent=5 // pred_check
      _
    $region10: #{neural_network_forward.4} parent=5 // pred_check_branch
      %143 = sbr.rel (%p140) target = $region12
    $region11: #{neural_network_forward.4} parent=5 // pred_region
      %s144 = ssub.s32 %s10, 1
      // Predicated region
      $region13: #{neural_network_forward.4} parent=11 // pred_check
        %p145 = pneg %p83
      $region14: #{neural_network_forward.4} parent=11 // pred_check_branch
        %147 = sbr.rel (%p145) target = $region16
      $region15: #{neural_network_forward.4} parent=11 // pred_region
        _
      $region16: #{neural_network_forward.4} parent=11 // pred_fallthru
        _
      // Predicated region
      $region17: #{neural_network_forward.4} parent=11 // pred_check
        %p148 = pneg %p104
      $region18: #{neural_network_forward.4} parent=11 // pred_check_branch
        %150 = sbr.rel (%p148) target = $region20
      $region19: #{neural_network_forward.4} parent=11 // pred_region
        _
      $region20: #{neural_network_forward.4} parent=11 // pred_fallthru
        _
    $region12: #{neural_network_forward.4} parent=5 // pred_fallthru
      _
    %p151 = scmp.lt.s32.totalorder %s10, 2
    // Predicated region
    $region21: #{neural_network_forward.4} parent=5 // pred_check
      %p152 = pneg %p151
    $region22: #{neural_network_forward.4} parent=5 // pred_check_branch
      %154 = sbr.rel (%p152) target = $region24
    $region23: #{neural_network_forward.4} parent=5 // pred_region
      // Predicated region
      $region25: #{neural_network_forward.4} parent=23 // pred_check
        %p155 = pneg %p30
      $region26: #{neural_network_forward.4} parent=23 // pred_check_branch
        %157 = sbr.rel (%p155) target = $region28
      $region27: #{neural_network_forward.4} parent=23 // pred_region
        %p158 = scmp.lt.s32.totalorder %s10, 1
        %s159 = scalar_select %p158, %s10, 1
        %s160 = smul.addr %s159, 128
        %s161 = smul.addr %s160, 8
        %s162 = scalar_lea.vmem %s0, %s161
      $region28: #{neural_network_forward.4} parent=23 // pred_fallthru
        _
      // Predicated region
      $region29: #{neural_network_forward.4} parent=23 // pred_check
        %p163 = pneg %p56
      $region30: #{neural_network_forward.4} parent=23 // pred_check_branch
        %165 = sbr.rel (%p163) target = $region32
      $region31: #{neural_network_forward.4} parent=23 // pred_region
        %p166 = scmp.lt.s32.totalorder %s10, 1
        %s167 = scalar_select %p166, %s10, 1
        %s168 = smul.addr %s167, 128
        %s169 = smul.addr %s168, 8
        %s170 = scalar_lea.vmem %s1, %s169
      $region32: #{neural_network_forward.4} parent=23 // pred_fallthru
        _
    $region24: #{neural_network_forward.4} parent=5 // pred_fallthru
      _
    %p171 = scmp.le.s32.totalorder 1, %s10
    %p172 = scmp.lt.s32.totalorder %s10, 3
    %p173 = pnand %p171, %p172
    %p174 = pneg %p173
    // Predicated region
    $region33: #{neural_network_forward.4} parent=5 // pred_check
      _
    $region34: #{neural_network_forward.4} parent=5 // pred_check_branch
      %176 = sbr.rel (%p173) target = $region36
    $region35: #{neural_network_forward.4} parent=5 // pred_region
      %s177 = ssub.s32 %s10, 1
      %p178 = scmp.lt.s32.totalorder %s15, 1
      %s179 = scalar_select %p178, %s15, 1
      %s180 = smul.addr %s179, 128
      %s181 = smul.addr %s180, 8
      %s182 = scalar_lea.vmem %s0, %s181
      %p183 = pneg %p36
      %p184 = pneg %p33
      %p185 = scmp.lt.s32.totalorder %s15, 1
      %s186 = scalar_select %p185, %s15, 1
      %s187 = smul.addr %s186, 128
      %s188 = smul.addr %s187, 8
      %s189 = scalar_lea.vmem %s1, %s188
      %p190 = pneg %p62
      %p191 = pneg %p59
      %p192 = pneg %p83
      %p193 = pneg %p80
      %p194 = pneg %p104
      %p195 = pneg %p101
      %p196 = pneg %p130
      %p197 = pneg %p127
      %p198 = scmp.lt.s32.totalorder %s15, 1
      %s199 = scalar_select %p198, %s15, 1
      %s200 = smul.addr %s199, 32
      %s201 = smul.addr %s200, 8
      %s202 = scalar_lea.vmem %s4, %s201
      %p203 = scmp.lt.s32.totalorder %s15, 1
      %s204 = scalar_select %p203, %s15, 1
      %s205 = smul.addr %s204, 128
      %s206 = smul.addr %s205, 8
      %s207 = scalar_lea.vmem %s0, %s206
      %p208 = scmp.lt.s32.totalorder %s15, 1
      %s209 = scalar_select %p208, %s15, 1
      %s210 = smul.addr %s209, 128
      %s211 = smul.addr %s210, 8
      %s212 = scalar_lea.vmem %s1, %s211
      %p213 = scmp.lt.s32.totalorder %s15, 1
      %s214 = scalar_select %p213, %s15, 1
      %s215 = smul.addr %s214, 32
      %s216 = smul.addr %s215, 8
      %s217 = scalar_lea.vmem %s4, %s216
      loop: start=0, step=1, limit=4
      $region37: #{neural_network_forward.4} parent=35 // loop_pre_header
        _
      $region38: #{neural_network_forward.4} parent=35 // loop_header
        %s219 = sphi 0, %s223
        %p220 = scmp.ge.s32.totalorder %s219, 4
      $region39: #{neural_network_forward.4} parent=35 // loop_header_branch
        %222 = sbr.rel (%p220) target = $region43
      $region40: #{neural_network_forward.4} parent=35 // loop_body
        %s224 = smul.u32 %s219, 128
        %v225 = vld [vmem:[%s2] sm:$0xff]
        %v226 = vld [vmem:[%s2 + $0x8] sm:$0xff]
        %v227 = vld [vmem:[%s2 + $0x10] sm:$0xff]
        %v228 = vld [vmem:[%s2 + $0x18] sm:$0xff]
        %v229 = vld [vmem:[%s2 + $0x20] sm:$0xff]
        %v230 = vld [vmem:[%s2 + $0x28] sm:$0xff]
        %v231 = vld [vmem:[%s2 + $0x30] sm:$0xff]
        %v232 = vld [vmem:[%s2 + $0x38] sm:$0xff]
        %v233 = vld [vmem:[%s2 + $0x40] sm:$0xff]
        %v234 = vld [vmem:[%s2 + $0x48] sm:$0xff]
        %v235 = vld [vmem:[%s2 + $0x50] sm:$0xff]
        %v236 = vld [vmem:[%s2 + $0x58] sm:$0xff]
        %v237 = vld [vmem:[%s2 + $0x60] sm:$0xff]
        %v238 = vld [vmem:[%s2 + $0x68] sm:$0xff]
        %v239 = vld [vmem:[%s2 + $0x70] sm:$0xff]
        %v240 = vld [vmem:[%s2 + $0x78] sm:$0xff]
        %v241 = vld [vmem:[%s2 + $0x80] sm:$0xff]
        %v242 = vld [vmem:[%s2 + $0x88] sm:$0xff]
        %v243 = vld [vmem:[%s2 + $0x90] sm:$0xff]
        %v244 = vld [vmem:[%s2 + $0x98] sm:$0xff]
        %v245 = vld [vmem:[%s2 + $0xa0] sm:$0xff]
        %v246 = vld [vmem:[%s2 + $0xa8] sm:$0xff]
        %v247 = vld [vmem:[%s2 + $0xb0] sm:$0xff]
        %v248 = vld [vmem:[%s2 + $0xb8] sm:$0xff]
        %v249 = vld [vmem:[%s2 + $0xc0] sm:$0xff]
        %s250 = sshra.s32 %s224, 3
        %s251 = sand.u32 %s224, 7
        %s252 = smul.u32 %s250, 2
        %s253 = smul.addr %s252, 8
        %s254 = scalar_lea.vmem %s207, %s253
        %v255 = vld [vmem:[%s254] sm:$0xff]
        %v256 = vld [vmem:[%s254 + $0x8] sm:$0xff]
        %v257 = vld [vmem:[%s254 + $0x10] sm:$0xff]
        %v258 = vld [vmem:[%s254 + $0x18] sm:$0xff]
        %v259 = vld [vmem:[%s254 + $0x20] sm:$0xff]
        %v260 = vld [vmem:[%s254 + $0x28] sm:$0xff]
        %v261 = vld [vmem:[%s254 + $0x30] sm:$0xff]
        %v262 = vld [vmem:[%s254 + $0x38] sm:$0xff]
        %v263 = vld [vmem:[%s254 + $0x40] sm:$0xff]
        %v264 = vld [vmem:[%s254 + $0x48] sm:$0xff]
        %v265 = vld [vmem:[%s254 + $0x50] sm:$0xff]
        %v266 = vld [vmem:[%s254 + $0x58] sm:$0xff]
        %v267 = vld [vmem:[%s254 + $0x60] sm:$0xff]
        %v268 = vld [vmem:[%s254 + $0x68] sm:$0xff]
        %v269 = vld [vmem:[%s254 + $0x70] sm:$0xff]
        %v270 = vld [vmem:[%s254 + $0x78] sm:$0xff]
        %v271 = vld [vmem:[%s254 + $0x80] sm:$0xff]
        %v272 = vld [vmem:[%s254 + $0x88] sm:$0xff]
        %v273 = vld [vmem:[%s254 + $0x90] sm:$0xff]
        %v274 = vld [vmem:[%s254 + $0x98] sm:$0xff]
        %v275 = vld [vmem:[%s254 + $0xa0] sm:$0xff]
        %v276 = vld [vmem:[%s254 + $0xa8] sm:$0xff]
        %v277 = vld [vmem:[%s254 + $0xb0] sm:$0xff]
        %v278 = vld [vmem:[%s254 + $0xb8] sm:$0xff]
        %v279 = vld [vmem:[%s254 + $0xc0] sm:$0xff]
        %v280 = vld [vmem:[%s254 + $0xc8] sm:$0xff]
        %v281 = vld [vmem:[%s254 + $0xd0] sm:$0xff]
        %v282 = vld [vmem:[%s254 + $0xd8] sm:$0xff]
        %v283 = vld [vmem:[%s254 + $0xe0] sm:$0xff]
        %v284 = vld [vmem:[%s254 + $0xe8] sm:$0xff]
        %v285 = vld [vmem:[%s254 + $0xf0] sm:$0xff]
        %v286 = vld [vmem:[%s254 + $0xf8] sm:$0xff]
        %vm287 = vcmask 588800
        %v289 = vsel %vm287, %v256, 0
        %v292 = vsel %vm287, %v258, 0
        %v295 = vsel %vm287, %v260, 0
        %v298 = vsel %vm287, %v262, 0
        %v301 = vsel %vm287, %v264, 0
        %v304 = vsel %vm287, %v266, 0
        %v307 = vsel %vm287, %v268, 0
        %v310 = vsel %vm287, %v270, 0
        %v313 = vsel %vm287, %v272, 0
        %v316 = vsel %vm287, %v274, 0
        %v319 = vsel %vm287, %v276, 0
        %v322 = vsel %vm287, %v278, 0
        %v325 = vsel %vm287, %v280, 0
        %v328 = vsel %vm287, %v282, 0
        %v331 = vsel %vm287, %v284, 0
        %v334 = vsel %vm287, %v286, 0
        %336 = vmatprep.subr.mxu0 0.0
        %337 = vmatpush1.msra.mxu0 %v225
        %338 = vmatprep.subr.mxu0 0.0
        %339 = vmatpush1.msra.mxu0 %v226
        %340 = vmatprep.subr.mxu0 0.0
        %341 = vmatpush1.msra.mxu0 %v227
        %342 = vmatprep.subr.mxu0 0.0
        %343 = vmatpush1.msra.mxu0 %v228
        %344 = vmatprep.subr.mxu0 0.0
        %345 = vmatpush1.msra.mxu0 %v229
        %346 = vmatprep.subr.mxu0 0.0
        %347 = vmatpush1.msra.mxu0 %v230
        %348 = vmatprep.subr.mxu0 0.0
        %349 = vmatpush1.msra.mxu0 %v231
        %350 = vmatprep.subr.mxu0 0.0
        %351 = vmatpush1.msra.mxu0 %v232
        %352 = vmatprep.subr.mxu0 0.0
        %353 = vmatpush1.msra.mxu0 %v233
        %354 = vmatprep.subr.mxu0 0.0
        %355 = vmatpush1.msra.mxu0 %v234
        %356 = vmatprep.subr.mxu0 0.0
        %357 = vmatpush1.msra.mxu0 %v235
        %358 = vmatprep.subr.mxu0 0.0
        %359 = vmatpush1.msra.mxu0 %v236
        %360 = vmatprep.subr.mxu0 0.0
        %361 = vmatpush1.msra.mxu0 %v237
        %362 = vmatprep.subr.mxu0 0.0
        %363 = vmatpush1.msra.mxu0 %v238
        %364 = vmatprep.subr.mxu0 0.0
        %365 = vmatpush1.msra.mxu0 %v239
        %366 = vmatprep.subr.mxu0 0.0
        %367 = vmatpush1.msra.mxu0 %v240
        %368 = vmatprep.subr.mxu0 0.0
        %369 = vmatpush1.msra.mxu0 %v241
        %370 = vmatprep.subr.mxu0 0.0
        %371 = vmatpush1.msra.mxu0 %v242
        %372 = vmatprep.subr.mxu0 0.0
        %373 = vmatpush1.msra.mxu0 %v243
        %374 = vmatprep.subr.mxu0 0.0
        %375 = vmatpush1.msra.mxu0 %v244
        %376 = vmatprep.subr.mxu0 0.0
        %377 = vmatpush1.msra.mxu0 %v245
        %378 = vmatprep.subr.mxu0 0.0
        %379 = vmatpush1.msra.mxu0 %v246
        %380 = vmatprep.subr.mxu0 0.0
        %381 = vmatpush1.msra.mxu0 %v247
        %382 = vmatprep.subr.mxu0 0.0
        %383 = vmatpush1.msra.mxu0 %v248
        %384 = vmatprep.subr.mxu0 0.0
        %385 = vmatpush1.msra.mxu0 %v249
        %386 = vmatprep.subr.mxu0 0.0
        %387 = vmatpush1.msra.mxu0 0.0
        %388 = vmatprep.subr.mxu0 0.0
        %389 = vmatpush1.msra.mxu0 0.0
        %390 = vmatprep.subr.mxu0 0.0
        %391 = vmatpush1.msra.mxu0 0.0
        %392 = vmatprep.subr.mxu0 0.0
        %393 = vmatpush1.msra.mxu0 0.0
        %394 = vmatprep.subr.mxu0 0.0
        %395 = vmatpush1.msra.mxu0 0.0
        %396 = vmatprep.subr.mxu0 0.0
        %397 = vmatpush1.msra.mxu0 0.0
        %398 = vmatprep.subr.mxu0 0.0
        %399 = vmatpush1.msra.mxu0 0.0
        %400 = vmatprep.mubr.f32.mxu0 %v289
        %401 = vmatmul.mubr.f32.gmra.mrb[0].mxu0 %v255
        %v402 = vpop.f32.mrb[0].mxu0
        %v403 = vadd.f32 0.0, %v402
        %v404 = vpop.f32.mrb[0].mxu0
        %405 = vmatprep.mubr.f32.mxu0 %v292
        %406 = vmatmul.mubr.f32.gmra.mrb[0].mxu0 %v257
        %v407 = vpop.f32.mrb[0].mxu0
        %v408 = vadd.f32 0.0, %v407
        %v409 = vpop.f32.mrb[0].mxu0
        %410 = vmatprep.mubr.f32.mxu0 %v295
        %411 = vmatmul.mubr.f32.gmra.mrb[0].mxu0 %v259
        %v412 = vpop.f32.mrb[0].mxu0
        %v413 = vadd.f32 0.0, %v412
        %v414 = vpop.f32.mrb[0].mxu0
        %415 = vmatprep.mubr.f32.mxu0 %v298
        %416 = vmatmul.mubr.f32.gmra.mrb[0].mxu0 %v261
        %v417 = vpop.f32.mrb[0].mxu0
        %v418 = vadd.f32 0.0, %v417
        %v419 = vpop.f32.mrb[0].mxu0
        %420 = vmatprep.mubr.f32.mxu0 %v301
        %421 = vmatmul.mubr.f32.gmra.mrb[0].mxu0 %v263
        %v422 = vpop.f32.mrb[0].mxu0
        %v423 = vadd.f32 0.0, %v422
        %v424 = vpop.f32.mrb[0].mxu0
        %425 = vmatprep.mubr.f32.mxu0 %v304
        %426 = vmatmul.mubr.f32.gmra.mrb[0].mxu0 %v265
        %v427 = vpop.f32.mrb[0].mxu0
        %v428 = vadd.f32 0.0, %v427
        %v429 = vpop.f32.mrb[0].mxu0
        %430 = vmatprep.mubr.f32.mxu0 %v307
        %431 = vmatmul.mubr.f32.gmra.mrb[0].mxu0 %v267
        %v432 = vpop.f32.mrb[0].mxu0
        %v433 = vadd.f32 0.0, %v432
        %v434 = vpop.f32.mrb[0].mxu0
        %435 = vmatprep.mubr.f32.mxu0 %v310
        %436 = vmatmul.mubr.f32.gmra.mrb[0].mxu0 %v269
        %v437 = vpop.f32.mrb[0].mxu0
        %v438 = vadd.f32 0.0, %v437
        %v439 = vpop.f32.mrb[0].mxu0
        %440 = vmatprep.mubr.f32.mxu0 %v313
        %441 = vmatmul.mubr.f32.gmra.mrb[0].mxu0 %v271
        %v442 = vpop.f32.mrb[0].mxu0
        %v443 = vadd.f32 0.0, %v442
        %v444 = vpop.f32.mrb[0].mxu0
        %445 = vmatprep.mubr.f32.mxu0 %v316
        %446 = vmatmul.mubr.f32.gmra.mrb[0].mxu0 %v273
        %v447 = vpop.f32.mrb[0].mxu0
        %v448 = vadd.f32 0.0, %v447
        %v449 = vpop.f32.mrb[0].mxu0
        %450 = vmatprep.mubr.f32.mxu0 %v319
        %451 = vmatmul.mubr.f32.gmra.mrb[0].mxu0 %v275
        %v452 = vpop.f32.mrb[0].mxu0
        %v453 = vadd.f32 0.0, %v452
        %v454 = vpop.f32.mrb[0].mxu0
        %455 = vmatprep.mubr.f32.mxu0 %v322
        %456 = vmatmul.mubr.f32.gmra.mrb[0].mxu0 %v277
        %v457 = vpop.f32.mrb[0].mxu0
        %v458 = vadd.f32 0.0, %v457
        %v459 = vpop.f32.mrb[0].mxu0
        %460 = vmatprep.mubr.f32.mxu0 %v325
        %461 = vmatmul.mubr.f32.gmra.mrb[0].mxu0 %v279
        %v462 = vpop.f32.mrb[0].mxu0
        %v463 = vadd.f32 0.0, %v462
        %v464 = vpop.f32.mrb[0].mxu0
        %465 = vmatprep.mubr.f32.mxu0 %v328
        %466 = vmatmul.mubr.f32.gmra.mrb[0].mxu0 %v281
        %v467 = vpop.f32.mrb[0].mxu0
        %v468 = vadd.f32 0.0, %v467
        %v469 = vpop.f32.mrb[0].mxu0
        %470 = vmatprep.mubr.f32.mxu0 %v331
        %471 = vmatmul.mubr.f32.gmra.mrb[0].mxu0 %v283
        %v472 = vpop.f32.mrb[0].mxu0
        %v473 = vadd.f32 0.0, %v472
        %v474 = vpop.f32.mrb[0].mxu0
        %475 = vmatprep.mubr.f32.mxu0 %v334
        %476 = vmatmul.mubr.f32.gmra.mrb[0].mxu0 %v285
        %v477 = vpop.f32.mrb[0].mxu0
        %v478 = vadd.f32 0.0, %v477
        %v479 = vpop.f32.mrb[0].mxu0
        %480 = vdwg.mxu0
        %s481 = smul.addr %s252, 8
        %s482 = scalar_lea.vmem %s212, %s481
        %v483 = vld [vmem:[%s482] sm:$0xff]
        %v484 = vld [vmem:[%s482 + $0x8] sm:$0xff]
        %v485 = vld [vmem:[%s482 + $0x10] sm:$0xff]
        %v486 = vld [vmem:[%s482 + $0x18] sm:$0xff]
        %v487 = vld [vmem:[%s482 + $0x20] sm:$0xff]
        %v488 = vld [vmem:[%s482 + $0x28] sm:$0xff]
        %v489 = vld [vmem:[%s482 + $0x30] sm:$0xff]
        %v490 = vld [vmem:[%s482 + $0x38] sm:$0xff]
        %v491 = vld [vmem:[%s482 + $0x40] sm:$0xff]
        %v492 = vld [vmem:[%s482 + $0x48] sm:$0xff]
        %v493 = vld [vmem:[%s482 + $0x50] sm:$0xff]
        %v494 = vld [vmem:[%s482 + $0x58] sm:$0xff]
        %v495 = vld [vmem:[%s482 + $0x60] sm:$0xff]
        %v496 = vld [vmem:[%s482 + $0x68] sm:$0xff]
        %v497 = vld [vmem:[%s482 + $0x70] sm:$0xff]
        %v498 = vld [vmem:[%s482 + $0x78] sm:$0xff]
        %v499 = vld [vmem:[%s482 + $0x80] sm:$0xff]
        %v500 = vld [vmem:[%s482 + $0x88] sm:$0xff]
        %v501 = vld [vmem:[%s482 + $0x90] sm:$0xff]
        %v502 = vld [vmem:[%s482 + $0x98] sm:$0xff]
        %v503 = vld [vmem:[%s482 + $0xa0] sm:$0xff]
        %v504 = vld [vmem:[%s482 + $0xa8] sm:$0xff]
        %v505 = vld [vmem:[%s482 + $0xb0] sm:$0xff]
        %v506 = vld [vmem:[%s482 + $0xb8] sm:$0xff]
        %v507 = vld [vmem:[%s482 + $0xc0] sm:$0xff]
        %v508 = vld [vmem:[%s482 + $0xc8] sm:$0xff]
        %v509 = vld [vmem:[%s482 + $0xd0] sm:$0xff]
        %v510 = vld [vmem:[%s482 + $0xd8] sm:$0xff]
        %v511 = vld [vmem:[%s482 + $0xe0] sm:$0xff]
        %v512 = vld [vmem:[%s482 + $0xe8] sm:$0xff]
        %v513 = vld [vmem:[%s482 + $0xf0] sm:$0xff]
        %v514 = vld [vmem:[%s482 + $0xf8] sm:$0xff]
        %v516 = vsel %vm287, %v484, 0
        %v519 = vsel %vm287, %v486, 0
        %v522 = vsel %vm287, %v488, 0
        %v525 = vsel %vm287, %v490, 0
        %v528 = vsel %vm287, %v492, 0
        %v531 = vsel %vm287, %v494, 0
        %v534 = vsel %vm287, %v496, 0
        %v537 = vsel %vm287, %v498, 0
        %v540 = vsel %vm287, %v500, 0
        %v543 = vsel %vm287, %v502, 0
        %v546 = vsel %vm287, %v504, 0
        %v549 = vsel %vm287, %v506, 0
        %v552 = vsel %vm287, %v508, 0
        %v555 = vsel %vm287, %v510, 0
        %v558 = vsel %vm287, %v512, 0
        %v561 = vsel %vm287, %v514, 0
        %563 = vmatprep.subr.mxu0 0.0
        %564 = vmatpush1.msra.mxu0 %v225
        %565 = vmatprep.subr.mxu0 0.0
        %566 = vmatpush1.msra.mxu0 %v226
        %567 = vmatprep.subr.mxu0 0.0
        %568 = vmatpush1.msra.mxu0 %v227
        %569 = vmatprep.subr.mxu0 0.0
        %570 = vmatpush1.msra.mxu0 %v228
        %571 = vmatprep.subr.mxu0 0.0
        %572 = vmatpush1.msra.mxu0 %v229
        %573 = vmatprep.subr.mxu0 0.0
        %574 = vmatpush1.msra.mxu0 %v230
        %575 = vmatprep.subr.mxu0 0.0
        %576 = vmatpush1.msra.mxu0 %v231
        %577 = vmatprep.subr.mxu0 0.0
        %578 = vmatpush1.msra.mxu0 %v232
        %579 = vmatprep.subr.mxu0 0.0
        %580 = vmatpush1.msra.mxu0 %v233
        %581 = vmatprep.subr.mxu0 0.0
        %582 = vmatpush1.msra.mxu0 %v234
        %583 = vmatprep.subr.mxu0 0.0
        %584 = vmatpush1.msra.mxu0 %v235
        %585 = vmatprep.subr.mxu0 0.0
        %586 = vmatpush1.msra.mxu0 %v236
        %587 = vmatprep.subr.mxu0 0.0
        %588 = vmatpush1.msra.mxu0 %v237
        %589 = vmatprep.subr.mxu0 0.0
        %590 = vmatpush1.msra.mxu0 %v238
        %591 = vmatprep.subr.mxu0 0.0
        %592 = vmatpush1.msra.mxu0 %v239
        %593 = vmatprep.subr.mxu0 0.0
        %594 = vmatpush1.msra.mxu0 %v240
        %595 = vmatprep.subr.mxu0 0.0
        %596 = vmatpush1.msra.mxu0 %v241
        %597 = vmatprep.subr.mxu0 0.0
        %598 = vmatpush1.msra.mxu0 %v242
        %599 = vmatprep.subr.mxu0 0.0
        %600 = vmatpush1.msra.mxu0 %v243
        %601 = vmatprep.subr.mxu0 0.0
        %602 = vmatpush1.msra.mxu0 %v244
        %603 = vmatprep.subr.mxu0 0.0
        %604 = vmatpush1.msra.mxu0 %v245
        %605 = vmatprep.subr.mxu0 0.0
        %606 = vmatpush1.msra.mxu0 %v246
        %607 = vmatprep.subr.mxu0 0.0
        %608 = vmatpush1.msra.mxu0 %v247
        %609 = vmatprep.subr.mxu0 0.0
        %610 = vmatpush1.msra.mxu0 %v248
        %611 = vmatprep.subr.mxu0 0.0
        %612 = vmatpush1.msra.mxu0 %v249
        %613 = vmatprep.subr.mxu0 0.0
        %614 = vmatpush1.msra.mxu0 0.0
        %615 = vmatprep.subr.mxu0 0.0
        %616 = vmatpush1.msra.mxu0 0.0
        %617 = vmatprep.subr.mxu0 0.0
        %618 = vmatpush1.msra.mxu0 0.0
        %619 = vmatprep.subr.mxu0 0.0
        %620 = vmatpush1.msra.mxu0 0.0
        %621 = vmatprep.subr.mxu0 0.0
        %622 = vmatpush1.msra.mxu0 0.0
        %623 = vmatprep.subr.mxu0 0.0
        %624 = vmatpush1.msra.mxu0 0.0
        %625 = vmatprep.subr.mxu0 0.0
        %626 = vmatpush1.msra.mxu0 0.0
        %627 = vmatprep.mubr.f32.mxu0 %v516
        %628 = vmatmul.mubr.f32.gmra.mrb[0].mxu0 %v483
        %v629 = vpop.f32.mrb[0].mxu0
        %v630 = vadd.f32 0.0, %v629
        %v631 = vpop.f32.mrb[0].mxu0
        %632 = vmatprep.mubr.f32.mxu0 %v519
        %633 = vmatmul.mubr.f32.gmra.mrb[0].mxu0 %v485
        %v634 = vpop.f32.mrb[0].mxu0
        %v635 = vadd.f32 0.0, %v634
        %v636 = vpop.f32.mrb[0].mxu0
        %637 = vmatprep.mubr.f32.mxu0 %v522
        %638 = vmatmul.mubr.f32.gmra.mrb[0].mxu0 %v487
        %v639 = vpop.f32.mrb[0].mxu0
        %v640 = vadd.f32 0.0, %v639
        %v641 = vpop.f32.mrb[0].mxu0
        %642 = vmatprep.mubr.f32.mxu0 %v525
        %643 = vmatmul.mubr.f32.gmra.mrb[0].mxu0 %v489
        %v644 = vpop.f32.mrb[0].mxu0
        %v645 = vadd.f32 0.0, %v644
        %v646 = vpop.f32.mrb[0].mxu0
        %647 = vmatprep.mubr.f32.mxu0 %v528
        %648 = vmatmul.mubr.f32.gmra.mrb[0].mxu0 %v491
        %v649 = vpop.f32.mrb[0].mxu0
        %v650 = vadd.f32 0.0, %v649
        %v651 = vpop.f32.mrb[0].mxu0
        %652 = vmatprep.mubr.f32.mxu0 %v531
        %653 = vmatmul.mubr.f32.gmra.mrb[0].mxu0 %v493
        %v654 = vpop.f32.mrb[0].mxu0
        %v655 = vadd.f32 0.0, %v654
        %v656 = vpop.f32.mrb[0].mxu0
        %657 = vmatprep.mubr.f32.mxu0 %v534
        %658 = vmatmul.mubr.f32.gmra.mrb[0].mxu0 %v495
        %v659 = vpop.f32.mrb[0].mxu0
        %v660 = vadd.f32 0.0, %v659
        %v661 = vpop.f32.mrb[0].mxu0
        %662 = vmatprep.mubr.f32.mxu0 %v537
        %663 = vmatmul.mubr.f32.gmra.mrb[0].mxu0 %v497
        %v664 = vpop.f32.mrb[0].mxu0
        %v665 = vadd.f32 0.0, %v664
        %v666 = vpop.f32.mrb[0].mxu0
        %667 = vmatprep.mubr.f32.mxu0 %v540
        %668 = vmatmul.mubr.f32.gmra.mrb[0].mxu0 %v499
        %v669 = vpop.f32.mrb[0].mxu0
        %v670 = vadd.f32 0.0, %v669
        %v671 = vpop.f32.mrb[0].mxu0
        %672 = vmatprep.mubr.f32.mxu0 %v543
        %673 = vmatmul.mubr.f32.gmra.mrb[0].mxu0 %v501
        %v674 = vpop.f32.mrb[0].mxu0
        %v675 = vadd.f32 0.0, %v674
        %v676 = vpop.f32.mrb[0].mxu0
        %677 = vmatprep.mubr.f32.mxu0 %v546
        %678 = vmatmul.mubr.f32.gmra.mrb[0].mxu0 %v503
        %v679 = vpop.f32.mrb[0].mxu0
        %v680 = vadd.f32 0.0, %v679
        %v681 = vpop.f32.mrb[0].mxu0
        %682 = vmatprep.mubr.f32.mxu0 %v549
        %683 = vmatmul.mubr.f32.gmra.mrb[0].mxu0 %v505
        %v684 = vpop.f32.mrb[0].mxu0
        %v685 = vadd.f32 0.0, %v684
        %v686 = vpop.f32.mrb[0].mxu0
        %687 = vmatprep.mubr.f32.mxu0 %v552
        %688 = vmatmul.mubr.f32.gmra.mrb[0].mxu0 %v507
        %v689 = vpop.f32.mrb[0].mxu0
        %v690 = vadd.f32 0.0, %v689
        %v691 = vpop.f32.mrb[0].mxu0
        %692 = vmatprep.mubr.f32.mxu0 %v555
        %693 = vmatmul.mubr.f32.gmra.mrb[0].mxu0 %v509
        %v694 = vpop.f32.mrb[0].mxu0
        %v695 = vadd.f32 0.0, %v694
        %v696 = vpop.f32.mrb[0].mxu0
        %697 = vmatprep.mubr.f32.mxu0 %v558
        %698 = vmatmul.mubr.f32.gmra.mrb[0].mxu0 %v511
        %v699 = vpop.f32.mrb[0].mxu0
        %v700 = vadd.f32 0.0, %v699
        %v701 = vpop.f32.mrb[0].mxu0
        %702 = vmatprep.mubr.f32.mxu0 %v561
        %703 = vmatmul.mubr.f32.gmra.mrb[0].mxu0 %v513
        %v704 = vpop.f32.mrb[0].mxu0
        %v705 = vadd.f32 0.0, %v704
        %v706 = vpop.f32.mrb[0].mxu0
        %707 = vdwg.mxu0
        %v708 = vmax.f32 %v403, %v630
        %v709 = vmax.f32 %v408, %v635
        %v710 = vmax.f32 %v413, %v640
        %v711 = vmax.f32 %v418, %v645
        %v712 = vmax.f32 %v423, %v650
        %v713 = vmax.f32 %v428, %v655
        %v714 = vmax.f32 %v433, %v660
        %v715 = vmax.f32 %v438, %v665
        %v716 = vmax.f32 %v443, %v670
        %v717 = vmax.f32 %v448, %v675
        %v718 = vmax.f32 %v453, %v680
        %v719 = vmax.f32 %v458, %v685
        %v720 = vmax.f32 %v463, %v690
        %v721 = vmax.f32 %v468, %v695
        %v722 = vmax.f32 %v473, %v700
        %v723 = vmax.f32 %v478, %v705
        %v724 = vmax.f32 %v708, %v710
        %v725 = vmax.f32 %v709, %v711
        %v726 = vmax.f32 %v712, %v714
        %v727 = vmax.f32 %v713, %v715
        %v728 = vmax.f32 %v716, %v718
        %v729 = vmax.f32 %v717, %v719
        %v730 = vmax.f32 %v720, %v722
        %v731 = vmax.f32 %v721, %v723
        %v732 = vld [vmem:[%s3] sm:$0x1]
        %v734 = vlaneseq
        %v735 = vshrl.u32 %v734, 7
        %v736 = vsub.s32 0, %v735
        %v737 = vrot.slane %v732, %v736
        %v739 = vadd.f32 %v724, %v737
        %v740 = vadd.f32 %v725, %v737
        %v741 = vadd.f32 %v726, %v737
        %v742 = vadd.f32 %v727, %v737
        %v743 = vadd.f32 %v728, %v737
        %v744 = vadd.f32 %v729, %v737
        %v745 = vadd.f32 %v730, %v737
        %v746 = vadd.f32 %v731, %v737
        %s747 = smul.u32 %s219, 64
        %s748 = scalar_lea.vmem %s217, %s747
        %vm749 = vcmask 261120
        %750 = vst.msk [vmem:[%s748] sm:$0xff] %vm749, %v739
        %751 = vst.msk [vmem:[%s748 + $0x8] sm:$0xff] %vm749, %v740
        %752 = vst.msk [vmem:[%s748 + $0x10] sm:$0xff] %vm749, %v741
        %753 = vst.msk [vmem:[%s748 + $0x18] sm:$0xff] %vm749, %v742
        %754 = vst.msk [vmem:[%s748 + $0x20] sm:$0xff] %vm749, %v743
        %755 = vst.msk [vmem:[%s748 + $0x28] sm:$0xff] %vm749, %v744
        %756 = vst.msk [vmem:[%s748 + $0x30] sm:$0xff] %vm749, %v745
        %757 = vst.msk [vmem:[%s748 + $0x38] sm:$0xff] %vm749, %v746
      $region41: #{neural_network_forward.4} parent=35 // loop_footer
        %s223 = sadd.s32 1, %s219
      $region42: #{neural_network_forward.4} parent=35 // loop_footer_branch
        %218 = sbr.rel target = $region38
      $region43: #{neural_network_forward.4} parent=35 // loop_exit
        _
      %p758 = scmp.lt.s32.totalorder %s15, 1
      %s759 = scalar_select %p758, %s15, 1
      %s760 = smul.addr %s759, 32
      %s761 = smul.addr %s760, 8
      %s762 = scalar_lea.vmem %s4, %s761
      // Predicated region
      $region44: #{neural_network_forward.4} parent=35 // pred_check
        %p763 = pneg %p127
      $region45: #{neural_network_forward.4} parent=35 // pred_check_branch
        %765 = sbr.rel (%p763) target = $region47
      $region46: #{neural_network_forward.4} parent=35 // pred_region
        _
      $region47: #{neural_network_forward.4} parent=35 // pred_fallthru
        _
    $region36: #{neural_network_forward.4} parent=5 // pred_fallthru
      _
    %p766 = scmp.le.s32.totalorder 2, %s10
    // Predicated region
    $region48: #{neural_network_forward.4} parent=5 // pred_check
      %p767 = pneg %p766
    $region49: #{neural_network_forward.4} parent=5 // pred_check_branch
      %769 = sbr.rel (%p767) target = $region51
    $region50: #{neural_network_forward.4} parent=5 // pred_region
      %s770 = ssub.s32 %s10, 2
      // Predicated region
      $region52: #{neural_network_forward.4} parent=50 // pred_check
        %p771 = pneg %p133
      $region53: #{neural_network_forward.4} parent=50 // pred_check_branch
        %773 = sbr.rel (%p771) target = $region55
      $region54: #{neural_network_forward.4} parent=50 // pred_region
        %p774 = scmp.lt.s32.totalorder %s16, 1
        %s775 = scalar_select %p774, %s16, 1
        %s776 = smul.addr %s775, 32
        %s777 = smul.addr %s776, 8
        %s778 = scalar_lea.vmem %s4, %s777
      $region55: #{neural_network_forward.4} parent=50 // pred_fallthru
        _
    $region51: #{neural_network_forward.4} parent=5 // pred_fallthru
      _
  $region6: #{neural_network_forward.4} parent=0 // loop_footer
    %s14 = sadd.s32 1, %s10
  $region7: #{neural_network_forward.4} parent=0 // loop_footer_branch
    %9 = sbr.rel target = $region3
  $region8: #{neural_network_forward.4} parent=0 // loop_exit
    _

// kernel: neural_network_forward.5
$region0: #{neural_network_forward.5}
  #allocation0 [shape = 'u32[]', space=smem, size = 0x4, offset = 0x4, fixed_abs, tag = 'smem constant byte address 0x4 - core index']
  #allocation1 [shape = 'u32[144,128]{1,0:T(1,128)}', space=vmem, size = 0x12000, scoped, tag = 'internal scratch']
  %s0 = inlined_call_operand.vmem [shape: f32[2,160,160], index: 0, kind: input, shape index: {}]
  %s1 = inlined_call_operand.vmem [shape: f32[2,160,160], index: 1, kind: input, shape index: {}]
  %s2 = inlined_call_operand.vmem [shape: f32[5,160,64], index: 2, kind: input, shape index: {}]
  %s3 = inlined_call_operand.vmem [shape: f32[1,64], index: 3, kind: input, shape index: {}]
  %s4 = inlined_call_operand.vmem [shape: f32[2,64,64], index: 4, kind: output, shape index: {}]
  %s5 = sld [smem:[#allocation0]]
  $region56: #{neural_network_forward.5} parent=0
    _
  %s7 = ssub.s32 1, %s5
  %s8 = scalar_select 0, %s7, %s5
  loop: start=0, step=1, limit=4
  $region2: #{neural_network_forward.5} parent=0 // loop_pre_header
    _
  $region3: #{neural_network_forward.5} parent=0 // loop_header
    %s10 = sphi 0, %s14
    %p11 = scmp.ge.s32.totalorder %s10, 4
    %s20 = sphi 0, %s22
    %s23 = sphi 0, %s20
    %s24 = sphi 0, %s23
    %s40 = sphi 0, %s24
    %s46 = sphi 0, %s48
    %s49 = sphi 0, %s46
    %s50 = sphi 0, %s49
    %s66 = sphi 0, %s50
    %s70 = sphi 0, %s70
    %s72 = sphi 0, %s70
    %s73 = sphi 0, %s72
    %s87 = sphi 0, %s73
    %s91 = sphi 0, %s91
    %s93 = sphi 0, %s91
    %s94 = sphi 0, %s93
    %s108 = sphi 0, %s94
    %s114 = sphi 0, %s116
    %s117 = sphi 0, %s114
    %s118 = sphi 0, %s117
    %s134 = sphi 0, %s118
  $region4: #{neural_network_forward.5} parent=0 // loop_header_branch
    %13 = sbr.rel (%p11) target = $region8
  $region5: #{neural_network_forward.5} parent=0 // loop_body
    %s15 = ssub.s32 %s10, 1
    %s16 = ssub.s32 %s10, 2
    %s17 = sadd.s32 %s10, 1
    %s18 = ssub.s32 %s10, %s17
    %p19 = scmp.eq.s32.totalorder %s18, 0
    %s21 = sadd.s32 %s20, 1
    %s22 = scalar_select %p19, %s20, %s21
    %p25 = pneg %p19
    %p26 = scmp.eq.s32.totalorder %s10, 1
    %p27 = por %p25, %p26
    %p28 = scmp.ne.s32.totalorder %s20, %s23
    %p29 = scmp.eq.s32.totalorder %s10, 0
    %p30 = por %p28, %p29
    %p31 = scmp.ne.s32.totalorder %s20, %s23
    %p32 = scmp.eq.s32.totalorder %s15, 1
    %p33 = por %p31, %p32
    %p34 = scmp.ne.s32.totalorder %s23, %s24
    %p35 = scmp.eq.s32.totalorder %s15, 0
    %p36 = por %p34, %p35
    %p37 = scmp.ne.s32.totalorder %s23, %s24
    %p38 = scmp.eq.s32.totalorder %s16, 1
    %p39 = por %p37, %p38
    %p41 = scmp.ne.s32.totalorder %s24, %s40
    %p42 = scmp.eq.s32.totalorder %s16, 0
    %p43 = por %p41, %p42
    %s44 = ssub.s32 %s10, %s17
    %p45 = scmp.eq.s32.totalorder %s44, 0
    %s47 = sadd.s32 %s46, 1
    %s48 = scalar_select %p45, %s46, %s47
    %p51 = pneg %p45
    %p52 = scmp.eq.s32.totalorder %s10, 1
    %p53 = por %p51, %p52
    %p54 = scmp.ne.s32.totalorder %s46, %s49
    %p55 = scmp.eq.s32.totalorder %s10, 0
    %p56 = por %p54, %p55
    %p57 = scmp.ne.s32.totalorder %s46, %s49
    %p58 = scmp.eq.s32.totalorder %s15, 1
    %p59 = por %p57, %p58
    %p60 = scmp.ne.s32.totalorder %s49, %s50
    %p61 = scmp.eq.s32.totalorder %s15, 0
    %p62 = por %p60, %p61
    %p63 = scmp.ne.s32.totalorder %s49, %s50
    %p64 = scmp.eq.s32.totalorder %s16, 1
    %p65 = por %p63, %p64
    %p67 = scmp.ne.s32.totalorder %s50, %s66
    %p68 = scmp.eq.s32.totalorder %s16, 0
    %p69 = por %p67, %p68
    %s71 = sadd.s32 %s70, 1
    %p74 = scmp.eq.s32.totalorder %s10, 1
    %p75 = scmp.ne.s32.totalorder %s70, %s72
    %p76 = scmp.eq.s32.totalorder %s10, 0
    %p77 = por %p75, %p76
    %p78 = scmp.ne.s32.totalorder %s70, %s72
    %p79 = scmp.eq.s32.totalorder %s15, 1
    %p80 = por %p78, %p79
    %p81 = scmp.ne.s32.totalorder %s72, %s73
    %p82 = scmp.eq.s32.totalorder %s15, 0
    %p83 = por %p81, %p82
    %p84 = scmp.ne.s32.totalorder %s72, %s73
    %p85 = scmp.eq.s32.totalorder %s16, 1
    %p86 = por %p84, %p85
    %p88 = scmp.ne.s32.totalorder %s73, %s87
    %p89 = scmp.eq.s32.totalorder %s16, 0
    %p90 = por %p88, %p89
    %s92 = sadd.s32 %s91, 1
    %p95 = scmp.eq.s32.totalorder %s10, 1
    %p96 = scmp.ne.s32.totalorder %s91, %s93
    %p97 = scmp.eq.s32.totalorder %s10, 0
    %p98 = por %p96, %p97
    %p99 = scmp.ne.s32.totalorder %s91, %s93
    %p100 = scmp.eq.s32.totalorder %s15, 1
    %p101 = por %p99, %p100
    %p102 = scmp.ne.s32.totalorder %s93, %s94
    %p103 = scmp.eq.s32.totalorder %s15, 0
    %p104 = por %p102, %p103
    %p105 = scmp.ne.s32.totalorder %s93, %s94
    %p106 = scmp.eq.s32.totalorder %s16, 1
    %p107 = por %p105, %p106
    %p109 = scmp.ne.s32.totalorder %s94, %s108
    %p110 = scmp.eq.s32.totalorder %s16, 0
    %p111 = por %p109, %p110
    %s112 = ssub.s32 %s10, %s17
    %p113 = scmp.eq.s32.totalorder %s112, 0
    %s115 = sadd.s32 %s114, 1
    %s116 = scalar_select %p113, %s114, %s115
    %p119 = pneg %p113
    %p120 = scmp.eq.s32.totalorder %s10, 1
    %p121 = por %p119, %p120
    %p122 = scmp.ne.s32.totalorder %s114, %s117
    %p123 = scmp.eq.s32.totalorder %s10, 0
    %p124 = por %p122, %p123
    %p125 = scmp.ne.s32.totalorder %s114, %s117
    %p126 = scmp.eq.s32.totalorder %s15, 1
    %p127 = por %p125, %p126
    %p128 = scmp.ne.s32.totalorder %s117, %s118
    %p129 = scmp.eq.s32.totalorder %s15, 0
    %p130 = por %p128, %p129
    %p131 = scmp.ne.s32.totalorder %s117, %s118
    %p132 = scmp.eq.s32.totalorder %s16, 1
    %p133 = por %p131, %p132
    %p135 = scmp.ne.s32.totalorder %s118, %s134
    %p136 = scmp.eq.s32.totalorder %s16, 0
    %p137 = por %p135, %p136
    %p138 = scmp.le.s32.totalorder 1, %s10
    %p139 = scmp.lt.s32.totalorder %s10, 3
    %p140 = pnand %p138, %p139
    %p141 = pneg %p140
    // Predicated region
    $region9: #{neural_network_forward.5} parent=5 // pred_check
      _
    $region10: #{neural_network_forward.5} parent=5 // pred_check_branch
      %143 = sbr.rel (%p140) target = $region12
    $region11: #{neural_network_forward.5} parent=5 // pred_region
      %s144 = ssub.s32 %s10, 1
      // Predicated region
      $region13: #{neural_network_forward.5} parent=11 // pred_check
        %p145 = pneg %p83
      $region14: #{neural_network_forward.5} parent=11 // pred_check_branch
        %147 = sbr.rel (%p145) target = $region16
      $region15: #{neural_network_forward.5} parent=11 // pred_region
        _
      $region16: #{neural_network_forward.5} parent=11 // pred_fallthru
        _
      // Predicated region
      $region17: #{neural_network_forward.5} parent=11 // pred_check
        %p148 = pneg %p104
      $region18: #{neural_network_forward.5} parent=11 // pred_check_branch
        %150 = sbr.rel (%p148) target = $region20
      $region19: #{neural_network_forward.5} parent=11 // pred_region
        _
      $region20: #{neural_network_forward.5} parent=11 // pred_fallthru
        _
    $region12: #{neural_network_forward.5} parent=5 // pred_fallthru
      _
    %p151 = scmp.lt.s32.totalorder %s10, 2
    // Predicated region
    $region21: #{neural_network_forward.5} parent=5 // pred_check
      %p152 = pneg %p151
    $region22: #{neural_network_forward.5} parent=5 // pred_check_branch
      %154 = sbr.rel (%p152) target = $region24
    $region23: #{neural_network_forward.5} parent=5 // pred_region
      // Predicated region
      $region25: #{neural_network_forward.5} parent=23 // pred_check
        %p155 = pneg %p30
      $region26: #{neural_network_forward.5} parent=23 // pred_check_branch
        %157 = sbr.rel (%p155) target = $region28
      $region27: #{neural_network_forward.5} parent=23 // pred_region
        %p158 = scmp.lt.s32.totalorder %s10, 1
        %s159 = scalar_select %p158, %s10, 1
        %s160 = smul.addr %s159, 40
        %s161 = smul.addr %s160, 8
        %s162 = scalar_lea.vmem %s0, %s161
      $region28: #{neural_network_forward.5} parent=23 // pred_fallthru
        _
      // Predicated region
      $region29: #{neural_network_forward.5} parent=23 // pred_check
        %p163 = pneg %p56
      $region30: #{neural_network_forward.5} parent=23 // pred_check_branch
        %165 = sbr.rel (%p163) target = $region32
      $region31: #{neural_network_forward.5} parent=23 // pred_region
        %p166 = scmp.lt.s32.totalorder %s10, 1
        %s167 = scalar_select %p166, %s10, 1
        %s168 = smul.addr %s167, 40
        %s169 = smul.addr %s168, 8
        %s170 = scalar_lea.vmem %s1, %s169
      $region32: #{neural_network_forward.5} parent=23 // pred_fallthru
        _
    $region24: #{neural_network_forward.5} parent=5 // pred_fallthru
      _
    %p171 = scmp.le.s32.totalorder 1, %s10
    %p172 = scmp.lt.s32.totalorder %s10, 3
    %p173 = pnand %p171, %p172
    %p174 = pneg %p173
    // Predicated region
    $region33: #{neural_network_forward.5} parent=5 // pred_check
      _
    $region34: #{neural_network_forward.5} parent=5 // pred_check_branch
      %176 = sbr.rel (%p173) target = $region36
    $region35: #{neural_network_forward.5} parent=5 // pred_region
      %s177 = ssub.s32 %s10, 1
      %p178 = scmp.lt.s32.totalorder %s15, 1
      %s179 = scalar_select %p178, %s15, 1
      %s180 = smul.addr %s179, 40
      %s181 = smul.addr %s180, 8
      %s182 = scalar_lea.vmem %s0, %s181
      %p183 = pneg %p36
      %p184 = pneg %p33
      %p185 = scmp.lt.s32.totalorder %s15, 1
      %s186 = scalar_select %p185, %s15, 1
      %s187 = smul.addr %s186, 40
      %s188 = smul.addr %s187, 8
      %s189 = scalar_lea.vmem %s1, %s188
      %p190 = pneg %p62
      %p191 = pneg %p59
      %p192 = pneg %p83
      %p193 = pneg %p80
      %p194 = pneg %p104
      %p195 = pneg %p101
      %p196 = pneg %p130
      %p197 = pneg %p127
      %p198 = scmp.lt.s32.totalorder %s15, 1
      %s199 = scalar_select %p198, %s15, 1
      %s200 = smul.addr %s199, 8
      %s201 = smul.addr %s200, 8
      %s202 = scalar_lea.vmem %s4, %s201
      %p203 = scmp.lt.s32.totalorder %s15, 1
      %s204 = scalar_select %p203, %s15, 1
      %s205 = smul.addr %s204, 40
      %s206 = smul.addr %s205, 8
      %s207 = scalar_lea.vmem %s0, %s206
      %p208 = scmp.lt.s32.totalorder %s15, 1
      %s209 = scalar_select %p208, %s15, 1
      %s210 = smul.addr %s209, 40
      %s211 = smul.addr %s210, 8
      %s212 = scalar_lea.vmem %s1, %s211
      %p213 = scmp.lt.s32.totalorder %s15, 1
      %s214 = scalar_select %p213, %s15, 1
      %s215 = smul.addr %s214, 8
      %s216 = smul.addr %s215, 8
      %s217 = scalar_lea.vmem %s4, %s216
      loop: start=0, step=1, limit=2
      $region37: #{neural_network_forward.5} parent=35 // loop_pre_header
        _
      $region38: #{neural_network_forward.5} parent=35 // loop_header
        %s219 = sphi 0, %s223
        %p220 = scmp.ge.s32.totalorder %s219, 2
      $region39: #{neural_network_forward.5} parent=35 // loop_header_branch
        %222 = sbr.rel (%p220) target = $region43
      $region40: #{neural_network_forward.5} parent=35 // loop_body
        %s224 = smul.u32 %s219, 64
        %v225 = vld [vmem:[%s2] sm:$0xff]
        %v226 = vld [vmem:[%s2 + $0x8] sm:$0xff]
        %v227 = vld [vmem:[%s2 + $0x10] sm:$0xff]
        %v228 = vld [vmem:[%s2 + $0x18] sm:$0xff]
        %v229 = vld [vmem:[%s2 + $0x20] sm:$0xff]
        %v230 = vld [vmem:[%s2 + $0x28] sm:$0xff]
        %v231 = vld [vmem:[%s2 + $0x30] sm:$0xff]
        %v232 = vld [vmem:[%s2 + $0x38] sm:$0xff]
        %v233 = vld [vmem:[%s2 + $0x40] sm:$0xff]
        %v234 = vld [vmem:[%s2 + $0x48] sm:$0xff]
        %v235 = vld [vmem:[%s2 + $0x50] sm:$0xff]
        %v236 = vld [vmem:[%s2 + $0x58] sm:$0xff]
        %v237 = vld [vmem:[%s2 + $0x60] sm:$0xff]
        %v238 = vld [vmem:[%s2 + $0x68] sm:$0xff]
        %v239 = vld [vmem:[%s2 + $0x70] sm:$0xff]
        %v240 = vld [vmem:[%s2 + $0x78] sm:$0xff]
        %v241 = vld [vmem:[%s2 + $0x80] sm:$0xff]
        %v242 = vld [vmem:[%s2 + $0x88] sm:$0xff]
        %v243 = vld [vmem:[%s2 + $0x90] sm:$0xff]
        %v244 = vld [vmem:[%s2 + $0x98] sm:$0xff]
        %s245 = sshra.s32 %s224, 3
        %s246 = sand.u32 %s224, 7
        %s247 = smul.u32 %s245, 2
        %s248 = smul.addr %s247, 8
        %s249 = scalar_lea.vmem %s207, %s248
        %v250 = vld [vmem:[%s249] sm:$0xff]
        %v251 = vld [vmem:[%s249 + $0x8] sm:$0xff]
        %v252 = vld [vmem:[%s249 + $0x10] sm:$0xff]
        %v253 = vld [vmem:[%s249 + $0x18] sm:$0xff]
        %v254 = vld [vmem:[%s249 + $0x20] sm:$0xff]
        %v255 = vld [vmem:[%s249 + $0x28] sm:$0xff]
        %v256 = vld [vmem:[%s249 + $0x30] sm:$0xff]
        %v257 = vld [vmem:[%s249 + $0x38] sm:$0xff]
        %v258 = vld [vmem:[%s249 + $0x40] sm:$0xff]
        %v259 = vld [vmem:[%s249 + $0x48] sm:$0xff]
        %v260 = vld [vmem:[%s249 + $0x50] sm:$0xff]
        %v261 = vld [vmem:[%s249 + $0x58] sm:$0xff]
        %v262 = vld [vmem:[%s249 + $0x60] sm:$0xff]
        %v263 = vld [vmem:[%s249 + $0x68] sm:$0xff]
        %v264 = vld [vmem:[%s249 + $0x70] sm:$0xff]
        %v265 = vld [vmem:[%s249 + $0x78] sm:$0xff]
        %s266 = smul.addr %s247, 8
        %s267 = scalar_lea.vmem %s212, %s266
        %v268 = vld [vmem:[%s267] sm:$0xff]
        %v269 = vld [vmem:[%s267 + $0x8] sm:$0xff]
        %v270 = vld [vmem:[%s267 + $0x10] sm:$0xff]
        %v271 = vld [vmem:[%s267 + $0x18] sm:$0xff]
        %v272 = vld [vmem:[%s267 + $0x20] sm:$0xff]
        %v273 = vld [vmem:[%s267 + $0x28] sm:$0xff]
        %v274 = vld [vmem:[%s267 + $0x30] sm:$0xff]
        %v275 = vld [vmem:[%s267 + $0x38] sm:$0xff]
        %v276 = vld [vmem:[%s267 + $0x40] sm:$0xff]
        %v277 = vld [vmem:[%s267 + $0x48] sm:$0xff]
        %v278 = vld [vmem:[%s267 + $0x50] sm:$0xff]
        %v279 = vld [vmem:[%s267 + $0x58] sm:$0xff]
        %v280 = vld [vmem:[%s267 + $0x60] sm:$0xff]
        %v281 = vld [vmem:[%s267 + $0x68] sm:$0xff]
        %v282 = vld [vmem:[%s267 + $0x70] sm:$0xff]
        %v283 = vld [vmem:[%s267 + $0x78] sm:$0xff]
        %s284 = sadd.s32 %s224, 8
        %s285 = scalar_lea.vmem %s2, 160
        %v286 = vld [vmem:[%s285] sm:$0xff]
        %v287 = vld [vmem:[%s285 + $0x8] sm:$0xff]
        %v288 = vld [vmem:[%s285 + $0x10] sm:$0xff]
        %v289 = vld [vmem:[%s285 + $0x18] sm:$0xff]
        %v290 = vld [vmem:[%s285 + $0x20] sm:$0xff]
        %v291 = vld [vmem:[%s285 + $0x28] sm:$0xff]
        %v292 = vld [vmem:[%s285 + $0x30] sm:$0xff]
        %v293 = vld [vmem:[%s285 + $0x38] sm:$0xff]
        %v294 = vld [vmem:[%s285 + $0x40] sm:$0xff]
        %v295 = vld [vmem:[%s285 + $0x48] sm:$0xff]
        %v296 = vld [vmem:[%s285 + $0x50] sm:$0xff]
        %v297 = vld [vmem:[%s285 + $0x58] sm:$0xff]
        %v298 = vld [vmem:[%s285 + $0x60] sm:$0xff]
        %v299 = vld [vmem:[%s285 + $0x68] sm:$0xff]
        %v300 = vld [vmem:[%s285 + $0x70] sm:$0xff]
        %v301 = vld [vmem:[%s285 + $0x78] sm:$0xff]
        %v302 = vld [vmem:[%s285 + $0x80] sm:$0xff]
        %v303 = vld [vmem:[%s285 + $0x88] sm:$0xff]
        %v304 = vld [vmem:[%s285 + $0x90] sm:$0xff]
        %v305 = vld [vmem:[%s285 + $0x98] sm:$0xff]
        %s306 = sshra.s32 %s284, 3
        %s307 = sand.u32 %s284, 7
        %s308 = smul.u32 %s306, 2
        %s309 = smul.addr %s308, 8
        %s310 = scalar_lea.vmem %s207, %s309
        %v311 = vld [vmem:[%s310] sm:$0xff]
        %v312 = vld [vmem:[%s310 + $0x8] sm:$0xff]
        %v313 = vld [vmem:[%s310 + $0x10] sm:$0xff]
        %v314 = vld [vmem:[%s310 + $0x18] sm:$0xff]
        %v315 = vld [vmem:[%s310 + $0x20] sm:$0xff]
        %v316 = vld [vmem:[%s310 + $0x28] sm:$0xff]
        %v317 = vld [vmem:[%s310 + $0x30] sm:$0xff]
        %v318 = vld [vmem:[%s310 + $0x38] sm:$0xff]
        %v319 = vld [vmem:[%s310 + $0x40] sm:$0xff]
        %v320 = vld [vmem:[%s310 + $0x48] sm:$0xff]
        %v321 = vld [vmem:[%s310 + $0x50] sm:$0xff]
        %v322 = vld [vmem:[%s310 + $0x58] sm:$0xff]
        %v323 = vld [vmem:[%s310 + $0x60] sm:$0xff]
        %v324 = vld [vmem:[%s310 + $0x68] sm:$0xff]
        %v325 = vld [vmem:[%s310 + $0x70] sm:$0xff]
        %v326 = vld [vmem:[%s310 + $0x78] sm:$0xff]
        %vm327 = vcmask 261120
        %v329 = vsel %vm327, %v312, 0
        %v332 = vsel %vm327, %v314, 0
        %v335 = vsel %vm327, %v316, 0
        %v338 = vsel %vm327, %v318, 0
        %v341 = vsel %vm327, %v320, 0
        %v344 = vsel %vm327, %v322, 0
        %v347 = vsel %vm327, %v324, 0
        %v350 = vsel %vm327, %v326, 0
        %352 = vmatprep.subr.mxu0 0.0
        %353 = vmatpush1.msra.mxu0 %v286
        %354 = vmatprep.subr.mxu0 0.0
        %355 = vmatpush1.msra.mxu0 %v287
        %356 = vmatprep.subr.mxu0 0.0
        %357 = vmatpush1.msra.mxu0 %v288
        %358 = vmatprep.subr.mxu0 0.0
        %359 = vmatpush1.msra.mxu0 %v289
        %360 = vmatprep.subr.mxu0 0.0
        %361 = vmatpush1.msra.mxu0 %v290
        %362 = vmatprep.subr.mxu0 0.0
        %363 = vmatpush1.msra.mxu0 %v291
        %364 = vmatprep.subr.mxu0 0.0
        %365 = vmatpush1.msra.mxu0 %v292
        %366 = vmatprep.subr.mxu0 0.0
        %367 = vmatpush1.msra.mxu0 %v293
        %368 = vmatprep.subr.mxu0 0.0
        %369 = vmatpush1.msra.mxu0 %v294
        %370 = vmatprep.subr.mxu0 0.0
        %371 = vmatpush1.msra.mxu0 %v295
        %372 = vmatprep.subr.mxu0 0.0
        %373 = vmatpush1.msra.mxu0 %v296
        %374 = vmatprep.subr.mxu0 0.0
        %375 = vmatpush1.msra.mxu0 %v297
        %376 = vmatprep.subr.mxu0 0.0
        %377 = vmatpush1.msra.mxu0 %v298
        %378 = vmatprep.subr.mxu0 0.0
        %379 = vmatpush1.msra.mxu0 %v299
        %380 = vmatprep.subr.mxu0 0.0
        %381 = vmatpush1.msra.mxu0 %v300
        %382 = vmatprep.subr.mxu0 0.0
        %383 = vmatpush1.msra.mxu0 %v301
        %384 = vmatprep.subr.mxu0 0.0
        %385 = vmatpush1.msra.mxu0 %v302
        %386 = vmatprep.subr.mxu0 0.0
        %387 = vmatpush1.msra.mxu0 %v303
        %388 = vmatprep.subr.mxu0 0.0
        %389 = vmatpush1.msra.mxu0 %v304
        %390 = vmatprep.subr.mxu0 0.0
        %391 = vmatpush1.msra.mxu0 %v305
        %392 = vmatprep.subr.mxu0 0.0
        %393 = vmatpush1.msra.mxu0 0.0
        %394 = vmatprep.subr.mxu0 0.0
        %395 = vmatpush1.msra.mxu0 0.0
        %396 = vmatprep.subr.mxu0 0.0
        %397 = vmatpush1.msra.mxu0 0.0
        %398 = vmatprep.subr.mxu0 0.0
        %399 = vmatpush1.msra.mxu0 0.0
        %400 = vmatprep.subr.mxu0 0.0
        %401 = vmatpush1.msra.mxu0 0.0
        %402 = vmatprep.subr.mxu0 0.0
        %403 = vmatpush1.msra.mxu0 0.0
        %404 = vmatprep.subr.mxu0 0.0
        %405 = vmatpush1.msra.mxu0 0.0
        %406 = vmatprep.subr.mxu0 0.0
        %407 = vmatpush1.msra.mxu0 0.0
        %408 = vmatprep.subr.mxu0 0.0
        %409 = vmatpush1.msra.mxu0 0.0
        %410 = vmatprep.subr.mxu0 0.0
        %411 = vmatpush1.msra.mxu0 0.0
        %412 = vmatprep.subr.mxu0 0.0
        %413 = vmatpush1.msra.mxu0 0.0
        %414 = vmatprep.subr.mxu0 0.0
        %415 = vmatpush1.msra.mxu0 0.0
        %416 = vmatprep.mubr.f32.mxu0 %v329
        %417 = vmatmul.mubr.f32.gmra.mrb[0].mxu0 %v311
        %v418 = vpop.f32.mrb[0].mxu0
        %v419 = vadd.f32 0.0, %v418
        %v420 = vpop.f32.mrb[0].mxu0
        %421 = vmatprep.mubr.f32.mxu0 %v332
        %422 = vmatmul.mubr.f32.gmra.mrb[0].mxu0 %v313
        %v423 = vpop.f32.mrb[0].mxu0
        %v424 = vadd.f32 0.0, %v423
        %v425 = vpop.f32.mrb[0].mxu0
        %426 = vmatprep.mubr.f32.mxu0 %v335
        %427 = vmatmul.mubr.f32.gmra.mrb[0].mxu0 %v315
        %v428 = vpop.f32.mrb[0].mxu0
        %v429 = vadd.f32 0.0, %v428
        %v430 = vpop.f32.mrb[0].mxu0
        %431 = vmatprep.mubr.f32.mxu0 %v338
        %432 = vmatmul.mubr.f32.gmra.mrb[0].mxu0 %v317
        %v433 = vpop.f32.mrb[0].mxu0
        %v434 = vadd.f32 0.0, %v433
        %v435 = vpop.f32.mrb[0].mxu0
        %436 = vmatprep.mubr.f32.mxu0 %v341
        %437 = vmatmul.mubr.f32.gmra.mrb[0].mxu0 %v319
        %v438 = vpop.f32.mrb[0].mxu0
        %v439 = vadd.f32 0.0, %v438
        %v440 = vpop.f32.mrb[0].mxu0
        %441 = vmatprep.mubr.f32.mxu0 %v344
        %442 = vmatmul.mubr.f32.gmra.mrb[0].mxu0 %v321
        %v443 = vpop.f32.mrb[0].mxu0
        %v444 = vadd.f32 0.0, %v443
        %v445 = vpop.f32.mrb[0].mxu0
        %446 = vmatprep.mubr.f32.mxu0 %v347
        %447 = vmatmul.mubr.f32.gmra.mrb[0].mxu0 %v323
        %v448 = vpop.f32.mrb[0].mxu0
        %v449 = vadd.f32 0.0, %v448
        %v450 = vpop.f32.mrb[0].mxu0
        %451 = vmatprep.mubr.f32.mxu0 %v350
        %452 = vmatmul.mubr.f32.gmra.mrb[0].mxu0 %v325
        %v453 = vpop.f32.mrb[0].mxu0
        %v454 = vadd.f32 0.0, %v453
        %v455 = vpop.f32.mrb[0].mxu0
        %456 = vdwg.mxu0
        %v458 = vsel %vm327, %v251, 0
        %v461 = vsel %vm327, %v253, 0
        %v464 = vsel %vm327, %v255, 0
        %v467 = vsel %vm327, %v257, 0
        %v470 = vsel %vm327, %v259, 0
        %v473 = vsel %vm327, %v261, 0
        %v476 = vsel %vm327, %v263, 0
        %v479 = vsel %vm327, %v265, 0
        %481 = vmatprep.subr.mxu0 0.0
        %482 = vmatpush1.msra.mxu0 %v225
        %483 = vmatprep.subr.mxu0 0.0
        %484 = vmatpush1.msra.mxu0 %v226
        %485 = vmatprep.subr.mxu0 0.0
        %486 = vmatpush1.msra.mxu0 %v227
        %487 = vmatprep.subr.mxu0 0.0
        %488 = vmatpush1.msra.mxu0 %v228
        %489 = vmatprep.subr.mxu0 0.0
        %490 = vmatpush1.msra.mxu0 %v229
        %491 = vmatprep.subr.mxu0 0.0
        %492 = vmatpush1.msra.mxu0 %v230
        %493 = vmatprep.subr.mxu0 0.0
        %494 = vmatpush1.msra.mxu0 %v231
        %495 = vmatprep.subr.mxu0 0.0
        %496 = vmatpush1.msra.mxu0 %v232
        %497 = vmatprep.subr.mxu0 0.0
        %498 = vmatpush1.msra.mxu0 %v233
        %499 = vmatprep.subr.mxu0 0.0
        %500 = vmatpush1.msra.mxu0 %v234
        %501 = vmatprep.subr.mxu0 0.0
        %502 = vmatpush1.msra.mxu0 %v235
        %503 = vmatprep.subr.mxu0 0.0
        %504 = vmatpush1.msra.mxu0 %v236
        %505 = vmatprep.subr.mxu0 0.0
        %506 = vmatpush1.msra.mxu0 %v237
        %507 = vmatprep.subr.mxu0 0.0
        %508 = vmatpush1.msra.mxu0 %v238
        %509 = vmatprep.subr.mxu0 0.0
        %510 = vmatpush1.msra.mxu0 %v239
        %511 = vmatprep.subr.mxu0 0.0
        %512 = vmatpush1.msra.mxu0 %v240
        %513 = vmatprep.subr.mxu0 0.0
        %514 = vmatpush1.msra.mxu0 %v241
        %515 = vmatprep.subr.mxu0 0.0
        %516 = vmatpush1.msra.mxu0 %v242
        %517 = vmatprep.subr.mxu0 0.0
        %518 = vmatpush1.msra.mxu0 %v243
        %519 = vmatprep.subr.mxu0 0.0
        %520 = vmatpush1.msra.mxu0 %v244
        %521 = vmatprep.subr.mxu0 0.0
        %522 = vmatpush1.msra.mxu0 0.0
        %523 = vmatprep.subr.mxu0 0.0
        %524 = vmatpush1.msra.mxu0 0.0
        %525 = vmatprep.subr.mxu0 0.0
        %526 = vmatpush1.msra.mxu0 0.0
        %527 = vmatprep.subr.mxu0 0.0
        %528 = vmatpush1.msra.mxu0 0.0
        %529 = vmatprep.subr.mxu0 0.0
        %530 = vmatpush1.msra.mxu0 0.0
        %531 = vmatprep.subr.mxu0 0.0
        %532 = vmatpush1.msra.mxu0 0.0
        %533 = vmatprep.subr.mxu0 0.0
        %534 = vmatpush1.msra.mxu0 0.0
        %535 = vmatprep.subr.mxu0 0.0
        %536 = vmatpush1.msra.mxu0 0.0
        %537 = vmatprep.subr.mxu0 0.0
        %538 = vmatpush1.msra.mxu0 0.0
        %539 = vmatprep.subr.mxu0 0.0
        %540 = vmatpush1.msra.mxu0 0.0
        %541 = vmatprep.subr.mxu0 0.0
        %542 = vmatpush1.msra.mxu0 0.0
        %543 = vmatprep.subr.mxu0 0.0
        %544 = vmatpush1.msra.mxu0 0.0
        %545 = vmatprep.mubr.f32.mxu0 %v458
        %546 = vmatmul.mubr.f32.gmra.mrb[0].mxu0 %v250
        %v547 = vpop.f32.mrb[0].mxu0
        %v548 = vadd.f32 %v419, %v547
        %v549 = vpop.f32.mrb[0].mxu0
        %550 = vmatprep.mubr.f32.mxu0 %v461
        %551 = vmatmul.mubr.f32.gmra.mrb[0].mxu0 %v252
        %v552 = vpop.f32.mrb[0].mxu0
        %v553 = vadd.f32 %v424, %v552
        %v554 = vpop.f32.mrb[0].mxu0
        %555 = vmatprep.mubr.f32.mxu0 %v464
        %556 = vmatmul.mubr.f32.gmra.mrb[0].mxu0 %v254
        %v557 = vpop.f32.mrb[0].mxu0
        %v558 = vadd.f32 %v429, %v557
        %v559 = vpop.f32.mrb[0].mxu0
        %560 = vmatprep.mubr.f32.mxu0 %v467
        %561 = vmatmul.mubr.f32.gmra.mrb[0].mxu0 %v256
        %v562 = vpop.f32.mrb[0].mxu0
        %v563 = vadd.f32 %v434, %v562
        %v564 = vpop.f32.mrb[0].mxu0
        %565 = vmatprep.mubr.f32.mxu0 %v470
        %566 = vmatmul.mubr.f32.gmra.mrb[0].mxu0 %v258
        %v567 = vpop.f32.mrb[0].mxu0
        %v568 = vadd.f32 %v439, %v567
        %v569 = vpop.f32.mrb[0].mxu0
        %570 = vmatprep.mubr.f32.mxu0 %v473
        %571 = vmatmul.mubr.f32.gmra.mrb[0].mxu0 %v260
        %v572 = vpop.f32.mrb[0].mxu0
        %v573 = vadd.f32 %v444, %v572
        %v574 = vpop.f32.mrb[0].mxu0
        %575 = vmatprep.mubr.f32.mxu0 %v476
        %576 = vmatmul.mubr.f32.gmra.mrb[0].mxu0 %v262
        %v577 = vpop.f32.mrb[0].mxu0
        %v578 = vadd.f32 %v449, %v577
        %v579 = vpop.f32.mrb[0].mxu0
        %580 = vmatprep.mubr.f32.mxu0 %v479
        %581 = vmatmul.mubr.f32.gmra.mrb[0].mxu0 %v264
        %v582 = vpop.f32.mrb[0].mxu0
        %v583 = vadd.f32 %v454, %v582
        %v584 = vpop.f32.mrb[0].mxu0
        %585 = vdwg.mxu0
        %s586 = smul.addr %s308, 8
        %s587 = scalar_lea.vmem %s212, %s586
        %v588 = vld [vmem:[%s587] sm:$0xff]
        %v589 = vld [vmem:[%s587 + $0x8] sm:$0xff]
        %v590 = vld [vmem:[%s587 + $0x10] sm:$0xff]
        %v591 = vld [vmem:[%s587 + $0x18] sm:$0xff]
        %v592 = vld [vmem:[%s587 + $0x20] sm:$0xff]
        %v593 = vld [vmem:[%s587 + $0x28] sm:$0xff]
        %v594 = vld [vmem:[%s587 + $0x30] sm:$0xff]
        %v595 = vld [vmem:[%s587 + $0x38] sm:$0xff]
        %v596 = vld [vmem:[%s587 + $0x40] sm:$0xff]
        %v597 = vld [vmem:[%s587 + $0x48] sm:$0xff]
        %v598 = vld [vmem:[%s587 + $0x50] sm:$0xff]
        %v599 = vld [vmem:[%s587 + $0x58] sm:$0xff]
        %v600 = vld [vmem:[%s587 + $0x60] sm:$0xff]
        %v601 = vld [vmem:[%s587 + $0x68] sm:$0xff]
        %v602 = vld [vmem:[%s587 + $0x70] sm:$0xff]
        %v603 = vld [vmem:[%s587 + $0x78] sm:$0xff]
        %v605 = vsel %vm327, %v589, 0
        %v608 = vsel %vm327, %v591, 0
        %v611 = vsel %vm327, %v593, 0
        %v614 = vsel %vm327, %v595, 0
        %v617 = vsel %vm327, %v597, 0
        %v620 = vsel %vm327, %v599, 0
        %v623 = vsel %vm327, %v601, 0
        %v626 = vsel %vm327, %v603, 0
        %628 = vmatprep.subr.mxu0 0.0
        %629 = vmatpush1.msra.mxu0 %v286
        %630 = vmatprep.subr.mxu0 0.0
        %631 = vmatpush1.msra.mxu0 %v287
        %632 = vmatprep.subr.mxu0 0.0
        %633 = vmatpush1.msra.mxu0 %v288
        %634 = vmatprep.subr.mxu0 0.0
        %635 = vmatpush1.msra.mxu0 %v289
        %636 = vmatprep.subr.mxu0 0.0
        %637 = vmatpush1.msra.mxu0 %v290
        %638 = vmatprep.subr.mxu0 0.0
        %639 = vmatpush1.msra.mxu0 %v291
        %640 = vmatprep.subr.mxu0 0.0
        %641 = vmatpush1.msra.mxu0 %v292
        %642 = vmatprep.subr.mxu0 0.0
        %643 = vmatpush1.msra.mxu0 %v293
        %644 = vmatprep.subr.mxu0 0.0
        %645 = vmatpush1.msra.mxu0 %v294
        %646 = vmatprep.subr.mxu0 0.0
        %647 = vmatpush1.msra.mxu0 %v295
        %648 = vmatprep.subr.mxu0 0.0
        %649 = vmatpush1.msra.mxu0 %v296
        %650 = vmatprep.subr.mxu0 0.0
        %651 = vmatpush1.msra.mxu0 %v297
        %652 = vmatprep.subr.mxu0 0.0
        %653 = vmatpush1.msra.mxu0 %v298
        %654 = vmatprep.subr.mxu0 0.0
        %655 = vmatpush1.msra.mxu0 %v299
        %656 = vmatprep.subr.mxu0 0.0
        %657 = vmatpush1.msra.mxu0 %v300
        %658 = vmatprep.subr.mxu0 0.0
        %659 = vmatpush1.msra.mxu0 %v301
        %660 = vmatprep.subr.mxu0 0.0
        %661 = vmatpush1.msra.mxu0 %v302
        %662 = vmatprep.subr.mxu0 0.0
        %663 = vmatpush1.msra.mxu0 %v303
        %664 = vmatprep.subr.mxu0 0.0
        %665 = vmatpush1.msra.mxu0 %v304
        %666 = vmatprep.subr.mxu0 0.0
        %667 = vmatpush1.msra.mxu0 %v305
        %668 = vmatprep.subr.mxu0 0.0
        %669 = vmatpush1.msra.mxu0 0.0
        %670 = vmatprep.subr.mxu0 0.0
        %671 = vmatpush1.msra.mxu0 0.0
        %672 = vmatprep.subr.mxu0 0.0
        %673 = vmatpush1.msra.mxu0 0.0
        %674 = vmatprep.subr.mxu0 0.0
        %675 = vmatpush1.msra.mxu0 0.0
        %676 = vmatprep.subr.mxu0 0.0
        %677 = vmatpush1.msra.mxu0 0.0
        %678 = vmatprep.subr.mxu0 0.0
        %679 = vmatpush1.msra.mxu0 0.0
        %680 = vmatprep.subr.mxu0 0.0
        %681 = vmatpush1.msra.mxu0 0.0
        %682 = vmatprep.subr.mxu0 0.0
        %683 = vmatpush1.msra.mxu0 0.0
        %684 = vmatprep.subr.mxu0 0.0
        %685 = vmatpush1.msra.mxu0 0.0
        %686 = vmatprep.subr.mxu0 0.0
        %687 = vmatpush1.msra.mxu0 0.0
        %688 = vmatprep.subr.mxu0 0.0
        %689 = vmatpush1.msra.mxu0 0.0
        %690 = vmatprep.subr.mxu0 0.0
        %691 = vmatpush1.msra.mxu0 0.0
        %692 = vmatprep.mubr.f32.mxu0 %v605
        %693 = vmatmul.mubr.f32.gmra.mrb[0].mxu0 %v588
        %v694 = vpop.f32.mrb[0].mxu0
        %v695 = vadd.f32 0.0, %v694
        %v696 = vpop.f32.mrb[0].mxu0
        %697 = vmatprep.mubr.f32.mxu0 %v608
        %698 = vmatmul.mubr.f32.gmra.mrb[0].mxu0 %v590
        %v699 = vpop.f32.mrb[0].mxu0
        %v700 = vadd.f32 0.0, %v699
        %v701 = vpop.f32.mrb[0].mxu0
        %702 = vmatprep.mubr.f32.mxu0 %v611
        %703 = vmatmul.mubr.f32.gmra.mrb[0].mxu0 %v592
        %v704 = vpop.f32.mrb[0].mxu0
        %v705 = vadd.f32 0.0, %v704
        %v706 = vpop.f32.mrb[0].mxu0
        %707 = vmatprep.mubr.f32.mxu0 %v614
        %708 = vmatmul.mubr.f32.gmra.mrb[0].mxu0 %v594
        %v709 = vpop.f32.mrb[0].mxu0
        %v710 = vadd.f32 0.0, %v709
        %v711 = vpop.f32.mrb[0].mxu0
        %712 = vmatprep.mubr.f32.mxu0 %v617
        %713 = vmatmul.mubr.f32.gmra.mrb[0].mxu0 %v596
        %v714 = vpop.f32.mrb[0].mxu0
        %v715 = vadd.f32 0.0, %v714
        %v716 = vpop.f32.mrb[0].mxu0
        %717 = vmatprep.mubr.f32.mxu0 %v620
        %718 = vmatmul.mubr.f32.gmra.mrb[0].mxu0 %v598
        %v719 = vpop.f32.mrb[0].mxu0
        %v720 = vadd.f32 0.0, %v719
        %v721 = vpop.f32.mrb[0].mxu0
        %722 = vmatprep.mubr.f32.mxu0 %v623
        %723 = vmatmul.mubr.f32.gmra.mrb[0].mxu0 %v600
        %v724 = vpop.f32.mrb[0].mxu0
        %v725 = vadd.f32 0.0, %v724
        %v726 = vpop.f32.mrb[0].mxu0
        %727 = vmatprep.mubr.f32.mxu0 %v626
        %728 = vmatmul.mubr.f32.gmra.mrb[0].mxu0 %v602
        %v729 = vpop.f32.mrb[0].mxu0
        %v730 = vadd.f32 0.0, %v729
        %v731 = vpop.f32.mrb[0].mxu0
        %732 = vdwg.mxu0
        %v734 = vsel %vm327, %v269, 0
        %v737 = vsel %vm327, %v271, 0
        %v740 = vsel %vm327, %v273, 0
        %v743 = vsel %vm327, %v275, 0
        %v746 = vsel %vm327, %v277, 0
        %v749 = vsel %vm327, %v279, 0
        %v752 = vsel %vm327, %v281, 0
        %v755 = vsel %vm327, %v283, 0
        %757 = vmatprep.subr.mxu0 0.0
        %758 = vmatpush1.msra.mxu0 %v225
        %759 = vmatprep.subr.mxu0 0.0
        %760 = vmatpush1.msra.mxu0 %v226
        %761 = vmatprep.subr.mxu0 0.0
        %762 = vmatpush1.msra.mxu0 %v227
        %763 = vmatprep.subr.mxu0 0.0
        %764 = vmatpush1.msra.mxu0 %v228
        %765 = vmatprep.subr.mxu0 0.0
        %766 = vmatpush1.msra.mxu0 %v229
        %767 = vmatprep.subr.mxu0 0.0
        %768 = vmatpush1.msra.mxu0 %v230
        %769 = vmatprep.subr.mxu0 0.0
        %770 = vmatpush1.msra.mxu0 %v231
        %771 = vmatprep.subr.mxu0 0.0
        %772 = vmatpush1.msra.mxu0 %v232
        %773 = vmatprep.subr.mxu0 0.0
        %774 = vmatpush1.msra.mxu0 %v233
        %775 = vmatprep.subr.mxu0 0.0
        %776 = vmatpush1.msra.mxu0 %v234
        %777 = vmatprep.subr.mxu0 0.0
        %778 = vmatpush1.msra.mxu0 %v235
        %779 = vmatprep.subr.mxu0 0.0
        %780 = vmatpush1.msra.mxu0 %v236
        %781 = vmatprep.subr.mxu0 0.0
        %782 = vmatpush1.msra.mxu0 %v237
        %783 = vmatprep.subr.mxu0 0.0
        %784 = vmatpush1.msra.mxu0 %v238
        %785 = vmatprep.subr.mxu0 0.0
        %786 = vmatpush1.msra.mxu0 %v239
        %787 = vmatprep.subr.mxu0 0.0
        %788 = vmatpush1.msra.mxu0 %v240
        %789 = vmatprep.subr.mxu0 0.0
        %790 = vmatpush1.msra.mxu0 %v241
        %791 = vmatprep.subr.mxu0 0.0
        %792 = vmatpush1.msra.mxu0 %v242
        %793 = vmatprep.subr.mxu0 0.0
        %794 = vmatpush1.msra.mxu0 %v243
        %795 = vmatprep.subr.mxu0 0.0
        %796 = vmatpush1.msra.mxu0 %v244
        %797 = vmatprep.subr.mxu0 0.0
        %798 = vmatpush1.msra.mxu0 0.0
        %799 = vmatprep.subr.mxu0 0.0
        %800 = vmatpush1.msra.mxu0 0.0
        %801 = vmatprep.subr.mxu0 0.0
        %802 = vmatpush1.msra.mxu0 0.0
        %803 = vmatprep.subr.mxu0 0.0
        %804 = vmatpush1.msra.mxu0 0.0
        %805 = vmatprep.subr.mxu0 0.0
        %806 = vmatpush1.msra.mxu0 0.0
        %807 = vmatprep.subr.mxu0 0.0
        %808 = vmatpush1.msra.mxu0 0.0
        %809 = vmatprep.subr.mxu0 0.0
        %810 = vmatpush1.msra.mxu0 0.0
        %811 = vmatprep.subr.mxu0 0.0
        %812 = vmatpush1.msra.mxu0 0.0
        %813 = vmatprep.subr.mxu0 0.0
        %814 = vmatpush1.msra.mxu0 0.0
        %815 = vmatprep.subr.mxu0 0.0
        %816 = vmatpush1.msra.mxu0 0.0
        %817 = vmatprep.subr.mxu0 0.0
        %818 = vmatpush1.msra.mxu0 0.0
        %819 = vmatprep.subr.mxu0 0.0
        %820 = vmatpush1.msra.mxu0 0.0
        %821 = vmatprep.mubr.f32.mxu0 %v734
        %822 = vmatmul.mubr.f32.gmra.mrb[0].mxu0 %v268
        %v823 = vpop.f32.mrb[0].mxu0
        %v824 = vadd.f32 %v695, %v823
        %v825 = vpop.f32.mrb[0].mxu0
        %826 = vmatprep.mubr.f32.mxu0 %v737
        %827 = vmatmul.mubr.f32.gmra.mrb[0].mxu0 %v270
        %v828 = vpop.f32.mrb[0].mxu0
        %v829 = vadd.f32 %v700, %v828
        %v830 = vpop.f32.mrb[0].mxu0
        %831 = vmatprep.mubr.f32.mxu0 %v740
        %832 = vmatmul.mubr.f32.gmra.mrb[0].mxu0 %v272
        %v833 = vpop.f32.mrb[0].mxu0
        %v834 = vadd.f32 %v705, %v833
        %v835 = vpop.f32.mrb[0].mxu0
        %836 = vmatprep.mubr.f32.mxu0 %v743
        %837 = vmatmul.mubr.f32.gmra.mrb[0].mxu0 %v274
        %v838 = vpop.f32.mrb[0].mxu0
        %v839 = vadd.f32 %v710, %v838
        %v840 = vpop.f32.mrb[0].mxu0
        %841 = vmatprep.mubr.f32.mxu0 %v746
        %842 = vmatmul.mubr.f32.gmra.mrb[0].mxu0 %v276
        %v843 = vpop.f32.mrb[0].mxu0
        %v844 = vadd.f32 %v715, %v843
        %v845 = vpop.f32.mrb[0].mxu0
        %846 = vmatprep.mubr.f32.mxu0 %v749
        %847 = vmatmul.mubr.f32.gmra.mrb[0].mxu0 %v278
        %v848 = vpop.f32.mrb[0].mxu0
        %v849 = vadd.f32 %v720, %v848
        %v850 = vpop.f32.mrb[0].mxu0
        %851 = vmatprep.mubr.f32.mxu0 %v752
        %852 = vmatmul.mubr.f32.gmra.mrb[0].mxu0 %v280
        %v853 = vpop.f32.mrb[0].mxu0
        %v854 = vadd.f32 %v725, %v853
        %v855 = vpop.f32.mrb[0].mxu0
        %856 = vmatprep.mubr.f32.mxu0 %v755
        %857 = vmatmul.mubr.f32.gmra.mrb[0].mxu0 %v282
        %v858 = vpop.f32.mrb[0].mxu0
        %v859 = vadd.f32 %v730, %v858
        %v860 = vpop.f32.mrb[0].mxu0
        %861 = vdwg.mxu0
        %s862 = sadd.s32 %s224, 16
        %s863 = scalar_lea.vmem %s2, 320
        %v864 = vld [vmem:[%s863] sm:$0xff]
        %v865 = vld [vmem:[%s863 + $0x8] sm:$0xff]
        %v866 = vld [vmem:[%s863 + $0x10] sm:$0xff]
        %v867 = vld [vmem:[%s863 + $0x18] sm:$0xff]
        %v868 = vld [vmem:[%s863 + $0x20] sm:$0xff]
        %v869 = vld [vmem:[%s863 + $0x28] sm:$0xff]
        %v870 = vld [vmem:[%s863 + $0x30] sm:$0xff]
        %v871 = vld [vmem:[%s863 + $0x38] sm:$0xff]
        %v872 = vld [vmem:[%s863 + $0x40] sm:$0xff]
        %v873 = vld [vmem:[%s863 + $0x48] sm:$0xff]
        %v874 = vld [vmem:[%s863 + $0x50] sm:$0xff]
        %v875 = vld [vmem:[%s863 + $0x58] sm:$0xff]
        %v876 = vld [vmem:[%s863 + $0x60] sm:$0xff]
        %v877 = vld [vmem:[%s863 + $0x68] sm:$0xff]
        %v878 = vld [vmem:[%s863 + $0x70] sm:$0xff]
        %v879 = vld [vmem:[%s863 + $0x78] sm:$0xff]
        %v880 = vld [vmem:[%s863 + $0x80] sm:$0xff]
        %v881 = vld [vmem:[%s863 + $0x88] sm:$0xff]
        %v882 = vld [vmem:[%s863 + $0x90] sm:$0xff]
        %v883 = vld [vmem:[%s863 + $0x98] sm:$0xff]
        %s884 = sshra.s32 %s862, 3
        %s885 = sand.u32 %s862, 7
        %s886 = smul.u32 %s884, 2
        %s887 = smul.addr %s886, 8
        %s888 = scalar_lea.vmem %s207, %s887
        %v889 = vld [vmem:[%s888] sm:$0xff]
        %v890 = vld [vmem:[%s888 + $0x8] sm:$0xff]
        %v891 = vld [vmem:[%s888 + $0x10] sm:$0xff]
        %v892 = vld [vmem:[%s888 + $0x18] sm:$0xff]
        %v893 = vld [vmem:[%s888 + $0x20] sm:$0xff]
        %v894 = vld [vmem:[%s888 + $0x28] sm:$0xff]
        %v895 = vld [vmem:[%s888 + $0x30] sm:$0xff]
        %v896 = vld [vmem:[%s888 + $0x38] sm:$0xff]
        %v897 = vld [vmem:[%s888 + $0x40] sm:$0xff]
        %v898 = vld [vmem:[%s888 + $0x48] sm:$0xff]
        %v899 = vld [vmem:[%s888 + $0x50] sm:$0xff]
        %v900 = vld [vmem:[%s888 + $0x58] sm:$0xff]
        %v901 = vld [vmem:[%s888 + $0x60] sm:$0xff]
        %v902 = vld [vmem:[%s888 + $0x68] sm:$0xff]
        %v903 = vld [vmem:[%s888 + $0x70] sm:$0xff]
        %v904 = vld [vmem:[%s888 + $0x78] sm:$0xff]
        %v906 = vsel %vm327, %v890, 0
        %v909 = vsel %vm327, %v892, 0
        %v912 = vsel %vm327, %v894, 0
        %v915 = vsel %vm327, %v896, 0
        %v918 = vsel %vm327, %v898, 0
        %v921 = vsel %vm327, %v900, 0
        %v924 = vsel %vm327, %v902, 0
        %v927 = vsel %vm327, %v904, 0
        %929 = vmatprep.subr.mxu0 0.0
        %930 = vmatpush1.msra.mxu0 %v864
        %931 = vmatprep.subr.mxu0 0.0
        %932 = vmatpush1.msra.mxu0 %v865
        %933 = vmatprep.subr.mxu0 0.0
        %934 = vmatpush1.msra.mxu0 %v866
        %935 = vmatprep.subr.mxu0 0.0
        %936 = vmatpush1.msra.mxu0 %v867
        %937 = vmatprep.subr.mxu0 0.0
        %938 = vmatpush1.msra.mxu0 %v868
        %939 = vmatprep.subr.mxu0 0.0
        %940 = vmatpush1.msra.mxu0 %v869
        %941 = vmatprep.subr.mxu0 0.0
        %942 = vmatpush1.msra.mxu0 %v870
        %943 = vmatprep.subr.mxu0 0.0
        %944 = vmatpush1.msra.mxu0 %v871
        %945 = vmatprep.subr.mxu0 0.0
        %946 = vmatpush1.msra.mxu0 %v872
        %947 = vmatprep.subr.mxu0 0.0
        %948 = vmatpush1.msra.mxu0 %v873
        %949 = vmatprep.subr.mxu0 0.0
        %950 = vmatpush1.msra.mxu0 %v874
        %951 = vmatprep.subr.mxu0 0.0
        %952 = vmatpush1.msra.mxu0 %v875
        %953 = vmatprep.subr.mxu0 0.0
        %954 = vmatpush1.msra.mxu0 %v876
        %955 = vmatprep.subr.mxu0 0.0
        %956 = vmatpush1.msra.mxu0 %v877
        %957 = vmatprep.subr.mxu0 0.0
        %958 = vmatpush1.msra.mxu0 %v878
        %959 = vmatprep.subr.mxu0 0.0
        %960 = vmatpush1.msra.mxu0 %v879
        %961 = vmatprep.subr.mxu0 0.0
        %962 = vmatpush1.msra.mxu0 %v880
        %963 = vmatprep.subr.mxu0 0.0
        %964 = vmatpush1.msra.mxu0 %v881
        %965 = vmatprep.subr.mxu0 0.0
        %966 = vmatpush1.msra.mxu0 %v882
        %967 = vmatprep.subr.mxu0 0.0
        %968 = vmatpush1.msra.mxu0 %v883
        %969 = vmatprep.subr.mxu0 0.0
        %970 = vmatpush1.msra.mxu0 0.0
        %971 = vmatprep.subr.mxu0 0.0
        %972 = vmatpush1.msra.mxu0 0.0
        %973 = vmatprep.subr.mxu0 0.0
        %974 = vmatpush1.msra.mxu0 0.0
        %975 = vmatprep.subr.mxu0 0.0
        %976 = vmatpush1.msra.mxu0 0.0
        %977 = vmatprep.subr.mxu0 0.0
        %978 = vmatpush1.msra.mxu0 0.0
        %979 = vmatprep.subr.mxu0 0.0
        %980 = vmatpush1.msra.mxu0 0.0
        %981 = vmatprep.subr.mxu0 0.0
        %982 = vmatpush1.msra.mxu0 0.0
        %983 = vmatprep.subr.mxu0 0.0
        %984 = vmatpush1.msra.mxu0 0.0
        %985 = vmatprep.subr.mxu0 0.0
        %986 = vmatpush1.msra.mxu0 0.0
        %987 = vmatprep.subr.mxu0 0.0
        %988 = vmatpush1.msra.mxu0 0.0
        %989 = vmatprep.subr.mxu0 0.0
        %990 = vmatpush1.msra.mxu0 0.0
        %991 = vmatprep.subr.mxu0 0.0
        %992 = vmatpush1.msra.mxu0 0.0
        %993 = vmatprep.mubr.f32.mxu0 %v906
        %994 = vmatmul.mubr.f32.gmra.mrb[0].mxu0 %v889
        %v995 = vpop.f32.mrb[0].mxu0
        %v996 = vadd.f32 0.0, %v995
        %v997 = vpop.f32.mrb[0].mxu0
        %998 = vmatprep.mubr.f32.mxu0 %v909
        %999 = vmatmul.mubr.f32.gmra.mrb[0].mxu0 %v891
        %v1000 = vpop.f32.mrb[0].mxu0
        %v1001 = vadd.f32 0.0, %v1000
        %v1002 = vpop.f32.mrb[0].mxu0
        %1003 = vmatprep.mubr.f32.mxu0 %v912
        %1004 = vmatmul.mubr.f32.gmra.mrb[0].mxu0 %v893
        %v1005 = vpop.f32.mrb[0].mxu0
        %v1006 = vadd.f32 0.0, %v1005
        %v1007 = vpop.f32.mrb[0].mxu0
        %1008 = vmatprep.mubr.f32.mxu0 %v915
        %1009 = vmatmul.mubr.f32.gmra.mrb[0].mxu0 %v895
        %v1010 = vpop.f32.mrb[0].mxu0
        %v1011 = vadd.f32 0.0, %v1010
        %v1012 = vpop.f32.mrb[0].mxu0
        %1013 = vmatprep.mubr.f32.mxu0 %v918
        %1014 = vmatmul.mubr.f32.gmra.mrb[0].mxu0 %v897
        %v1015 = vpop.f32.mrb[0].mxu0
        %v1016 = vadd.f32 0.0, %v1015
        %v1017 = vpop.f32.mrb[0].mxu0
        %1018 = vmatprep.mubr.f32.mxu0 %v921
        %1019 = vmatmul.mubr.f32.gmra.mrb[0].mxu0 %v899
        %v1020 = vpop.f32.mrb[0].mxu0
        %v1021 = vadd.f32 0.0, %v1020
        %v1022 = vpop.f32.mrb[0].mxu0
        %1023 = vmatprep.mubr.f32.mxu0 %v924
        %1024 = vmatmul.mubr.f32.gmra.mrb[0].mxu0 %v901
        %v1025 = vpop.f32.mrb[0].mxu0
        %v1026 = vadd.f32 0.0, %v1025
        %v1027 = vpop.f32.mrb[0].mxu0
        %1028 = vmatprep.mubr.f32.mxu0 %v927
        %1029 = vmatmul.mubr.f32.gmra.mrb[0].mxu0 %v903
        %v1030 = vpop.f32.mrb[0].mxu0
        %v1031 = vadd.f32 0.0, %v1030
        %v1032 = vpop.f32.mrb[0].mxu0
        %1033 = vdwg.mxu0
        %v1034 = vadd.f32 %v548, %v996
        %v1035 = vadd.f32 %v553, %v1001
        %v1036 = vadd.f32 %v558, %v1006
        %v1037 = vadd.f32 %v563, %v1011
        %v1038 = vadd.f32 %v568, %v1016
        %v1039 = vadd.f32 %v573, %v1021
        %v1040 = vadd.f32 %v578, %v1026
        %v1041 = vadd.f32 %v583, %v1031
        %s1042 = smul.addr %s886, 8
        %s1043 = scalar_lea.vmem %s212, %s1042
        %v1044 = vld [vmem:[%s1043] sm:$0xff]
        %v1045 = vld [vmem:[%s1043 + $0x8] sm:$0xff]
        %v1046 = vld [vmem:[%s1043 + $0x10] sm:$0xff]
        %v1047 = vld [vmem:[%s1043 + $0x18] sm:$0xff]
        %v1048 = vld [vmem:[%s1043 + $0x20] sm:$0xff]
        %v1049 = vld [vmem:[%s1043 + $0x28] sm:$0xff]
        %v1050 = vld [vmem:[%s1043 + $0x30] sm:$0xff]
        %v1051 = vld [vmem:[%s1043 + $0x38] sm:$0xff]
        %v1052 = vld [vmem:[%s1043 + $0x40] sm:$0xff]
        %v1053 = vld [vmem:[%s1043 + $0x48] sm:$0xff]
        %v1054 = vld [vmem:[%s1043 + $0x50] sm:$0xff]
        %v1055 = vld [vmem:[%s1043 + $0x58] sm:$0xff]
        %v1056 = vld [vmem:[%s1043 + $0x60] sm:$0xff]
        %v1057 = vld [vmem:[%s1043 + $0x68] sm:$0xff]
        %v1058 = vld [vmem:[%s1043 + $0x70] sm:$0xff]
        %v1059 = vld [vmem:[%s1043 + $0x78] sm:$0xff]
        %v1061 = vsel %vm327, %v1045, 0
        %v1064 = vsel %vm327, %v1047, 0
        %v1067 = vsel %vm327, %v1049, 0
        %v1070 = vsel %vm327, %v1051, 0
        %v1073 = vsel %vm327, %v1053, 0
        %v1076 = vsel %vm327, %v1055, 0
        %v1079 = vsel %vm327, %v1057, 0
        %v1082 = vsel %vm327, %v1059, 0
        %1084 = vmatprep.subr.mxu0 0.0
        %1085 = vmatpush1.msra.mxu0 %v864
        %1086 = vmatprep.subr.mxu0 0.0
        %1087 = vmatpush1.msra.mxu0 %v865
        %1088 = vmatprep.subr.mxu0 0.0
        %1089 = vmatpush1.msra.mxu0 %v866
        %1090 = vmatprep.subr.mxu0 0.0
        %1091 = vmatpush1.msra.mxu0 %v867
        %1092 = vmatprep.subr.mxu0 0.0
        %1093 = vmatpush1.msra.mxu0 %v868
        %1094 = vmatprep.subr.mxu0 0.0
        %1095 = vmatpush1.msra.mxu0 %v869
        %1096 = vmatprep.subr.mxu0 0.0
        %1097 = vmatpush1.msra.mxu0 %v870
        %1098 = vmatprep.subr.mxu0 0.0
        %1099 = vmatpush1.msra.mxu0 %v871
        %1100 = vmatprep.subr.mxu0 0.0
        %1101 = vmatpush1.msra.mxu0 %v872
        %1102 = vmatprep.subr.mxu0 0.0
        %1103 = vmatpush1.msra.mxu0 %v873
        %1104 = vmatprep.subr.mxu0 0.0
        %1105 = vmatpush1.msra.mxu0 %v874
        %1106 = vmatprep.subr.mxu0 0.0
        %1107 = vmatpush1.msra.mxu0 %v875
        %1108 = vmatprep.subr.mxu0 0.0
        %1109 = vmatpush1.msra.mxu0 %v876
        %1110 = vmatprep.subr.mxu0 0.0
        %1111 = vmatpush1.msra.mxu0 %v877
        %1112 = vmatprep.subr.mxu0 0.0
        %1113 = vmatpush1.msra.mxu0 %v878
        %1114 = vmatprep.subr.mxu0 0.0
        %1115 = vmatpush1.msra.mxu0 %v879
        %1116 = vmatprep.subr.mxu0 0.0
        %1117 = vmatpush1.msra.mxu0 %v880
        %1118 = vmatprep.subr.mxu0 0.0
        %1119 = vmatpush1.msra.mxu0 %v881
        %1120 = vmatprep.subr.mxu0 0.0
        %1121 = vmatpush1.msra.mxu0 %v882
        %1122 = vmatprep.subr.mxu0 0.0
        %1123 = vmatpush1.msra.mxu0 %v883
        %1124 = vmatprep.subr.mxu0 0.0
        %1125 = vmatpush1.msra.mxu0 0.0
        %1126 = vmatprep.subr.mxu0 0.0
        %1127 = vmatpush1.msra.mxu0 0.0
        %1128 = vmatprep.subr.mxu0 0.0
        %1129 = vmatpush1.msra.mxu0 0.0
        %1130 = vmatprep.subr.mxu0 0.0
        %1131 = vmatpush1.msra.mxu0 0.0
        %1132 = vmatprep.subr.mxu0 0.0
        %1133 = vmatpush1.msra.mxu0 0.0
        %1134 = vmatprep.subr.mxu0 0.0
        %1135 = vmatpush1.msra.mxu0 0.0
        %1136 = vmatprep.subr.mxu0 0.0
        %1137 = vmatpush1.msra.mxu0 0.0
        %1138 = vmatprep.subr.mxu0 0.0
        %1139 = vmatpush1.msra.mxu0 0.0
        %1140 = vmatprep.subr.mxu0 0.0
        %1141 = vmatpush1.msra.mxu0 0.0
        %1142 = vmatprep.subr.mxu0 0.0
        %1143 = vmatpush1.msra.mxu0 0.0
        %1144 = vmatprep.subr.mxu0 0.0
        %1145 = vmatpush1.msra.mxu0 0.0
        %1146 = vmatprep.subr.mxu0 0.0
        %1147 = vmatpush1.msra.mxu0 0.0
        %1148 = vmatprep.mubr.f32.mxu0 %v1061
        %1149 = vmatmul.mubr.f32.gmra.mrb[0].mxu0 %v1044
        %v1150 = vpop.f32.mrb[0].mxu0
        %v1151 = vadd.f32 0.0, %v1150
        %v1152 = vpop.f32.mrb[0].mxu0
        %1153 = vmatprep.mubr.f32.mxu0 %v1064
        %1154 = vmatmul.mubr.f32.gmra.mrb[0].mxu0 %v1046
        %v1155 = vpop.f32.mrb[0].mxu0
        %v1156 = vadd.f32 0.0, %v1155
        %v1157 = vpop.f32.mrb[0].mxu0
        %1158 = vmatprep.mubr.f32.mxu0 %v1067
        %1159 = vmatmul.mubr.f32.gmra.mrb[0].mxu0 %v1048
        %v1160 = vpop.f32.mrb[0].mxu0
        %v1161 = vadd.f32 0.0, %v1160
        %v1162 = vpop.f32.mrb[0].mxu0
        %1163 = vmatprep.mubr.f32.mxu0 %v1070
        %1164 = vmatmul.mubr.f32.gmra.mrb[0].mxu0 %v1050
        %v1165 = vpop.f32.mrb[0].mxu0
        %v1166 = vadd.f32 0.0, %v1165
        %v1167 = vpop.f32.mrb[0].mxu0
        %1168 = vmatprep.mubr.f32.mxu0 %v1073
        %1169 = vmatmul.mubr.f32.gmra.mrb[0].mxu0 %v1052
        %v1170 = vpop.f32.mrb[0].mxu0
        %v1171 = vadd.f32 0.0, %v1170
        %v1172 = vpop.f32.mrb[0].mxu0
        %1173 = vmatprep.mubr.f32.mxu0 %v1076
        %1174 = vmatmul.mubr.f32.gmra.mrb[0].mxu0 %v1054
        %v1175 = vpop.f32.mrb[0].mxu0
        %v1176 = vadd.f32 0.0, %v1175
        %v1177 = vpop.f32.mrb[0].mxu0
        %1178 = vmatprep.mubr.f32.mxu0 %v1079
        %1179 = vmatmul.mubr.f32.gmra.mrb[0].mxu0 %v1056
        %v1180 = vpop.f32.mrb[0].mxu0
        %v1181 = vadd.f32 0.0, %v1180
        %v1182 = vpop.f32.mrb[0].mxu0
        %1183 = vmatprep.mubr.f32.mxu0 %v1082
        %1184 = vmatmul.mubr.f32.gmra.mrb[0].mxu0 %v1058
        %v1185 = vpop.f32.mrb[0].mxu0
        %v1186 = vadd.f32 0.0, %v1185
        %v1187 = vpop.f32.mrb[0].mxu0
        %1188 = vdwg.mxu0
        %v1189 = vadd.f32 %v824, %v1151
        %v1190 = vadd.f32 %v829, %v1156
        %v1191 = vadd.f32 %v834, %v1161
        %v1192 = vadd.f32 %v839, %v1166
        %v1193 = vadd.f32 %v844, %v1171
        %v1194 = vadd.f32 %v849, %v1176
        %v1195 = vadd.f32 %v854, %v1181
        %v1196 = vadd.f32 %v859, %v1186
        %s1197 = sadd.s32 %s224, 24
        %s1198 = scalar_lea.vmem %s2, 480
        %v1199 = vld [vmem:[%s1198] sm:$0xff]
        %v1200 = vld [vmem:[%s1198 + $0x8] sm:$0xff]
        %v1201 = vld [vmem:[%s1198 + $0x10] sm:$0xff]
        %v1202 = vld [vmem:[%s1198 + $0x18] sm:$0xff]
        %v1203 = vld [vmem:[%s1198 + $0x20] sm:$0xff]
        %v1204 = vld [vmem:[%s1198 + $0x28] sm:$0xff]
        %v1205 = vld [vmem:[%s1198 + $0x30] sm:$0xff]
        %v1206 = vld [vmem:[%s1198 + $0x38] sm:$0xff]
        %v1207 = vld [vmem:[%s1198 + $0x40] sm:$0xff]
        %v1208 = vld [vmem:[%s1198 + $0x48] sm:$0xff]
        %v1209 = vld [vmem:[%s1198 + $0x50] sm:$0xff]
        %v1210 = vld [vmem:[%s1198 + $0x58] sm:$0xff]
        %v1211 = vld [vmem:[%s1198 + $0x60] sm:$0xff]
        %v1212 = vld [vmem:[%s1198 + $0x68] sm:$0xff]
        %v1213 = vld [vmem:[%s1198 + $0x70] sm:$0xff]
        %v1214 = vld [vmem:[%s1198 + $0x78] sm:$0xff]
        %v1215 = vld [vmem:[%s1198 + $0x80] sm:$0xff]
        %v1216 = vld [vmem:[%s1198 + $0x88] sm:$0xff]
        %v1217 = vld [vmem:[%s1198 + $0x90] sm:$0xff]
        %v1218 = vld [vmem:[%s1198 + $0x98] sm:$0xff]
        %s1219 = sshra.s32 %s1197, 3
        %s1220 = sand.u32 %s1197, 7
        %s1221 = smul.u32 %s1219, 2
        %s1222 = smul.addr %s1221, 8
        %s1223 = scalar_lea.vmem %s207, %s1222
        %v1224 = vld [vmem:[%s1223] sm:$0xff]
        %v1225 = vld [vmem:[%s1223 + $0x8] sm:$0xff]
        %v1226 = vld [vmem:[%s1223 + $0x10] sm:$0xff]
        %v1227 = vld [vmem:[%s1223 + $0x18] sm:$0xff]
        %v1228 = vld [vmem:[%s1223 + $0x20] sm:$0xff]
        %v1229 = vld [vmem:[%s1223 + $0x28] sm:$0xff]
        %v1230 = vld [vmem:[%s1223 + $0x30] sm:$0xff]
        %v1231 = vld [vmem:[%s1223 + $0x38] sm:$0xff]
        %v1232 = vld [vmem:[%s1223 + $0x40] sm:$0xff]
        %v1233 = vld [vmem:[%s1223 + $0x48] sm:$0xff]
        %v1234 = vld [vmem:[%s1223 + $0x50] sm:$0xff]
        %v1235 = vld [vmem:[%s1223 + $0x58] sm:$0xff]
        %v1236 = vld [vmem:[%s1223 + $0x60] sm:$0xff]
        %v1237 = vld [vmem:[%s1223 + $0x68] sm:$0xff]
        %v1238 = vld [vmem:[%s1223 + $0x70] sm:$0xff]
        %v1239 = vld [vmem:[%s1223 + $0x78] sm:$0xff]
        %v1241 = vsel %vm327, %v1225, 0
        %v1244 = vsel %vm327, %v1227, 0
        %v1247 = vsel %vm327, %v1229, 0
        %v1250 = vsel %vm327, %v1231, 0
        %v1253 = vsel %vm327, %v1233, 0
        %v1256 = vsel %vm327, %v1235, 0
        %v1259 = vsel %vm327, %v1237, 0
        %v1262 = vsel %vm327, %v1239, 0
        %1264 = vmatprep.subr.mxu0 0.0
        %1265 = vmatpush1.msra.mxu0 %v1199
        %1266 = vmatprep.subr.mxu0 0.0
        %1267 = vmatpush1.msra.mxu0 %v1200
        %1268 = vmatprep.subr.mxu0 0.0
        %1269 = vmatpush1.msra.mxu0 %v1201
        %1270 = vmatprep.subr.mxu0 0.0
        %1271 = vmatpush1.msra.mxu0 %v1202
        %1272 = vmatprep.subr.mxu0 0.0
        %1273 = vmatpush1.msra.mxu0 %v1203
        %1274 = vmatprep.subr.mxu0 0.0
        %1275 = vmatpush1.msra.mxu0 %v1204
        %1276 = vmatprep.subr.mxu0 0.0
        %1277 = vmatpush1.msra.mxu0 %v1205
        %1278 = vmatprep.subr.mxu0 0.0
        %1279 = vmatpush1.msra.mxu0 %v1206
        %1280 = vmatprep.subr.mxu0 0.0
        %1281 = vmatpush1.msra.mxu0 %v1207
        %1282 = vmatprep.subr.mxu0 0.0
        %1283 = vmatpush1.msra.mxu0 %v1208
        %1284 = vmatprep.subr.mxu0 0.0
        %1285 = vmatpush1.msra.mxu0 %v1209
        %1286 = vmatprep.subr.mxu0 0.0
        %1287 = vmatpush1.msra.mxu0 %v1210
        %1288 = vmatprep.subr.mxu0 0.0
        %1289 = vmatpush1.msra.mxu0 %v1211
        %1290 = vmatprep.subr.mxu0 0.0
        %1291 = vmatpush1.msra.mxu0 %v1212
        %1292 = vmatprep.subr.mxu0 0.0
        %1293 = vmatpush1.msra.mxu0 %v1213
        %1294 = vmatprep.subr.mxu0 0.0
        %1295 = vmatpush1.msra.mxu0 %v1214
        %1296 = vmatprep.subr.mxu0 0.0
        %1297 = vmatpush1.msra.mxu0 %v1215
        %1298 = vmatprep.subr.mxu0 0.0
        %1299 = vmatpush1.msra.mxu0 %v1216
        %1300 = vmatprep.subr.mxu0 0.0
        %1301 = vmatpush1.msra.mxu0 %v1217
        %1302 = vmatprep.subr.mxu0 0.0
        %1303 = vmatpush1.msra.mxu0 %v1218
        %1304 = vmatprep.subr.mxu0 0.0
        %1305 = vmatpush1.msra.mxu0 0.0
        %1306 = vmatprep.subr.mxu0 0.0
        %1307 = vmatpush1.msra.mxu0 0.0
        %1308 = vmatprep.subr.mxu0 0.0
        %1309 = vmatpush1.msra.mxu0 0.0
        %1310 = vmatprep.subr.mxu0 0.0
        %1311 = vmatpush1.msra.mxu0 0.0
        %1312 = vmatprep.subr.mxu0 0.0
        %1313 = vmatpush1.msra.mxu0 0.0
        %1314 = vmatprep.subr.mxu0 0.0
        %1315 = vmatpush1.msra.mxu0 0.0
        %1316 = vmatprep.subr.mxu0 0.0
        %1317 = vmatpush1.msra.mxu0 0.0
        %1318 = vmatprep.subr.mxu0 0.0
        %1319 = vmatpush1.msra.mxu0 0.0
        %1320 = vmatprep.subr.mxu0 0.0
        %1321 = vmatpush1.msra.mxu0 0.0
        %1322 = vmatprep.subr.mxu0 0.0
        %1323 = vmatpush1.msra.mxu0 0.0
        %1324 = vmatprep.subr.mxu0 0.0
        %1325 = vmatpush1.msra.mxu0 0.0
        %1326 = vmatprep.subr.mxu0 0.0
        %1327 = vmatpush1.msra.mxu0 0.0
        %1328 = vmatprep.mubr.f32.mxu0 %v1241
        %1329 = vmatmul.mubr.f32.gmra.mrb[0].mxu0 %v1224
        %v1330 = vpop.f32.mrb[0].mxu0
        %v1331 = vadd.f32 0.0, %v1330
        %v1332 = vpop.f32.mrb[0].mxu0
        %1333 = vmatprep.mubr.f32.mxu0 %v1244
        %1334 = vmatmul.mubr.f32.gmra.mrb[0].mxu0 %v1226
        %v1335 = vpop.f32.mrb[0].mxu0
        %v1336 = vadd.f32 0.0, %v1335
        %v1337 = vpop.f32.mrb[0].mxu0
        %1338 = vmatprep.mubr.f32.mxu0 %v1247
        %1339 = vmatmul.mubr.f32.gmra.mrb[0].mxu0 %v1228
        %v1340 = vpop.f32.mrb[0].mxu0
        %v1341 = vadd.f32 0.0, %v1340
        %v1342 = vpop.f32.mrb[0].mxu0
        %1343 = vmatprep.mubr.f32.mxu0 %v1250
        %1344 = vmatmul.mubr.f32.gmra.mrb[0].mxu0 %v1230
        %v1345 = vpop.f32.mrb[0].mxu0
        %v1346 = vadd.f32 0.0, %v1345
        %v1347 = vpop.f32.mrb[0].mxu0
        %1348 = vmatprep.mubr.f32.mxu0 %v1253
        %1349 = vmatmul.mubr.f32.gmra.mrb[0].mxu0 %v1232
        %v1350 = vpop.f32.mrb[0].mxu0
        %v1351 = vadd.f32 0.0, %v1350
        %v1352 = vpop.f32.mrb[0].mxu0
        %1353 = vmatprep.mubr.f32.mxu0 %v1256
        %1354 = vmatmul.mubr.f32.gmra.mrb[0].mxu0 %v1234
        %v1355 = vpop.f32.mrb[0].mxu0
        %v1356 = vadd.f32 0.0, %v1355
        %v1357 = vpop.f32.mrb[0].mxu0
        %1358 = vmatprep.mubr.f32.mxu0 %v1259
        %1359 = vmatmul.mubr.f32.gmra.mrb[0].mxu0 %v1236
        %v1360 = vpop.f32.mrb[0].mxu0
        %v1361 = vadd.f32 0.0, %v1360
        %v1362 = vpop.f32.mrb[0].mxu0
        %1363 = vmatprep.mubr.f32.mxu0 %v1262
        %1364 = vmatmul.mubr.f32.gmra.mrb[0].mxu0 %v1238
        %v1365 = vpop.f32.mrb[0].mxu0
        %v1366 = vadd.f32 0.0, %v1365
        %v1367 = vpop.f32.mrb[0].mxu0
        %1368 = vdwg.mxu0
        %v1369 = vadd.f32 %v1034, %v1331
        %v1370 = vadd.f32 %v1035, %v1336
        %v1371 = vadd.f32 %v1036, %v1341
        %v1372 = vadd.f32 %v1037, %v1346
        %v1373 = vadd.f32 %v1038, %v1351
        %v1374 = vadd.f32 %v1039, %v1356
        %v1375 = vadd.f32 %v1040, %v1361
        %v1376 = vadd.f32 %v1041, %v1366
        %s1377 = smul.addr %s1221, 8
        %s1378 = scalar_lea.vmem %s212, %s1377
        %v1379 = vld [vmem:[%s1378] sm:$0xff]
        %v1380 = vld [vmem:[%s1378 + $0x8] sm:$0xff]
        %v1381 = vld [vmem:[%s1378 + $0x10] sm:$0xff]
        %v1382 = vld [vmem:[%s1378 + $0x18] sm:$0xff]
        %v1383 = vld [vmem:[%s1378 + $0x20] sm:$0xff]
        %v1384 = vld [vmem:[%s1378 + $0x28] sm:$0xff]
        %v1385 = vld [vmem:[%s1378 + $0x30] sm:$0xff]
        %v1386 = vld [vmem:[%s1378 + $0x38] sm:$0xff]
        %v1387 = vld [vmem:[%s1378 + $0x40] sm:$0xff]
        %v1388 = vld [vmem:[%s1378 + $0x48] sm:$0xff]
        %v1389 = vld [vmem:[%s1378 + $0x50] sm:$0xff]
        %v1390 = vld [vmem:[%s1378 + $0x58] sm:$0xff]
        %v1391 = vld [vmem:[%s1378 + $0x60] sm:$0xff]
        %v1392 = vld [vmem:[%s1378 + $0x68] sm:$0xff]
        %v1393 = vld [vmem:[%s1378 + $0x70] sm:$0xff]
        %v1394 = vld [vmem:[%s1378 + $0x78] sm:$0xff]
        %v1396 = vsel %vm327, %v1380, 0
        %v1399 = vsel %vm327, %v1382, 0
        %v1402 = vsel %vm327, %v1384, 0
        %v1405 = vsel %vm327, %v1386, 0
        %v1408 = vsel %vm327, %v1388, 0
        %v1411 = vsel %vm327, %v1390, 0
        %v1414 = vsel %vm327, %v1392, 0
        %v1417 = vsel %vm327, %v1394, 0
        %1419 = vmatprep.subr.mxu0 0.0
        %1420 = vmatpush1.msra.mxu0 %v1199
        %1421 = vmatprep.subr.mxu0 0.0
        %1422 = vmatpush1.msra.mxu0 %v1200
        %1423 = vmatprep.subr.mxu0 0.0
        %1424 = vmatpush1.msra.mxu0 %v1201
        %1425 = vmatprep.subr.mxu0 0.0
        %1426 = vmatpush1.msra.mxu0 %v1202
        %1427 = vmatprep.subr.mxu0 0.0
        %1428 = vmatpush1.msra.mxu0 %v1203
        %1429 = vmatprep.subr.mxu0 0.0
        %1430 = vmatpush1.msra.mxu0 %v1204
        %1431 = vmatprep.subr.mxu0 0.0
        %1432 = vmatpush1.msra.mxu0 %v1205
        %1433 = vmatprep.subr.mxu0 0.0
        %1434 = vmatpush1.msra.mxu0 %v1206
        %1435 = vmatprep.subr.mxu0 0.0
        %1436 = vmatpush1.msra.mxu0 %v1207
        %1437 = vmatprep.subr.mxu0 0.0
        %1438 = vmatpush1.msra.mxu0 %v1208
        %1439 = vmatprep.subr.mxu0 0.0
        %1440 = vmatpush1.msra.mxu0 %v1209
        %1441 = vmatprep.subr.mxu0 0.0
        %1442 = vmatpush1.msra.mxu0 %v1210
        %1443 = vmatprep.subr.mxu0 0.0
        %1444 = vmatpush1.msra.mxu0 %v1211
        %1445 = vmatprep.subr.mxu0 0.0
        %1446 = vmatpush1.msra.mxu0 %v1212
        %1447 = vmatprep.subr.mxu0 0.0
        %1448 = vmatpush1.msra.mxu0 %v1213
        %1449 = vmatprep.subr.mxu0 0.0
        %1450 = vmatpush1.msra.mxu0 %v1214
        %1451 = vmatprep.subr.mxu0 0.0
        %1452 = vmatpush1.msra.mxu0 %v1215
        %1453 = vmatprep.subr.mxu0 0.0
        %1454 = vmatpush1.msra.mxu0 %v1216
        %1455 = vmatprep.subr.mxu0 0.0
        %1456 = vmatpush1.msra.mxu0 %v1217
        %1457 = vmatprep.subr.mxu0 0.0
        %1458 = vmatpush1.msra.mxu0 %v1218
        %1459 = vmatprep.subr.mxu0 0.0
        %1460 = vmatpush1.msra.mxu0 0.0
        %1461 = vmatprep.subr.mxu0 0.0
        %1462 = vmatpush1.msra.mxu0 0.0
        %1463 = vmatprep.subr.mxu0 0.0
        %1464 = vmatpush1.msra.mxu0 0.0
        %1465 = vmatprep.subr.mxu0 0.0
        %1466 = vmatpush1.msra.mxu0 0.0
        %1467 = vmatprep.subr.mxu0 0.0
        %1468 = vmatpush1.msra.mxu0 0.0
        %1469 = vmatprep.subr.mxu0 0.0
        %1470 = vmatpush1.msra.mxu0 0.0
        %1471 = vmatprep.subr.mxu0 0.0
        %1472 = vmatpush1.msra.mxu0 0.0
        %1473 = vmatprep.subr.mxu0 0.0
        %1474 = vmatpush1.msra.mxu0 0.0
        %1475 = vmatprep.subr.mxu0 0.0
        %1476 = vmatpush1.msra.mxu0 0.0
        %1477 = vmatprep.subr.mxu0 0.0
        %1478 = vmatpush1.msra.mxu0 0.0
        %1479 = vmatprep.subr.mxu0 0.0
        %1480 = vmatpush1.msra.mxu0 0.0
        %1481 = vmatprep.subr.mxu0 0.0
        %1482 = vmatpush1.msra.mxu0 0.0
        %1483 = vmatprep.mubr.f32.mxu0 %v1396
        %1484 = vmatmul.mubr.f32.gmra.mrb[0].mxu0 %v1379
        %v1485 = vpop.f32.mrb[0].mxu0
        %v1486 = vadd.f32 0.0, %v1485
        %v1487 = vpop.f32.mrb[0].mxu0
        %1488 = vmatprep.mubr.f32.mxu0 %v1399
        %1489 = vmatmul.mubr.f32.gmra.mrb[0].mxu0 %v1381
        %v1490 = vpop.f32.mrb[0].mxu0
        %v1491 = vadd.f32 0.0, %v1490
        %v1492 = vpop.f32.mrb[0].mxu0
        %1493 = vmatprep.mubr.f32.mxu0 %v1402
        %1494 = vmatmul.mubr.f32.gmra.mrb[0].mxu0 %v1383
        %v1495 = vpop.f32.mrb[0].mxu0
        %v1496 = vadd.f32 0.0, %v1495
        %v1497 = vpop.f32.mrb[0].mxu0
        %1498 = vmatprep.mubr.f32.mxu0 %v1405
        %1499 = vmatmul.mubr.f32.gmra.mrb[0].mxu0 %v1385
        %v1500 = vpop.f32.mrb[0].mxu0
        %v1501 = vadd.f32 0.0, %v1500
        %v1502 = vpop.f32.mrb[0].mxu0
        %1503 = vmatprep.mubr.f32.mxu0 %v1408
        %1504 = vmatmul.mubr.f32.gmra.mrb[0].mxu0 %v1387
        %v1505 = vpop.f32.mrb[0].mxu0
        %v1506 = vadd.f32 0.0, %v1505
        %v1507 = vpop.f32.mrb[0].mxu0
        %1508 = vmatprep.mubr.f32.mxu0 %v1411
        %1509 = vmatmul.mubr.f32.gmra.mrb[0].mxu0 %v1389
        %v1510 = vpop.f32.mrb[0].mxu0
        %v1511 = vadd.f32 0.0, %v1510
        %v1512 = vpop.f32.mrb[0].mxu0
        %1513 = vmatprep.mubr.f32.mxu0 %v1414
        %1514 = vmatmul.mubr.f32.gmra.mrb[0].mxu0 %v1391
        %v1515 = vpop.f32.mrb[0].mxu0
        %v1516 = vadd.f32 0.0, %v1515
        %v1517 = vpop.f32.mrb[0].mxu0
        %1518 = vmatprep.mubr.f32.mxu0 %v1417
        %1519 = vmatmul.mubr.f32.gmra.mrb[0].mxu0 %v1393
        %v1520 = vpop.f32.mrb[0].mxu0
        %v1521 = vadd.f32 0.0, %v1520
        %v1522 = vpop.f32.mrb[0].mxu0
        %1523 = vdwg.mxu0
        %v1524 = vadd.f32 %v1189, %v1486
        %v1525 = vadd.f32 %v1190, %v1491
        %v1526 = vadd.f32 %v1191, %v1496
        %v1527 = vadd.f32 %v1192, %v1501
        %v1528 = vadd.f32 %v1193, %v1506
        %v1529 = vadd.f32 %v1194, %v1511
        %v1530 = vadd.f32 %v1195, %v1516
        %v1531 = vadd.f32 %v1196, %v1521
        %s1532 = sadd.s32 %s224, 32
        %s1533 = scalar_lea.vmem %s2, 640
        %v1534 = vld [vmem:[%s1533] sm:$0xff]
        %v1535 = vld [vmem:[%s1533 + $0x8] sm:$0xff]
        %v1536 = vld [vmem:[%s1533 + $0x10] sm:$0xff]
        %v1537 = vld [vmem:[%s1533 + $0x18] sm:$0xff]
        %v1538 = vld [vmem:[%s1533 + $0x20] sm:$0xff]
        %v1539 = vld [vmem:[%s1533 + $0x28] sm:$0xff]
        %v1540 = vld [vmem:[%s1533 + $0x30] sm:$0xff]
        %v1541 = vld [vmem:[%s1533 + $0x38] sm:$0xff]
        %v1542 = vld [vmem:[%s1533 + $0x40] sm:$0xff]
        %v1543 = vld [vmem:[%s1533 + $0x48] sm:$0xff]
        %v1544 = vld [vmem:[%s1533 + $0x50] sm:$0xff]
        %v1545 = vld [vmem:[%s1533 + $0x58] sm:$0xff]
        %v1546 = vld [vmem:[%s1533 + $0x60] sm:$0xff]
        %v1547 = vld [vmem:[%s1533 + $0x68] sm:$0xff]
        %v1548 = vld [vmem:[%s1533 + $0x70] sm:$0xff]
        %v1549 = vld [vmem:[%s1533 + $0x78] sm:$0xff]
        %v1550 = vld [vmem:[%s1533 + $0x80] sm:$0xff]
        %v1551 = vld [vmem:[%s1533 + $0x88] sm:$0xff]
        %v1552 = vld [vmem:[%s1533 + $0x90] sm:$0xff]
        %v1553 = vld [vmem:[%s1533 + $0x98] sm:$0xff]
        %s1554 = sshra.s32 %s1532, 3
        %s1555 = sand.u32 %s1532, 7
        %s1556 = smul.u32 %s1554, 2
        %s1557 = smul.addr %s1556, 8
        %s1558 = scalar_lea.vmem %s207, %s1557
        %v1559 = vld [vmem:[%s1558] sm:$0xff]
        %v1560 = vld [vmem:[%s1558 + $0x8] sm:$0xff]
        %v1561 = vld [vmem:[%s1558 + $0x10] sm:$0xff]
        %v1562 = vld [vmem:[%s1558 + $0x18] sm:$0xff]
        %v1563 = vld [vmem:[%s1558 + $0x20] sm:$0xff]
        %v1564 = vld [vmem:[%s1558 + $0x28] sm:$0xff]
        %v1565 = vld [vmem:[%s1558 + $0x30] sm:$0xff]
        %v1566 = vld [vmem:[%s1558 + $0x38] sm:$0xff]
        %v1567 = vld [vmem:[%s1558 + $0x40] sm:$0xff]
        %v1568 = vld [vmem:[%s1558 + $0x48] sm:$0xff]
        %v1569 = vld [vmem:[%s1558 + $0x50] sm:$0xff]
        %v1570 = vld [vmem:[%s1558 + $0x58] sm:$0xff]
        %v1571 = vld [vmem:[%s1558 + $0x60] sm:$0xff]
        %v1572 = vld [vmem:[%s1558 + $0x68] sm:$0xff]
        %v1573 = vld [vmem:[%s1558 + $0x70] sm:$0xff]
        %v1574 = vld [vmem:[%s1558 + $0x78] sm:$0xff]
        %v1576 = vsel %vm327, %v1560, 0
        %v1579 = vsel %vm327, %v1562, 0
        %v1582 = vsel %vm327, %v1564, 0
        %v1585 = vsel %vm327, %v1566, 0
        %v1588 = vsel %vm327, %v1568, 0
        %v1591 = vsel %vm327, %v1570, 0
        %v1594 = vsel %vm327, %v1572, 0
        %v1597 = vsel %vm327, %v1574, 0
        %1599 = vmatprep.subr.mxu0 0.0
        %1600 = vmatpush1.msra.mxu0 %v1534
        %1601 = vmatprep.subr.mxu0 0.0
        %1602 = vmatpush1.msra.mxu0 %v1535
        %1603 = vmatprep.subr.mxu0 0.0
        %1604 = vmatpush1.msra.mxu0 %v1536
        %1605 = vmatprep.subr.mxu0 0.0
        %1606 = vmatpush1.msra.mxu0 %v1537
        %1607 = vmatprep.subr.mxu0 0.0
        %1608 = vmatpush1.msra.mxu0 %v1538
        %1609 = vmatprep.subr.mxu0 0.0
        %1610 = vmatpush1.msra.mxu0 %v1539
        %1611 = vmatprep.subr.mxu0 0.0
        %1612 = vmatpush1.msra.mxu0 %v1540
        %1613 = vmatprep.subr.mxu0 0.0
        %1614 = vmatpush1.msra.mxu0 %v1541
        %1615 = vmatprep.subr.mxu0 0.0
        %1616 = vmatpush1.msra.mxu0 %v1542
        %1617 = vmatprep.subr.mxu0 0.0
        %1618 = vmatpush1.msra.mxu0 %v1543
        %1619 = vmatprep.subr.mxu0 0.0
        %1620 = vmatpush1.msra.mxu0 %v1544
        %1621 = vmatprep.subr.mxu0 0.0
        %1622 = vmatpush1.msra.mxu0 %v1545
        %1623 = vmatprep.subr.mxu0 0.0
        %1624 = vmatpush1.msra.mxu0 %v1546
        %1625 = vmatprep.subr.mxu0 0.0
        %1626 = vmatpush1.msra.mxu0 %v1547
        %1627 = vmatprep.subr.mxu0 0.0
        %1628 = vmatpush1.msra.mxu0 %v1548
        %1629 = vmatprep.subr.mxu0 0.0
        %1630 = vmatpush1.msra.mxu0 %v1549
        %1631 = vmatprep.subr.mxu0 0.0
        %1632 = vmatpush1.msra.mxu0 %v1550
        %1633 = vmatprep.subr.mxu0 0.0
        %1634 = vmatpush1.msra.mxu0 %v1551
        %1635 = vmatprep.subr.mxu0 0.0
        %1636 = vmatpush1.msra.mxu0 %v1552
        %1637 = vmatprep.subr.mxu0 0.0
        %1638 = vmatpush1.msra.mxu0 %v1553
        %1639 = vmatprep.subr.mxu0 0.0
        %1640 = vmatpush1.msra.mxu0 0.0
        %1641 = vmatprep.subr.mxu0 0.0
        %1642 = vmatpush1.msra.mxu0 0.0
        %1643 = vmatprep.subr.mxu0 0.0
        %1644 = vmatpush1.msra.mxu0 0.0
        %1645 = vmatprep.subr.mxu0 0.0
        %1646 = vmatpush1.msra.mxu0 0.0
        %1647 = vmatprep.subr.mxu0 0.0
        %1648 = vmatpush1.msra.mxu0 0.0
        %1649 = vmatprep.subr.mxu0 0.0
        %1650 = vmatpush1.msra.mxu0 0.0
        %1651 = vmatprep.subr.mxu0 0.0
        %1652 = vmatpush1.msra.mxu0 0.0
        %1653 = vmatprep.subr.mxu0 0.0
        %1654 = vmatpush1.msra.mxu0 0.0
        %1655 = vmatprep.subr.mxu0 0.0
        %1656 = vmatpush1.msra.mxu0 0.0
        %1657 = vmatprep.subr.mxu0 0.0
        %1658 = vmatpush1.msra.mxu0 0.0
        %1659 = vmatprep.subr.mxu0 0.0
        %1660 = vmatpush1.msra.mxu0 0.0
        %1661 = vmatprep.subr.mxu0 0.0
        %1662 = vmatpush1.msra.mxu0 0.0
        %1663 = vmatprep.mubr.f32.mxu0 %v1576
        %1664 = vmatmul.mubr.f32.gmra.mrb[0].mxu0 %v1559
        %v1665 = vpop.f32.mrb[0].mxu0
        %v1666 = vadd.f32 0.0, %v1665
        %v1667 = vpop.f32.mrb[0].mxu0
        %1668 = vmatprep.mubr.f32.mxu0 %v1579
        %1669 = vmatmul.mubr.f32.gmra.mrb[0].mxu0 %v1561
        %v1670 = vpop.f32.mrb[0].mxu0
        %v1671 = vadd.f32 0.0, %v1670
        %v1672 = vpop.f32.mrb[0].mxu0
        %1673 = vmatprep.mubr.f32.mxu0 %v1582
        %1674 = vmatmul.mubr.f32.gmra.mrb[0].mxu0 %v1563
        %v1675 = vpop.f32.mrb[0].mxu0
        %v1676 = vadd.f32 0.0, %v1675
        %v1677 = vpop.f32.mrb[0].mxu0
        %1678 = vmatprep.mubr.f32.mxu0 %v1585
        %1679 = vmatmul.mubr.f32.gmra.mrb[0].mxu0 %v1565
        %v1680 = vpop.f32.mrb[0].mxu0
        %v1681 = vadd.f32 0.0, %v1680
        %v1682 = vpop.f32.mrb[0].mxu0
        %1683 = vmatprep.mubr.f32.mxu0 %v1588
        %1684 = vmatmul.mubr.f32.gmra.mrb[0].mxu0 %v1567
        %v1685 = vpop.f32.mrb[0].mxu0
        %v1686 = vadd.f32 0.0, %v1685
        %v1687 = vpop.f32.mrb[0].mxu0
        %1688 = vmatprep.mubr.f32.mxu0 %v1591
        %1689 = vmatmul.mubr.f32.gmra.mrb[0].mxu0 %v1569
        %v1690 = vpop.f32.mrb[0].mxu0
        %v1691 = vadd.f32 0.0, %v1690
        %v1692 = vpop.f32.mrb[0].mxu0
        %1693 = vmatprep.mubr.f32.mxu0 %v1594
        %1694 = vmatmul.mubr.f32.gmra.mrb[0].mxu0 %v1571
        %v1695 = vpop.f32.mrb[0].mxu0
        %v1696 = vadd.f32 0.0, %v1695
        %v1697 = vpop.f32.mrb[0].mxu0
        %1698 = vmatprep.mubr.f32.mxu0 %v1597
        %1699 = vmatmul.mubr.f32.gmra.mrb[0].mxu0 %v1573
        %v1700 = vpop.f32.mrb[0].mxu0
        %v1701 = vadd.f32 0.0, %v1700
        %v1702 = vpop.f32.mrb[0].mxu0
        %1703 = vdwg.mxu0
        %v1704 = vadd.f32 %v1369, %v1666
        %v1705 = vadd.f32 %v1370, %v1671
        %v1706 = vadd.f32 %v1371, %v1676
        %v1707 = vadd.f32 %v1372, %v1681
        %v1708 = vadd.f32 %v1373, %v1686
        %v1709 = vadd.f32 %v1374, %v1691
        %v1710 = vadd.f32 %v1375, %v1696
        %v1711 = vadd.f32 %v1376, %v1701
        %s1712 = smul.addr %s1556, 8
        %s1713 = scalar_lea.vmem %s212, %s1712
        %v1714 = vld [vmem:[%s1713] sm:$0xff]
        %v1715 = vld [vmem:[%s1713 + $0x8] sm:$0xff]
        %v1716 = vld [vmem:[%s1713 + $0x10] sm:$0xff]
        %v1717 = vld [vmem:[%s1713 + $0x18] sm:$0xff]
        %v1718 = vld [vmem:[%s1713 + $0x20] sm:$0xff]
        %v1719 = vld [vmem:[%s1713 + $0x28] sm:$0xff]
        %v1720 = vld [vmem:[%s1713 + $0x30] sm:$0xff]
        %v1721 = vld [vmem:[%s1713 + $0x38] sm:$0xff]
        %v1722 = vld [vmem:[%s1713 + $0x40] sm:$0xff]
        %v1723 = vld [vmem:[%s1713 + $0x48] sm:$0xff]
        %v1724 = vld [vmem:[%s1713 + $0x50] sm:$0xff]
        %v1725 = vld [vmem:[%s1713 + $0x58] sm:$0xff]
        %v1726 = vld [vmem:[%s1713 + $0x60] sm:$0xff]
        %v1727 = vld [vmem:[%s1713 + $0x68] sm:$0xff]
        %v1728 = vld [vmem:[%s1713 + $0x70] sm:$0xff]
        %v1729 = vld [vmem:[%s1713 + $0x78] sm:$0xff]
        %v1731 = vsel %vm327, %v1715, 0
        %v1734 = vsel %vm327, %v1717, 0
        %v1737 = vsel %vm327, %v1719, 0
        %v1740 = vsel %vm327, %v1721, 0
        %v1743 = vsel %vm327, %v1723, 0
        %v1746 = vsel %vm327, %v1725, 0
        %v1749 = vsel %vm327, %v1727, 0
        %v1752 = vsel %vm327, %v1729, 0
        %1754 = vmatprep.subr.mxu0 0.0
        %1755 = vmatpush1.msra.mxu0 %v1534
        %1756 = vmatprep.subr.mxu0 0.0
        %1757 = vmatpush1.msra.mxu0 %v1535
        %1758 = vmatprep.subr.mxu0 0.0
        %1759 = vmatpush1.msra.mxu0 %v1536
        %1760 = vmatprep.subr.mxu0 0.0
        %1761 = vmatpush1.msra.mxu0 %v1537
        %1762 = vmatprep.subr.mxu0 0.0
        %1763 = vmatpush1.msra.mxu0 %v1538
        %1764 = vmatprep.subr.mxu0 0.0
        %1765 = vmatpush1.msra.mxu0 %v1539
        %1766 = vmatprep.subr.mxu0 0.0
        %1767 = vmatpush1.msra.mxu0 %v1540
        %1768 = vmatprep.subr.mxu0 0.0
        %1769 = vmatpush1.msra.mxu0 %v1541
        %1770 = vmatprep.subr.mxu0 0.0
        %1771 = vmatpush1.msra.mxu0 %v1542
        %1772 = vmatprep.subr.mxu0 0.0
        %1773 = vmatpush1.msra.mxu0 %v1543
        %1774 = vmatprep.subr.mxu0 0.0
        %1775 = vmatpush1.msra.mxu0 %v1544
        %1776 = vmatprep.subr.mxu0 0.0
        %1777 = vmatpush1.msra.mxu0 %v1545
        %1778 = vmatprep.subr.mxu0 0.0
        %1779 = vmatpush1.msra.mxu0 %v1546
        %1780 = vmatprep.subr.mxu0 0.0
        %1781 = vmatpush1.msra.mxu0 %v1547
        %1782 = vmatprep.subr.mxu0 0.0
        %1783 = vmatpush1.msra.mxu0 %v1548
        %1784 = vmatprep.subr.mxu0 0.0
        %1785 = vmatpush1.msra.mxu0 %v1549
        %1786 = vmatprep.subr.mxu0 0.0
        %1787 = vmatpush1.msra.mxu0 %v1550
        %1788 = vmatprep.subr.mxu0 0.0
        %1789 = vmatpush1.msra.mxu0 %v1551
        %1790 = vmatprep.subr.mxu0 0.0
        %1791 = vmatpush1.msra.mxu0 %v1552
        %1792 = vmatprep.subr.mxu0 0.0
        %1793 = vmatpush1.msra.mxu0 %v1553
        %1794 = vmatprep.subr.mxu0 0.0
        %1795 = vmatpush1.msra.mxu0 0.0
        %1796 = vmatprep.subr.mxu0 0.0
        %1797 = vmatpush1.msra.mxu0 0.0
        %1798 = vmatprep.subr.mxu0 0.0
        %1799 = vmatpush1.msra.mxu0 0.0
        %1800 = vmatprep.subr.mxu0 0.0
        %1801 = vmatpush1.msra.mxu0 0.0
        %1802 = vmatprep.subr.mxu0 0.0
        %1803 = vmatpush1.msra.mxu0 0.0
        %1804 = vmatprep.subr.mxu0 0.0
        %1805 = vmatpush1.msra.mxu0 0.0
        %1806 = vmatprep.subr.mxu0 0.0
        %1807 = vmatpush1.msra.mxu0 0.0
        %1808 = vmatprep.subr.mxu0 0.0
        %1809 = vmatpush1.msra.mxu0 0.0
        %1810 = vmatprep.subr.mxu0 0.0
        %1811 = vmatpush1.msra.mxu0 0.0
        %1812 = vmatprep.subr.mxu0 0.0
        %1813 = vmatpush1.msra.mxu0 0.0
        %1814 = vmatprep.subr.mxu0 0.0
        %1815 = vmatpush1.msra.mxu0 0.0
        %1816 = vmatprep.subr.mxu0 0.0
        %1817 = vmatpush1.msra.mxu0 0.0
        %1818 = vmatprep.mubr.f32.mxu0 %v1731
        %1819 = vmatmul.mubr.f32.gmra.mrb[0].mxu0 %v1714
        %v1820 = vpop.f32.mrb[0].mxu0
        %v1821 = vadd.f32 0.0, %v1820
        %v1822 = vpop.f32.mrb[0].mxu0
        %1823 = vmatprep.mubr.f32.mxu0 %v1734
        %1824 = vmatmul.mubr.f32.gmra.mrb[0].mxu0 %v1716
        %v1825 = vpop.f32.mrb[0].mxu0
        %v1826 = vadd.f32 0.0, %v1825
        %v1827 = vpop.f32.mrb[0].mxu0
        %1828 = vmatprep.mubr.f32.mxu0 %v1737
        %1829 = vmatmul.mubr.f32.gmra.mrb[0].mxu0 %v1718
        %v1830 = vpop.f32.mrb[0].mxu0
        %v1831 = vadd.f32 0.0, %v1830
        %v1832 = vpop.f32.mrb[0].mxu0
        %1833 = vmatprep.mubr.f32.mxu0 %v1740
        %1834 = vmatmul.mubr.f32.gmra.mrb[0].mxu0 %v1720
        %v1835 = vpop.f32.mrb[0].mxu0
        %v1836 = vadd.f32 0.0, %v1835
        %v1837 = vpop.f32.mrb[0].mxu0
        %1838 = vmatprep.mubr.f32.mxu0 %v1743
        %1839 = vmatmul.mubr.f32.gmra.mrb[0].mxu0 %v1722
        %v1840 = vpop.f32.mrb[0].mxu0
        %v1841 = vadd.f32 0.0, %v1840
        %v1842 = vpop.f32.mrb[0].mxu0
        %1843 = vmatprep.mubr.f32.mxu0 %v1746
        %1844 = vmatmul.mubr.f32.gmra.mrb[0].mxu0 %v1724
        %v1845 = vpop.f32.mrb[0].mxu0
        %v1846 = vadd.f32 0.0, %v1845
        %v1847 = vpop.f32.mrb[0].mxu0
        %1848 = vmatprep.mubr.f32.mxu0 %v1749
        %1849 = vmatmul.mubr.f32.gmra.mrb[0].mxu0 %v1726
        %v1850 = vpop.f32.mrb[0].mxu0
        %v1851 = vadd.f32 0.0, %v1850
        %v1852 = vpop.f32.mrb[0].mxu0
        %1853 = vmatprep.mubr.f32.mxu0 %v1752
        %1854 = vmatmul.mubr.f32.gmra.mrb[0].mxu0 %v1728
        %v1855 = vpop.f32.mrb[0].mxu0
        %v1856 = vadd.f32 0.0, %v1855
        %v1857 = vpop.f32.mrb[0].mxu0
        %1858 = vdwg.mxu0
        %v1859 = vadd.f32 %v1524, %v1821
        %v1860 = vadd.f32 %v1525, %v1826
        %v1861 = vadd.f32 %v1526, %v1831
        %v1862 = vadd.f32 %v1527, %v1836
        %v1863 = vadd.f32 %v1528, %v1841
        %v1864 = vadd.f32 %v1529, %v1846
        %v1865 = vadd.f32 %v1530, %v1851
        %v1866 = vadd.f32 %v1531, %v1856
        %v1867 = vmax.f32 %v1704, %v1859
        %v1868 = vmax.f32 %v1705, %v1860
        %v1869 = vmax.f32 %v1706, %v1861
        %v1870 = vmax.f32 %v1707, %v1862
        %v1871 = vmax.f32 %v1708, %v1863
        %v1872 = vmax.f32 %v1709, %v1864
        %v1873 = vmax.f32 %v1710, %v1865
        %v1874 = vmax.f32 %v1711, %v1866
        %v1875 = vmax.f32 %v1867, %v1868
        %v1876 = vmax.f32 %v1869, %v1870
        %v1877 = vmax.f32 %v1871, %v1872
        %v1878 = vmax.f32 %v1873, %v1874
        %v1879 = vld [vmem:[%s3] sm:$0x1]
        %v1881 = vlaneseq
        %v1882 = vshrl.u32 %v1881, 7
        %v1883 = vsub.s32 0, %v1882
        %v1884 = vrot.slane %v1879, %v1883
        %v1886 = vadd.f32 %v1875, %v1884
        %v1887 = vadd.f32 %v1876, %v1884
        %v1888 = vadd.f32 %v1877, %v1884
        %v1889 = vadd.f32 %v1878, %v1884
        %s1890 = smul.u32 %s219, 32
        %s1891 = scalar_lea.vmem %s217, %s1890
        %vm1892 = vcmask 523264
        %1893 = vst.msk [vmem:[%s1891] sm:$0xff] %vm1892, %v1886
        %1894 = vst.msk [vmem:[%s1891 + $0x8] sm:$0xff] %vm1892, %v1887
        %1895 = vst.msk [vmem:[%s1891 + $0x10] sm:$0xff] %vm1892, %v1888
        %1896 = vst.msk [vmem:[%s1891 + $0x18] sm:$0xff] %vm1892, %v1889
      $region41: #{neural_network_forward.5} parent=35 // loop_footer
        %s223 = sadd.s32 1, %s219
      $region42: #{neural_network_forward.5} parent=35 // loop_footer_branch
        %218 = sbr.rel target = $region38
      $region43: #{neural_network_forward.5} parent=35 // loop_exit
        _
      %p1897 = scmp.lt.s32.totalorder %s15, 1
      %s1898 = scalar_select %p1897, %s15, 1
      %s1899 = smul.addr %s1898, 8
      %s1900 = smul.addr %s1899, 8
      %s1901 = scalar_lea.vmem %s4, %s1900
      // Predicated region
      $region44: #{neural_network_forward.5} parent=35 // pred_check
        %p1902 = pneg %p127
      $region45: #{neural_network_forward.5} parent=35 // pred_check_branch
        %1904 = sbr.rel (%p1902) target = $region47
      $region46: #{neural_network_forward.5} parent=35 // pred_region
        _
      $region47: #{neural_network_forward.5} parent=35 // pred_fallthru
        _
    $region36: #{neural_network_forward.5} parent=5 // pred_fallthru
      _
    %p1905 = scmp.le.s32.totalorder 2, %s10
    // Predicated region
    $region48: #{neural_network_forward.5} parent=5 // pred_check
      %p1906 = pneg %p1905
    $region49: #{neural_network_forward.5} parent=5 // pred_check_branch
      %1908 = sbr.rel (%p1906) target = $region51
    $region50: #{neural_network_forward.5} parent=5 // pred_region
      %s1909 = ssub.s32 %s10, 2
      // Predicated region
      $region52: #{neural_network_forward.5} parent=50 // pred_check
        %p1910 = pneg %p133
      $region53: #{neural_network_forward.5} parent=50 // pred_check_branch
        %1912 = sbr.rel (%p1910) target = $region55
      $region54: #{neural_network_forward.5} parent=50 // pred_region
        %p1913 = scmp.lt.s32.totalorder %s16, 1
        %s1914 = scalar_select %p1913, %s16, 1
        %s1915 = smul.addr %s1914, 8
        %s1916 = smul.addr %s1915, 8
        %s1917 = scalar_lea.vmem %s4, %s1916
      $region55: #{neural_network_forward.5} parent=50 // pred_fallthru
        _
    $region51: #{neural_network_forward.5} parent=5 // pred_fallthru
      _
  $region6: #{neural_network_forward.5} parent=0 // loop_footer
    %s14 = sadd.s32 1, %s10
  $region7: #{neural_network_forward.5} parent=0 // loop_footer_branch
    %9 = sbr.rel target = $region3
  $region8: #{neural_network_forward.5} parent=0 // loop_exit
    _

// kernel: neural_network_forward.6
$region0: #{neural_network_forward.6}
  #allocation0 [shape = 'u32[]', space=smem, size = 0x4, offset = 0x4, fixed_abs, tag = 'smem constant byte address 0x4 - core index']
  #allocation1 [shape = 'u32[144,128]{1,0:T(1,128)}', space=vmem, size = 0x12000, scoped, tag = 'internal scratch']
  %s0 = inlined_call_operand.vmem [shape: f32[2,48,320], index: 0, kind: input, shape index: {}]
  %s1 = inlined_call_operand.vmem [shape: f32[2,48,320], index: 1, kind: input, shape index: {}]
  %s2 = inlined_call_operand.vmem [shape: f32[5,320,128], index: 2, kind: input, shape index: {}]
  %s3 = inlined_call_operand.vmem [shape: f32[1,128], index: 3, kind: input, shape index: {}]
  %s4 = inlined_call_operand.vmem [shape: f32[2,16,128], index: 4, kind: output, shape index: {}]
  %s5 = sld [smem:[#allocation0]]
  $region49: #{neural_network_forward.6} parent=0
    _
  %s7 = ssub.s32 1, %s5
  %s8 = scalar_select 0, %s7, %s5
  loop: start=0, step=1, limit=4
  $region2: #{neural_network_forward.6} parent=0 // loop_pre_header
    _
  $region3: #{neural_network_forward.6} parent=0 // loop_header
    %s10 = sphi 0, %s14
    %p11 = scmp.ge.s32.totalorder %s10, 4
    %s20 = sphi 0, %s22
    %s23 = sphi 0, %s20
    %s24 = sphi 0, %s23
    %s40 = sphi 0, %s24
    %s46 = sphi 0, %s48
    %s49 = sphi 0, %s46
    %s50 = sphi 0, %s49
    %s66 = sphi 0, %s50
    %s70 = sphi 0, %s70
    %s72 = sphi 0, %s70
    %s73 = sphi 0, %s72
    %s87 = sphi 0, %s73
    %s91 = sphi 0, %s91
    %s93 = sphi 0, %s91
    %s94 = sphi 0, %s93
    %s108 = sphi 0, %s94
    %s114 = sphi 0, %s116
    %s117 = sphi 0, %s114
    %s118 = sphi 0, %s117
    %s134 = sphi 0, %s118
  $region4: #{neural_network_forward.6} parent=0 // loop_header_branch
    %13 = sbr.rel (%p11) target = $region8
  $region5: #{neural_network_forward.6} parent=0 // loop_body
    %s15 = ssub.s32 %s10, 1
    %s16 = ssub.s32 %s10, 2
    %s17 = sadd.s32 %s10, 1
    %s18 = ssub.s32 %s10, %s17
    %p19 = scmp.eq.s32.totalorder %s18, 0
    %s21 = sadd.s32 %s20, 1
    %s22 = scalar_select %p19, %s20, %s21
    %p25 = pneg %p19
    %p26 = scmp.eq.s32.totalorder %s10, 1
    %p27 = por %p25, %p26
    %p28 = scmp.ne.s32.totalorder %s20, %s23
    %p29 = scmp.eq.s32.totalorder %s10, 0
    %p30 = por %p28, %p29
    %p31 = scmp.ne.s32.totalorder %s20, %s23
    %p32 = scmp.eq.s32.totalorder %s15, 1
    %p33 = por %p31, %p32
    %p34 = scmp.ne.s32.totalorder %s23, %s24
    %p35 = scmp.eq.s32.totalorder %s15, 0
    %p36 = por %p34, %p35
    %p37 = scmp.ne.s32.totalorder %s23, %s24
    %p38 = scmp.eq.s32.totalorder %s16, 1
    %p39 = por %p37, %p38
    %p41 = scmp.ne.s32.totalorder %s24, %s40
    %p42 = scmp.eq.s32.totalorder %s16, 0
    %p43 = por %p41, %p42
    %s44 = ssub.s32 %s10, %s17
    %p45 = scmp.eq.s32.totalorder %s44, 0
    %s47 = sadd.s32 %s46, 1
    %s48 = scalar_select %p45, %s46, %s47
    %p51 = pneg %p45
    %p52 = scmp.eq.s32.totalorder %s10, 1
    %p53 = por %p51, %p52
    %p54 = scmp.ne.s32.totalorder %s46, %s49
    %p55 = scmp.eq.s32.totalorder %s10, 0
    %p56 = por %p54, %p55
    %p57 = scmp.ne.s32.totalorder %s46, %s49
    %p58 = scmp.eq.s32.totalorder %s15, 1
    %p59 = por %p57, %p58
    %p60 = scmp.ne.s32.totalorder %s49, %s50
    %p61 = scmp.eq.s32.totalorder %s15, 0
    %p62 = por %p60, %p61
    %p63 = scmp.ne.s32.totalorder %s49, %s50
    %p64 = scmp.eq.s32.totalorder %s16, 1
    %p65 = por %p63, %p64
    %p67 = scmp.ne.s32.totalorder %s50, %s66
    %p68 = scmp.eq.s32.totalorder %s16, 0
    %p69 = por %p67, %p68
    %s71 = sadd.s32 %s70, 1
    %p74 = scmp.eq.s32.totalorder %s10, 1
    %p75 = scmp.ne.s32.totalorder %s70, %s72
    %p76 = scmp.eq.s32.totalorder %s10, 0
    %p77 = por %p75, %p76
    %p78 = scmp.ne.s32.totalorder %s70, %s72
    %p79 = scmp.eq.s32.totalorder %s15, 1
    %p80 = por %p78, %p79
    %p81 = scmp.ne.s32.totalorder %s72, %s73
    %p82 = scmp.eq.s32.totalorder %s15, 0
    %p83 = por %p81, %p82
    %p84 = scmp.ne.s32.totalorder %s72, %s73
    %p85 = scmp.eq.s32.totalorder %s16, 1
    %p86 = por %p84, %p85
    %p88 = scmp.ne.s32.totalorder %s73, %s87
    %p89 = scmp.eq.s32.totalorder %s16, 0
    %p90 = por %p88, %p89
    %s92 = sadd.s32 %s91, 1
    %p95 = scmp.eq.s32.totalorder %s10, 1
    %p96 = scmp.ne.s32.totalorder %s91, %s93
    %p97 = scmp.eq.s32.totalorder %s10, 0
    %p98 = por %p96, %p97
    %p99 = scmp.ne.s32.totalorder %s91, %s93
    %p100 = scmp.eq.s32.totalorder %s15, 1
    %p101 = por %p99, %p100
    %p102 = scmp.ne.s32.totalorder %s93, %s94
    %p103 = scmp.eq.s32.totalorder %s15, 0
    %p104 = por %p102, %p103
    %p105 = scmp.ne.s32.totalorder %s93, %s94
    %p106 = scmp.eq.s32.totalorder %s16, 1
    %p107 = por %p105, %p106
    %p109 = scmp.ne.s32.totalorder %s94, %s108
    %p110 = scmp.eq.s32.totalorder %s16, 0
    %p111 = por %p109, %p110
    %s112 = ssub.s32 %s10, %s17
    %p113 = scmp.eq.s32.totalorder %s112, 0
    %s115 = sadd.s32 %s114, 1
    %s116 = scalar_select %p113, %s114, %s115
    %p119 = pneg %p113
    %p120 = scmp.eq.s32.totalorder %s10, 1
    %p121 = por %p119, %p120
    %p122 = scmp.ne.s32.totalorder %s114, %s117
    %p123 = scmp.eq.s32.totalorder %s10, 0
    %p124 = por %p122, %p123
    %p125 = scmp.ne.s32.totalorder %s114, %s117
    %p126 = scmp.eq.s32.totalorder %s15, 1
    %p127 = por %p125, %p126
    %p128 = scmp.ne.s32.totalorder %s117, %s118
    %p129 = scmp.eq.s32.totalorder %s15, 0
    %p130 = por %p128, %p129
    %p131 = scmp.ne.s32.totalorder %s117, %s118
    %p132 = scmp.eq.s32.totalorder %s16, 1
    %p133 = por %p131, %p132
    %p135 = scmp.ne.s32.totalorder %s118, %s134
    %p136 = scmp.eq.s32.totalorder %s16, 0
    %p137 = por %p135, %p136
    %p138 = scmp.le.s32.totalorder 1, %s10
    %p139 = scmp.lt.s32.totalorder %s10, 3
    %p140 = pnand %p138, %p139
    %p141 = pneg %p140
    // Predicated region
    $region9: #{neural_network_forward.6} parent=5 // pred_check
      _
    $region10: #{neural_network_forward.6} parent=5 // pred_check_branch
      %143 = sbr.rel (%p140) target = $region12
    $region11: #{neural_network_forward.6} parent=5 // pred_region
      %s144 = ssub.s32 %s10, 1
      // Predicated region
      $region13: #{neural_network_forward.6} parent=11 // pred_check
        %p145 = pneg %p83
      $region14: #{neural_network_forward.6} parent=11 // pred_check_branch
        %147 = sbr.rel (%p145) target = $region16
      $region15: #{neural_network_forward.6} parent=11 // pred_region
        _
      $region16: #{neural_network_forward.6} parent=11 // pred_fallthru
        _
      // Predicated region
      $region17: #{neural_network_forward.6} parent=11 // pred_check
        %p148 = pneg %p104
      $region18: #{neural_network_forward.6} parent=11 // pred_check_branch
        %150 = sbr.rel (%p148) target = $region20
      $region19: #{neural_network_forward.6} parent=11 // pred_region
        _
      $region20: #{neural_network_forward.6} parent=11 // pred_fallthru
        _
    $region12: #{neural_network_forward.6} parent=5 // pred_fallthru
      _
    %p151 = scmp.lt.s32.totalorder %s10, 2
    // Predicated region
    $region21: #{neural_network_forward.6} parent=5 // pred_check
      %p152 = pneg %p151
    $region22: #{neural_network_forward.6} parent=5 // pred_check_branch
      %154 = sbr.rel (%p152) target = $region24
    $region23: #{neural_network_forward.6} parent=5 // pred_region
      // Predicated region
      $region25: #{neural_network_forward.6} parent=23 // pred_check
        %p155 = pneg %p30
      $region26: #{neural_network_forward.6} parent=23 // pred_check_branch
        %157 = sbr.rel (%p155) target = $region28
      $region27: #{neural_network_forward.6} parent=23 // pred_region
        %p158 = scmp.lt.s32.totalorder %s10, 1
        %s159 = scalar_select %p158, %s10, 1
        %s160 = smul.addr %s159, 18
        %s161 = smul.addr %s160, 8
        %s162 = scalar_lea.vmem %s0, %s161
      $region28: #{neural_network_forward.6} parent=23 // pred_fallthru
        _
      // Predicated region
      $region29: #{neural_network_forward.6} parent=23 // pred_check
        %p163 = pneg %p56
      $region30: #{neural_network_forward.6} parent=23 // pred_check_branch
        %165 = sbr.rel (%p163) target = $region32
      $region31: #{neural_network_forward.6} parent=23 // pred_region
        %p166 = scmp.lt.s32.totalorder %s10, 1
        %s167 = scalar_select %p166, %s10, 1
        %s168 = smul.addr %s167, 18
        %s169 = smul.addr %s168, 8
        %s170 = scalar_lea.vmem %s1, %s169
      $region32: #{neural_network_forward.6} parent=23 // pred_fallthru
        _
    $region24: #{neural_network_forward.6} parent=5 // pred_fallthru
      _
    %p171 = scmp.le.s32.totalorder 1, %s10
    %p172 = scmp.lt.s32.totalorder %s10, 3
    %p173 = pnand %p171, %p172
    %p174 = pneg %p173
    // Predicated region
    $region33: #{neural_network_forward.6} parent=5 // pred_check
      _
    $region34: #{neural_network_forward.6} parent=5 // pred_check_branch
      %176 = sbr.rel (%p173) target = $region36
    $region35: #{neural_network_forward.6} parent=5 // pred_region
      %s177 = ssub.s32 %s10, 1
      %p178 = scmp.lt.s32.totalorder %s15, 1
      %s179 = scalar_select %p178, %s15, 1
      %s180 = smul.addr %s179, 18
      %s181 = smul.addr %s180, 8
      %s182 = scalar_lea.vmem %s0, %s181
      %p183 = pneg %p36
      %p184 = pneg %p33
      %p185 = scmp.lt.s32.totalorder %s15, 1
      %s186 = scalar_select %p185, %s15, 1
      %s187 = smul.addr %s186, 18
      %s188 = smul.addr %s187, 8
      %s189 = scalar_lea.vmem %s1, %s188
      %p190 = pneg %p62
      %p191 = pneg %p59
      %p192 = pneg %p83
      %p193 = pneg %p80
      %p194 = pneg %p104
      %p195 = pneg %p101
      %p196 = pneg %p130
      %p197 = pneg %p127
      %p198 = scmp.lt.s32.totalorder %s15, 1
      %s199 = scalar_select %p198, %s15, 1
      %s200 = smul.addr %s199, 2
      %s201 = smul.addr %s200, 8
      %s202 = scalar_lea.vmem %s4, %s201
      %p203 = scmp.lt.s32.totalorder %s15, 1
      %s204 = scalar_select %p203, %s15, 1
      %s205 = smul.addr %s204, 18
      %s206 = smul.addr %s205, 8
      %s207 = scalar_lea.vmem %s0, %s206
      %p208 = scmp.lt.s32.totalorder %s15, 1
      %s209 = scalar_select %p208, %s15, 1
      %s210 = smul.addr %s209, 18
      %s211 = smul.addr %s210, 8
      %s212 = scalar_lea.vmem %s1, %s211
      %p213 = scmp.lt.s32.totalorder %s15, 1
      %s214 = scalar_select %p213, %s15, 1
      %s215 = smul.addr %s214, 2
      %s216 = smul.addr %s215, 8
      %s217 = scalar_lea.vmem %s4, %s216
      %v218 = vld [vmem:[%s2] sm:$0xff]
      %v219 = vld [vmem:[%s2 + $0x8] sm:$0xff]
      %v220 = vld [vmem:[%s2 + $0x10] sm:$0xff]
      %v221 = vld [vmem:[%s2 + $0x18] sm:$0xff]
      %v222 = vld [vmem:[%s2 + $0x20] sm:$0xff]
      %v223 = vld [vmem:[%s2 + $0x28] sm:$0xff]
      %v224 = vld [vmem:[%s2 + $0x30] sm:$0xff]
      %v225 = vld [vmem:[%s2 + $0x38] sm:$0xff]
      %v226 = vld [vmem:[%s2 + $0x40] sm:$0xff]
      %v227 = vld [vmem:[%s2 + $0x48] sm:$0xff]
      %v228 = vld [vmem:[%s2 + $0x50] sm:$0xff]
      %v229 = vld [vmem:[%s2 + $0x58] sm:$0xff]
      %v230 = vld [vmem:[%s2 + $0x60] sm:$0xff]
      %v231 = vld [vmem:[%s2 + $0x68] sm:$0xff]
      %v232 = vld [vmem:[%s2 + $0x70] sm:$0xff]
      %v233 = vld [vmem:[%s2 + $0x78] sm:$0xff]
      %v234 = vld [vmem:[%s2 + $0x80] sm:$0xff]
      %v235 = vld [vmem:[%s2 + $0x88] sm:$0xff]
      %v236 = vld [vmem:[%s2 + $0x90] sm:$0xff]
      %v237 = vld [vmem:[%s2 + $0x98] sm:$0xff]
      %v238 = vld [vmem:[%s2 + $0xa0] sm:$0xff]
      %v239 = vld [vmem:[%s2 + $0xa8] sm:$0xff]
      %v240 = vld [vmem:[%s2 + $0xb0] sm:$0xff]
      %v241 = vld [vmem:[%s2 + $0xb8] sm:$0xff]
      %v242 = vld [vmem:[%s2 + $0xc0] sm:$0xff]
      %v243 = vld [vmem:[%s2 + $0xc8] sm:$0xff]
      %v244 = vld [vmem:[%s2 + $0xd0] sm:$0xff]
      %v245 = vld [vmem:[%s2 + $0xd8] sm:$0xff]
      %v246 = vld [vmem:[%s2 + $0xe0] sm:$0xff]
      %v247 = vld [vmem:[%s2 + $0xe8] sm:$0xff]
      %v248 = vld [vmem:[%s2 + $0xf0] sm:$0xff]
      %v249 = vld [vmem:[%s2 + $0xf8] sm:$0xff]
      %v250 = vld [vmem:[%s2 + $0x100] sm:$0xff]
      %v251 = vld [vmem:[%s2 + $0x108] sm:$0xff]
      %v252 = vld [vmem:[%s2 + $0x110] sm:$0xff]
      %v253 = vld [vmem:[%s2 + $0x118] sm:$0xff]
      %v254 = vld [vmem:[%s2 + $0x120] sm:$0xff]
      %v255 = vld [vmem:[%s2 + $0x128] sm:$0xff]
      %v256 = vld [vmem:[%s2 + $0x130] sm:$0xff]
      %v257 = vld [vmem:[%s2 + $0x138] sm:$0xff]
      %v258 = vld [vmem:[%s207] sm:$0xff]
      %v259 = vld [vmem:[%s207 + $0x8] sm:$0xff]
      %v260 = vld [vmem:[%s207 + $0x10] sm:$0xff]
      %v261 = vld [vmem:[%s207 + $0x18] sm:$0xff]
      %v262 = vld [vmem:[%s207 + $0x20] sm:$0xff]
      %v263 = vld [vmem:[%s207 + $0x28] sm:$0xff]
      %v264 = vld [vmem:[%s207 + $0x30] sm:$0xff]
      %v265 = vld [vmem:[%s207 + $0x38] sm:$0xff]
      %v266 = vld [vmem:[%s207 + $0x40] sm:$0xff]
      %v267 = vld [vmem:[%s207 + $0x48] sm:$0xff]
      %v268 = vld [vmem:[%s207 + $0x50] sm:$0xff]
      %v269 = vld [vmem:[%s207 + $0x58] sm:$0xff]
      %v270 = vld [vmem:[%s212] sm:$0xff]
      %v271 = vld [vmem:[%s212 + $0x8] sm:$0xff]
      %v272 = vld [vmem:[%s212 + $0x10] sm:$0xff]
      %v273 = vld [vmem:[%s212 + $0x18] sm:$0xff]
      %v274 = vld [vmem:[%s212 + $0x20] sm:$0xff]
      %v275 = vld [vmem:[%s212 + $0x28] sm:$0xff]
      %v276 = vld [vmem:[%s212 + $0x30] sm:$0xff]
      %v277 = vld [vmem:[%s212 + $0x38] sm:$0xff]
      %v278 = vld [vmem:[%s212 + $0x40] sm:$0xff]
      %v279 = vld [vmem:[%s212 + $0x48] sm:$0xff]
      %v280 = vld [vmem:[%s212 + $0x50] sm:$0xff]
      %v281 = vld [vmem:[%s212 + $0x58] sm:$0xff]
      %s282 = scalar_lea.vmem %s2, 320
      %v283 = vld [vmem:[%s282] sm:$0xff]
      %v284 = vld [vmem:[%s282 + $0x8] sm:$0xff]
      %v285 = vld [vmem:[%s282 + $0x10] sm:$0xff]
      %v286 = vld [vmem:[%s282 + $0x18] sm:$0xff]
      %v287 = vld [vmem:[%s282 + $0x20] sm:$0xff]
      %v288 = vld [vmem:[%s282 + $0x28] sm:$0xff]
      %v289 = vld [vmem:[%s282 + $0x30] sm:$0xff]
      %v290 = vld [vmem:[%s282 + $0x38] sm:$0xff]
      %v291 = vld [vmem:[%s282 + $0x40] sm:$0xff]
      %v292 = vld [vmem:[%s282 + $0x48] sm:$0xff]
      %v293 = vld [vmem:[%s282 + $0x50] sm:$0xff]
      %v294 = vld [vmem:[%s282 + $0x58] sm:$0xff]
      %v295 = vld [vmem:[%s282 + $0x60] sm:$0xff]
      %v296 = vld [vmem:[%s282 + $0x68] sm:$0xff]
      %v297 = vld [vmem:[%s282 + $0x70] sm:$0xff]
      %v298 = vld [vmem:[%s282 + $0x78] sm:$0xff]
      %v299 = vld [vmem:[%s282 + $0x80] sm:$0xff]
      %v300 = vld [vmem:[%s282 + $0x88] sm:$0xff]
      %v301 = vld [vmem:[%s282 + $0x90] sm:$0xff]
      %v302 = vld [vmem:[%s282 + $0x98] sm:$0xff]
      %v303 = vld [vmem:[%s282 + $0xa0] sm:$0xff]
      %v304 = vld [vmem:[%s282 + $0xa8] sm:$0xff]
      %v305 = vld [vmem:[%s282 + $0xb0] sm:$0xff]
      %v306 = vld [vmem:[%s282 + $0xb8] sm:$0xff]
      %v307 = vld [vmem:[%s282 + $0xc0] sm:$0xff]
      %v308 = vld [vmem:[%s282 + $0xc8] sm:$0xff]
      %v309 = vld [vmem:[%s282 + $0xd0] sm:$0xff]
      %v310 = vld [vmem:[%s282 + $0xd8] sm:$0xff]
      %v311 = vld [vmem:[%s282 + $0xe0] sm:$0xff]
      %v312 = vld [vmem:[%s282 + $0xe8] sm:$0xff]
      %v313 = vld [vmem:[%s282 + $0xf0] sm:$0xff]
      %v314 = vld [vmem:[%s282 + $0xf8] sm:$0xff]
      %v315 = vld [vmem:[%s282 + $0x100] sm:$0xff]
      %v316 = vld [vmem:[%s282 + $0x108] sm:$0xff]
      %v317 = vld [vmem:[%s282 + $0x110] sm:$0xff]
      %v318 = vld [vmem:[%s282 + $0x118] sm:$0xff]
      %v319 = vld [vmem:[%s282 + $0x120] sm:$0xff]
      %v320 = vld [vmem:[%s282 + $0x128] sm:$0xff]
      %v321 = vld [vmem:[%s282 + $0x130] sm:$0xff]
      %v322 = vld [vmem:[%s282 + $0x138] sm:$0xff]
      %v323 = vld [vmem:[%s207] sm:$0xf0]
      %v324 = vld [vmem:[%s207 + $0x8] sm:$0xf0]
      %v325 = vld [vmem:[%s207 + $0x10] sm:$0xf0]
      %v326 = vld [vmem:[%s207 + $0x60] sm:$0xf]
      %v327 = vld [vmem:[%s207 + $0x68] sm:$0xf]
      %v328 = vld [vmem:[%s207 + $0x70] sm:$0xf]
      %vm344 = vcmask 1043456
      %v345 = vrot.slane %v323, 4
      %v346 = vrot.slane %v261, 4
      %v347 = vsel %vm344, %v345, %v346
      %v348 = vrot.slane %v324, 4
      %v349 = vrot.slane %v262, 4
      %v350 = vsel %vm344, %v348, %v349
      %v351 = vrot.slane %v325, 4
      %v352 = vrot.slane %v263, 4
      %v353 = vsel %vm344, %v351, %v352
      %v354 = vrot.slane %v264, 4
      %v355 = vsel %vm344, %v346, %v354
      %v356 = vrot.slane %v265, 4
      %v357 = vsel %vm344, %v349, %v356
      %v358 = vrot.slane %v266, 4
      %v359 = vsel %vm344, %v352, %v358
      %v360 = vrot.slane %v267, 4
      %v361 = vsel %vm344, %v354, %v360
      %v362 = vrot.slane %v268, 4
      %v363 = vsel %vm344, %v356, %v362
      %v364 = vrot.slane %v269, 4
      %v365 = vsel %vm344, %v358, %v364
      %v366 = vrot.slane %v326, 4
      %v367 = vsel %vm344, %v360, %v366
      %v368 = vrot.slane %v327, 4
      %v369 = vsel %vm344, %v362, %v368
      %v370 = vrot.slane %v328, 4
      %v371 = vsel %vm344, %v364, %v370
      %vm380 = vcmask 523264
      %v381 = vsel %vm380, %v353, 0
      %v383 = vsel %vm380, %v359, 0
      %v385 = vsel %vm380, %v365, 0
      %v387 = vsel %vm380, %v371, 0
      %389 = vmatprep.subr.mxu0 0.0
      %390 = vmatpush1.msra.mxu0 %v283
      %391 = vmatprep.subr.mxu0 0.0
      %392 = vmatpush1.msra.mxu0 %v284
      %393 = vmatprep.subr.mxu0 0.0
      %394 = vmatpush1.msra.mxu0 %v285
      %395 = vmatprep.subr.mxu0 0.0
      %396 = vmatpush1.msra.mxu0 %v286
      %397 = vmatprep.subr.mxu0 0.0
      %398 = vmatpush1.msra.mxu0 %v287
      %399 = vmatprep.subr.mxu0 0.0
      %400 = vmatpush1.msra.mxu0 %v288
      %401 = vmatprep.subr.mxu0 0.0
      %402 = vmatpush1.msra.mxu0 %v289
      %403 = vmatprep.subr.mxu0 0.0
      %404 = vmatpush1.msra.mxu0 %v290
      %405 = vmatprep.subr.mxu0 0.0
      %406 = vmatpush1.msra.mxu0 %v291
      %407 = vmatprep.subr.mxu0 0.0
      %408 = vmatpush1.msra.mxu0 %v292
      %409 = vmatprep.subr.mxu0 0.0
      %410 = vmatpush1.msra.mxu0 %v293
      %411 = vmatprep.subr.mxu0 0.0
      %412 = vmatpush1.msra.mxu0 %v294
      %413 = vmatprep.subr.mxu0 0.0
      %414 = vmatpush1.msra.mxu0 %v295
      %415 = vmatprep.subr.mxu0 0.0
      %416 = vmatpush1.msra.mxu0 %v296
      %417 = vmatprep.subr.mxu0 0.0
      %418 = vmatpush1.msra.mxu0 %v297
      %419 = vmatprep.subr.mxu0 0.0
      %420 = vmatpush1.msra.mxu0 %v298
      %421 = vmatprep.subr.mxu0 0.0
      %422 = vmatpush1.msra.mxu0 %v299
      %423 = vmatprep.subr.mxu0 0.0
      %424 = vmatpush1.msra.mxu0 %v300
      %425 = vmatprep.subr.mxu0 0.0
      %426 = vmatpush1.msra.mxu0 %v301
      %427 = vmatprep.subr.mxu0 0.0
      %428 = vmatpush1.msra.mxu0 %v302
      %429 = vmatprep.subr.mxu0 0.0
      %430 = vmatpush1.msra.mxu0 %v303
      %431 = vmatprep.subr.mxu0 0.0
      %432 = vmatpush1.msra.mxu0 %v304
      %433 = vmatprep.subr.mxu0 0.0
      %434 = vmatpush1.msra.mxu0 %v305
      %435 = vmatprep.subr.mxu0 0.0
      %436 = vmatpush1.msra.mxu0 %v306
      %437 = vmatprep.subr.mxu0 0.0
      %438 = vmatpush1.msra.mxu0 %v307
      %439 = vmatprep.subr.mxu0 0.0
      %440 = vmatpush1.msra.mxu0 %v308
      %441 = vmatprep.subr.mxu0 0.0
      %442 = vmatpush1.msra.mxu0 %v309
      %443 = vmatprep.subr.mxu0 0.0
      %444 = vmatpush1.msra.mxu0 %v310
      %445 = vmatprep.subr.mxu0 0.0
      %446 = vmatpush1.msra.mxu0 %v311
      %447 = vmatprep.subr.mxu0 0.0
      %448 = vmatpush1.msra.mxu0 %v312
      %449 = vmatprep.subr.mxu0 0.0
      %450 = vmatpush1.msra.mxu0 %v313
      %451 = vmatprep.subr.mxu0 0.0
      %452 = vmatpush1.msra.mxu0 %v314
      %453 = vmatprep.mubr.f32.mxu0 %v350
      %454 = vmatmul.mubr.f32.gmra.mrb[0].mxu0 %v347
      %v455 = vpop.f32.mrb[0].mxu0
      %v456 = vadd.f32 0.0, %v455
      %v457 = vpop.f32.mrb[0].mxu0
      %458 = vmatprep.mubr.f32.mxu0 %v357
      %459 = vmatmul.mubr.f32.gmra.mrb[0].mxu0 %v355
      %v460 = vpop.f32.mrb[0].mxu0
      %v461 = vadd.f32 0.0, %v460
      %v462 = vpop.f32.mrb[0].mxu0
      %463 = vmatprep.mubr.f32.mxu0 %v363
      %464 = vmatmul.mubr.f32.gmra.mrb[0].mxu0 %v361
      %v465 = vpop.f32.mrb[0].mxu0
      %v466 = vadd.f32 0.0, %v465
      %v467 = vpop.f32.mrb[0].mxu0
      %468 = vmatprep.mubr.f32.mxu0 %v369
      %469 = vmatmul.mubr.f32.gmra.mrb[0].mxu0 %v367
      %v470 = vpop.f32.mrb[0].mxu0
      %v471 = vadd.f32 0.0, %v470
      %v472 = vpop.f32.mrb[0].mxu0
      %473 = vdwg.mxu0
      %474 = vmatprep.subr.mxu0 0.0
      %475 = vmatpush1.msra.mxu0 %v315
      %476 = vmatprep.subr.mxu0 0.0
      %477 = vmatpush1.msra.mxu0 %v316
      %478 = vmatprep.subr.mxu0 0.0
      %479 = vmatpush1.msra.mxu0 %v317
      %480 = vmatprep.subr.mxu0 0.0
      %481 = vmatpush1.msra.mxu0 %v318
      %482 = vmatprep.subr.mxu0 0.0
      %483 = vmatpush1.msra.mxu0 %v319
      %484 = vmatprep.subr.mxu0 0.0
      %485 = vmatpush1.msra.mxu0 %v320
      %486 = vmatprep.subr.mxu0 0.0
      %487 = vmatpush1.msra.mxu0 %v321
      %488 = vmatprep.subr.mxu0 0.0
      %489 = vmatpush1.msra.mxu0 %v322
      %490 = vmatprep.subr.mxu0 0.0
      %491 = vmatpush1.msra.mxu0 0.0
      %492 = vmatprep.subr.mxu0 0.0
      %493 = vmatpush1.msra.mxu0 0.0
      %494 = vmatprep.subr.mxu0 0.0
      %495 = vmatpush1.msra.mxu0 0.0
      %496 = vmatprep.subr.mxu0 0.0
      %497 = vmatpush1.msra.mxu0 0.0
      %498 = vmatprep.subr.mxu0 0.0
      %499 = vmatpush1.msra.mxu0 0.0
      %500 = vmatprep.subr.mxu0 0.0
      %501 = vmatpush1.msra.mxu0 0.0
      %502 = vmatprep.subr.mxu0 0.0
      %503 = vmatpush1.msra.mxu0 0.0
      %504 = vmatprep.subr.mxu0 0.0
      %505 = vmatpush1.msra.mxu0 0.0
      %506 = vmatprep.subr.mxu0 0.0
      %507 = vmatpush1.msra.mxu0 0.0
      %508 = vmatprep.subr.mxu0 0.0
      %509 = vmatpush1.msra.mxu0 0.0
      %510 = vmatprep.subr.mxu0 0.0
      %511 = vmatpush1.msra.mxu0 0.0
      %512 = vmatprep.subr.mxu0 0.0
      %513 = vmatpush1.msra.mxu0 0.0
      %514 = vmatprep.subr.mxu0 0.0
      %515 = vmatpush1.msra.mxu0 0.0
      %516 = vmatprep.subr.mxu0 0.0
      %517 = vmatpush1.msra.mxu0 0.0
      %518 = vmatprep.subr.mxu0 0.0
      %519 = vmatpush1.msra.mxu0 0.0
      %520 = vmatprep.subr.mxu0 0.0
      %521 = vmatpush1.msra.mxu0 0.0
      %522 = vmatprep.subr.mxu0 0.0
      %523 = vmatpush1.msra.mxu0 0.0
      %524 = vmatprep.subr.mxu0 0.0
      %525 = vmatpush1.msra.mxu0 0.0
      %526 = vmatprep.subr.mxu0 0.0
      %527 = vmatpush1.msra.mxu0 0.0
      %528 = vmatprep.subr.mxu0 0.0
      %529 = vmatpush1.msra.mxu0 0.0
      %530 = vmatprep.subr.mxu0 0.0
      %531 = vmatpush1.msra.mxu0 0.0
      %532 = vmatprep.subr.mxu0 0.0
      %533 = vmatpush1.msra.mxu0 0.0
      %534 = vmatprep.subr.mxu0 0.0
      %535 = vmatpush1.msra.mxu0 0.0
      %536 = vmatprep.subr.mxu0 0.0
      %537 = vmatpush1.msra.mxu0 0.0
      %538 = vmatprep.mubr.f32.mxu0 0.0
      %539 = vmatmul.mubr.f32.gmra.mrb[0].mxu0 %v381
      %v540 = vpop.f32.mrb[0].mxu0
      %v541 = vadd.f32 %v456, %v540
      %v542 = vpop.f32.mrb[0].mxu0
      %543 = vmatprep.mubr.f32.mxu0 0.0
      %544 = vmatmul.mubr.f32.gmra.mrb[0].mxu0 %v383
      %v545 = vpop.f32.mrb[0].mxu0
      %v546 = vadd.f32 %v461, %v545
      %v547 = vpop.f32.mrb[0].mxu0
      %548 = vmatprep.mubr.f32.mxu0 0.0
      %549 = vmatmul.mubr.f32.gmra.mrb[0].mxu0 %v385
      %v550 = vpop.f32.mrb[0].mxu0
      %v551 = vadd.f32 %v466, %v550
      %v552 = vpop.f32.mrb[0].mxu0
      %553 = vmatprep.mubr.f32.mxu0 0.0
      %554 = vmatmul.mubr.f32.gmra.mrb[0].mxu0 %v387
      %v555 = vpop.f32.mrb[0].mxu0
      %v556 = vadd.f32 %v471, %v555
      %v557 = vpop.f32.mrb[0].mxu0
      %558 = vdwg.mxu0
      %v560 = vsel %vm380, %v260, 0
      %v562 = vsel %vm380, %v263, 0
      %v564 = vsel %vm380, %v266, 0
      %v566 = vsel %vm380, %v269, 0
      %568 = vmatprep.subr.mxu0 0.0
      %569 = vmatpush1.msra.mxu0 %v218
      %570 = vmatprep.subr.mxu0 0.0
      %571 = vmatpush1.msra.mxu0 %v219
      %572 = vmatprep.subr.mxu0 0.0
      %573 = vmatpush1.msra.mxu0 %v220
      %574 = vmatprep.subr.mxu0 0.0
      %575 = vmatpush1.msra.mxu0 %v221
      %576 = vmatprep.subr.mxu0 0.0
      %577 = vmatpush1.msra.mxu0 %v222
      %578 = vmatprep.subr.mxu0 0.0
      %579 = vmatpush1.msra.mxu0 %v223
      %580 = vmatprep.subr.mxu0 0.0
      %581 = vmatpush1.msra.mxu0 %v224
      %582 = vmatprep.subr.mxu0 0.0
      %583 = vmatpush1.msra.mxu0 %v225
      %584 = vmatprep.subr.mxu0 0.0
      %585 = vmatpush1.msra.mxu0 %v226
      %586 = vmatprep.subr.mxu0 0.0
      %587 = vmatpush1.msra.mxu0 %v227
      %588 = vmatprep.subr.mxu0 0.0
      %589 = vmatpush1.msra.mxu0 %v228
      %590 = vmatprep.subr.mxu0 0.0
      %591 = vmatpush1.msra.mxu0 %v229
      %592 = vmatprep.subr.mxu0 0.0
      %593 = vmatpush1.msra.mxu0 %v230
      %594 = vmatprep.subr.mxu0 0.0
      %595 = vmatpush1.msra.mxu0 %v231
      %596 = vmatprep.subr.mxu0 0.0
      %597 = vmatpush1.msra.mxu0 %v232
      %598 = vmatprep.subr.mxu0 0.0
      %599 = vmatpush1.msra.mxu0 %v233
      %600 = vmatprep.subr.mxu0 0.0
      %601 = vmatpush1.msra.mxu0 %v234
      %602 = vmatprep.subr.mxu0 0.0
      %603 = vmatpush1.msra.mxu0 %v235
      %604 = vmatprep.subr.mxu0 0.0
      %605 = vmatpush1.msra.mxu0 %v236
      %606 = vmatprep.subr.mxu0 0.0
      %607 = vmatpush1.msra.mxu0 %v237
      %608 = vmatprep.subr.mxu0 0.0
      %609 = vmatpush1.msra.mxu0 %v238
      %610 = vmatprep.subr.mxu0 0.0
      %611 = vmatpush1.msra.mxu0 %v239
      %612 = vmatprep.subr.mxu0 0.0
      %613 = vmatpush1.msra.mxu0 %v240
      %614 = vmatprep.subr.mxu0 0.0
      %615 = vmatpush1.msra.mxu0 %v241
      %616 = vmatprep.subr.mxu0 0.0
      %617 = vmatpush1.msra.mxu0 %v242
      %618 = vmatprep.subr.mxu0 0.0
      %619 = vmatpush1.msra.mxu0 %v243
      %620 = vmatprep.subr.mxu0 0.0
      %621 = vmatpush1.msra.mxu0 %v244
      %622 = vmatprep.subr.mxu0 0.0
      %623 = vmatpush1.msra.mxu0 %v245
      %624 = vmatprep.subr.mxu0 0.0
      %625 = vmatpush1.msra.mxu0 %v246
      %626 = vmatprep.subr.mxu0 0.0
      %627 = vmatpush1.msra.mxu0 %v247
      %628 = vmatprep.subr.mxu0 0.0
      %629 = vmatpush1.msra.mxu0 %v248
      %630 = vmatprep.subr.mxu0 0.0
      %631 = vmatpush1.msra.mxu0 %v249
      %632 = vmatprep.mubr.f32.mxu0 %v259
      %633 = vmatmul.mubr.f32.gmra.mrb[0].mxu0 %v258
      %v634 = vpop.f32.mrb[0].mxu0
      %v635 = vadd.f32 %v541, %v634
      %v636 = vpop.f32.mrb[0].mxu0
      %637 = vmatprep.mubr.f32.mxu0 %v262
      %638 = vmatmul.mubr.f32.gmra.mrb[0].mxu0 %v261
      %v639 = vpop.f32.mrb[0].mxu0
      %v640 = vadd.f32 %v546, %v639
      %v641 = vpop.f32.mrb[0].mxu0
      %642 = vmatprep.mubr.f32.mxu0 %v265
      %643 = vmatmul.mubr.f32.gmra.mrb[0].mxu0 %v264
      %v644 = vpop.f32.mrb[0].mxu0
      %v645 = vadd.f32 %v551, %v644
      %v646 = vpop.f32.mrb[0].mxu0
      %647 = vmatprep.mubr.f32.mxu0 %v268
      %648 = vmatmul.mubr.f32.gmra.mrb[0].mxu0 %v267
      %v649 = vpop.f32.mrb[0].mxu0
      %v650 = vadd.f32 %v556, %v649
      %v651 = vpop.f32.mrb[0].mxu0
      %652 = vdwg.mxu0
      %653 = vmatprep.subr.mxu0 0.0
      %654 = vmatpush1.msra.mxu0 %v250
      %655 = vmatprep.subr.mxu0 0.0
      %656 = vmatpush1.msra.mxu0 %v251
      %657 = vmatprep.subr.mxu0 0.0
      %658 = vmatpush1.msra.mxu0 %v252
      %659 = vmatprep.subr.mxu0 0.0
      %660 = vmatpush1.msra.mxu0 %v253
      %661 = vmatprep.subr.mxu0 0.0
      %662 = vmatpush1.msra.mxu0 %v254
      %663 = vmatprep.subr.mxu0 0.0
      %664 = vmatpush1.msra.mxu0 %v255
      %665 = vmatprep.subr.mxu0 0.0
      %666 = vmatpush1.msra.mxu0 %v256
      %667 = vmatprep.subr.mxu0 0.0
      %668 = vmatpush1.msra.mxu0 %v257
      %669 = vmatprep.subr.mxu0 0.0
      %670 = vmatpush1.msra.mxu0 0.0
      %671 = vmatprep.subr.mxu0 0.0
      %672 = vmatpush1.msra.mxu0 0.0
      %673 = vmatprep.subr.mxu0 0.0
      %674 = vmatpush1.msra.mxu0 0.0
      %675 = vmatprep.subr.mxu0 0.0
      %676 = vmatpush1.msra.mxu0 0.0
      %677 = vmatprep.subr.mxu0 0.0
      %678 = vmatpush1.msra.mxu0 0.0
      %679 = vmatprep.subr.mxu0 0.0
      %680 = vmatpush1.msra.mxu0 0.0
      %681 = vmatprep.subr.mxu0 0.0
      %682 = vmatpush1.msra.mxu0 0.0
      %683 = vmatprep.subr.mxu0 0.0
      %684 = vmatpush1.msra.mxu0 0.0
      %685 = vmatprep.subr.mxu0 0.0
      %686 = vmatpush1.msra.mxu0 0.0
      %687 = vmatprep.subr.mxu0 0.0
      %688 = vmatpush1.msra.mxu0 0.0
      %689 = vmatprep.subr.mxu0 0.0
      %690 = vmatpush1.msra.mxu0 0.0
      %691 = vmatprep.subr.mxu0 0.0
      %692 = vmatpush1.msra.mxu0 0.0
      %693 = vmatprep.subr.mxu0 0.0
      %694 = vmatpush1.msra.mxu0 0.0
      %695 = vmatprep.subr.mxu0 0.0
      %696 = vmatpush1.msra.mxu0 0.0
      %697 = vmatprep.subr.mxu0 0.0
      %698 = vmatpush1.msra.mxu0 0.0
      %699 = vmatprep.subr.mxu0 0.0
      %700 = vmatpush1.msra.mxu0 0.0
      %701 = vmatprep.subr.mxu0 0.0
      %702 = vmatpush1.msra.mxu0 0.0
      %703 = vmatprep.subr.mxu0 0.0
      %704 = vmatpush1.msra.mxu0 0.0
      %705 = vmatprep.subr.mxu0 0.0
      %706 = vmatpush1.msra.mxu0 0.0
      %707 = vmatprep.subr.mxu0 0.0
      %708 = vmatpush1.msra.mxu0 0.0
      %709 = vmatprep.subr.mxu0 0.0
      %710 = vmatpush1.msra.mxu0 0.0
      %711 = vmatprep.subr.mxu0 0.0
      %712 = vmatpush1.msra.mxu0 0.0
      %713 = vmatprep.subr.mxu0 0.0
      %714 = vmatpush1.msra.mxu0 0.0
      %715 = vmatprep.subr.mxu0 0.0
      %716 = vmatpush1.msra.mxu0 0.0
      %717 = vmatprep.mubr.f32.mxu0 0.0
      %718 = vmatmul.mubr.f32.gmra.mrb[0].mxu0 %v560
      %v719 = vpop.f32.mrb[0].mxu0
      %v720 = vadd.f32 %v635, %v719
      %v721 = vpop.f32.mrb[0].mxu0
      %722 = vmatprep.mubr.f32.mxu0 0.0
      %723 = vmatmul.mubr.f32.gmra.mrb[0].mxu0 %v562
      %v724 = vpop.f32.mrb[0].mxu0
      %v725 = vadd.f32 %v640, %v724
      %v726 = vpop.f32.mrb[0].mxu0
      %727 = vmatprep.mubr.f32.mxu0 0.0
      %728 = vmatmul.mubr.f32.gmra.mrb[0].mxu0 %v564
      %v729 = vpop.f32.mrb[0].mxu0
      %v730 = vadd.f32 %v645, %v729
      %v731 = vpop.f32.mrb[0].mxu0
      %732 = vmatprep.mubr.f32.mxu0 0.0
      %733 = vmatmul.mubr.f32.gmra.mrb[0].mxu0 %v566
      %v734 = vpop.f32.mrb[0].mxu0
      %v735 = vadd.f32 %v650, %v734
      %v736 = vpop.f32.mrb[0].mxu0
      %737 = vdwg.mxu0
      %v738 = vld [vmem:[%s212] sm:$0xf0]
      %v739 = vld [vmem:[%s212 + $0x8] sm:$0xf0]
      %v740 = vld [vmem:[%s212 + $0x10] sm:$0xf0]
      %v741 = vld [vmem:[%s212 + $0x18] sm:$0xff]
      %v742 = vld [vmem:[%s212 + $0x20] sm:$0xff]
      %v743 = vld [vmem:[%s212 + $0x28] sm:$0xff]
      %v744 = vld [vmem:[%s212 + $0x30] sm:$0xff]
      %v745 = vld [vmem:[%s212 + $0x38] sm:$0xff]
      %v746 = vld [vmem:[%s212 + $0x40] sm:$0xff]
      %v747 = vld [vmem:[%s212 + $0x48] sm:$0xff]
      %v748 = vld [vmem:[%s212 + $0x50] sm:$0xff]
      %v749 = vld [vmem:[%s212 + $0x58] sm:$0xff]
      %v750 = vld [vmem:[%s212 + $0x60] sm:$0xf]
      %v751 = vld [vmem:[%s212 + $0x68] sm:$0xf]
      %v752 = vld [vmem:[%s212 + $0x70] sm:$0xf]
      %v768 = vrot.slane %v738, 4
      %v769 = vrot.slane %v741, 4
      %v770 = vsel %vm344, %v768, %v769
      %v771 = vrot.slane %v739, 4
      %v772 = vrot.slane %v742, 4
      %v773 = vsel %vm344, %v771, %v772
      %v774 = vrot.slane %v740, 4
      %v775 = vrot.slane %v743, 4
      %v776 = vsel %vm344, %v774, %v775
      %v777 = vrot.slane %v744, 4
      %v778 = vsel %vm344, %v769, %v777
      %v779 = vrot.slane %v745, 4
      %v780 = vsel %vm344, %v772, %v779
      %v781 = vrot.slane %v746, 4
      %v782 = vsel %vm344, %v775, %v781
      %v783 = vrot.slane %v747, 4
      %v784 = vsel %vm344, %v777, %v783
      %v785 = vrot.slane %v748, 4
      %v786 = vsel %vm344, %v779, %v785
      %v787 = vrot.slane %v749, 4
      %v788 = vsel %vm344, %v781, %v787
      %v789 = vrot.slane %v750, 4
      %v790 = vsel %vm344, %v783, %v789
      %v791 = vrot.slane %v751, 4
      %v792 = vsel %vm344, %v785, %v791
      %v793 = vrot.slane %v752, 4
      %v794 = vsel %vm344, %v787, %v793
      %v803 = vsel %vm380, %v776, 0
      %v805 = vsel %vm380, %v782, 0
      %v807 = vsel %vm380, %v788, 0
      %v809 = vsel %vm380, %v794, 0
      %811 = vmatprep.subr.mxu0 0.0
      %812 = vmatpush1.msra.mxu0 %v283
      %813 = vmatprep.subr.mxu0 0.0
      %814 = vmatpush1.msra.mxu0 %v284
      %815 = vmatprep.subr.mxu0 0.0
      %816 = vmatpush1.msra.mxu0 %v285
      %817 = vmatprep.subr.mxu0 0.0
      %818 = vmatpush1.msra.mxu0 %v286
      %819 = vmatprep.subr.mxu0 0.0
      %820 = vmatpush1.msra.mxu0 %v287
      %821 = vmatprep.subr.mxu0 0.0
      %822 = vmatpush1.msra.mxu0 %v288
      %823 = vmatprep.subr.mxu0 0.0
      %824 = vmatpush1.msra.mxu0 %v289
      %825 = vmatprep.subr.mxu0 0.0
      %826 = vmatpush1.msra.mxu0 %v290
      %827 = vmatprep.subr.mxu0 0.0
      %828 = vmatpush1.msra.mxu0 %v291
      %829 = vmatprep.subr.mxu0 0.0
      %830 = vmatpush1.msra.mxu0 %v292
      %831 = vmatprep.subr.mxu0 0.0
      %832 = vmatpush1.msra.mxu0 %v293
      %833 = vmatprep.subr.mxu0 0.0
      %834 = vmatpush1.msra.mxu0 %v294
      %835 = vmatprep.subr.mxu0 0.0
      %836 = vmatpush1.msra.mxu0 %v295
      %837 = vmatprep.subr.mxu0 0.0
      %838 = vmatpush1.msra.mxu0 %v296
      %839 = vmatprep.subr.mxu0 0.0
      %840 = vmatpush1.msra.mxu0 %v297
      %841 = vmatprep.subr.mxu0 0.0
      %842 = vmatpush1.msra.mxu0 %v298
      %843 = vmatprep.subr.mxu0 0.0
      %844 = vmatpush1.msra.mxu0 %v299
      %845 = vmatprep.subr.mxu0 0.0
      %846 = vmatpush1.msra.mxu0 %v300
      %847 = vmatprep.subr.mxu0 0.0
      %848 = vmatpush1.msra.mxu0 %v301
      %849 = vmatprep.subr.mxu0 0.0
      %850 = vmatpush1.msra.mxu0 %v302
      %851 = vmatprep.subr.mxu0 0.0
      %852 = vmatpush1.msra.mxu0 %v303
      %853 = vmatprep.subr.mxu0 0.0
      %854 = vmatpush1.msra.mxu0 %v304
      %855 = vmatprep.subr.mxu0 0.0
      %856 = vmatpush1.msra.mxu0 %v305
      %857 = vmatprep.subr.mxu0 0.0
      %858 = vmatpush1.msra.mxu0 %v306
      %859 = vmatprep.subr.mxu0 0.0
      %860 = vmatpush1.msra.mxu0 %v307
      %861 = vmatprep.subr.mxu0 0.0
      %862 = vmatpush1.msra.mxu0 %v308
      %863 = vmatprep.subr.mxu0 0.0
      %864 = vmatpush1.msra.mxu0 %v309
      %865 = vmatprep.subr.mxu0 0.0
      %866 = vmatpush1.msra.mxu0 %v310
      %867 = vmatprep.subr.mxu0 0.0
      %868 = vmatpush1.msra.mxu0 %v311
      %869 = vmatprep.subr.mxu0 0.0
      %870 = vmatpush1.msra.mxu0 %v312
      %871 = vmatprep.subr.mxu0 0.0
      %872 = vmatpush1.msra.mxu0 %v313
      %873 = vmatprep.subr.mxu0 0.0
      %874 = vmatpush1.msra.mxu0 %v314
      %875 = vmatprep.mubr.f32.mxu0 %v773
      %876 = vmatmul.mubr.f32.gmra.mrb[0].mxu0 %v770
      %v877 = vpop.f32.mrb[0].mxu0
      %v878 = vadd.f32 0.0, %v877
      %v879 = vpop.f32.mrb[0].mxu0
      %880 = vmatprep.mubr.f32.mxu0 %v780
      %881 = vmatmul.mubr.f32.gmra.mrb[0].mxu0 %v778
      %v882 = vpop.f32.mrb[0].mxu0
      %v883 = vadd.f32 0.0, %v882
      %v884 = vpop.f32.mrb[0].mxu0
      %885 = vmatprep.mubr.f32.mxu0 %v786
      %886 = vmatmul.mubr.f32.gmra.mrb[0].mxu0 %v784
      %v887 = vpop.f32.mrb[0].mxu0
      %v888 = vadd.f32 0.0, %v887
      %v889 = vpop.f32.mrb[0].mxu0
      %890 = vmatprep.mubr.f32.mxu0 %v792
      %891 = vmatmul.mubr.f32.gmra.mrb[0].mxu0 %v790
      %v892 = vpop.f32.mrb[0].mxu0
      %v893 = vadd.f32 0.0, %v892
      %v894 = vpop.f32.mrb[0].mxu0
      %895 = vdwg.mxu0
      %896 = vmatprep.subr.mxu0 0.0
      %897 = vmatpush1.msra.mxu0 %v315
      %898 = vmatprep.subr.mxu0 0.0
      %899 = vmatpush1.msra.mxu0 %v316
      %900 = vmatprep.subr.mxu0 0.0
      %901 = vmatpush1.msra.mxu0 %v317
      %902 = vmatprep.subr.mxu0 0.0
      %903 = vmatpush1.msra.mxu0 %v318
      %904 = vmatprep.subr.mxu0 0.0
      %905 = vmatpush1.msra.mxu0 %v319
      %906 = vmatprep.subr.mxu0 0.0
      %907 = vmatpush1.msra.mxu0 %v320
      %908 = vmatprep.subr.mxu0 0.0
      %909 = vmatpush1.msra.mxu0 %v321
      %910 = vmatprep.subr.mxu0 0.0
      %911 = vmatpush1.msra.mxu0 %v322
      %912 = vmatprep.subr.mxu0 0.0
      %913 = vmatpush1.msra.mxu0 0.0
      %914 = vmatprep.subr.mxu0 0.0
      %915 = vmatpush1.msra.mxu0 0.0
      %916 = vmatprep.subr.mxu0 0.0
      %917 = vmatpush1.msra.mxu0 0.0
      %918 = vmatprep.subr.mxu0 0.0
      %919 = vmatpush1.msra.mxu0 0.0
      %920 = vmatprep.subr.mxu0 0.0
      %921 = vmatpush1.msra.mxu0 0.0
      %922 = vmatprep.subr.mxu0 0.0
      %923 = vmatpush1.msra.mxu0 0.0
      %924 = vmatprep.subr.mxu0 0.0
      %925 = vmatpush1.msra.mxu0 0.0
      %926 = vmatprep.subr.mxu0 0.0
      %927 = vmatpush1.msra.mxu0 0.0
      %928 = vmatprep.subr.mxu0 0.0
      %929 = vmatpush1.msra.mxu0 0.0
      %930 = vmatprep.subr.mxu0 0.0
      %931 = vmatpush1.msra.mxu0 0.0
      %932 = vmatprep.subr.mxu0 0.0
      %933 = vmatpush1.msra.mxu0 0.0
      %934 = vmatprep.subr.mxu0 0.0
      %935 = vmatpush1.msra.mxu0 0.0
      %936 = vmatprep.subr.mxu0 0.0
      %937 = vmatpush1.msra.mxu0 0.0
      %938 = vmatprep.subr.mxu0 0.0
      %939 = vmatpush1.msra.mxu0 0.0
      %940 = vmatprep.subr.mxu0 0.0
      %941 = vmatpush1.msra.mxu0 0.0
      %942 = vmatprep.subr.mxu0 0.0
      %943 = vmatpush1.msra.mxu0 0.0
      %944 = vmatprep.subr.mxu0 0.0
      %945 = vmatpush1.msra.mxu0 0.0
      %946 = vmatprep.subr.mxu0 0.0
      %947 = vmatpush1.msra.mxu0 0.0
      %948 = vmatprep.subr.mxu0 0.0
      %949 = vmatpush1.msra.mxu0 0.0
      %950 = vmatprep.subr.mxu0 0.0
      %951 = vmatpush1.msra.mxu0 0.0
      %952 = vmatprep.subr.mxu0 0.0
      %953 = vmatpush1.msra.mxu0 0.0
      %954 = vmatprep.subr.mxu0 0.0
      %955 = vmatpush1.msra.mxu0 0.0
      %956 = vmatprep.subr.mxu0 0.0
      %957 = vmatpush1.msra.mxu0 0.0
      %958 = vmatprep.subr.mxu0 0.0
      %959 = vmatpush1.msra.mxu0 0.0
      %960 = vmatprep.mubr.f32.mxu0 0.0
      %961 = vmatmul.mubr.f32.gmra.mrb[0].mxu0 %v803
      %v962 = vpop.f32.mrb[0].mxu0
      %v963 = vadd.f32 %v878, %v962
      %v964 = vpop.f32.mrb[0].mxu0
      %965 = vmatprep.mubr.f32.mxu0 0.0
      %966 = vmatmul.mubr.f32.gmra.mrb[0].mxu0 %v805
      %v967 = vpop.f32.mrb[0].mxu0
      %v968 = vadd.f32 %v883, %v967
      %v969 = vpop.f32.mrb[0].mxu0
      %970 = vmatprep.mubr.f32.mxu0 0.0
      %971 = vmatmul.mubr.f32.gmra.mrb[0].mxu0 %v807
      %v972 = vpop.f32.mrb[0].mxu0
      %v973 = vadd.f32 %v888, %v972
      %v974 = vpop.f32.mrb[0].mxu0
      %975 = vmatprep.mubr.f32.mxu0 0.0
      %976 = vmatmul.mubr.f32.gmra.mrb[0].mxu0 %v809
      %v977 = vpop.f32.mrb[0].mxu0
      %v978 = vadd.f32 %v893, %v977
      %v979 = vpop.f32.mrb[0].mxu0
      %980 = vdwg.mxu0
      %v982 = vsel %vm380, %v272, 0
      %v985 = vsel %vm380, %v275, 0
      %v988 = vsel %vm380, %v278, 0
      %v991 = vsel %vm380, %v281, 0
      %993 = vmatprep.subr.mxu0 0.0
      %994 = vmatpush1.msra.mxu0 %v218
      %995 = vmatprep.subr.mxu0 0.0
      %996 = vmatpush1.msra.mxu0 %v219
      %997 = vmatprep.subr.mxu0 0.0
      %998 = vmatpush1.msra.mxu0 %v220
      %999 = vmatprep.subr.mxu0 0.0
      %1000 = vmatpush1.msra.mxu0 %v221
      %1001 = vmatprep.subr.mxu0 0.0
      %1002 = vmatpush1.msra.mxu0 %v222
      %1003 = vmatprep.subr.mxu0 0.0
      %1004 = vmatpush1.msra.mxu0 %v223
      %1005 = vmatprep.subr.mxu0 0.0
      %1006 = vmatpush1.msra.mxu0 %v224
      %1007 = vmatprep.subr.mxu0 0.0
      %1008 = vmatpush1.msra.mxu0 %v225
      %1009 = vmatprep.subr.mxu0 0.0
      %1010 = vmatpush1.msra.mxu0 %v226
      %1011 = vmatprep.subr.mxu0 0.0
      %1012 = vmatpush1.msra.mxu0 %v227
      %1013 = vmatprep.subr.mxu0 0.0
      %1014 = vmatpush1.msra.mxu0 %v228
      %1015 = vmatprep.subr.mxu0 0.0
      %1016 = vmatpush1.msra.mxu0 %v229
      %1017 = vmatprep.subr.mxu0 0.0
      %1018 = vmatpush1.msra.mxu0 %v230
      %1019 = vmatprep.subr.mxu0 0.0
      %1020 = vmatpush1.msra.mxu0 %v231
      %1021 = vmatprep.subr.mxu0 0.0
      %1022 = vmatpush1.msra.mxu0 %v232
      %1023 = vmatprep.subr.mxu0 0.0
      %1024 = vmatpush1.msra.mxu0 %v233
      %1025 = vmatprep.subr.mxu0 0.0
      %1026 = vmatpush1.msra.mxu0 %v234
      %1027 = vmatprep.subr.mxu0 0.0
      %1028 = vmatpush1.msra.mxu0 %v235
      %1029 = vmatprep.subr.mxu0 0.0
      %1030 = vmatpush1.msra.mxu0 %v236
      %1031 = vmatprep.subr.mxu0 0.0
      %1032 = vmatpush1.msra.mxu0 %v237
      %1033 = vmatprep.subr.mxu0 0.0
      %1034 = vmatpush1.msra.mxu0 %v238
      %1035 = vmatprep.subr.mxu0 0.0
      %1036 = vmatpush1.msra.mxu0 %v239
      %1037 = vmatprep.subr.mxu0 0.0
      %1038 = vmatpush1.msra.mxu0 %v240
      %1039 = vmatprep.subr.mxu0 0.0
      %1040 = vmatpush1.msra.mxu0 %v241
      %1041 = vmatprep.subr.mxu0 0.0
      %1042 = vmatpush1.msra.mxu0 %v242
      %1043 = vmatprep.subr.mxu0 0.0
      %1044 = vmatpush1.msra.mxu0 %v243
      %1045 = vmatprep.subr.mxu0 0.0
      %1046 = vmatpush1.msra.mxu0 %v244
      %1047 = vmatprep.subr.mxu0 0.0
      %1048 = vmatpush1.msra.mxu0 %v245
      %1049 = vmatprep.subr.mxu0 0.0
      %1050 = vmatpush1.msra.mxu0 %v246
      %1051 = vmatprep.subr.mxu0 0.0
      %1052 = vmatpush1.msra.mxu0 %v247
      %1053 = vmatprep.subr.mxu0 0.0
      %1054 = vmatpush1.msra.mxu0 %v248
      %1055 = vmatprep.subr.mxu0 0.0
      %1056 = vmatpush1.msra.mxu0 %v249
      %1057 = vmatprep.mubr.f32.mxu0 %v271
      %1058 = vmatmul.mubr.f32.gmra.mrb[0].mxu0 %v270
      %v1059 = vpop.f32.mrb[0].mxu0
      %v1060 = vadd.f32 %v963, %v1059
      %v1061 = vpop.f32.mrb[0].mxu0
      %1062 = vmatprep.mubr.f32.mxu0 %v274
      %1063 = vmatmul.mubr.f32.gmra.mrb[0].mxu0 %v273
      %v1064 = vpop.f32.mrb[0].mxu0
      %v1065 = vadd.f32 %v968, %v1064
      %v1066 = vpop.f32.mrb[0].mxu0
      %1067 = vmatprep.mubr.f32.mxu0 %v277
      %1068 = vmatmul.mubr.f32.gmra.mrb[0].mxu0 %v276
      %v1069 = vpop.f32.mrb[0].mxu0
      %v1070 = vadd.f32 %v973, %v1069
      %v1071 = vpop.f32.mrb[0].mxu0
      %1072 = vmatprep.mubr.f32.mxu0 %v280
      %1073 = vmatmul.mubr.f32.gmra.mrb[0].mxu0 %v279
      %v1074 = vpop.f32.mrb[0].mxu0
      %v1075 = vadd.f32 %v978, %v1074
      %v1076 = vpop.f32.mrb[0].mxu0
      %1077 = vdwg.mxu0
      %1078 = vmatprep.subr.mxu0 0.0
      %1079 = vmatpush1.msra.mxu0 %v250
      %1080 = vmatprep.subr.mxu0 0.0
      %1081 = vmatpush1.msra.mxu0 %v251
      %1082 = vmatprep.subr.mxu0 0.0
      %1083 = vmatpush1.msra.mxu0 %v252
      %1084 = vmatprep.subr.mxu0 0.0
      %1085 = vmatpush1.msra.mxu0 %v253
      %1086 = vmatprep.subr.mxu0 0.0
      %1087 = vmatpush1.msra.mxu0 %v254
      %1088 = vmatprep.subr.mxu0 0.0
      %1089 = vmatpush1.msra.mxu0 %v255
      %1090 = vmatprep.subr.mxu0 0.0
      %1091 = vmatpush1.msra.mxu0 %v256
      %1092 = vmatprep.subr.mxu0 0.0
      %1093 = vmatpush1.msra.mxu0 %v257
      %1094 = vmatprep.subr.mxu0 0.0
      %1095 = vmatpush1.msra.mxu0 0.0
      %1096 = vmatprep.subr.mxu0 0.0
      %1097 = vmatpush1.msra.mxu0 0.0
      %1098 = vmatprep.subr.mxu0 0.0
      %1099 = vmatpush1.msra.mxu0 0.0
      %1100 = vmatprep.subr.mxu0 0.0
      %1101 = vmatpush1.msra.mxu0 0.0
      %1102 = vmatprep.subr.mxu0 0.0
      %1103 = vmatpush1.msra.mxu0 0.0
      %1104 = vmatprep.subr.mxu0 0.0
      %1105 = vmatpush1.msra.mxu0 0.0
      %1106 = vmatprep.subr.mxu0 0.0
      %1107 = vmatpush1.msra.mxu0 0.0
      %1108 = vmatprep.subr.mxu0 0.0
      %1109 = vmatpush1.msra.mxu0 0.0
      %1110 = vmatprep.subr.mxu0 0.0
      %1111 = vmatpush1.msra.mxu0 0.0
      %1112 = vmatprep.subr.mxu0 0.0
      %1113 = vmatpush1.msra.mxu0 0.0
      %1114 = vmatprep.subr.mxu0 0.0
      %1115 = vmatpush1.msra.mxu0 0.0
      %1116 = vmatprep.subr.mxu0 0.0
      %1117 = vmatpush1.msra.mxu0 0.0
      %1118 = vmatprep.subr.mxu0 0.0
      %1119 = vmatpush1.msra.mxu0 0.0
      %1120 = vmatprep.subr.mxu0 0.0
      %1121 = vmatpush1.msra.mxu0 0.0
      %1122 = vmatprep.subr.mxu0 0.0
      %1123 = vmatpush1.msra.mxu0 0.0
      %1124 = vmatprep.subr.mxu0 0.0
      %1125 = vmatpush1.msra.mxu0 0.0
      %1126 = vmatprep.subr.mxu0 0.0
      %1127 = vmatpush1.msra.mxu0 0.0
      %1128 = vmatprep.subr.mxu0 0.0
      %1129 = vmatpush1.msra.mxu0 0.0
      %1130 = vmatprep.subr.mxu0 0.0
      %1131 = vmatpush1.msra.mxu0 0.0
      %1132 = vmatprep.subr.mxu0 0.0
      %1133 = vmatpush1.msra.mxu0 0.0
      %1134 = vmatprep.subr.mxu0 0.0
      %1135 = vmatpush1.msra.mxu0 0.0
      %1136 = vmatprep.subr.mxu0 0.0
      %1137 = vmatpush1.msra.mxu0 0.0
      %1138 = vmatprep.subr.mxu0 0.0
      %1139 = vmatpush1.msra.mxu0 0.0
      %1140 = vmatprep.subr.mxu0 0.0
      %1141 = vmatpush1.msra.mxu0 0.0
      %1142 = vmatprep.mubr.f32.mxu0 0.0
      %1143 = vmatmul.mubr.f32.gmra.mrb[0].mxu0 %v982
      %v1144 = vpop.f32.mrb[0].mxu0
      %v1145 = vadd.f32 %v1060, %v1144
      %v1146 = vpop.f32.mrb[0].mxu0
      %1147 = vmatprep.mubr.f32.mxu0 0.0
      %1148 = vmatmul.mubr.f32.gmra.mrb[0].mxu0 %v985
      %v1149 = vpop.f32.mrb[0].mxu0
      %v1150 = vadd.f32 %v1065, %v1149
      %v1151 = vpop.f32.mrb[0].mxu0
      %1152 = vmatprep.mubr.f32.mxu0 0.0
      %1153 = vmatmul.mubr.f32.gmra.mrb[0].mxu0 %v988
      %v1154 = vpop.f32.mrb[0].mxu0
      %v1155 = vadd.f32 %v1070, %v1154
      %v1156 = vpop.f32.mrb[0].mxu0
      %1157 = vmatprep.mubr.f32.mxu0 0.0
      %1158 = vmatmul.mubr.f32.gmra.mrb[0].mxu0 %v991
      %v1159 = vpop.f32.mrb[0].mxu0
      %v1160 = vadd.f32 %v1075, %v1159
      %v1161 = vpop.f32.mrb[0].mxu0
      %1162 = vdwg.mxu0
      %s1163 = scalar_lea.vmem %s2, 640
      %v1164 = vld [vmem:[%s1163] sm:$0xff]
      %v1165 = vld [vmem:[%s1163 + $0x8] sm:$0xff]
      %v1166 = vld [vmem:[%s1163 + $0x10] sm:$0xff]
      %v1167 = vld [vmem:[%s1163 + $0x18] sm:$0xff]
      %v1168 = vld [vmem:[%s1163 + $0x20] sm:$0xff]
      %v1169 = vld [vmem:[%s1163 + $0x28] sm:$0xff]
      %v1170 = vld [vmem:[%s1163 + $0x30] sm:$0xff]
      %v1171 = vld [vmem:[%s1163 + $0x38] sm:$0xff]
      %v1172 = vld [vmem:[%s1163 + $0x40] sm:$0xff]
      %v1173 = vld [vmem:[%s1163 + $0x48] sm:$0xff]
      %v1174 = vld [vmem:[%s1163 + $0x50] sm:$0xff]
      %v1175 = vld [vmem:[%s1163 + $0x58] sm:$0xff]
      %v1176 = vld [vmem:[%s1163 + $0x60] sm:$0xff]
      %v1177 = vld [vmem:[%s1163 + $0x68] sm:$0xff]
      %v1178 = vld [vmem:[%s1163 + $0x70] sm:$0xff]
      %v1179 = vld [vmem:[%s1163 + $0x78] sm:$0xff]
      %v1180 = vld [vmem:[%s1163 + $0x80] sm:$0xff]
      %v1181 = vld [vmem:[%s1163 + $0x88] sm:$0xff]
      %v1182 = vld [vmem:[%s1163 + $0x90] sm:$0xff]
      %v1183 = vld [vmem:[%s1163 + $0x98] sm:$0xff]
      %v1184 = vld [vmem:[%s1163 + $0xa0] sm:$0xff]
      %v1185 = vld [vmem:[%s1163 + $0xa8] sm:$0xff]
      %v1186 = vld [vmem:[%s1163 + $0xb0] sm:$0xff]
      %v1187 = vld [vmem:[%s1163 + $0xb8] sm:$0xff]
      %v1188 = vld [vmem:[%s1163 + $0xc0] sm:$0xff]
      %v1189 = vld [vmem:[%s1163 + $0xc8] sm:$0xff]
      %v1190 = vld [vmem:[%s1163 + $0xd0] sm:$0xff]
      %v1191 = vld [vmem:[%s1163 + $0xd8] sm:$0xff]
      %v1192 = vld [vmem:[%s1163 + $0xe0] sm:$0xff]
      %v1193 = vld [vmem:[%s1163 + $0xe8] sm:$0xff]
      %v1194 = vld [vmem:[%s1163 + $0xf0] sm:$0xff]
      %v1195 = vld [vmem:[%s1163 + $0xf8] sm:$0xff]
      %v1196 = vld [vmem:[%s1163 + $0x100] sm:$0xff]
      %v1197 = vld [vmem:[%s1163 + $0x108] sm:$0xff]
      %v1198 = vld [vmem:[%s1163 + $0x110] sm:$0xff]
      %v1199 = vld [vmem:[%s1163 + $0x118] sm:$0xff]
      %v1200 = vld [vmem:[%s1163 + $0x120] sm:$0xff]
      %v1201 = vld [vmem:[%s1163 + $0x128] sm:$0xff]
      %v1202 = vld [vmem:[%s1163 + $0x130] sm:$0xff]
      %v1203 = vld [vmem:[%s1163 + $0x138] sm:$0xff]
      %v1204 = vld [vmem:[%s207 + $0x60] sm:$0xff]
      %v1205 = vld [vmem:[%s207 + $0x68] sm:$0xff]
      %v1206 = vld [vmem:[%s207 + $0x70] sm:$0xff]
      %v1208 = vsel %vm380, %v1206, 0
      %1210 = vmatprep.subr.mxu0 0.0
      %1211 = vmatpush1.msra.mxu0 %v1164
      %1212 = vmatprep.subr.mxu0 0.0
      %1213 = vmatpush1.msra.mxu0 %v1165
      %1214 = vmatprep.subr.mxu0 0.0
      %1215 = vmatpush1.msra.mxu0 %v1166
      %1216 = vmatprep.subr.mxu0 0.0
      %1217 = vmatpush1.msra.mxu0 %v1167
      %1218 = vmatprep.subr.mxu0 0.0
      %1219 = vmatpush1.msra.mxu0 %v1168
      %1220 = vmatprep.subr.mxu0 0.0
      %1221 = vmatpush1.msra.mxu0 %v1169
      %1222 = vmatprep.subr.mxu0 0.0
      %1223 = vmatpush1.msra.mxu0 %v1170
      %1224 = vmatprep.subr.mxu0 0.0
      %1225 = vmatpush1.msra.mxu0 %v1171
      %1226 = vmatprep.subr.mxu0 0.0
      %1227 = vmatpush1.msra.mxu0 %v1172
      %1228 = vmatprep.subr.mxu0 0.0
      %1229 = vmatpush1.msra.mxu0 %v1173
      %1230 = vmatprep.subr.mxu0 0.0
      %1231 = vmatpush1.msra.mxu0 %v1174
      %1232 = vmatprep.subr.mxu0 0.0
      %1233 = vmatpush1.msra.mxu0 %v1175
      %1234 = vmatprep.subr.mxu0 0.0
      %1235 = vmatpush1.msra.mxu0 %v1176
      %1236 = vmatprep.subr.mxu0 0.0
      %1237 = vmatpush1.msra.mxu0 %v1177
      %1238 = vmatprep.subr.mxu0 0.0
      %1239 = vmatpush1.msra.mxu0 %v1178
      %1240 = vmatprep.subr.mxu0 0.0
      %1241 = vmatpush1.msra.mxu0 %v1179
      %1242 = vmatprep.subr.mxu0 0.0
      %1243 = vmatpush1.msra.mxu0 %v1180
      %1244 = vmatprep.subr.mxu0 0.0
      %1245 = vmatpush1.msra.mxu0 %v1181
      %1246 = vmatprep.subr.mxu0 0.0
      %1247 = vmatpush1.msra.mxu0 %v1182
      %1248 = vmatprep.subr.mxu0 0.0
      %1249 = vmatpush1.msra.mxu0 %v1183
      %1250 = vmatprep.subr.mxu0 0.0
      %1251 = vmatpush1.msra.mxu0 %v1184
      %1252 = vmatprep.subr.mxu0 0.0
      %1253 = vmatpush1.msra.mxu0 %v1185
      %1254 = vmatprep.subr.mxu0 0.0
      %1255 = vmatpush1.msra.mxu0 %v1186
      %1256 = vmatprep.subr.mxu0 0.0
      %1257 = vmatpush1.msra.mxu0 %v1187
      %1258 = vmatprep.subr.mxu0 0.0
      %1259 = vmatpush1.msra.mxu0 %v1188
      %1260 = vmatprep.subr.mxu0 0.0
      %1261 = vmatpush1.msra.mxu0 %v1189
      %1262 = vmatprep.subr.mxu0 0.0
      %1263 = vmatpush1.msra.mxu0 %v1190
      %1264 = vmatprep.subr.mxu0 0.0
      %1265 = vmatpush1.msra.mxu0 %v1191
      %1266 = vmatprep.subr.mxu0 0.0
      %1267 = vmatpush1.msra.mxu0 %v1192
      %1268 = vmatprep.subr.mxu0 0.0
      %1269 = vmatpush1.msra.mxu0 %v1193
      %1270 = vmatprep.subr.mxu0 0.0
      %1271 = vmatpush1.msra.mxu0 %v1194
      %1272 = vmatprep.subr.mxu0 0.0
      %1273 = vmatpush1.msra.mxu0 %v1195
      %1274 = vmatprep.mubr.f32.mxu0 %v262
      %1275 = vmatmul.mubr.f32.gmra.mrb[0].mxu0 %v261
      %v1276 = vpop.f32.mrb[0].mxu0
      %v1277 = vadd.f32 0.0, %v1276
      %v1278 = vpop.f32.mrb[0].mxu0
      %1279 = vmatprep.mubr.f32.mxu0 %v265
      %1280 = vmatmul.mubr.f32.gmra.mrb[0].mxu0 %v264
      %v1281 = vpop.f32.mrb[0].mxu0
      %v1282 = vadd.f32 0.0, %v1281
      %v1283 = vpop.f32.mrb[0].mxu0
      %1284 = vmatprep.mubr.f32.mxu0 %v268
      %1285 = vmatmul.mubr.f32.gmra.mrb[0].mxu0 %v267
      %v1286 = vpop.f32.mrb[0].mxu0
      %v1287 = vadd.f32 0.0, %v1286
      %v1288 = vpop.f32.mrb[0].mxu0
      %1289 = vmatprep.mubr.f32.mxu0 %v1205
      %1290 = vmatmul.mubr.f32.gmra.mrb[0].mxu0 %v1204
      %v1291 = vpop.f32.mrb[0].mxu0
      %v1292 = vadd.f32 0.0, %v1291
      %v1293 = vpop.f32.mrb[0].mxu0
      %1294 = vdwg.mxu0
      %1295 = vmatprep.subr.mxu0 0.0
      %1296 = vmatpush1.msra.mxu0 %v1196
      %1297 = vmatprep.subr.mxu0 0.0
      %1298 = vmatpush1.msra.mxu0 %v1197
      %1299 = vmatprep.subr.mxu0 0.0
      %1300 = vmatpush1.msra.mxu0 %v1198
      %1301 = vmatprep.subr.mxu0 0.0
      %1302 = vmatpush1.msra.mxu0 %v1199
      %1303 = vmatprep.subr.mxu0 0.0
      %1304 = vmatpush1.msra.mxu0 %v1200
      %1305 = vmatprep.subr.mxu0 0.0
      %1306 = vmatpush1.msra.mxu0 %v1201
      %1307 = vmatprep.subr.mxu0 0.0
      %1308 = vmatpush1.msra.mxu0 %v1202
      %1309 = vmatprep.subr.mxu0 0.0
      %1310 = vmatpush1.msra.mxu0 %v1203
      %1311 = vmatprep.subr.mxu0 0.0
      %1312 = vmatpush1.msra.mxu0 0.0
      %1313 = vmatprep.subr.mxu0 0.0
      %1314 = vmatpush1.msra.mxu0 0.0
      %1315 = vmatprep.subr.mxu0 0.0
      %1316 = vmatpush1.msra.mxu0 0.0
      %1317 = vmatprep.subr.mxu0 0.0
      %1318 = vmatpush1.msra.mxu0 0.0
      %1319 = vmatprep.subr.mxu0 0.0
      %1320 = vmatpush1.msra.mxu0 0.0
      %1321 = vmatprep.subr.mxu0 0.0
      %1322 = vmatpush1.msra.mxu0 0.0
      %1323 = vmatprep.subr.mxu0 0.0
      %1324 = vmatpush1.msra.mxu0 0.0
      %1325 = vmatprep.subr.mxu0 0.0
      %1326 = vmatpush1.msra.mxu0 0.0
      %1327 = vmatprep.subr.mxu0 0.0
      %1328 = vmatpush1.msra.mxu0 0.0
      %1329 = vmatprep.subr.mxu0 0.0
      %1330 = vmatpush1.msra.mxu0 0.0
      %1331 = vmatprep.subr.mxu0 0.0
      %1332 = vmatpush1.msra.mxu0 0.0
      %1333 = vmatprep.subr.mxu0 0.0
      %1334 = vmatpush1.msra.mxu0 0.0
      %1335 = vmatprep.subr.mxu0 0.0
      %1336 = vmatpush1.msra.mxu0 0.0
      %1337 = vmatprep.subr.mxu0 0.0
      %1338 = vmatpush1.msra.mxu0 0.0
      %1339 = vmatprep.subr.mxu0 0.0
      %1340 = vmatpush1.msra.mxu0 0.0
      %1341 = vmatprep.subr.mxu0 0.0
      %1342 = vmatpush1.msra.mxu0 0.0
      %1343 = vmatprep.subr.mxu0 0.0
      %1344 = vmatpush1.msra.mxu0 0.0
      %1345 = vmatprep.subr.mxu0 0.0
      %1346 = vmatpush1.msra.mxu0 0.0
      %1347 = vmatprep.subr.mxu0 0.0
      %1348 = vmatpush1.msra.mxu0 0.0
      %1349 = vmatprep.subr.mxu0 0.0
      %1350 = vmatpush1.msra.mxu0 0.0
      %1351 = vmatprep.subr.mxu0 0.0
      %1352 = vmatpush1.msra.mxu0 0.0
      %1353 = vmatprep.subr.mxu0 0.0
      %1354 = vmatpush1.msra.mxu0 0.0
      %1355 = vmatprep.subr.mxu0 0.0
      %1356 = vmatpush1.msra.mxu0 0.0
      %1357 = vmatprep.subr.mxu0 0.0
      %1358 = vmatpush1.msra.mxu0 0.0
      %1359 = vmatprep.mubr.f32.mxu0 0.0
      %1360 = vmatmul.mubr.f32.gmra.mrb[0].mxu0 %v562
      %v1361 = vpop.f32.mrb[0].mxu0
      %v1362 = vadd.f32 %v1277, %v1361
      %v1363 = vpop.f32.mrb[0].mxu0
      %1364 = vmatprep.mubr.f32.mxu0 0.0
      %1365 = vmatmul.mubr.f32.gmra.mrb[0].mxu0 %v564
      %v1366 = vpop.f32.mrb[0].mxu0
      %v1367 = vadd.f32 %v1282, %v1366
      %v1368 = vpop.f32.mrb[0].mxu0
      %1369 = vmatprep.mubr.f32.mxu0 0.0
      %1370 = vmatmul.mubr.f32.gmra.mrb[0].mxu0 %v566
      %v1371 = vpop.f32.mrb[0].mxu0
      %v1372 = vadd.f32 %v1287, %v1371
      %v1373 = vpop.f32.mrb[0].mxu0
      %1374 = vmatprep.mubr.f32.mxu0 0.0
      %1375 = vmatmul.mubr.f32.gmra.mrb[0].mxu0 %v1208
      %v1376 = vpop.f32.mrb[0].mxu0
      %v1377 = vadd.f32 %v1292, %v1376
      %v1378 = vpop.f32.mrb[0].mxu0
      %1379 = vdwg.mxu0
      %v1380 = vadd.f32 %v720, %v1362
      %v1381 = vadd.f32 %v725, %v1367
      %v1382 = vadd.f32 %v730, %v1372
      %v1383 = vadd.f32 %v735, %v1377
      %v1384 = vld [vmem:[%s212 + $0x60] sm:$0xff]
      %v1385 = vld [vmem:[%s212 + $0x68] sm:$0xff]
      %v1386 = vld [vmem:[%s212 + $0x70] sm:$0xff]
      %v1387 = vsel %vm380, %v743, 0
      %v1389 = vsel %vm380, %v746, 0
      %v1391 = vsel %vm380, %v749, 0
      %v1394 = vsel %vm380, %v1386, 0
      %1396 = vmatprep.subr.mxu0 0.0
      %1397 = vmatpush1.msra.mxu0 %v1164
      %1398 = vmatprep.subr.mxu0 0.0
      %1399 = vmatpush1.msra.mxu0 %v1165
      %1400 = vmatprep.subr.mxu0 0.0
      %1401 = vmatpush1.msra.mxu0 %v1166
      %1402 = vmatprep.subr.mxu0 0.0
      %1403 = vmatpush1.msra.mxu0 %v1167
      %1404 = vmatprep.subr.mxu0 0.0
      %1405 = vmatpush1.msra.mxu0 %v1168
      %1406 = vmatprep.subr.mxu0 0.0
      %1407 = vmatpush1.msra.mxu0 %v1169
      %1408 = vmatprep.subr.mxu0 0.0
      %1409 = vmatpush1.msra.mxu0 %v1170
      %1410 = vmatprep.subr.mxu0 0.0
      %1411 = vmatpush1.msra.mxu0 %v1171
      %1412 = vmatprep.subr.mxu0 0.0
      %1413 = vmatpush1.msra.mxu0 %v1172
      %1414 = vmatprep.subr.mxu0 0.0
      %1415 = vmatpush1.msra.mxu0 %v1173
      %1416 = vmatprep.subr.mxu0 0.0
      %1417 = vmatpush1.msra.mxu0 %v1174
      %1418 = vmatprep.subr.mxu0 0.0
      %1419 = vmatpush1.msra.mxu0 %v1175
      %1420 = vmatprep.subr.mxu0 0.0
      %1421 = vmatpush1.msra.mxu0 %v1176
      %1422 = vmatprep.subr.mxu0 0.0
      %1423 = vmatpush1.msra.mxu0 %v1177
      %1424 = vmatprep.subr.mxu0 0.0
      %1425 = vmatpush1.msra.mxu0 %v1178
      %1426 = vmatprep.subr.mxu0 0.0
      %1427 = vmatpush1.msra.mxu0 %v1179
      %1428 = vmatprep.subr.mxu0 0.0
      %1429 = vmatpush1.msra.mxu0 %v1180
      %1430 = vmatprep.subr.mxu0 0.0
      %1431 = vmatpush1.msra.mxu0 %v1181
      %1432 = vmatprep.subr.mxu0 0.0
      %1433 = vmatpush1.msra.mxu0 %v1182
      %1434 = vmatprep.subr.mxu0 0.0
      %1435 = vmatpush1.msra.mxu0 %v1183
      %1436 = vmatprep.subr.mxu0 0.0
      %1437 = vmatpush1.msra.mxu0 %v1184
      %1438 = vmatprep.subr.mxu0 0.0
      %1439 = vmatpush1.msra.mxu0 %v1185
      %1440 = vmatprep.subr.mxu0 0.0
      %1441 = vmatpush1.msra.mxu0 %v1186
      %1442 = vmatprep.subr.mxu0 0.0
      %1443 = vmatpush1.msra.mxu0 %v1187
      %1444 = vmatprep.subr.mxu0 0.0
      %1445 = vmatpush1.msra.mxu0 %v1188
      %1446 = vmatprep.subr.mxu0 0.0
      %1447 = vmatpush1.msra.mxu0 %v1189
      %1448 = vmatprep.subr.mxu0 0.0
      %1449 = vmatpush1.msra.mxu0 %v1190
      %1450 = vmatprep.subr.mxu0 0.0
      %1451 = vmatpush1.msra.mxu0 %v1191
      %1452 = vmatprep.subr.mxu0 0.0
      %1453 = vmatpush1.msra.mxu0 %v1192
      %1454 = vmatprep.subr.mxu0 0.0
      %1455 = vmatpush1.msra.mxu0 %v1193
      %1456 = vmatprep.subr.mxu0 0.0
      %1457 = vmatpush1.msra.mxu0 %v1194
      %1458 = vmatprep.subr.mxu0 0.0
      %1459 = vmatpush1.msra.mxu0 %v1195
      %1460 = vmatprep.mubr.f32.mxu0 %v742
      %1461 = vmatmul.mubr.f32.gmra.mrb[0].mxu0 %v741
      %v1462 = vpop.f32.mrb[0].mxu0
      %v1463 = vadd.f32 0.0, %v1462
      %v1464 = vpop.f32.mrb[0].mxu0
      %1465 = vmatprep.mubr.f32.mxu0 %v745
      %1466 = vmatmul.mubr.f32.gmra.mrb[0].mxu0 %v744
      %v1467 = vpop.f32.mrb[0].mxu0
      %v1468 = vadd.f32 0.0, %v1467
      %v1469 = vpop.f32.mrb[0].mxu0
      %1470 = vmatprep.mubr.f32.mxu0 %v748
      %1471 = vmatmul.mubr.f32.gmra.mrb[0].mxu0 %v747
      %v1472 = vpop.f32.mrb[0].mxu0
      %v1473 = vadd.f32 0.0, %v1472
      %v1474 = vpop.f32.mrb[0].mxu0
      %1475 = vmatprep.mubr.f32.mxu0 %v1385
      %1476 = vmatmul.mubr.f32.gmra.mrb[0].mxu0 %v1384
      %v1477 = vpop.f32.mrb[0].mxu0
      %v1478 = vadd.f32 0.0, %v1477
      %v1479 = vpop.f32.mrb[0].mxu0
      %1480 = vdwg.mxu0
      %1481 = vmatprep.subr.mxu0 0.0
      %1482 = vmatpush1.msra.mxu0 %v1196
      %1483 = vmatprep.subr.mxu0 0.0
      %1484 = vmatpush1.msra.mxu0 %v1197
      %1485 = vmatprep.subr.mxu0 0.0
      %1486 = vmatpush1.msra.mxu0 %v1198
      %1487 = vmatprep.subr.mxu0 0.0
      %1488 = vmatpush1.msra.mxu0 %v1199
      %1489 = vmatprep.subr.mxu0 0.0
      %1490 = vmatpush1.msra.mxu0 %v1200
      %1491 = vmatprep.subr.mxu0 0.0
      %1492 = vmatpush1.msra.mxu0 %v1201
      %1493 = vmatprep.subr.mxu0 0.0
      %1494 = vmatpush1.msra.mxu0 %v1202
      %1495 = vmatprep.subr.mxu0 0.0
      %1496 = vmatpush1.msra.mxu0 %v1203
      %1497 = vmatprep.subr.mxu0 0.0
      %1498 = vmatpush1.msra.mxu0 0.0
      %1499 = vmatprep.subr.mxu0 0.0
      %1500 = vmatpush1.msra.mxu0 0.0
      %1501 = vmatprep.subr.mxu0 0.0
      %1502 = vmatpush1.msra.mxu0 0.0
      %1503 = vmatprep.subr.mxu0 0.0
      %1504 = vmatpush1.msra.mxu0 0.0
      %1505 = vmatprep.subr.mxu0 0.0
      %1506 = vmatpush1.msra.mxu0 0.0
      %1507 = vmatprep.subr.mxu0 0.0
      %1508 = vmatpush1.msra.mxu0 0.0
      %1509 = vmatprep.subr.mxu0 0.0
      %1510 = vmatpush1.msra.mxu0 0.0
      %1511 = vmatprep.subr.mxu0 0.0
      %1512 = vmatpush1.msra.mxu0 0.0
      %1513 = vmatprep.subr.mxu0 0.0
      %1514 = vmatpush1.msra.mxu0 0.0
      %1515 = vmatprep.subr.mxu0 0.0
      %1516 = vmatpush1.msra.mxu0 0.0
      %1517 = vmatprep.subr.mxu0 0.0
      %1518 = vmatpush1.msra.mxu0 0.0
      %1519 = vmatprep.subr.mxu0 0.0
      %1520 = vmatpush1.msra.mxu0 0.0
      %1521 = vmatprep.subr.mxu0 0.0
      %1522 = vmatpush1.msra.mxu0 0.0
      %1523 = vmatprep.subr.mxu0 0.0
      %1524 = vmatpush1.msra.mxu0 0.0
      %1525 = vmatprep.subr.mxu0 0.0
      %1526 = vmatpush1.msra.mxu0 0.0
      %1527 = vmatprep.subr.mxu0 0.0
      %1528 = vmatpush1.msra.mxu0 0.0
      %1529 = vmatprep.subr.mxu0 0.0
      %1530 = vmatpush1.msra.mxu0 0.0
      %1531 = vmatprep.subr.mxu0 0.0
      %1532 = vmatpush1.msra.mxu0 0.0
      %1533 = vmatprep.subr.mxu0 0.0
      %1534 = vmatpush1.msra.mxu0 0.0
      %1535 = vmatprep.subr.mxu0 0.0
      %1536 = vmatpush1.msra.mxu0 0.0
      %1537 = vmatprep.subr.mxu0 0.0
      %1538 = vmatpush1.msra.mxu0 0.0
      %1539 = vmatprep.subr.mxu0 0.0
      %1540 = vmatpush1.msra.mxu0 0.0
      %1541 = vmatprep.subr.mxu0 0.0
      %1542 = vmatpush1.msra.mxu0 0.0
      %1543 = vmatprep.subr.mxu0 0.0
      %1544 = vmatpush1.msra.mxu0 0.0
      %1545 = vmatprep.mubr.f32.mxu0 0.0
      %1546 = vmatmul.mubr.f32.gmra.mrb[0].mxu0 %v1387
      %v1547 = vpop.f32.mrb[0].mxu0
      %v1548 = vadd.f32 %v1463, %v1547
      %v1549 = vpop.f32.mrb[0].mxu0
      %1550 = vmatprep.mubr.f32.mxu0 0.0
      %1551 = vmatmul.mubr.f32.gmra.mrb[0].mxu0 %v1389
      %v1552 = vpop.f32.mrb[0].mxu0
      %v1553 = vadd.f32 %v1468, %v1552
      %v1554 = vpop.f32.mrb[0].mxu0
      %1555 = vmatprep.mubr.f32.mxu0 0.0
      %1556 = vmatmul.mubr.f32.gmra.mrb[0].mxu0 %v1391
      %v1557 = vpop.f32.mrb[0].mxu0
      %v1558 = vadd.f32 %v1473, %v1557
      %v1559 = vpop.f32.mrb[0].mxu0
      %1560 = vmatprep.mubr.f32.mxu0 0.0
      %1561 = vmatmul.mubr.f32.gmra.mrb[0].mxu0 %v1394
      %v1562 = vpop.f32.mrb[0].mxu0
      %v1563 = vadd.f32 %v1478, %v1562
      %v1564 = vpop.f32.mrb[0].mxu0
      %1565 = vdwg.mxu0
      %v1566 = vadd.f32 %v1145, %v1548
      %v1567 = vadd.f32 %v1150, %v1553
      %v1568 = vadd.f32 %v1155, %v1558
      %v1569 = vadd.f32 %v1160, %v1563
      %s1570 = scalar_lea.vmem %s2, 960
      %v1571 = vld [vmem:[%s1570] sm:$0xff]
      %v1572 = vld [vmem:[%s1570 + $0x8] sm:$0xff]
      %v1573 = vld [vmem:[%s1570 + $0x10] sm:$0xff]
      %v1574 = vld [vmem:[%s1570 + $0x18] sm:$0xff]
      %v1575 = vld [vmem:[%s1570 + $0x20] sm:$0xff]
      %v1576 = vld [vmem:[%s1570 + $0x28] sm:$0xff]
      %v1577 = vld [vmem:[%s1570 + $0x30] sm:$0xff]
      %v1578 = vld [vmem:[%s1570 + $0x38] sm:$0xff]
      %v1579 = vld [vmem:[%s1570 + $0x40] sm:$0xff]
      %v1580 = vld [vmem:[%s1570 + $0x48] sm:$0xff]
      %v1581 = vld [vmem:[%s1570 + $0x50] sm:$0xff]
      %v1582 = vld [vmem:[%s1570 + $0x58] sm:$0xff]
      %v1583 = vld [vmem:[%s1570 + $0x60] sm:$0xff]
      %v1584 = vld [vmem:[%s1570 + $0x68] sm:$0xff]
      %v1585 = vld [vmem:[%s1570 + $0x70] sm:$0xff]
      %v1586 = vld [vmem:[%s1570 + $0x78] sm:$0xff]
      %v1587 = vld [vmem:[%s1570 + $0x80] sm:$0xff]
      %v1588 = vld [vmem:[%s1570 + $0x88] sm:$0xff]
      %v1589 = vld [vmem:[%s1570 + $0x90] sm:$0xff]
      %v1590 = vld [vmem:[%s1570 + $0x98] sm:$0xff]
      %v1591 = vld [vmem:[%s1570 + $0xa0] sm:$0xff]
      %v1592 = vld [vmem:[%s1570 + $0xa8] sm:$0xff]
      %v1593 = vld [vmem:[%s1570 + $0xb0] sm:$0xff]
      %v1594 = vld [vmem:[%s1570 + $0xb8] sm:$0xff]
      %v1595 = vld [vmem:[%s1570 + $0xc0] sm:$0xff]
      %v1596 = vld [vmem:[%s1570 + $0xc8] sm:$0xff]
      %v1597 = vld [vmem:[%s1570 + $0xd0] sm:$0xff]
      %v1598 = vld [vmem:[%s1570 + $0xd8] sm:$0xff]
      %v1599 = vld [vmem:[%s1570 + $0xe0] sm:$0xff]
      %v1600 = vld [vmem:[%s1570 + $0xe8] sm:$0xff]
      %v1601 = vld [vmem:[%s1570 + $0xf0] sm:$0xff]
      %v1602 = vld [vmem:[%s1570 + $0xf8] sm:$0xff]
      %v1603 = vld [vmem:[%s1570 + $0x100] sm:$0xff]
      %v1604 = vld [vmem:[%s1570 + $0x108] sm:$0xff]
      %v1605 = vld [vmem:[%s1570 + $0x110] sm:$0xff]
      %v1606 = vld [vmem:[%s1570 + $0x118] sm:$0xff]
      %v1607 = vld [vmem:[%s1570 + $0x120] sm:$0xff]
      %v1608 = vld [vmem:[%s1570 + $0x128] sm:$0xff]
      %v1609 = vld [vmem:[%s1570 + $0x130] sm:$0xff]
      %v1610 = vld [vmem:[%s1570 + $0x138] sm:$0xff]
      %v1611 = vld [vmem:[%s207 + $0x18] sm:$0xf0]
      %v1612 = vld [vmem:[%s207 + $0x20] sm:$0xf0]
      %v1613 = vld [vmem:[%s207 + $0x28] sm:$0xf0]
      %v1614 = vld [vmem:[%s207 + $0x30] sm:$0xff]
      %v1615 = vld [vmem:[%s207 + $0x38] sm:$0xff]
      %v1616 = vld [vmem:[%s207 + $0x40] sm:$0xff]
      %v1617 = vld [vmem:[%s207 + $0x48] sm:$0xff]
      %v1618 = vld [vmem:[%s207 + $0x50] sm:$0xff]
      %v1619 = vld [vmem:[%s207 + $0x58] sm:$0xff]
      %v1620 = vld [vmem:[%s207 + $0x60] sm:$0xff]
      %v1621 = vld [vmem:[%s207 + $0x68] sm:$0xff]
      %v1622 = vld [vmem:[%s207 + $0x70] sm:$0xff]
      %v1623 = vld [vmem:[%s207 + $0x78] sm:$0xf]
      %v1624 = vld [vmem:[%s207 + $0x80] sm:$0xf]
      %v1625 = vld [vmem:[%s207 + $0x88] sm:$0xf]
      %v1641 = vrot.slane %v1611, 4
      %v1642 = vrot.slane %v1614, 4
      %v1643 = vsel %vm344, %v1641, %v1642
      %v1644 = vrot.slane %v1612, 4
      %v1645 = vrot.slane %v1615, 4
      %v1646 = vsel %vm344, %v1644, %v1645
      %v1647 = vrot.slane %v1613, 4
      %v1648 = vrot.slane %v1616, 4
      %v1649 = vsel %vm344, %v1647, %v1648
      %v1650 = vrot.slane %v1617, 4
      %v1651 = vsel %vm344, %v1642, %v1650
      %v1652 = vrot.slane %v1618, 4
      %v1653 = vsel %vm344, %v1645, %v1652
      %v1654 = vrot.slane %v1619, 4
      %v1655 = vsel %vm344, %v1648, %v1654
      %v1656 = vrot.slane %v1620, 4
      %v1657 = vsel %vm344, %v1650, %v1656
      %v1658 = vrot.slane %v1621, 4
      %v1659 = vsel %vm344, %v1652, %v1658
      %v1660 = vrot.slane %v1622, 4
      %v1661 = vsel %vm344, %v1654, %v1660
      %v1662 = vrot.slane %v1623, 4
      %v1663 = vsel %vm344, %v1656, %v1662
      %v1664 = vrot.slane %v1624, 4
      %v1665 = vsel %vm344, %v1658, %v1664
      %v1666 = vrot.slane %v1625, 4
      %v1667 = vsel %vm344, %v1660, %v1666
      %v1676 = vsel %vm380, %v1649, 0
      %v1678 = vsel %vm380, %v1655, 0
      %v1680 = vsel %vm380, %v1661, 0
      %v1682 = vsel %vm380, %v1667, 0
      %1684 = vmatprep.subr.mxu0 0.0
      %1685 = vmatpush1.msra.mxu0 %v1571
      %1686 = vmatprep.subr.mxu0 0.0
      %1687 = vmatpush1.msra.mxu0 %v1572
      %1688 = vmatprep.subr.mxu0 0.0
      %1689 = vmatpush1.msra.mxu0 %v1573
      %1690 = vmatprep.subr.mxu0 0.0
      %1691 = vmatpush1.msra.mxu0 %v1574
      %1692 = vmatprep.subr.mxu0 0.0
      %1693 = vmatpush1.msra.mxu0 %v1575
      %1694 = vmatprep.subr.mxu0 0.0
      %1695 = vmatpush1.msra.mxu0 %v1576
      %1696 = vmatprep.subr.mxu0 0.0
      %1697 = vmatpush1.msra.mxu0 %v1577
      %1698 = vmatprep.subr.mxu0 0.0
      %1699 = vmatpush1.msra.mxu0 %v1578
      %1700 = vmatprep.subr.mxu0 0.0
      %1701 = vmatpush1.msra.mxu0 %v1579
      %1702 = vmatprep.subr.mxu0 0.0
      %1703 = vmatpush1.msra.mxu0 %v1580
      %1704 = vmatprep.subr.mxu0 0.0
      %1705 = vmatpush1.msra.mxu0 %v1581
      %1706 = vmatprep.subr.mxu0 0.0
      %1707 = vmatpush1.msra.mxu0 %v1582
      %1708 = vmatprep.subr.mxu0 0.0
      %1709 = vmatpush1.msra.mxu0 %v1583
      %1710 = vmatprep.subr.mxu0 0.0
      %1711 = vmatpush1.msra.mxu0 %v1584
      %1712 = vmatprep.subr.mxu0 0.0
      %1713 = vmatpush1.msra.mxu0 %v1585
      %1714 = vmatprep.subr.mxu0 0.0
      %1715 = vmatpush1.msra.mxu0 %v1586
      %1716 = vmatprep.subr.mxu0 0.0
      %1717 = vmatpush1.msra.mxu0 %v1587
      %1718 = vmatprep.subr.mxu0 0.0
      %1719 = vmatpush1.msra.mxu0 %v1588
      %1720 = vmatprep.subr.mxu0 0.0
      %1721 = vmatpush1.msra.mxu0 %v1589
      %1722 = vmatprep.subr.mxu0 0.0
      %1723 = vmatpush1.msra.mxu0 %v1590
      %1724 = vmatprep.subr.mxu0 0.0
      %1725 = vmatpush1.msra.mxu0 %v1591
      %1726 = vmatprep.subr.mxu0 0.0
      %1727 = vmatpush1.msra.mxu0 %v1592
      %1728 = vmatprep.subr.mxu0 0.0
      %1729 = vmatpush1.msra.mxu0 %v1593
      %1730 = vmatprep.subr.mxu0 0.0
      %1731 = vmatpush1.msra.mxu0 %v1594
      %1732 = vmatprep.subr.mxu0 0.0
      %1733 = vmatpush1.msra.mxu0 %v1595
      %1734 = vmatprep.subr.mxu0 0.0
      %1735 = vmatpush1.msra.mxu0 %v1596
      %1736 = vmatprep.subr.mxu0 0.0
      %1737 = vmatpush1.msra.mxu0 %v1597
      %1738 = vmatprep.subr.mxu0 0.0
      %1739 = vmatpush1.msra.mxu0 %v1598
      %1740 = vmatprep.subr.mxu0 0.0
      %1741 = vmatpush1.msra.mxu0 %v1599
      %1742 = vmatprep.subr.mxu0 0.0
      %1743 = vmatpush1.msra.mxu0 %v1600
      %1744 = vmatprep.subr.mxu0 0.0
      %1745 = vmatpush1.msra.mxu0 %v1601
      %1746 = vmatprep.subr.mxu0 0.0
      %1747 = vmatpush1.msra.mxu0 %v1602
      %1748 = vmatprep.mubr.f32.mxu0 %v1646
      %1749 = vmatmul.mubr.f32.gmra.mrb[0].mxu0 %v1643
      %v1750 = vpop.f32.mrb[0].mxu0
      %v1751 = vadd.f32 0.0, %v1750
      %v1752 = vpop.f32.mrb[0].mxu0
      %1753 = vmatprep.mubr.f32.mxu0 %v1653
      %1754 = vmatmul.mubr.f32.gmra.mrb[0].mxu0 %v1651
      %v1755 = vpop.f32.mrb[0].mxu0
      %v1756 = vadd.f32 0.0, %v1755
      %v1757 = vpop.f32.mrb[0].mxu0
      %1758 = vmatprep.mubr.f32.mxu0 %v1659
      %1759 = vmatmul.mubr.f32.gmra.mrb[0].mxu0 %v1657
      %v1760 = vpop.f32.mrb[0].mxu0
      %v1761 = vadd.f32 0.0, %v1760
      %v1762 = vpop.f32.mrb[0].mxu0
      %1763 = vmatprep.mubr.f32.mxu0 %v1665
      %1764 = vmatmul.mubr.f32.gmra.mrb[0].mxu0 %v1663
      %v1765 = vpop.f32.mrb[0].mxu0
      %v1766 = vadd.f32 0.0, %v1765
      %v1767 = vpop.f32.mrb[0].mxu0
      %1768 = vdwg.mxu0
      %1769 = vmatprep.subr.mxu0 0.0
      %1770 = vmatpush1.msra.mxu0 %v1603
      %1771 = vmatprep.subr.mxu0 0.0
      %1772 = vmatpush1.msra.mxu0 %v1604
      %1773 = vmatprep.subr.mxu0 0.0
      %1774 = vmatpush1.msra.mxu0 %v1605
      %1775 = vmatprep.subr.mxu0 0.0
      %1776 = vmatpush1.msra.mxu0 %v1606
      %1777 = vmatprep.subr.mxu0 0.0
      %1778 = vmatpush1.msra.mxu0 %v1607
      %1779 = vmatprep.subr.mxu0 0.0
      %1780 = vmatpush1.msra.mxu0 %v1608
      %1781 = vmatprep.subr.mxu0 0.0
      %1782 = vmatpush1.msra.mxu0 %v1609
      %1783 = vmatprep.subr.mxu0 0.0
      %1784 = vmatpush1.msra.mxu0 %v1610
      %1785 = vmatprep.subr.mxu0 0.0
      %1786 = vmatpush1.msra.mxu0 0.0
      %1787 = vmatprep.subr.mxu0 0.0
      %1788 = vmatpush1.msra.mxu0 0.0
      %1789 = vmatprep.subr.mxu0 0.0
      %1790 = vmatpush1.msra.mxu0 0.0
      %1791 = vmatprep.subr.mxu0 0.0
      %1792 = vmatpush1.msra.mxu0 0.0
      %1793 = vmatprep.subr.mxu0 0.0
      %1794 = vmatpush1.msra.mxu0 0.0
      %1795 = vmatprep.subr.mxu0 0.0
      %1796 = vmatpush1.msra.mxu0 0.0
      %1797 = vmatprep.subr.mxu0 0.0
      %1798 = vmatpush1.msra.mxu0 0.0
      %1799 = vmatprep.subr.mxu0 0.0
      %1800 = vmatpush1.msra.mxu0 0.0
      %1801 = vmatprep.subr.mxu0 0.0
      %1802 = vmatpush1.msra.mxu0 0.0
      %1803 = vmatprep.subr.mxu0 0.0
      %1804 = vmatpush1.msra.mxu0 0.0
      %1805 = vmatprep.subr.mxu0 0.0
      %1806 = vmatpush1.msra.mxu0 0.0
      %1807 = vmatprep.subr.mxu0 0.0
      %1808 = vmatpush1.msra.mxu0 0.0
      %1809 = vmatprep.subr.mxu0 0.0
      %1810 = vmatpush1.msra.mxu0 0.0
      %1811 = vmatprep.subr.mxu0 0.0
      %1812 = vmatpush1.msra.mxu0 0.0
      %1813 = vmatprep.subr.mxu0 0.0
      %1814 = vmatpush1.msra.mxu0 0.0
      %1815 = vmatprep.subr.mxu0 0.0
      %1816 = vmatpush1.msra.mxu0 0.0
      %1817 = vmatprep.subr.mxu0 0.0
      %1818 = vmatpush1.msra.mxu0 0.0
      %1819 = vmatprep.subr.mxu0 0.0
      %1820 = vmatpush1.msra.mxu0 0.0
      %1821 = vmatprep.subr.mxu0 0.0
      %1822 = vmatpush1.msra.mxu0 0.0
      %1823 = vmatprep.subr.mxu0 0.0
      %1824 = vmatpush1.msra.mxu0 0.0
      %1825 = vmatprep.subr.mxu0 0.0
      %1826 = vmatpush1.msra.mxu0 0.0
      %1827 = vmatprep.subr.mxu0 0.0
      %1828 = vmatpush1.msra.mxu0 0.0
      %1829 = vmatprep.subr.mxu0 0.0
      %1830 = vmatpush1.msra.mxu0 0.0
      %1831 = vmatprep.subr.mxu0 0.0
      %1832 = vmatpush1.msra.mxu0 0.0
      %1833 = vmatprep.mubr.f32.mxu0 0.0
      %1834 = vmatmul.mubr.f32.gmra.mrb[0].mxu0 %v1676
      %v1835 = vpop.f32.mrb[0].mxu0
      %v1836 = vadd.f32 %v1751, %v1835
      %v1837 = vpop.f32.mrb[0].mxu0
      %1838 = vmatprep.mubr.f32.mxu0 0.0
      %1839 = vmatmul.mubr.f32.gmra.mrb[0].mxu0 %v1678
      %v1840 = vpop.f32.mrb[0].mxu0
      %v1841 = vadd.f32 %v1756, %v1840
      %v1842 = vpop.f32.mrb[0].mxu0
      %1843 = vmatprep.mubr.f32.mxu0 0.0
      %1844 = vmatmul.mubr.f32.gmra.mrb[0].mxu0 %v1680
      %v1845 = vpop.f32.mrb[0].mxu0
      %v1846 = vadd.f32 %v1761, %v1845
      %v1847 = vpop.f32.mrb[0].mxu0
      %1848 = vmatprep.mubr.f32.mxu0 0.0
      %1849 = vmatmul.mubr.f32.gmra.mrb[0].mxu0 %v1682
      %v1850 = vpop.f32.mrb[0].mxu0
      %v1851 = vadd.f32 %v1766, %v1850
      %v1852 = vpop.f32.mrb[0].mxu0
      %1853 = vdwg.mxu0
      %v1854 = vadd.f32 %v1380, %v1836
      %v1855 = vadd.f32 %v1381, %v1841
      %v1856 = vadd.f32 %v1382, %v1846
      %v1857 = vadd.f32 %v1383, %v1851
      %v1858 = vld [vmem:[%s212 + $0x18] sm:$0xf0]
      %v1859 = vld [vmem:[%s212 + $0x20] sm:$0xf0]
      %v1860 = vld [vmem:[%s212 + $0x28] sm:$0xf0]
      %v1861 = vld [vmem:[%s212 + $0x30] sm:$0xff]
      %v1862 = vld [vmem:[%s212 + $0x38] sm:$0xff]
      %v1863 = vld [vmem:[%s212 + $0x40] sm:$0xff]
      %v1864 = vld [vmem:[%s212 + $0x48] sm:$0xff]
      %v1865 = vld [vmem:[%s212 + $0x50] sm:$0xff]
      %v1866 = vld [vmem:[%s212 + $0x58] sm:$0xff]
      %v1867 = vld [vmem:[%s212 + $0x60] sm:$0xff]
      %v1868 = vld [vmem:[%s212 + $0x68] sm:$0xff]
      %v1869 = vld [vmem:[%s212 + $0x70] sm:$0xff]
      %v1870 = vld [vmem:[%s212 + $0x78] sm:$0xf]
      %v1871 = vld [vmem:[%s212 + $0x80] sm:$0xf]
      %v1872 = vld [vmem:[%s212 + $0x88] sm:$0xf]
      %v1888 = vrot.slane %v1858, 4
      %v1889 = vrot.slane %v1861, 4
      %v1890 = vsel %vm344, %v1888, %v1889
      %v1891 = vrot.slane %v1859, 4
      %v1892 = vrot.slane %v1862, 4
      %v1893 = vsel %vm344, %v1891, %v1892
      %v1894 = vrot.slane %v1860, 4
      %v1895 = vrot.slane %v1863, 4
      %v1896 = vsel %vm344, %v1894, %v1895
      %v1897 = vrot.slane %v1864, 4
      %v1898 = vsel %vm344, %v1889, %v1897
      %v1899 = vrot.slane %v1865, 4
      %v1900 = vsel %vm344, %v1892, %v1899
      %v1901 = vrot.slane %v1866, 4
      %v1902 = vsel %vm344, %v1895, %v1901
      %v1903 = vrot.slane %v1867, 4
      %v1904 = vsel %vm344, %v1897, %v1903
      %v1905 = vrot.slane %v1868, 4
      %v1906 = vsel %vm344, %v1899, %v1905
      %v1907 = vrot.slane %v1869, 4
      %v1908 = vsel %vm344, %v1901, %v1907
      %v1909 = vrot.slane %v1870, 4
      %v1910 = vsel %vm344, %v1903, %v1909
      %v1911 = vrot.slane %v1871, 4
      %v1912 = vsel %vm344, %v1905, %v1911
      %v1913 = vrot.slane %v1872, 4
      %v1914 = vsel %vm344, %v1907, %v1913
      %v1923 = vsel %vm380, %v1896, 0
      %v1925 = vsel %vm380, %v1902, 0
      %v1927 = vsel %vm380, %v1908, 0
      %v1929 = vsel %vm380, %v1914, 0
      %1931 = vmatprep.subr.mxu0 0.0
      %1932 = vmatpush1.msra.mxu0 %v1571
      %1933 = vmatprep.subr.mxu0 0.0
      %1934 = vmatpush1.msra.mxu0 %v1572
      %1935 = vmatprep.subr.mxu0 0.0
      %1936 = vmatpush1.msra.mxu0 %v1573
      %1937 = vmatprep.subr.mxu0 0.0
      %1938 = vmatpush1.msra.mxu0 %v1574
      %1939 = vmatprep.subr.mxu0 0.0
      %1940 = vmatpush1.msra.mxu0 %v1575
      %1941 = vmatprep.subr.mxu0 0.0
      %1942 = vmatpush1.msra.mxu0 %v1576
      %1943 = vmatprep.subr.mxu0 0.0
      %1944 = vmatpush1.msra.mxu0 %v1577
      %1945 = vmatprep.subr.mxu0 0.0
      %1946 = vmatpush1.msra.mxu0 %v1578
      %1947 = vmatprep.subr.mxu0 0.0
      %1948 = vmatpush1.msra.mxu0 %v1579
      %1949 = vmatprep.subr.mxu0 0.0
      %1950 = vmatpush1.msra.mxu0 %v1580
      %1951 = vmatprep.subr.mxu0 0.0
      %1952 = vmatpush1.msra.mxu0 %v1581
      %1953 = vmatprep.subr.mxu0 0.0
      %1954 = vmatpush1.msra.mxu0 %v1582
      %1955 = vmatprep.subr.mxu0 0.0
      %1956 = vmatpush1.msra.mxu0 %v1583
      %1957 = vmatprep.subr.mxu0 0.0
      %1958 = vmatpush1.msra.mxu0 %v1584
      %1959 = vmatprep.subr.mxu0 0.0
      %1960 = vmatpush1.msra.mxu0 %v1585
      %1961 = vmatprep.subr.mxu0 0.0
      %1962 = vmatpush1.msra.mxu0 %v1586
      %1963 = vmatprep.subr.mxu0 0.0
      %1964 = vmatpush1.msra.mxu0 %v1587
      %1965 = vmatprep.subr.mxu0 0.0
      %1966 = vmatpush1.msra.mxu0 %v1588
      %1967 = vmatprep.subr.mxu0 0.0
      %1968 = vmatpush1.msra.mxu0 %v1589
      %1969 = vmatprep.subr.mxu0 0.0
      %1970 = vmatpush1.msra.mxu0 %v1590
      %1971 = vmatprep.subr.mxu0 0.0
      %1972 = vmatpush1.msra.mxu0 %v1591
      %1973 = vmatprep.subr.mxu0 0.0
      %1974 = vmatpush1.msra.mxu0 %v1592
      %1975 = vmatprep.subr.mxu0 0.0
      %1976 = vmatpush1.msra.mxu0 %v1593
      %1977 = vmatprep.subr.mxu0 0.0
      %1978 = vmatpush1.msra.mxu0 %v1594
      %1979 = vmatprep.subr.mxu0 0.0
      %1980 = vmatpush1.msra.mxu0 %v1595
      %1981 = vmatprep.subr.mxu0 0.0
      %1982 = vmatpush1.msra.mxu0 %v1596
      %1983 = vmatprep.subr.mxu0 0.0
      %1984 = vmatpush1.msra.mxu0 %v1597
      %1985 = vmatprep.subr.mxu0 0.0
      %1986 = vmatpush1.msra.mxu0 %v1598
      %1987 = vmatprep.subr.mxu0 0.0
      %1988 = vmatpush1.msra.mxu0 %v1599
      %1989 = vmatprep.subr.mxu0 0.0
      %1990 = vmatpush1.msra.mxu0 %v1600
      %1991 = vmatprep.subr.mxu0 0.0
      %1992 = vmatpush1.msra.mxu0 %v1601
      %1993 = vmatprep.subr.mxu0 0.0
      %1994 = vmatpush1.msra.mxu0 %v1602
      %1995 = vmatprep.mubr.f32.mxu0 %v1893
      %1996 = vmatmul.mubr.f32.gmra.mrb[0].mxu0 %v1890
      %v1997 = vpop.f32.mrb[0].mxu0
      %v1998 = vadd.f32 0.0, %v1997
      %v1999 = vpop.f32.mrb[0].mxu0
      %2000 = vmatprep.mubr.f32.mxu0 %v1900
      %2001 = vmatmul.mubr.f32.gmra.mrb[0].mxu0 %v1898
      %v2002 = vpop.f32.mrb[0].mxu0
      %v2003 = vadd.f32 0.0, %v2002
      %v2004 = vpop.f32.mrb[0].mxu0
      %2005 = vmatprep.mubr.f32.mxu0 %v1906
      %2006 = vmatmul.mubr.f32.gmra.mrb[0].mxu0 %v1904
      %v2007 = vpop.f32.mrb[0].mxu0
      %v2008 = vadd.f32 0.0, %v2007
      %v2009 = vpop.f32.mrb[0].mxu0
      %2010 = vmatprep.mubr.f32.mxu0 %v1912
      %2011 = vmatmul.mubr.f32.gmra.mrb[0].mxu0 %v1910
      %v2012 = vpop.f32.mrb[0].mxu0
      %v2013 = vadd.f32 0.0, %v2012
      %v2014 = vpop.f32.mrb[0].mxu0
      %2015 = vdwg.mxu0
      %2016 = vmatprep.subr.mxu0 0.0
      %2017 = vmatpush1.msra.mxu0 %v1603
      %2018 = vmatprep.subr.mxu0 0.0
      %2019 = vmatpush1.msra.mxu0 %v1604
      %2020 = vmatprep.subr.mxu0 0.0
      %2021 = vmatpush1.msra.mxu0 %v1605
      %2022 = vmatprep.subr.mxu0 0.0
      %2023 = vmatpush1.msra.mxu0 %v1606
      %2024 = vmatprep.subr.mxu0 0.0
      %2025 = vmatpush1.msra.mxu0 %v1607
      %2026 = vmatprep.subr.mxu0 0.0
      %2027 = vmatpush1.msra.mxu0 %v1608
      %2028 = vmatprep.subr.mxu0 0.0
      %2029 = vmatpush1.msra.mxu0 %v1609
      %2030 = vmatprep.subr.mxu0 0.0
      %2031 = vmatpush1.msra.mxu0 %v1610
      %2032 = vmatprep.subr.mxu0 0.0
      %2033 = vmatpush1.msra.mxu0 0.0
      %2034 = vmatprep.subr.mxu0 0.0
      %2035 = vmatpush1.msra.mxu0 0.0
      %2036 = vmatprep.subr.mxu0 0.0
      %2037 = vmatpush1.msra.mxu0 0.0
      %2038 = vmatprep.subr.mxu0 0.0
      %2039 = vmatpush1.msra.mxu0 0.0
      %2040 = vmatprep.subr.mxu0 0.0
      %2041 = vmatpush1.msra.mxu0 0.0
      %2042 = vmatprep.subr.mxu0 0.0
      %2043 = vmatpush1.msra.mxu0 0.0
      %2044 = vmatprep.subr.mxu0 0.0
      %2045 = vmatpush1.msra.mxu0 0.0
      %2046 = vmatprep.subr.mxu0 0.0
      %2047 = vmatpush1.msra.mxu0 0.0
      %2048 = vmatprep.subr.mxu0 0.0
      %2049 = vmatpush1.msra.mxu0 0.0
      %2050 = vmatprep.subr.mxu0 0.0
      %2051 = vmatpush1.msra.mxu0 0.0
      %2052 = vmatprep.subr.mxu0 0.0
      %2053 = vmatpush1.msra.mxu0 0.0
      %2054 = vmatprep.subr.mxu0 0.0
      %2055 = vmatpush1.msra.mxu0 0.0
      %2056 = vmatprep.subr.mxu0 0.0
      %2057 = vmatpush1.msra.mxu0 0.0
      %2058 = vmatprep.subr.mxu0 0.0
      %2059 = vmatpush1.msra.mxu0 0.0
      %2060 = vmatprep.subr.mxu0 0.0
      %2061 = vmatpush1.msra.mxu0 0.0
      %2062 = vmatprep.subr.mxu0 0.0
      %2063 = vmatpush1.msra.mxu0 0.0
      %2064 = vmatprep.subr.mxu0 0.0
      %2065 = vmatpush1.msra.mxu0 0.0
      %2066 = vmatprep.subr.mxu0 0.0
      %2067 = vmatpush1.msra.mxu0 0.0
      %2068 = vmatprep.subr.mxu0 0.0
      %2069 = vmatpush1.msra.mxu0 0.0
      %2070 = vmatprep.subr.mxu0 0.0
      %2071 = vmatpush1.msra.mxu0 0.0
      %2072 = vmatprep.subr.mxu0 0.0
      %2073 = vmatpush1.msra.mxu0 0.0
      %2074 = vmatprep.subr.mxu0 0.0
      %2075 = vmatpush1.msra.mxu0 0.0
      %2076 = vmatprep.subr.mxu0 0.0
      %2077 = vmatpush1.msra.mxu0 0.0
      %2078 = vmatprep.subr.mxu0 0.0
      %2079 = vmatpush1.msra.mxu0 0.0
      %2080 = vmatprep.mubr.f32.mxu0 0.0
      %2081 = vmatmul.mubr.f32.gmra.mrb[0].mxu0 %v1923
      %v2082 = vpop.f32.mrb[0].mxu0
      %v2083 = vadd.f32 %v1998, %v2082
      %v2084 = vpop.f32.mrb[0].mxu0
      %2085 = vmatprep.mubr.f32.mxu0 0.0
      %2086 = vmatmul.mubr.f32.gmra.mrb[0].mxu0 %v1925
      %v2087 = vpop.f32.mrb[0].mxu0
      %v2088 = vadd.f32 %v2003, %v2087
      %v2089 = vpop.f32.mrb[0].mxu0
      %2090 = vmatprep.mubr.f32.mxu0 0.0
      %2091 = vmatmul.mubr.f32.gmra.mrb[0].mxu0 %v1927
      %v2092 = vpop.f32.mrb[0].mxu0
      %v2093 = vadd.f32 %v2008, %v2092
      %v2094 = vpop.f32.mrb[0].mxu0
      %2095 = vmatprep.mubr.f32.mxu0 0.0
      %2096 = vmatmul.mubr.f32.gmra.mrb[0].mxu0 %v1929
      %v2097 = vpop.f32.mrb[0].mxu0
      %v2098 = vadd.f32 %v2013, %v2097
      %v2099 = vpop.f32.mrb[0].mxu0
      %2100 = vdwg.mxu0
      %v2101 = vadd.f32 %v1566, %v2083
      %v2102 = vadd.f32 %v1567, %v2088
      %v2103 = vadd.f32 %v1568, %v2093
      %v2104 = vadd.f32 %v1569, %v2098
      %s2105 = scalar_lea.vmem %s2, 1280
      %v2106 = vld [vmem:[%s2105] sm:$0xff]
      %v2107 = vld [vmem:[%s2105 + $0x8] sm:$0xff]
      %v2108 = vld [vmem:[%s2105 + $0x10] sm:$0xff]
      %v2109 = vld [vmem:[%s2105 + $0x18] sm:$0xff]
      %v2110 = vld [vmem:[%s2105 + $0x20] sm:$0xff]
      %v2111 = vld [vmem:[%s2105 + $0x28] sm:$0xff]
      %v2112 = vld [vmem:[%s2105 + $0x30] sm:$0xff]
      %v2113 = vld [vmem:[%s2105 + $0x38] sm:$0xff]
      %v2114 = vld [vmem:[%s2105 + $0x40] sm:$0xff]
      %v2115 = vld [vmem:[%s2105 + $0x48] sm:$0xff]
      %v2116 = vld [vmem:[%s2105 + $0x50] sm:$0xff]
      %v2117 = vld [vmem:[%s2105 + $0x58] sm:$0xff]
      %v2118 = vld [vmem:[%s2105 + $0x60] sm:$0xff]
      %v2119 = vld [vmem:[%s2105 + $0x68] sm:$0xff]
      %v2120 = vld [vmem:[%s2105 + $0x70] sm:$0xff]
      %v2121 = vld [vmem:[%s2105 + $0x78] sm:$0xff]
      %v2122 = vld [vmem:[%s2105 + $0x80] sm:$0xff]
      %v2123 = vld [vmem:[%s2105 + $0x88] sm:$0xff]
      %v2124 = vld [vmem:[%s2105 + $0x90] sm:$0xff]
      %v2125 = vld [vmem:[%s2105 + $0x98] sm:$0xff]
      %v2126 = vld [vmem:[%s2105 + $0xa0] sm:$0xff]
      %v2127 = vld [vmem:[%s2105 + $0xa8] sm:$0xff]
      %v2128 = vld [vmem:[%s2105 + $0xb0] sm:$0xff]
      %v2129 = vld [vmem:[%s2105 + $0xb8] sm:$0xff]
      %v2130 = vld [vmem:[%s2105 + $0xc0] sm:$0xff]
      %v2131 = vld [vmem:[%s2105 + $0xc8] sm:$0xff]
      %v2132 = vld [vmem:[%s2105 + $0xd0] sm:$0xff]
      %v2133 = vld [vmem:[%s2105 + $0xd8] sm:$0xff]
      %v2134 = vld [vmem:[%s2105 + $0xe0] sm:$0xff]
      %v2135 = vld [vmem:[%s2105 + $0xe8] sm:$0xff]
      %v2136 = vld [vmem:[%s2105 + $0xf0] sm:$0xff]
      %v2137 = vld [vmem:[%s2105 + $0xf8] sm:$0xff]
      %v2138 = vld [vmem:[%s2105 + $0x100] sm:$0xff]
      %v2139 = vld [vmem:[%s2105 + $0x108] sm:$0xff]
      %v2140 = vld [vmem:[%s2105 + $0x110] sm:$0xff]
      %v2141 = vld [vmem:[%s2105 + $0x118] sm:$0xff]
      %v2142 = vld [vmem:[%s2105 + $0x120] sm:$0xff]
      %v2143 = vld [vmem:[%s2105 + $0x128] sm:$0xff]
      %v2144 = vld [vmem:[%s2105 + $0x130] sm:$0xff]
      %v2145 = vld [vmem:[%s2105 + $0x138] sm:$0xff]
      %v2146 = vld [vmem:[%s207 + $0x78] sm:$0xff]
      %v2147 = vld [vmem:[%s207 + $0x80] sm:$0xff]
      %v2148 = vld [vmem:[%s207 + $0x88] sm:$0xff]
      %v2149 = vsel %vm380, %v1616, 0
      %v2151 = vsel %vm380, %v1619, 0
      %v2153 = vsel %vm380, %v1622, 0
      %v2156 = vsel %vm380, %v2148, 0
      %2158 = vmatprep.subr.mxu0 0.0
      %2159 = vmatpush1.msra.mxu0 %v2106
      %2160 = vmatprep.subr.mxu0 0.0
      %2161 = vmatpush1.msra.mxu0 %v2107
      %2162 = vmatprep.subr.mxu0 0.0
      %2163 = vmatpush1.msra.mxu0 %v2108
      %2164 = vmatprep.subr.mxu0 0.0
      %2165 = vmatpush1.msra.mxu0 %v2109
      %2166 = vmatprep.subr.mxu0 0.0
      %2167 = vmatpush1.msra.mxu0 %v2110
      %2168 = vmatprep.subr.mxu0 0.0
      %2169 = vmatpush1.msra.mxu0 %v2111
      %2170 = vmatprep.subr.mxu0 0.0
      %2171 = vmatpush1.msra.mxu0 %v2112
      %2172 = vmatprep.subr.mxu0 0.0
      %2173 = vmatpush1.msra.mxu0 %v2113
      %2174 = vmatprep.subr.mxu0 0.0
      %2175 = vmatpush1.msra.mxu0 %v2114
      %2176 = vmatprep.subr.mxu0 0.0
      %2177 = vmatpush1.msra.mxu0 %v2115
      %2178 = vmatprep.subr.mxu0 0.0
      %2179 = vmatpush1.msra.mxu0 %v2116
      %2180 = vmatprep.subr.mxu0 0.0
      %2181 = vmatpush1.msra.mxu0 %v2117
      %2182 = vmatprep.subr.mxu0 0.0
      %2183 = vmatpush1.msra.mxu0 %v2118
      %2184 = vmatprep.subr.mxu0 0.0
      %2185 = vmatpush1.msra.mxu0 %v2119
      %2186 = vmatprep.subr.mxu0 0.0
      %2187 = vmatpush1.msra.mxu0 %v2120
      %2188 = vmatprep.subr.mxu0 0.0
      %2189 = vmatpush1.msra.mxu0 %v2121
      %2190 = vmatprep.subr.mxu0 0.0
      %2191 = vmatpush1.msra.mxu0 %v2122
      %2192 = vmatprep.subr.mxu0 0.0
      %2193 = vmatpush1.msra.mxu0 %v2123
      %2194 = vmatprep.subr.mxu0 0.0
      %2195 = vmatpush1.msra.mxu0 %v2124
      %2196 = vmatprep.subr.mxu0 0.0
      %2197 = vmatpush1.msra.mxu0 %v2125
      %2198 = vmatprep.subr.mxu0 0.0
      %2199 = vmatpush1.msra.mxu0 %v2126
      %2200 = vmatprep.subr.mxu0 0.0
      %2201 = vmatpush1.msra.mxu0 %v2127
      %2202 = vmatprep.subr.mxu0 0.0
      %2203 = vmatpush1.msra.mxu0 %v2128
      %2204 = vmatprep.subr.mxu0 0.0
      %2205 = vmatpush1.msra.mxu0 %v2129
      %2206 = vmatprep.subr.mxu0 0.0
      %2207 = vmatpush1.msra.mxu0 %v2130
      %2208 = vmatprep.subr.mxu0 0.0
      %2209 = vmatpush1.msra.mxu0 %v2131
      %2210 = vmatprep.subr.mxu0 0.0
      %2211 = vmatpush1.msra.mxu0 %v2132
      %2212 = vmatprep.subr.mxu0 0.0
      %2213 = vmatpush1.msra.mxu0 %v2133
      %2214 = vmatprep.subr.mxu0 0.0
      %2215 = vmatpush1.msra.mxu0 %v2134
      %2216 = vmatprep.subr.mxu0 0.0
      %2217 = vmatpush1.msra.mxu0 %v2135
      %2218 = vmatprep.subr.mxu0 0.0
      %2219 = vmatpush1.msra.mxu0 %v2136
      %2220 = vmatprep.subr.mxu0 0.0
      %2221 = vmatpush1.msra.mxu0 %v2137
      %2222 = vmatprep.mubr.f32.mxu0 %v1615
      %2223 = vmatmul.mubr.f32.gmra.mrb[0].mxu0 %v1614
      %v2224 = vpop.f32.mrb[0].mxu0
      %v2225 = vadd.f32 0.0, %v2224
      %v2226 = vpop.f32.mrb[0].mxu0
      %2227 = vmatprep.mubr.f32.mxu0 %v1618
      %2228 = vmatmul.mubr.f32.gmra.mrb[0].mxu0 %v1617
      %v2229 = vpop.f32.mrb[0].mxu0
      %v2230 = vadd.f32 0.0, %v2229
      %v2231 = vpop.f32.mrb[0].mxu0
      %2232 = vmatprep.mubr.f32.mxu0 %v1621
      %2233 = vmatmul.mubr.f32.gmra.mrb[0].mxu0 %v1620
      %v2234 = vpop.f32.mrb[0].mxu0
      %v2235 = vadd.f32 0.0, %v2234
      %v2236 = vpop.f32.mrb[0].mxu0
      %2237 = vmatprep.mubr.f32.mxu0 %v2147
      %2238 = vmatmul.mubr.f32.gmra.mrb[0].mxu0 %v2146
      %v2239 = vpop.f32.mrb[0].mxu0
      %v2240 = vadd.f32 0.0, %v2239
      %v2241 = vpop.f32.mrb[0].mxu0
      %2242 = vdwg.mxu0
      %2243 = vmatprep.subr.mxu0 0.0
      %2244 = vmatpush1.msra.mxu0 %v2138
      %2245 = vmatprep.subr.mxu0 0.0
      %2246 = vmatpush1.msra.mxu0 %v2139
      %2247 = vmatprep.subr.mxu0 0.0
      %2248 = vmatpush1.msra.mxu0 %v2140
      %2249 = vmatprep.subr.mxu0 0.0
      %2250 = vmatpush1.msra.mxu0 %v2141
      %2251 = vmatprep.subr.mxu0 0.0
      %2252 = vmatpush1.msra.mxu0 %v2142
      %2253 = vmatprep.subr.mxu0 0.0
      %2254 = vmatpush1.msra.mxu0 %v2143
      %2255 = vmatprep.subr.mxu0 0.0
      %2256 = vmatpush1.msra.mxu0 %v2144
      %2257 = vmatprep.subr.mxu0 0.0
      %2258 = vmatpush1.msra.mxu0 %v2145
      %2259 = vmatprep.subr.mxu0 0.0
      %2260 = vmatpush1.msra.mxu0 0.0
      %2261 = vmatprep.subr.mxu0 0.0
      %2262 = vmatpush1.msra.mxu0 0.0
      %2263 = vmatprep.subr.mxu0 0.0
      %2264 = vmatpush1.msra.mxu0 0.0
      %2265 = vmatprep.subr.mxu0 0.0
      %2266 = vmatpush1.msra.mxu0 0.0
      %2267 = vmatprep.subr.mxu0 0.0
      %2268 = vmatpush1.msra.mxu0 0.0
      %2269 = vmatprep.subr.mxu0 0.0
      %2270 = vmatpush1.msra.mxu0 0.0
      %2271 = vmatprep.subr.mxu0 0.0
      %2272 = vmatpush1.msra.mxu0 0.0
      %2273 = vmatprep.subr.mxu0 0.0
      %2274 = vmatpush1.msra.mxu0 0.0
      %2275 = vmatprep.subr.mxu0 0.0
      %2276 = vmatpush1.msra.mxu0 0.0
      %2277 = vmatprep.subr.mxu0 0.0
      %2278 = vmatpush1.msra.mxu0 0.0
      %2279 = vmatprep.subr.mxu0 0.0
      %2280 = vmatpush1.msra.mxu0 0.0
      %2281 = vmatprep.subr.mxu0 0.0
      %2282 = vmatpush1.msra.mxu0 0.0
      %2283 = vmatprep.subr.mxu0 0.0
      %2284 = vmatpush1.msra.mxu0 0.0
      %2285 = vmatprep.subr.mxu0 0.0
      %2286 = vmatpush1.msra.mxu0 0.0
      %2287 = vmatprep.subr.mxu0 0.0
      %2288 = vmatpush1.msra.mxu0 0.0
      %2289 = vmatprep.subr.mxu0 0.0
      %2290 = vmatpush1.msra.mxu0 0.0
      %2291 = vmatprep.subr.mxu0 0.0
      %2292 = vmatpush1.msra.mxu0 0.0
      %2293 = vmatprep.subr.mxu0 0.0
      %2294 = vmatpush1.msra.mxu0 0.0
      %2295 = vmatprep.subr.mxu0 0.0
      %2296 = vmatpush1.msra.mxu0 0.0
      %2297 = vmatprep.subr.mxu0 0.0
      %2298 = vmatpush1.msra.mxu0 0.0
      %2299 = vmatprep.subr.mxu0 0.0
      %2300 = vmatpush1.msra.mxu0 0.0
      %2301 = vmatprep.subr.mxu0 0.0
      %2302 = vmatpush1.msra.mxu0 0.0
      %2303 = vmatprep.subr.mxu0 0.0
      %2304 = vmatpush1.msra.mxu0 0.0
      %2305 = vmatprep.subr.mxu0 0.0
      %2306 = vmatpush1.msra.mxu0 0.0
      %2307 = vmatprep.mubr.f32.mxu0 0.0
      %2308 = vmatmul.mubr.f32.gmra.mrb[0].mxu0 %v2149
      %v2309 = vpop.f32.mrb[0].mxu0
      %v2310 = vadd.f32 %v2225, %v2309
      %v2311 = vpop.f32.mrb[0].mxu0
      %2312 = vmatprep.mubr.f32.mxu0 0.0
      %2313 = vmatmul.mubr.f32.gmra.mrb[0].mxu0 %v2151
      %v2314 = vpop.f32.mrb[0].mxu0
      %v2315 = vadd.f32 %v2230, %v2314
      %v2316 = vpop.f32.mrb[0].mxu0
      %2317 = vmatprep.mubr.f32.mxu0 0.0
      %2318 = vmatmul.mubr.f32.gmra.mrb[0].mxu0 %v2153
      %v2319 = vpop.f32.mrb[0].mxu0
      %v2320 = vadd.f32 %v2235, %v2319
      %v2321 = vpop.f32.mrb[0].mxu0
      %2322 = vmatprep.mubr.f32.mxu0 0.0
      %2323 = vmatmul.mubr.f32.gmra.mrb[0].mxu0 %v2156
      %v2324 = vpop.f32.mrb[0].mxu0
      %v2325 = vadd.f32 %v2240, %v2324
      %v2326 = vpop.f32.mrb[0].mxu0
      %2327 = vdwg.mxu0
      %v2328 = vadd.f32 %v1854, %v2310
      %v2329 = vadd.f32 %v1855, %v2315
      %v2330 = vadd.f32 %v1856, %v2320
      %v2331 = vadd.f32 %v1857, %v2325
      %v2332 = vld [vmem:[%s212 + $0x78] sm:$0xff]
      %v2333 = vld [vmem:[%s212 + $0x80] sm:$0xff]
      %v2334 = vld [vmem:[%s212 + $0x88] sm:$0xff]
      %v2335 = vsel %vm380, %v1863, 0
      %v2337 = vsel %vm380, %v1866, 0
      %v2339 = vsel %vm380, %v1869, 0
      %v2342 = vsel %vm380, %v2334, 0
      %2344 = vmatprep.subr.mxu0 0.0
      %2345 = vmatpush1.msra.mxu0 %v2106
      %2346 = vmatprep.subr.mxu0 0.0
      %2347 = vmatpush1.msra.mxu0 %v2107
      %2348 = vmatprep.subr.mxu0 0.0
      %2349 = vmatpush1.msra.mxu0 %v2108
      %2350 = vmatprep.subr.mxu0 0.0
      %2351 = vmatpush1.msra.mxu0 %v2109
      %2352 = vmatprep.subr.mxu0 0.0
      %2353 = vmatpush1.msra.mxu0 %v2110
      %2354 = vmatprep.subr.mxu0 0.0
      %2355 = vmatpush1.msra.mxu0 %v2111
      %2356 = vmatprep.subr.mxu0 0.0
      %2357 = vmatpush1.msra.mxu0 %v2112
      %2358 = vmatprep.subr.mxu0 0.0
      %2359 = vmatpush1.msra.mxu0 %v2113
      %2360 = vmatprep.subr.mxu0 0.0
      %2361 = vmatpush1.msra.mxu0 %v2114
      %2362 = vmatprep.subr.mxu0 0.0
      %2363 = vmatpush1.msra.mxu0 %v2115
      %2364 = vmatprep.subr.mxu0 0.0
      %2365 = vmatpush1.msra.mxu0 %v2116
      %2366 = vmatprep.subr.mxu0 0.0
      %2367 = vmatpush1.msra.mxu0 %v2117
      %2368 = vmatprep.subr.mxu0 0.0
      %2369 = vmatpush1.msra.mxu0 %v2118
      %2370 = vmatprep.subr.mxu0 0.0
      %2371 = vmatpush1.msra.mxu0 %v2119
      %2372 = vmatprep.subr.mxu0 0.0
      %2373 = vmatpush1.msra.mxu0 %v2120
      %2374 = vmatprep.subr.mxu0 0.0
      %2375 = vmatpush1.msra.mxu0 %v2121
      %2376 = vmatprep.subr.mxu0 0.0
      %2377 = vmatpush1.msra.mxu0 %v2122
      %2378 = vmatprep.subr.mxu0 0.0
      %2379 = vmatpush1.msra.mxu0 %v2123
      %2380 = vmatprep.subr.mxu0 0.0
      %2381 = vmatpush1.msra.mxu0 %v2124
      %2382 = vmatprep.subr.mxu0 0.0
      %2383 = vmatpush1.msra.mxu0 %v2125
      %2384 = vmatprep.subr.mxu0 0.0
      %2385 = vmatpush1.msra.mxu0 %v2126
      %2386 = vmatprep.subr.mxu0 0.0
      %2387 = vmatpush1.msra.mxu0 %v2127
      %2388 = vmatprep.subr.mxu0 0.0
      %2389 = vmatpush1.msra.mxu0 %v2128
      %2390 = vmatprep.subr.mxu0 0.0
      %2391 = vmatpush1.msra.mxu0 %v2129
      %2392 = vmatprep.subr.mxu0 0.0
      %2393 = vmatpush1.msra.mxu0 %v2130
      %2394 = vmatprep.subr.mxu0 0.0
      %2395 = vmatpush1.msra.mxu0 %v2131
      %2396 = vmatprep.subr.mxu0 0.0
      %2397 = vmatpush1.msra.mxu0 %v2132
      %2398 = vmatprep.subr.mxu0 0.0
      %2399 = vmatpush1.msra.mxu0 %v2133
      %2400 = vmatprep.subr.mxu0 0.0
      %2401 = vmatpush1.msra.mxu0 %v2134
      %2402 = vmatprep.subr.mxu0 0.0
      %2403 = vmatpush1.msra.mxu0 %v2135
      %2404 = vmatprep.subr.mxu0 0.0
      %2405 = vmatpush1.msra.mxu0 %v2136
      %2406 = vmatprep.subr.mxu0 0.0
      %2407 = vmatpush1.msra.mxu0 %v2137
      %2408 = vmatprep.mubr.f32.mxu0 %v1862
      %2409 = vmatmul.mubr.f32.gmra.mrb[0].mxu0 %v1861
      %v2410 = vpop.f32.mrb[0].mxu0
      %v2411 = vadd.f32 0.0, %v2410
      %v2412 = vpop.f32.mrb[0].mxu0
      %2413 = vmatprep.mubr.f32.mxu0 %v1865
      %2414 = vmatmul.mubr.f32.gmra.mrb[0].mxu0 %v1864
      %v2415 = vpop.f32.mrb[0].mxu0
      %v2416 = vadd.f32 0.0, %v2415
      %v2417 = vpop.f32.mrb[0].mxu0
      %2418 = vmatprep.mubr.f32.mxu0 %v1868
      %2419 = vmatmul.mubr.f32.gmra.mrb[0].mxu0 %v1867
      %v2420 = vpop.f32.mrb[0].mxu0
      %v2421 = vadd.f32 0.0, %v2420
      %v2422 = vpop.f32.mrb[0].mxu0
      %2423 = vmatprep.mubr.f32.mxu0 %v2333
      %2424 = vmatmul.mubr.f32.gmra.mrb[0].mxu0 %v2332
      %v2425 = vpop.f32.mrb[0].mxu0
      %v2426 = vadd.f32 0.0, %v2425
      %v2427 = vpop.f32.mrb[0].mxu0
      %2428 = vdwg.mxu0
      %2429 = vmatprep.subr.mxu0 0.0
      %2430 = vmatpush1.msra.mxu0 %v2138
      %2431 = vmatprep.subr.mxu0 0.0
      %2432 = vmatpush1.msra.mxu0 %v2139
      %2433 = vmatprep.subr.mxu0 0.0
      %2434 = vmatpush1.msra.mxu0 %v2140
      %2435 = vmatprep.subr.mxu0 0.0
      %2436 = vmatpush1.msra.mxu0 %v2141
      %2437 = vmatprep.subr.mxu0 0.0
      %2438 = vmatpush1.msra.mxu0 %v2142
      %2439 = vmatprep.subr.mxu0 0.0
      %2440 = vmatpush1.msra.mxu0 %v2143
      %2441 = vmatprep.subr.mxu0 0.0
      %2442 = vmatpush1.msra.mxu0 %v2144
      %2443 = vmatprep.subr.mxu0 0.0
      %2444 = vmatpush1.msra.mxu0 %v2145
      %2445 = vmatprep.subr.mxu0 0.0
      %2446 = vmatpush1.msra.mxu0 0.0
      %2447 = vmatprep.subr.mxu0 0.0
      %2448 = vmatpush1.msra.mxu0 0.0
      %2449 = vmatprep.subr.mxu0 0.0
      %2450 = vmatpush1.msra.mxu0 0.0
      %2451 = vmatprep.subr.mxu0 0.0
      %2452 = vmatpush1.msra.mxu0 0.0
      %2453 = vmatprep.subr.mxu0 0.0
      %2454 = vmatpush1.msra.mxu0 0.0
      %2455 = vmatprep.subr.mxu0 0.0
      %2456 = vmatpush1.msra.mxu0 0.0
      %2457 = vmatprep.subr.mxu0 0.0
      %2458 = vmatpush1.msra.mxu0 0.0
      %2459 = vmatprep.subr.mxu0 0.0
      %2460 = vmatpush1.msra.mxu0 0.0
      %2461 = vmatprep.subr.mxu0 0.0
      %2462 = vmatpush1.msra.mxu0 0.0
      %2463 = vmatprep.subr.mxu0 0.0
      %2464 = vmatpush1.msra.mxu0 0.0
      %2465 = vmatprep.subr.mxu0 0.0
      %2466 = vmatpush1.msra.mxu0 0.0
      %2467 = vmatprep.subr.mxu0 0.0
      %2468 = vmatpush1.msra.mxu0 0.0
      %2469 = vmatprep.subr.mxu0 0.0
      %2470 = vmatpush1.msra.mxu0 0.0
      %2471 = vmatprep.subr.mxu0 0.0
      %2472 = vmatpush1.msra.mxu0 0.0
      %2473 = vmatprep.subr.mxu0 0.0
      %2474 = vmatpush1.msra.mxu0 0.0
      %2475 = vmatprep.subr.mxu0 0.0
      %2476 = vmatpush1.msra.mxu0 0.0
      %2477 = vmatprep.subr.mxu0 0.0
      %2478 = vmatpush1.msra.mxu0 0.0
      %2479 = vmatprep.subr.mxu0 0.0
      %2480 = vmatpush1.msra.mxu0 0.0
      %2481 = vmatprep.subr.mxu0 0.0
      %2482 = vmatpush1.msra.mxu0 0.0
      %2483 = vmatprep.subr.mxu0 0.0
      %2484 = vmatpush1.msra.mxu0 0.0
      %2485 = vmatprep.subr.mxu0 0.0
      %2486 = vmatpush1.msra.mxu0 0.0
      %2487 = vmatprep.subr.mxu0 0.0
      %2488 = vmatpush1.msra.mxu0 0.0
      %2489 = vmatprep.subr.mxu0 0.0
      %2490 = vmatpush1.msra.mxu0 0.0
      %2491 = vmatprep.subr.mxu0 0.0
      %2492 = vmatpush1.msra.mxu0 0.0
      %2493 = vmatprep.mubr.f32.mxu0 0.0
      %2494 = vmatmul.mubr.f32.gmra.mrb[0].mxu0 %v2335
      %v2495 = vpop.f32.mrb[0].mxu0
      %v2496 = vadd.f32 %v2411, %v2495
      %v2497 = vpop.f32.mrb[0].mxu0
      %2498 = vmatprep.mubr.f32.mxu0 0.0
      %2499 = vmatmul.mubr.f32.gmra.mrb[0].mxu0 %v2337
      %v2500 = vpop.f32.mrb[0].mxu0
      %v2501 = vadd.f32 %v2416, %v2500
      %v2502 = vpop.f32.mrb[0].mxu0
      %2503 = vmatprep.mubr.f32.mxu0 0.0
      %2504 = vmatmul.mubr.f32.gmra.mrb[0].mxu0 %v2339
      %v2505 = vpop.f32.mrb[0].mxu0
      %v2506 = vadd.f32 %v2421, %v2505
      %v2507 = vpop.f32.mrb[0].mxu0
      %2508 = vmatprep.mubr.f32.mxu0 0.0
      %2509 = vmatmul.mubr.f32.gmra.mrb[0].mxu0 %v2342
      %v2510 = vpop.f32.mrb[0].mxu0
      %v2511 = vadd.f32 %v2426, %v2510
      %v2512 = vpop.f32.mrb[0].mxu0
      %2513 = vdwg.mxu0
      %v2514 = vadd.f32 %v2101, %v2496
      %v2515 = vadd.f32 %v2102, %v2501
      %v2516 = vadd.f32 %v2103, %v2506
      %v2517 = vadd.f32 %v2104, %v2511
      %v2518 = vmax.f32 %v2328, %v2514
      %v2519 = vmax.f32 %v2329, %v2515
      %v2520 = vmax.f32 %v2330, %v2516
      %v2521 = vmax.f32 %v2331, %v2517
      %v2523 = vrot.slane %v2518, 4
      %v2525 = vmax.f32 %v2518, %v2523
      %v2527 = vrot.slane %v2519, 4
      %v2529 = vmax.f32 %v2519, %v2527
      %v2531 = vrot.slane %v2520, 4
      %v2533 = vmax.f32 %v2520, %v2531
      %v2535 = vrot.slane %v2521, 4
      %v2537 = vmax.f32 %v2521, %v2535
      %v2539 = vrot.slane %v2529, 4
      %v2542 = vrot.slane %v2537, 4
      %v2544 = vsel %vm344, %v2525, %v2539
      %v2545 = vsel %vm344, %v2533, %v2542
      %v2546 = vld [vmem:[%s3] sm:$0x1]
      %v2548 = vlaneseq
      %v2549 = vshrl.u32 %v2548, 7
      %v2550 = vsub.s32 0, %v2549
      %v2551 = vrot.slane %v2546, %v2550
      %v2553 = vadd.f32 %v2544, %v2551
      %v2554 = vadd.f32 %v2545, %v2551
      %2555 = vst [vmem:[%s217] sm:$0xff] %v2553
      %2556 = vst [vmem:[%s217 + $0x8] sm:$0xff] %v2554
      %p2557 = scmp.lt.s32.totalorder %s15, 1
      %s2558 = scalar_select %p2557, %s15, 1
      %s2559 = smul.addr %s2558, 2
      %s2560 = smul.addr %s2559, 8
      %s2561 = scalar_lea.vmem %s4, %s2560
      // Predicated region
      $region37: #{neural_network_forward.6} parent=35 // pred_check
        %p2562 = pneg %p127
      $region38: #{neural_network_forward.6} parent=35 // pred_check_branch
        %2564 = sbr.rel (%p2562) target = $region40
      $region39: #{neural_network_forward.6} parent=35 // pred_region
        _
      $region40: #{neural_network_forward.6} parent=35 // pred_fallthru
        _
    $region36: #{neural_network_forward.6} parent=5 // pred_fallthru
      _
    %p2565 = scmp.le.s32.totalorder 2, %s10
    // Predicated region
    $region41: #{neural_network_forward.6} parent=5 // pred_check
      %p2566 = pneg %p2565
    $region42: #{neural_network_forward.6} parent=5 // pred_check_branch
      %2568 = sbr.rel (%p2566) target = $region44
    $region43: #{neural_network_forward.6} parent=5 // pred_region
      %s2569 = ssub.s32 %s10, 2
      // Predicated region
      $region45: #{neural_network_forward.6} parent=43 // pred_check
        %p2570 = pneg %p133
      $region46: #{neural_network_forward.6} parent=43 // pred_check_branch
        %2572 = sbr.rel (%p2570) target = $region48
      $region47: #{neural_network_forward.6} parent=43 // pred_region
        %p2573 = scmp.lt.s32.totalorder %s16, 1
        %s2574 = scalar_select %p2573, %s16, 1
        %s2575 = smul.addr %s2574, 2
        %s2576 = smul.addr %s2575, 8
        %s2577 = scalar_lea.vmem %s4, %s2576
      $region48: #{neural_network_forward.6} parent=43 // pred_fallthru
        _
    $region44: #{neural_network_forward.6} parent=5 // pred_fallthru
      _
  $region6: #{neural_network_forward.6} parent=0 // loop_footer
    %s14 = sadd.s32 1, %s10
  $region7: #{neural_network_forward.6} parent=0 // loop_footer_branch
    %9 = sbr.rel target = $region3
  $region8: #{neural_network_forward.6} parent=0 // loop_exit
    _

// kernel: neural_network_forward.7
$region0: #{neural_network_forward.7}
  #allocation0 [shape = 'u32[]', space=smem, size = 0x4, offset = 0x4, fixed_abs, tag = 'smem constant byte address 0x4 - core index']
  #allocation1 [shape = 'u32[144,128]{1,0:T(1,128)}', space=vmem, size = 0x12000, scoped, tag = 'internal scratch']
  %s0 = inlined_call_operand.vmem [shape: f32[2,2048], index: 0, kind: input, shape index: {}]
  %s1 = inlined_call_operand.vmem [shape: f32[2048,10], index: 1, kind: input, shape index: {}]
  %s2 = inlined_call_operand.vmem [shape: f32[1,10], index: 2, kind: input, shape index: {}]
  %s3 = inlined_call_operand.hbm [shape: f32[2,10], index: 3, kind: output, shape index: {}]
  %s4 = sld [smem:[#allocation0]]
  $region22: #{neural_network_forward.7} parent=0
    _
  %s6 = ssub.s32 1, %s4
  %s7 = scalar_select 0, %s6, %s4
  $region1: #{neural_network_forward.7} parent=0
    #allocation2 [shape = 'u8[1024]{0}', space=vmem, size = 0x400, scoped, tag = 'output window, operand 0, single buffered']
    #allocation3 [shape = 's32[1]{0}', space=sflag, size = 0x4, scoped, tag = 'scoped memory for neural_network_forward.7']
    %8 = vsyncpa [#allocation3], 0
    // Predicated region
    $region2: #{neural_network_forward.7} parent=1 // pred_check
      _
    $region3: #{neural_network_forward.7} parent=1 // pred_check_branch
      %10 = sbr.rel (0) target = $region5
    $region4: #{neural_network_forward.7} parent=1 // pred_region
      _
    $region5: #{neural_network_forward.7} parent=1 // pred_fallthru
      _
    // Predicated region
    $region6: #{neural_network_forward.7} parent=1 // pred_check
      _
    $region7: #{neural_network_forward.7} parent=1 // pred_check_branch
      %12 = sbr.rel (0) target = $region9
    $region8: #{neural_network_forward.7} parent=1 // pred_region
      _
    $region9: #{neural_network_forward.7} parent=1 // pred_fallthru
      _
    // Predicated region
    $region10: #{neural_network_forward.7} parent=1 // pred_check
      _
    $region11: #{neural_network_forward.7} parent=1 // pred_check_branch
      %14 = sbr.rel (0) target = $region13
    $region12: #{neural_network_forward.7} parent=1 // pred_region
      _
    $region13: #{neural_network_forward.7} parent=1 // pred_fallthru
      _
    %v15 = vld [vmem:[%s0] sm:$0xff]
    %v16 = vld [vmem:[%s0 + $0x8] sm:$0xff]
    %v17 = vld [vmem:[%s0 + $0x10] sm:$0xff]
    %v18 = vld [vmem:[%s0 + $0x18] sm:$0xff]
    %v19 = vld [vmem:[%s1] sm:$0xff]
    %v20 = vld [vmem:[%s1 + $0x8] sm:$0xff]
    %v21 = vld [vmem:[%s1 + $0x10] sm:$0xff]
    %v22 = vld [vmem:[%s1 + $0x18] sm:$0xff]
    %v23 = vld [vmem:[%s1 + $0x20] sm:$0xff]
    %v24 = vld [vmem:[%s1 + $0x28] sm:$0xff]
    %v25 = vld [vmem:[%s1 + $0x30] sm:$0xff]
    %v26 = vld [vmem:[%s1 + $0x38] sm:$0xff]
    %v27 = vld [vmem:[%s1 + $0x40] sm:$0xff]
    %v28 = vld [vmem:[%s1 + $0x48] sm:$0xff]
    %v29 = vld [vmem:[%s1 + $0x50] sm:$0xff]
    %v30 = vld [vmem:[%s1 + $0x58] sm:$0xff]
    %v31 = vld [vmem:[%s1 + $0x60] sm:$0xff]
    %v32 = vld [vmem:[%s1 + $0x68] sm:$0xff]
    %v33 = vld [vmem:[%s1 + $0x70] sm:$0xff]
    %v34 = vld [vmem:[%s1 + $0x78] sm:$0xff]
    %v35 = vld [vmem:[%s1 + $0x80] sm:$0xff]
    %v36 = vld [vmem:[%s1 + $0x88] sm:$0xff]
    %v37 = vld [vmem:[%s1 + $0x90] sm:$0xff]
    %v38 = vld [vmem:[%s1 + $0x98] sm:$0xff]
    %v39 = vld [vmem:[%s1 + $0xa0] sm:$0xff]
    %v40 = vld [vmem:[%s1 + $0xa8] sm:$0xff]
    %v41 = vld [vmem:[%s1 + $0xb0] sm:$0xff]
    %v42 = vld [vmem:[%s1 + $0xb8] sm:$0xff]
    %v43 = vld [vmem:[%s1 + $0xc0] sm:$0xff]
    %v44 = vld [vmem:[%s1 + $0xc8] sm:$0xff]
    %v45 = vld [vmem:[%s1 + $0xd0] sm:$0xff]
    %v46 = vld [vmem:[%s1 + $0xd8] sm:$0xff]
    %v47 = vld [vmem:[%s1 + $0xe0] sm:$0xff]
    %v48 = vld [vmem:[%s1 + $0xe8] sm:$0xff]
    %v49 = vld [vmem:[%s1 + $0xf0] sm:$0xff]
    %v50 = vld [vmem:[%s1 + $0xf8] sm:$0xff]
    %v51 = vld [vmem:[%s1 + $0x100] sm:$0xff]
    %v52 = vld [vmem:[%s1 + $0x108] sm:$0xff]
    %v53 = vld [vmem:[%s1 + $0x110] sm:$0xff]
    %v54 = vld [vmem:[%s1 + $0x118] sm:$0xff]
    %v55 = vld [vmem:[%s1 + $0x120] sm:$0xff]
    %v56 = vld [vmem:[%s1 + $0x128] sm:$0xff]
    %v57 = vld [vmem:[%s1 + $0x130] sm:$0xff]
    %v58 = vld [vmem:[%s1 + $0x138] sm:$0xff]
    %v59 = vld [vmem:[%s1 + $0x140] sm:$0xff]
    %v60 = vld [vmem:[%s1 + $0x148] sm:$0xff]
    %v61 = vld [vmem:[%s1 + $0x150] sm:$0xff]
    %v62 = vld [vmem:[%s1 + $0x158] sm:$0xff]
    %v63 = vld [vmem:[%s1 + $0x160] sm:$0xff]
    %v64 = vld [vmem:[%s1 + $0x168] sm:$0xff]
    %v65 = vld [vmem:[%s1 + $0x170] sm:$0xff]
    %v66 = vld [vmem:[%s1 + $0x178] sm:$0xff]
    %v67 = vld [vmem:[%s1 + $0x180] sm:$0xff]
    %v68 = vld [vmem:[%s1 + $0x188] sm:$0xff]
    %v69 = vld [vmem:[%s1 + $0x190] sm:$0xff]
    %v70 = vld [vmem:[%s1 + $0x198] sm:$0xff]
    %v71 = vld [vmem:[%s1 + $0x1a0] sm:$0xff]
    %v72 = vld [vmem:[%s1 + $0x1a8] sm:$0xff]
    %v73 = vld [vmem:[%s1 + $0x1b0] sm:$0xff]
    %v74 = vld [vmem:[%s1 + $0x1b8] sm:$0xff]
    %v75 = vld [vmem:[%s1 + $0x1c0] sm:$0xff]
    %v76 = vld [vmem:[%s1 + $0x1c8] sm:$0xff]
    %v77 = vld [vmem:[%s1 + $0x1d0] sm:$0xff]
    %v78 = vld [vmem:[%s1 + $0x1d8] sm:$0xff]
    %v79 = vld [vmem:[%s1 + $0x1e0] sm:$0xff]
    %v80 = vld [vmem:[%s1 + $0x1e8] sm:$0xff]
    %v81 = vld [vmem:[%s1 + $0x1f0] sm:$0xff]
    %v82 = vld [vmem:[%s1 + $0x1f8] sm:$0xff]
    %v83 = vld [vmem:[%s1 + $0x200] sm:$0xff]
    %v84 = vld [vmem:[%s1 + $0x208] sm:$0xff]
    %v85 = vld [vmem:[%s1 + $0x210] sm:$0xff]
    %v86 = vld [vmem:[%s1 + $0x218] sm:$0xff]
    %v87 = vld [vmem:[%s1 + $0x220] sm:$0xff]
    %v88 = vld [vmem:[%s1 + $0x228] sm:$0xff]
    %v89 = vld [vmem:[%s1 + $0x230] sm:$0xff]
    %v90 = vld [vmem:[%s1 + $0x238] sm:$0xff]
    %v91 = vld [vmem:[%s1 + $0x240] sm:$0xff]
    %v92 = vld [vmem:[%s1 + $0x248] sm:$0xff]
    %v93 = vld [vmem:[%s1 + $0x250] sm:$0xff]
    %v94 = vld [vmem:[%s1 + $0x258] sm:$0xff]
    %v95 = vld [vmem:[%s1 + $0x260] sm:$0xff]
    %v96 = vld [vmem:[%s1 + $0x268] sm:$0xff]
    %v97 = vld [vmem:[%s1 + $0x270] sm:$0xff]
    %v98 = vld [vmem:[%s1 + $0x278] sm:$0xff]
    %v99 = vld [vmem:[%s1 + $0x280] sm:$0xff]
    %v100 = vld [vmem:[%s1 + $0x288] sm:$0xff]
    %v101 = vld [vmem:[%s1 + $0x290] sm:$0xff]
    %v102 = vld [vmem:[%s1 + $0x298] sm:$0xff]
    %v103 = vld [vmem:[%s1 + $0x2a0] sm:$0xff]
    %v104 = vld [vmem:[%s1 + $0x2a8] sm:$0xff]
    %v105 = vld [vmem:[%s1 + $0x2b0] sm:$0xff]
    %v106 = vld [vmem:[%s1 + $0x2b8] sm:$0xff]
    %v107 = vld [vmem:[%s1 + $0x2c0] sm:$0xff]
    %v108 = vld [vmem:[%s1 + $0x2c8] sm:$0xff]
    %v109 = vld [vmem:[%s1 + $0x2d0] sm:$0xff]
    %v110 = vld [vmem:[%s1 + $0x2d8] sm:$0xff]
    %v111 = vld [vmem:[%s1 + $0x2e0] sm:$0xff]
    %v112 = vld [vmem:[%s1 + $0x2e8] sm:$0xff]
    %v113 = vld [vmem:[%s1 + $0x2f0] sm:$0xff]
    %v114 = vld [vmem:[%s1 + $0x2f8] sm:$0xff]
    %v115 = vld [vmem:[%s1 + $0x300] sm:$0xff]
    %v116 = vld [vmem:[%s1 + $0x308] sm:$0xff]
    %v117 = vld [vmem:[%s1 + $0x310] sm:$0xff]
    %v118 = vld [vmem:[%s1 + $0x318] sm:$0xff]
    %v119 = vld [vmem:[%s1 + $0x320] sm:$0xff]
    %v120 = vld [vmem:[%s1 + $0x328] sm:$0xff]
    %v121 = vld [vmem:[%s1 + $0x330] sm:$0xff]
    %v122 = vld [vmem:[%s1 + $0x338] sm:$0xff]
    %v123 = vld [vmem:[%s1 + $0x340] sm:$0xff]
    %v124 = vld [vmem:[%s1 + $0x348] sm:$0xff]
    %v125 = vld [vmem:[%s1 + $0x350] sm:$0xff]
    %v126 = vld [vmem:[%s1 + $0x358] sm:$0xff]
    %v127 = vld [vmem:[%s1 + $0x360] sm:$0xff]
    %v128 = vld [vmem:[%s1 + $0x368] sm:$0xff]
    %v129 = vld [vmem:[%s1 + $0x370] sm:$0xff]
    %v130 = vld [vmem:[%s1 + $0x378] sm:$0xff]
    %v131 = vld [vmem:[%s1 + $0x380] sm:$0xff]
    %v132 = vld [vmem:[%s1 + $0x388] sm:$0xff]
    %v133 = vld [vmem:[%s1 + $0x390] sm:$0xff]
    %v134 = vld [vmem:[%s1 + $0x398] sm:$0xff]
    %v135 = vld [vmem:[%s1 + $0x3a0] sm:$0xff]
    %v136 = vld [vmem:[%s1 + $0x3a8] sm:$0xff]
    %v137 = vld [vmem:[%s1 + $0x3b0] sm:$0xff]
    %v138 = vld [vmem:[%s1 + $0x3b8] sm:$0xff]
    %v139 = vld [vmem:[%s1 + $0x3c0] sm:$0xff]
    %v140 = vld [vmem:[%s1 + $0x3c8] sm:$0xff]
    %v141 = vld [vmem:[%s1 + $0x3d0] sm:$0xff]
    %v142 = vld [vmem:[%s1 + $0x3d8] sm:$0xff]
    %v143 = vld [vmem:[%s1 + $0x3e0] sm:$0xff]
    %v144 = vld [vmem:[%s1 + $0x3e8] sm:$0xff]
    %v145 = vld [vmem:[%s1 + $0x3f0] sm:$0xff]
    %v146 = vld [vmem:[%s1 + $0x3f8] sm:$0xff]
    %v147 = vld [vmem:[%s1 + $0x400] sm:$0xff]
    %v148 = vld [vmem:[%s1 + $0x408] sm:$0xff]
    %v149 = vld [vmem:[%s1 + $0x410] sm:$0xff]
    %v150 = vld [vmem:[%s1 + $0x418] sm:$0xff]
    %v151 = vld [vmem:[%s1 + $0x420] sm:$0xff]
    %v152 = vld [vmem:[%s1 + $0x428] sm:$0xff]
    %v153 = vld [vmem:[%s1 + $0x430] sm:$0xff]
    %v154 = vld [vmem:[%s1 + $0x438] sm:$0xff]
    %v155 = vld [vmem:[%s1 + $0x440] sm:$0xff]
    %v156 = vld [vmem:[%s1 + $0x448] sm:$0xff]
    %v157 = vld [vmem:[%s1 + $0x450] sm:$0xff]
    %v158 = vld [vmem:[%s1 + $0x458] sm:$0xff]
    %v159 = vld [vmem:[%s1 + $0x460] sm:$0xff]
    %v160 = vld [vmem:[%s1 + $0x468] sm:$0xff]
    %v161 = vld [vmem:[%s1 + $0x470] sm:$0xff]
    %v162 = vld [vmem:[%s1 + $0x478] sm:$0xff]
    %v163 = vld [vmem:[%s1 + $0x480] sm:$0xff]
    %v164 = vld [vmem:[%s1 + $0x488] sm:$0xff]
    %v165 = vld [vmem:[%s1 + $0x490] sm:$0xff]
    %v166 = vld [vmem:[%s1 + $0x498] sm:$0xff]
    %v167 = vld [vmem:[%s1 + $0x4a0] sm:$0xff]
    %v168 = vld [vmem:[%s1 + $0x4a8] sm:$0xff]
    %v169 = vld [vmem:[%s1 + $0x4b0] sm:$0xff]
    %v170 = vld [vmem:[%s1 + $0x4b8] sm:$0xff]
    %v171 = vld [vmem:[%s1 + $0x4c0] sm:$0xff]
    %v172 = vld [vmem:[%s1 + $0x4c8] sm:$0xff]
    %v173 = vld [vmem:[%s1 + $0x4d0] sm:$0xff]
    %v174 = vld [vmem:[%s1 + $0x4d8] sm:$0xff]
    %v175 = vld [vmem:[%s1 + $0x4e0] sm:$0xff]
    %v176 = vld [vmem:[%s1 + $0x4e8] sm:$0xff]
    %v177 = vld [vmem:[%s1 + $0x4f0] sm:$0xff]
    %v178 = vld [vmem:[%s1 + $0x4f8] sm:$0xff]
    %v179 = vld [vmem:[%s1 + $0x500] sm:$0xff]
    %v180 = vld [vmem:[%s1 + $0x508] sm:$0xff]
    %v181 = vld [vmem:[%s1 + $0x510] sm:$0xff]
    %v182 = vld [vmem:[%s1 + $0x518] sm:$0xff]
    %v183 = vld [vmem:[%s1 + $0x520] sm:$0xff]
    %v184 = vld [vmem:[%s1 + $0x528] sm:$0xff]
    %v185 = vld [vmem:[%s1 + $0x530] sm:$0xff]
    %v186 = vld [vmem:[%s1 + $0x538] sm:$0xff]
    %v187 = vld [vmem:[%s1 + $0x540] sm:$0xff]
    %v188 = vld [vmem:[%s1 + $0x548] sm:$0xff]
    %v189 = vld [vmem:[%s1 + $0x550] sm:$0xff]
    %v190 = vld [vmem:[%s1 + $0x558] sm:$0xff]
    %v191 = vld [vmem:[%s1 + $0x560] sm:$0xff]
    %v192 = vld [vmem:[%s1 + $0x568] sm:$0xff]
    %v193 = vld [vmem:[%s1 + $0x570] sm:$0xff]
    %v194 = vld [vmem:[%s1 + $0x578] sm:$0xff]
    %v195 = vld [vmem:[%s1 + $0x580] sm:$0xff]
    %v196 = vld [vmem:[%s1 + $0x588] sm:$0xff]
    %v197 = vld [vmem:[%s1 + $0x590] sm:$0xff]
    %v198 = vld [vmem:[%s1 + $0x598] sm:$0xff]
    %v199 = vld [vmem:[%s1 + $0x5a0] sm:$0xff]
    %v200 = vld [vmem:[%s1 + $0x5a8] sm:$0xff]
    %v201 = vld [vmem:[%s1 + $0x5b0] sm:$0xff]
    %v202 = vld [vmem:[%s1 + $0x5b8] sm:$0xff]
    %v203 = vld [vmem:[%s1 + $0x5c0] sm:$0xff]
    %v204 = vld [vmem:[%s1 + $0x5c8] sm:$0xff]
    %v205 = vld [vmem:[%s1 + $0x5d0] sm:$0xff]
    %v206 = vld [vmem:[%s1 + $0x5d8] sm:$0xff]
    %v207 = vld [vmem:[%s1 + $0x5e0] sm:$0xff]
    %v208 = vld [vmem:[%s1 + $0x5e8] sm:$0xff]
    %v209 = vld [vmem:[%s1 + $0x5f0] sm:$0xff]
    %v210 = vld [vmem:[%s1 + $0x5f8] sm:$0xff]
    %v211 = vld [vmem:[%s1 + $0x600] sm:$0xff]
    %v212 = vld [vmem:[%s1 + $0x608] sm:$0xff]
    %v213 = vld [vmem:[%s1 + $0x610] sm:$0xff]
    %v214 = vld [vmem:[%s1 + $0x618] sm:$0xff]
    %v215 = vld [vmem:[%s1 + $0x620] sm:$0xff]
    %v216 = vld [vmem:[%s1 + $0x628] sm:$0xff]
    %v217 = vld [vmem:[%s1 + $0x630] sm:$0xff]
    %v218 = vld [vmem:[%s1 + $0x638] sm:$0xff]
    %v219 = vld [vmem:[%s1 + $0x640] sm:$0xff]
    %v220 = vld [vmem:[%s1 + $0x648] sm:$0xff]
    %v221 = vld [vmem:[%s1 + $0x650] sm:$0xff]
    %v222 = vld [vmem:[%s1 + $0x658] sm:$0xff]
    %v223 = vld [vmem:[%s1 + $0x660] sm:$0xff]
    %v224 = vld [vmem:[%s1 + $0x668] sm:$0xff]
    %v225 = vld [vmem:[%s1 + $0x670] sm:$0xff]
    %v226 = vld [vmem:[%s1 + $0x678] sm:$0xff]
    %v227 = vld [vmem:[%s1 + $0x680] sm:$0xff]
    %v228 = vld [vmem:[%s1 + $0x688] sm:$0xff]
    %v229 = vld [vmem:[%s1 + $0x690] sm:$0xff]
    %v230 = vld [vmem:[%s1 + $0x698] sm:$0xff]
    %v231 = vld [vmem:[%s1 + $0x6a0] sm:$0xff]
    %v232 = vld [vmem:[%s1 + $0x6a8] sm:$0xff]
    %v233 = vld [vmem:[%s1 + $0x6b0] sm:$0xff]
    %v234 = vld [vmem:[%s1 + $0x6b8] sm:$0xff]
    %v235 = vld [vmem:[%s1 + $0x6c0] sm:$0xff]
    %v236 = vld [vmem:[%s1 + $0x6c8] sm:$0xff]
    %v237 = vld [vmem:[%s1 + $0x6d0] sm:$0xff]
    %v238 = vld [vmem:[%s1 + $0x6d8] sm:$0xff]
    %v239 = vld [vmem:[%s1 + $0x6e0] sm:$0xff]
    %v240 = vld [vmem:[%s1 + $0x6e8] sm:$0xff]
    %v241 = vld [vmem:[%s1 + $0x6f0] sm:$0xff]
    %v242 = vld [vmem:[%s1 + $0x6f8] sm:$0xff]
    %v243 = vld [vmem:[%s1 + $0x700] sm:$0xff]
    %v244 = vld [vmem:[%s1 + $0x708] sm:$0xff]
    %v245 = vld [vmem:[%s1 + $0x710] sm:$0xff]
    %v246 = vld [vmem:[%s1 + $0x718] sm:$0xff]
    %v247 = vld [vmem:[%s1 + $0x720] sm:$0xff]
    %v248 = vld [vmem:[%s1 + $0x728] sm:$0xff]
    %v249 = vld [vmem:[%s1 + $0x730] sm:$0xff]
    %v250 = vld [vmem:[%s1 + $0x738] sm:$0xff]
    %v251 = vld [vmem:[%s1 + $0x740] sm:$0xff]
    %v252 = vld [vmem:[%s1 + $0x748] sm:$0xff]
    %v253 = vld [vmem:[%s1 + $0x750] sm:$0xff]
    %v254 = vld [vmem:[%s1 + $0x758] sm:$0xff]
    %v255 = vld [vmem:[%s1 + $0x760] sm:$0xff]
    %v256 = vld [vmem:[%s1 + $0x768] sm:$0xff]
    %v257 = vld [vmem:[%s1 + $0x770] sm:$0xff]
    %v258 = vld [vmem:[%s1 + $0x778] sm:$0xff]
    %v259 = vld [vmem:[%s1 + $0x780] sm:$0xff]
    %v260 = vld [vmem:[%s1 + $0x788] sm:$0xff]
    %v261 = vld [vmem:[%s1 + $0x790] sm:$0xff]
    %v262 = vld [vmem:[%s1 + $0x798] sm:$0xff]
    %v263 = vld [vmem:[%s1 + $0x7a0] sm:$0xff]
    %v264 = vld [vmem:[%s1 + $0x7a8] sm:$0xff]
    %v265 = vld [vmem:[%s1 + $0x7b0] sm:$0xff]
    %v266 = vld [vmem:[%s1 + $0x7b8] sm:$0xff]
    %v267 = vld [vmem:[%s1 + $0x7c0] sm:$0xff]
    %v268 = vld [vmem:[%s1 + $0x7c8] sm:$0xff]
    %v269 = vld [vmem:[%s1 + $0x7d0] sm:$0xff]
    %v270 = vld [vmem:[%s1 + $0x7d8] sm:$0xff]
    %v271 = vld [vmem:[%s1 + $0x7e0] sm:$0xff]
    %v272 = vld [vmem:[%s1 + $0x7e8] sm:$0xff]
    %v273 = vld [vmem:[%s1 + $0x7f0] sm:$0xff]
    %v274 = vld [vmem:[%s1 + $0x7f8] sm:$0xff]
    %v275 = vld [vmem:[%s2] sm:$0x1]
    %v277 = vlaneseq
    %v278 = vshrl.u32 %v277, 7
    %v279 = vsub.s32 0, %v278
    %v280 = vrot.slane %v275, %v279
    %v286 = vcombine.high %v15, %v15
    %v288 = vunpack.c.l.s4 1983009808
    %v289 = vunpack.c.0.s8 %v288
    %v290 = vlaneseq
    %v291 = vshrl.u32 %v290, 7
    %v292 = vsub.s32 %v289, %v291
    %v293 = vrot.slane %v15, %v292
    %v295 = vunpack.c.l.s4 1983009808
    %v296 = vunpack.c.0.s8 %v295
    %v297 = vlaneseq
    %v298 = vshrl.u32 %v297, 7
    %v299 = vsub.s32 %v296, %v298
    %v300 = vrot.slane %v286, %v299
    %v301 = vcombine.high %v293, %v293
    %v302 = vcombine.high %v300, %v300
    %v303 = vcombine.high %v16, %v16
    %v305 = vunpack.c.l.s4 1983009808
    %v306 = vunpack.c.0.s8 %v305
    %v307 = vlaneseq
    %v308 = vshrl.u32 %v307, 7
    %v309 = vsub.s32 %v306, %v308
    %v310 = vrot.slane %v16, %v309
    %v312 = vunpack.c.l.s4 1983009808
    %v313 = vunpack.c.0.s8 %v312
    %v314 = vlaneseq
    %v315 = vshrl.u32 %v314, 7
    %v316 = vsub.s32 %v313, %v315
    %v317 = vrot.slane %v303, %v316
    %v318 = vcombine.high %v310, %v310
    %v319 = vcombine.high %v317, %v317
    %v320 = vcombine.high %v17, %v17
    %v322 = vunpack.c.l.s4 1983009808
    %v323 = vunpack.c.0.s8 %v322
    %v324 = vlaneseq
    %v325 = vshrl.u32 %v324, 7
    %v326 = vsub.s32 %v323, %v325
    %v327 = vrot.slane %v17, %v326
    %v329 = vunpack.c.l.s4 1983009808
    %v330 = vunpack.c.0.s8 %v329
    %v331 = vlaneseq
    %v332 = vshrl.u32 %v331, 7
    %v333 = vsub.s32 %v330, %v332
    %v334 = vrot.slane %v320, %v333
    %v335 = vcombine.high %v327, %v327
    %v336 = vcombine.high %v334, %v334
    %v337 = vcombine.high %v18, %v18
    %v339 = vunpack.c.l.s4 1983009808
    %v340 = vunpack.c.0.s8 %v339
    %v341 = vlaneseq
    %v342 = vshrl.u32 %v341, 7
    %v343 = vsub.s32 %v340, %v342
    %v344 = vrot.slane %v18, %v343
    %v346 = vunpack.c.l.s4 1983009808
    %v347 = vunpack.c.0.s8 %v346
    %v348 = vlaneseq
    %v349 = vshrl.u32 %v348, 7
    %v350 = vsub.s32 %v347, %v349
    %v351 = vrot.slane %v337, %v350
    %v352 = vcombine.high %v344, %v344
    %v353 = vcombine.high %v351, %v351
    %370 = vmatprep.subr.mxu0 0.0
    %371 = vmatpush1.msra.mxu0 %v19
    %372 = vmatprep.subr.mxu0 0.0
    %373 = vmatpush1.msra.mxu0 %v20
    %374 = vmatprep.subr.mxu0 0.0
    %375 = vmatpush1.msra.mxu0 %v21
    %376 = vmatprep.subr.mxu0 0.0
    %377 = vmatpush1.msra.mxu0 %v22
    %378 = vmatprep.subr.mxu0 0.0
    %379 = vmatpush1.msra.mxu0 %v23
    %380 = vmatprep.subr.mxu0 0.0
    %381 = vmatpush1.msra.mxu0 %v24
    %382 = vmatprep.subr.mxu0 0.0
    %383 = vmatpush1.msra.mxu0 %v25
    %384 = vmatprep.subr.mxu0 0.0
    %385 = vmatpush1.msra.mxu0 %v26
    %386 = vmatprep.subr.mxu0 0.0
    %387 = vmatpush1.msra.mxu0 %v27
    %388 = vmatprep.subr.mxu0 0.0
    %389 = vmatpush1.msra.mxu0 %v28
    %390 = vmatprep.subr.mxu0 0.0
    %391 = vmatpush1.msra.mxu0 %v29
    %392 = vmatprep.subr.mxu0 0.0
    %393 = vmatpush1.msra.mxu0 %v30
    %394 = vmatprep.subr.mxu0 0.0
    %395 = vmatpush1.msra.mxu0 %v31
    %396 = vmatprep.subr.mxu0 0.0
    %397 = vmatpush1.msra.mxu0 %v32
    %398 = vmatprep.subr.mxu0 0.0
    %399 = vmatpush1.msra.mxu0 %v33
    %400 = vmatprep.subr.mxu0 0.0
    %401 = vmatpush1.msra.mxu0 %v34
    %402 = vmatprep.subr.mxu0 0.0
    %403 = vmatpush1.msra.mxu0 %v35
    %404 = vmatprep.subr.mxu0 0.0
    %405 = vmatpush1.msra.mxu0 %v36
    %406 = vmatprep.subr.mxu0 0.0
    %407 = vmatpush1.msra.mxu0 %v37
    %408 = vmatprep.subr.mxu0 0.0
    %409 = vmatpush1.msra.mxu0 %v38
    %410 = vmatprep.subr.mxu0 0.0
    %411 = vmatpush1.msra.mxu0 %v39
    %412 = vmatprep.subr.mxu0 0.0
    %413 = vmatpush1.msra.mxu0 %v40
    %414 = vmatprep.subr.mxu0 0.0
    %415 = vmatpush1.msra.mxu0 %v41
    %416 = vmatprep.subr.mxu0 0.0
    %417 = vmatpush1.msra.mxu0 %v42
    %418 = vmatprep.subr.mxu0 0.0
    %419 = vmatpush1.msra.mxu0 %v43
    %420 = vmatprep.subr.mxu0 0.0
    %421 = vmatpush1.msra.mxu0 %v44
    %422 = vmatprep.subr.mxu0 0.0
    %423 = vmatpush1.msra.mxu0 %v45
    %424 = vmatprep.subr.mxu0 0.0
    %425 = vmatpush1.msra.mxu0 %v46
    %426 = vmatprep.subr.mxu0 0.0
    %427 = vmatpush1.msra.mxu0 %v47
    %428 = vmatprep.subr.mxu0 0.0
    %429 = vmatpush1.msra.mxu0 %v48
    %430 = vmatprep.subr.mxu0 0.0
    %431 = vmatpush1.msra.mxu0 %v49
    %432 = vmatprep.subr.mxu0 0.0
    %433 = vmatpush1.msra.mxu0 %v50
    %434 = vmatprep.mubr.f32.mxu0 %v301
    %435 = vmatmul.mubr.f32.gmra.mrb[0].mxu0 %v293
    %v436 = vpop.f32.mrb[0].mxu0
    %v437 = vadd.f32 %v280, %v436
    %v438 = vpop.f32.mrb[0].mxu0
    %439 = vdwg.mxu0
    %440 = vmatprep.subr.mxu0 0.0
    %441 = vmatpush1.msra.mxu0 %v51
    %442 = vmatprep.subr.mxu0 0.0
    %443 = vmatpush1.msra.mxu0 %v52
    %444 = vmatprep.subr.mxu0 0.0
    %445 = vmatpush1.msra.mxu0 %v53
    %446 = vmatprep.subr.mxu0 0.0
    %447 = vmatpush1.msra.mxu0 %v54
    %448 = vmatprep.subr.mxu0 0.0
    %449 = vmatpush1.msra.mxu0 %v55
    %450 = vmatprep.subr.mxu0 0.0
    %451 = vmatpush1.msra.mxu0 %v56
    %452 = vmatprep.subr.mxu0 0.0
    %453 = vmatpush1.msra.mxu0 %v57
    %454 = vmatprep.subr.mxu0 0.0
    %455 = vmatpush1.msra.mxu0 %v58
    %456 = vmatprep.subr.mxu0 0.0
    %457 = vmatpush1.msra.mxu0 %v59
    %458 = vmatprep.subr.mxu0 0.0
    %459 = vmatpush1.msra.mxu0 %v60
    %460 = vmatprep.subr.mxu0 0.0
    %461 = vmatpush1.msra.mxu0 %v61
    %462 = vmatprep.subr.mxu0 0.0
    %463 = vmatpush1.msra.mxu0 %v62
    %464 = vmatprep.subr.mxu0 0.0
    %465 = vmatpush1.msra.mxu0 %v63
    %466 = vmatprep.subr.mxu0 0.0
    %467 = vmatpush1.msra.mxu0 %v64
    %468 = vmatprep.subr.mxu0 0.0
    %469 = vmatpush1.msra.mxu0 %v65
    %470 = vmatprep.subr.mxu0 0.0
    %471 = vmatpush1.msra.mxu0 %v66
    %472 = vmatprep.subr.mxu0 0.0
    %473 = vmatpush1.msra.mxu0 %v67
    %474 = vmatprep.subr.mxu0 0.0
    %475 = vmatpush1.msra.mxu0 %v68
    %476 = vmatprep.subr.mxu0 0.0
    %477 = vmatpush1.msra.mxu0 %v69
    %478 = vmatprep.subr.mxu0 0.0
    %479 = vmatpush1.msra.mxu0 %v70
    %480 = vmatprep.subr.mxu0 0.0
    %481 = vmatpush1.msra.mxu0 %v71
    %482 = vmatprep.subr.mxu0 0.0
    %483 = vmatpush1.msra.mxu0 %v72
    %484 = vmatprep.subr.mxu0 0.0
    %485 = vmatpush1.msra.mxu0 %v73
    %486 = vmatprep.subr.mxu0 0.0
    %487 = vmatpush1.msra.mxu0 %v74
    %488 = vmatprep.subr.mxu0 0.0
    %489 = vmatpush1.msra.mxu0 %v75
    %490 = vmatprep.subr.mxu0 0.0
    %491 = vmatpush1.msra.mxu0 %v76
    %492 = vmatprep.subr.mxu0 0.0
    %493 = vmatpush1.msra.mxu0 %v77
    %494 = vmatprep.subr.mxu0 0.0
    %495 = vmatpush1.msra.mxu0 %v78
    %496 = vmatprep.subr.mxu0 0.0
    %497 = vmatpush1.msra.mxu0 %v79
    %498 = vmatprep.subr.mxu0 0.0
    %499 = vmatpush1.msra.mxu0 %v80
    %500 = vmatprep.subr.mxu0 0.0
    %501 = vmatpush1.msra.mxu0 %v81
    %502 = vmatprep.subr.mxu0 0.0
    %503 = vmatpush1.msra.mxu0 %v82
    %504 = vmatprep.mubr.f32.mxu0 %v302
    %505 = vmatmul.mubr.f32.gmra.mrb[0].mxu0 %v300
    %v506 = vpop.f32.mrb[0].mxu0
    %v507 = vadd.f32 %v437, %v506
    %v508 = vpop.f32.mrb[0].mxu0
    %509 = vdwg.mxu0
    %510 = vmatprep.subr.mxu0 0.0
    %511 = vmatpush1.msra.mxu0 %v83
    %512 = vmatprep.subr.mxu0 0.0
    %513 = vmatpush1.msra.mxu0 %v84
    %514 = vmatprep.subr.mxu0 0.0
    %515 = vmatpush1.msra.mxu0 %v85
    %516 = vmatprep.subr.mxu0 0.0
    %517 = vmatpush1.msra.mxu0 %v86
    %518 = vmatprep.subr.mxu0 0.0
    %519 = vmatpush1.msra.mxu0 %v87
    %520 = vmatprep.subr.mxu0 0.0
    %521 = vmatpush1.msra.mxu0 %v88
    %522 = vmatprep.subr.mxu0 0.0
    %523 = vmatpush1.msra.mxu0 %v89
    %524 = vmatprep.subr.mxu0 0.0
    %525 = vmatpush1.msra.mxu0 %v90
    %526 = vmatprep.subr.mxu0 0.0
    %527 = vmatpush1.msra.mxu0 %v91
    %528 = vmatprep.subr.mxu0 0.0
    %529 = vmatpush1.msra.mxu0 %v92
    %530 = vmatprep.subr.mxu0 0.0
    %531 = vmatpush1.msra.mxu0 %v93
    %532 = vmatprep.subr.mxu0 0.0
    %533 = vmatpush1.msra.mxu0 %v94
    %534 = vmatprep.subr.mxu0 0.0
    %535 = vmatpush1.msra.mxu0 %v95
    %536 = vmatprep.subr.mxu0 0.0
    %537 = vmatpush1.msra.mxu0 %v96
    %538 = vmatprep.subr.mxu0 0.0
    %539 = vmatpush1.msra.mxu0 %v97
    %540 = vmatprep.subr.mxu0 0.0
    %541 = vmatpush1.msra.mxu0 %v98
    %542 = vmatprep.subr.mxu0 0.0
    %543 = vmatpush1.msra.mxu0 %v99
    %544 = vmatprep.subr.mxu0 0.0
    %545 = vmatpush1.msra.mxu0 %v100
    %546 = vmatprep.subr.mxu0 0.0
    %547 = vmatpush1.msra.mxu0 %v101
    %548 = vmatprep.subr.mxu0 0.0
    %549 = vmatpush1.msra.mxu0 %v102
    %550 = vmatprep.subr.mxu0 0.0
    %551 = vmatpush1.msra.mxu0 %v103
    %552 = vmatprep.subr.mxu0 0.0
    %553 = vmatpush1.msra.mxu0 %v104
    %554 = vmatprep.subr.mxu0 0.0
    %555 = vmatpush1.msra.mxu0 %v105
    %556 = vmatprep.subr.mxu0 0.0
    %557 = vmatpush1.msra.mxu0 %v106
    %558 = vmatprep.subr.mxu0 0.0
    %559 = vmatpush1.msra.mxu0 %v107
    %560 = vmatprep.subr.mxu0 0.0
    %561 = vmatpush1.msra.mxu0 %v108
    %562 = vmatprep.subr.mxu0 0.0
    %563 = vmatpush1.msra.mxu0 %v109
    %564 = vmatprep.subr.mxu0 0.0
    %565 = vmatpush1.msra.mxu0 %v110
    %566 = vmatprep.subr.mxu0 0.0
    %567 = vmatpush1.msra.mxu0 %v111
    %568 = vmatprep.subr.mxu0 0.0
    %569 = vmatpush1.msra.mxu0 %v112
    %570 = vmatprep.subr.mxu0 0.0
    %571 = vmatpush1.msra.mxu0 %v113
    %572 = vmatprep.subr.mxu0 0.0
    %573 = vmatpush1.msra.mxu0 %v114
    %574 = vmatprep.mubr.f32.mxu0 %v318
    %575 = vmatmul.mubr.f32.gmra.mrb[0].mxu0 %v310
    %v576 = vpop.f32.mrb[0].mxu0
    %v577 = vadd.f32 %v507, %v576
    %v578 = vpop.f32.mrb[0].mxu0
    %579 = vdwg.mxu0
    %580 = vmatprep.subr.mxu0 0.0
    %581 = vmatpush1.msra.mxu0 %v115
    %582 = vmatprep.subr.mxu0 0.0
    %583 = vmatpush1.msra.mxu0 %v116
    %584 = vmatprep.subr.mxu0 0.0
    %585 = vmatpush1.msra.mxu0 %v117
    %586 = vmatprep.subr.mxu0 0.0
    %587 = vmatpush1.msra.mxu0 %v118
    %588 = vmatprep.subr.mxu0 0.0
    %589 = vmatpush1.msra.mxu0 %v119
    %590 = vmatprep.subr.mxu0 0.0
    %591 = vmatpush1.msra.mxu0 %v120
    %592 = vmatprep.subr.mxu0 0.0
    %593 = vmatpush1.msra.mxu0 %v121
    %594 = vmatprep.subr.mxu0 0.0
    %595 = vmatpush1.msra.mxu0 %v122
    %596 = vmatprep.subr.mxu0 0.0
    %597 = vmatpush1.msra.mxu0 %v123
    %598 = vmatprep.subr.mxu0 0.0
    %599 = vmatpush1.msra.mxu0 %v124
    %600 = vmatprep.subr.mxu0 0.0
    %601 = vmatpush1.msra.mxu0 %v125
    %602 = vmatprep.subr.mxu0 0.0
    %603 = vmatpush1.msra.mxu0 %v126
    %604 = vmatprep.subr.mxu0 0.0
    %605 = vmatpush1.msra.mxu0 %v127
    %606 = vmatprep.subr.mxu0 0.0
    %607 = vmatpush1.msra.mxu0 %v128
    %608 = vmatprep.subr.mxu0 0.0
    %609 = vmatpush1.msra.mxu0 %v129
    %610 = vmatprep.subr.mxu0 0.0
    %611 = vmatpush1.msra.mxu0 %v130
    %612 = vmatprep.subr.mxu0 0.0
    %613 = vmatpush1.msra.mxu0 %v131
    %614 = vmatprep.subr.mxu0 0.0
    %615 = vmatpush1.msra.mxu0 %v132
    %616 = vmatprep.subr.mxu0 0.0
    %617 = vmatpush1.msra.mxu0 %v133
    %618 = vmatprep.subr.mxu0 0.0
    %619 = vmatpush1.msra.mxu0 %v134
    %620 = vmatprep.subr.mxu0 0.0
    %621 = vmatpush1.msra.mxu0 %v135
    %622 = vmatprep.subr.mxu0 0.0
    %623 = vmatpush1.msra.mxu0 %v136
    %624 = vmatprep.subr.mxu0 0.0
    %625 = vmatpush1.msra.mxu0 %v137
    %626 = vmatprep.subr.mxu0 0.0
    %627 = vmatpush1.msra.mxu0 %v138
    %628 = vmatprep.subr.mxu0 0.0
    %629 = vmatpush1.msra.mxu0 %v139
    %630 = vmatprep.subr.mxu0 0.0
    %631 = vmatpush1.msra.mxu0 %v140
    %632 = vmatprep.subr.mxu0 0.0
    %633 = vmatpush1.msra.mxu0 %v141
    %634 = vmatprep.subr.mxu0 0.0
    %635 = vmatpush1.msra.mxu0 %v142
    %636 = vmatprep.subr.mxu0 0.0
    %637 = vmatpush1.msra.mxu0 %v143
    %638 = vmatprep.subr.mxu0 0.0
    %639 = vmatpush1.msra.mxu0 %v144
    %640 = vmatprep.subr.mxu0 0.0
    %641 = vmatpush1.msra.mxu0 %v145
    %642 = vmatprep.subr.mxu0 0.0
    %643 = vmatpush1.msra.mxu0 %v146
    %644 = vmatprep.mubr.f32.mxu0 %v319
    %645 = vmatmul.mubr.f32.gmra.mrb[0].mxu0 %v317
    %v646 = vpop.f32.mrb[0].mxu0
    %v647 = vadd.f32 %v577, %v646
    %v648 = vpop.f32.mrb[0].mxu0
    %649 = vdwg.mxu0
    %650 = vmatprep.subr.mxu0 0.0
    %651 = vmatpush1.msra.mxu0 %v147
    %652 = vmatprep.subr.mxu0 0.0
    %653 = vmatpush1.msra.mxu0 %v148
    %654 = vmatprep.subr.mxu0 0.0
    %655 = vmatpush1.msra.mxu0 %v149
    %656 = vmatprep.subr.mxu0 0.0
    %657 = vmatpush1.msra.mxu0 %v150
    %658 = vmatprep.subr.mxu0 0.0
    %659 = vmatpush1.msra.mxu0 %v151
    %660 = vmatprep.subr.mxu0 0.0
    %661 = vmatpush1.msra.mxu0 %v152
    %662 = vmatprep.subr.mxu0 0.0
    %663 = vmatpush1.msra.mxu0 %v153
    %664 = vmatprep.subr.mxu0 0.0
    %665 = vmatpush1.msra.mxu0 %v154
    %666 = vmatprep.subr.mxu0 0.0
    %667 = vmatpush1.msra.mxu0 %v155
    %668 = vmatprep.subr.mxu0 0.0
    %669 = vmatpush1.msra.mxu0 %v156
    %670 = vmatprep.subr.mxu0 0.0
    %671 = vmatpush1.msra.mxu0 %v157
    %672 = vmatprep.subr.mxu0 0.0
    %673 = vmatpush1.msra.mxu0 %v158
    %674 = vmatprep.subr.mxu0 0.0
    %675 = vmatpush1.msra.mxu0 %v159
    %676 = vmatprep.subr.mxu0 0.0
    %677 = vmatpush1.msra.mxu0 %v160
    %678 = vmatprep.subr.mxu0 0.0
    %679 = vmatpush1.msra.mxu0 %v161
    %680 = vmatprep.subr.mxu0 0.0
    %681 = vmatpush1.msra.mxu0 %v162
    %682 = vmatprep.subr.mxu0 0.0
    %683 = vmatpush1.msra.mxu0 %v163
    %684 = vmatprep.subr.mxu0 0.0
    %685 = vmatpush1.msra.mxu0 %v164
    %686 = vmatprep.subr.mxu0 0.0
    %687 = vmatpush1.msra.mxu0 %v165
    %688 = vmatprep.subr.mxu0 0.0
    %689 = vmatpush1.msra.mxu0 %v166
    %690 = vmatprep.subr.mxu0 0.0
    %691 = vmatpush1.msra.mxu0 %v167
    %692 = vmatprep.subr.mxu0 0.0
    %693 = vmatpush1.msra.mxu0 %v168
    %694 = vmatprep.subr.mxu0 0.0
    %695 = vmatpush1.msra.mxu0 %v169
    %696 = vmatprep.subr.mxu0 0.0
    %697 = vmatpush1.msra.mxu0 %v170
    %698 = vmatprep.subr.mxu0 0.0
    %699 = vmatpush1.msra.mxu0 %v171
    %700 = vmatprep.subr.mxu0 0.0
    %701 = vmatpush1.msra.mxu0 %v172
    %702 = vmatprep.subr.mxu0 0.0
    %703 = vmatpush1.msra.mxu0 %v173
    %704 = vmatprep.subr.mxu0 0.0
    %705 = vmatpush1.msra.mxu0 %v174
    %706 = vmatprep.subr.mxu0 0.0
    %707 = vmatpush1.msra.mxu0 %v175
    %708 = vmatprep.subr.mxu0 0.0
    %709 = vmatpush1.msra.mxu0 %v176
    %710 = vmatprep.subr.mxu0 0.0
    %711 = vmatpush1.msra.mxu0 %v177
    %712 = vmatprep.subr.mxu0 0.0
    %713 = vmatpush1.msra.mxu0 %v178
    %714 = vmatprep.mubr.f32.mxu0 %v335
    %715 = vmatmul.mubr.f32.gmra.mrb[0].mxu0 %v327
    %v716 = vpop.f32.mrb[0].mxu0
    %v717 = vadd.f32 %v647, %v716
    %v718 = vpop.f32.mrb[0].mxu0
    %719 = vdwg.mxu0
    %720 = vmatprep.subr.mxu0 0.0
    %721 = vmatpush1.msra.mxu0 %v179
    %722 = vmatprep.subr.mxu0 0.0
    %723 = vmatpush1.msra.mxu0 %v180
    %724 = vmatprep.subr.mxu0 0.0
    %725 = vmatpush1.msra.mxu0 %v181
    %726 = vmatprep.subr.mxu0 0.0
    %727 = vmatpush1.msra.mxu0 %v182
    %728 = vmatprep.subr.mxu0 0.0
    %729 = vmatpush1.msra.mxu0 %v183
    %730 = vmatprep.subr.mxu0 0.0
    %731 = vmatpush1.msra.mxu0 %v184
    %732 = vmatprep.subr.mxu0 0.0
    %733 = vmatpush1.msra.mxu0 %v185
    %734 = vmatprep.subr.mxu0 0.0
    %735 = vmatpush1.msra.mxu0 %v186
    %736 = vmatprep.subr.mxu0 0.0
    %737 = vmatpush1.msra.mxu0 %v187
    %738 = vmatprep.subr.mxu0 0.0
    %739 = vmatpush1.msra.mxu0 %v188
    %740 = vmatprep.subr.mxu0 0.0
    %741 = vmatpush1.msra.mxu0 %v189
    %742 = vmatprep.subr.mxu0 0.0
    %743 = vmatpush1.msra.mxu0 %v190
    %744 = vmatprep.subr.mxu0 0.0
    %745 = vmatpush1.msra.mxu0 %v191
    %746 = vmatprep.subr.mxu0 0.0
    %747 = vmatpush1.msra.mxu0 %v192
    %748 = vmatprep.subr.mxu0 0.0
    %749 = vmatpush1.msra.mxu0 %v193
    %750 = vmatprep.subr.mxu0 0.0
    %751 = vmatpush1.msra.mxu0 %v194
    %752 = vmatprep.subr.mxu0 0.0
    %753 = vmatpush1.msra.mxu0 %v195
    %754 = vmatprep.subr.mxu0 0.0
    %755 = vmatpush1.msra.mxu0 %v196
    %756 = vmatprep.subr.mxu0 0.0
    %757 = vmatpush1.msra.mxu0 %v197
    %758 = vmatprep.subr.mxu0 0.0
    %759 = vmatpush1.msra.mxu0 %v198
    %760 = vmatprep.subr.mxu0 0.0
    %761 = vmatpush1.msra.mxu0 %v199
    %762 = vmatprep.subr.mxu0 0.0
    %763 = vmatpush1.msra.mxu0 %v200
    %764 = vmatprep.subr.mxu0 0.0
    %765 = vmatpush1.msra.mxu0 %v201
    %766 = vmatprep.subr.mxu0 0.0
    %767 = vmatpush1.msra.mxu0 %v202
    %768 = vmatprep.subr.mxu0 0.0
    %769 = vmatpush1.msra.mxu0 %v203
    %770 = vmatprep.subr.mxu0 0.0
    %771 = vmatpush1.msra.mxu0 %v204
    %772 = vmatprep.subr.mxu0 0.0
    %773 = vmatpush1.msra.mxu0 %v205
    %774 = vmatprep.subr.mxu0 0.0
    %775 = vmatpush1.msra.mxu0 %v206
    %776 = vmatprep.subr.mxu0 0.0
    %777 = vmatpush1.msra.mxu0 %v207
    %778 = vmatprep.subr.mxu0 0.0
    %779 = vmatpush1.msra.mxu0 %v208
    %780 = vmatprep.subr.mxu0 0.0
    %781 = vmatpush1.msra.mxu0 %v209
    %782 = vmatprep.subr.mxu0 0.0
    %783 = vmatpush1.msra.mxu0 %v210
    %784 = vmatprep.mubr.f32.mxu0 %v336
    %785 = vmatmul.mubr.f32.gmra.mrb[0].mxu0 %v334
    %v786 = vpop.f32.mrb[0].mxu0
    %v787 = vadd.f32 %v717, %v786
    %v788 = vpop.f32.mrb[0].mxu0
    %789 = vdwg.mxu0
    %790 = vmatprep.subr.mxu0 0.0
    %791 = vmatpush1.msra.mxu0 %v211
    %792 = vmatprep.subr.mxu0 0.0
    %793 = vmatpush1.msra.mxu0 %v212
    %794 = vmatprep.subr.mxu0 0.0
    %795 = vmatpush1.msra.mxu0 %v213
    %796 = vmatprep.subr.mxu0 0.0
    %797 = vmatpush1.msra.mxu0 %v214
    %798 = vmatprep.subr.mxu0 0.0
    %799 = vmatpush1.msra.mxu0 %v215
    %800 = vmatprep.subr.mxu0 0.0
    %801 = vmatpush1.msra.mxu0 %v216
    %802 = vmatprep.subr.mxu0 0.0
    %803 = vmatpush1.msra.mxu0 %v217
    %804 = vmatprep.subr.mxu0 0.0
    %805 = vmatpush1.msra.mxu0 %v218
    %806 = vmatprep.subr.mxu0 0.0
    %807 = vmatpush1.msra.mxu0 %v219
    %808 = vmatprep.subr.mxu0 0.0
    %809 = vmatpush1.msra.mxu0 %v220
    %810 = vmatprep.subr.mxu0 0.0
    %811 = vmatpush1.msra.mxu0 %v221
    %812 = vmatprep.subr.mxu0 0.0
    %813 = vmatpush1.msra.mxu0 %v222
    %814 = vmatprep.subr.mxu0 0.0
    %815 = vmatpush1.msra.mxu0 %v223
    %816 = vmatprep.subr.mxu0 0.0
    %817 = vmatpush1.msra.mxu0 %v224
    %818 = vmatprep.subr.mxu0 0.0
    %819 = vmatpush1.msra.mxu0 %v225
    %820 = vmatprep.subr.mxu0 0.0
    %821 = vmatpush1.msra.mxu0 %v226
    %822 = vmatprep.subr.mxu0 0.0
    %823 = vmatpush1.msra.mxu0 %v227
    %824 = vmatprep.subr.mxu0 0.0
    %825 = vmatpush1.msra.mxu0 %v228
    %826 = vmatprep.subr.mxu0 0.0
    %827 = vmatpush1.msra.mxu0 %v229
    %828 = vmatprep.subr.mxu0 0.0
    %829 = vmatpush1.msra.mxu0 %v230
    %830 = vmatprep.subr.mxu0 0.0
    %831 = vmatpush1.msra.mxu0 %v231
    %832 = vmatprep.subr.mxu0 0.0
    %833 = vmatpush1.msra.mxu0 %v232
    %834 = vmatprep.subr.mxu0 0.0
    %835 = vmatpush1.msra.mxu0 %v233
    %836 = vmatprep.subr.mxu0 0.0
    %837 = vmatpush1.msra.mxu0 %v234
    %838 = vmatprep.subr.mxu0 0.0
    %839 = vmatpush1.msra.mxu0 %v235
    %840 = vmatprep.subr.mxu0 0.0
    %841 = vmatpush1.msra.mxu0 %v236
    %842 = vmatprep.subr.mxu0 0.0
    %843 = vmatpush1.msra.mxu0 %v237
    %844 = vmatprep.subr.mxu0 0.0
    %845 = vmatpush1.msra.mxu0 %v238
    %846 = vmatprep.subr.mxu0 0.0
    %847 = vmatpush1.msra.mxu0 %v239
    %848 = vmatprep.subr.mxu0 0.0
    %849 = vmatpush1.msra.mxu0 %v240
    %850 = vmatprep.subr.mxu0 0.0
    %851 = vmatpush1.msra.mxu0 %v241
    %852 = vmatprep.subr.mxu0 0.0
    %853 = vmatpush1.msra.mxu0 %v242
    %854 = vmatprep.mubr.f32.mxu0 %v352
    %855 = vmatmul.mubr.f32.gmra.mrb[0].mxu0 %v344
    %v856 = vpop.f32.mrb[0].mxu0
    %v857 = vadd.f32 %v787, %v856
    %v858 = vpop.f32.mrb[0].mxu0
    %859 = vdwg.mxu0
    %860 = vmatprep.subr.mxu0 0.0
    %861 = vmatpush1.msra.mxu0 %v243
    %862 = vmatprep.subr.mxu0 0.0
    %863 = vmatpush1.msra.mxu0 %v244
    %864 = vmatprep.subr.mxu0 0.0
    %865 = vmatpush1.msra.mxu0 %v245
    %866 = vmatprep.subr.mxu0 0.0
    %867 = vmatpush1.msra.mxu0 %v246
    %868 = vmatprep.subr.mxu0 0.0
    %869 = vmatpush1.msra.mxu0 %v247
    %870 = vmatprep.subr.mxu0 0.0
    %871 = vmatpush1.msra.mxu0 %v248
    %872 = vmatprep.subr.mxu0 0.0
    %873 = vmatpush1.msra.mxu0 %v249
    %874 = vmatprep.subr.mxu0 0.0
    %875 = vmatpush1.msra.mxu0 %v250
    %876 = vmatprep.subr.mxu0 0.0
    %877 = vmatpush1.msra.mxu0 %v251
    %878 = vmatprep.subr.mxu0 0.0
    %879 = vmatpush1.msra.mxu0 %v252
    %880 = vmatprep.subr.mxu0 0.0
    %881 = vmatpush1.msra.mxu0 %v253
    %882 = vmatprep.subr.mxu0 0.0
    %883 = vmatpush1.msra.mxu0 %v254
    %884 = vmatprep.subr.mxu0 0.0
    %885 = vmatpush1.msra.mxu0 %v255
    %886 = vmatprep.subr.mxu0 0.0
    %887 = vmatpush1.msra.mxu0 %v256
    %888 = vmatprep.subr.mxu0 0.0
    %889 = vmatpush1.msra.mxu0 %v257
    %890 = vmatprep.subr.mxu0 0.0
    %891 = vmatpush1.msra.mxu0 %v258
    %892 = vmatprep.subr.mxu0 0.0
    %893 = vmatpush1.msra.mxu0 %v259
    %894 = vmatprep.subr.mxu0 0.0
    %895 = vmatpush1.msra.mxu0 %v260
    %896 = vmatprep.subr.mxu0 0.0
    %897 = vmatpush1.msra.mxu0 %v261
    %898 = vmatprep.subr.mxu0 0.0
    %899 = vmatpush1.msra.mxu0 %v262
    %900 = vmatprep.subr.mxu0 0.0
    %901 = vmatpush1.msra.mxu0 %v263
    %902 = vmatprep.subr.mxu0 0.0
    %903 = vmatpush1.msra.mxu0 %v264
    %904 = vmatprep.subr.mxu0 0.0
    %905 = vmatpush1.msra.mxu0 %v265
    %906 = vmatprep.subr.mxu0 0.0
    %907 = vmatpush1.msra.mxu0 %v266
    %908 = vmatprep.subr.mxu0 0.0
    %909 = vmatpush1.msra.mxu0 %v267
    %910 = vmatprep.subr.mxu0 0.0
    %911 = vmatpush1.msra.mxu0 %v268
    %912 = vmatprep.subr.mxu0 0.0
    %913 = vmatpush1.msra.mxu0 %v269
    %914 = vmatprep.subr.mxu0 0.0
    %915 = vmatpush1.msra.mxu0 %v270
    %916 = vmatprep.subr.mxu0 0.0
    %917 = vmatpush1.msra.mxu0 %v271
    %918 = vmatprep.subr.mxu0 0.0
    %919 = vmatpush1.msra.mxu0 %v272
    %920 = vmatprep.subr.mxu0 0.0
    %921 = vmatpush1.msra.mxu0 %v273
    %922 = vmatprep.subr.mxu0 0.0
    %923 = vmatpush1.msra.mxu0 %v274
    %924 = vmatprep.mubr.f32.mxu0 %v353
    %925 = vmatmul.mubr.f32.gmra.mrb[0].mxu0 %v351
    %v926 = vpop.f32.mrb[0].mxu0
    %v927 = vadd.f32 %v857, %v926
    %v928 = vpop.f32.mrb[0].mxu0
    %929 = vdwg.mxu0
    %vm930 = vcmask 74752
    %931 = vst.msk [vmem:[#allocation2] sm:$0x3] %vm930, %v927
    // Predicated region
    $region14: #{neural_network_forward.7} parent=1 // pred_check
      _
    $region15: #{neural_network_forward.7} parent=1 // pred_check_branch
      %933 = sbr.rel (0) target = $region17
    $region16: #{neural_network_forward.7} parent=1 // pred_region
      %s935 = ssub.s32 32, 32
      %936 = vsyncadd [#allocation3], %s935
      %s938 = sshll.u32 [#allocation2], 4
      %s939 = int_to_ptr.vmem [resolvable:$true] %s938
      %941 = dma.vmem_to_hbm [thread:$0]  %s939, 32, %s3, [#allocation3]
    $region17: #{neural_network_forward.7} parent=1 // pred_fallthru
      _
    // Predicated region
    $region18: #{neural_network_forward.7} parent=1 // pred_check
      _
    $region19: #{neural_network_forward.7} parent=1 // pred_check_branch
      %943 = sbr.rel (0) target = $region21
    $region20: #{neural_network_forward.7} parent=1 // pred_region
      %944 = dma.done [#allocation3], 32
    $region21: #{neural_network_forward.7} parent=1 // pred_fallthru
      _
    %945 = vsyncpa [#allocation3], 1

</llo_original>
